<compile_context>
chip_gen: v7x
topology: tpu7x:2x2x1
jax: 0.10.0
libtpu: 0.0.40
codegen_flags: <defaults>
</compile_context>

<pallas_src>
import jax
import jax.numpy as jnp
from jax.experimental import pallas as pl
from jax.experimental.pallas import tpu as pltpu


# ------------------------------ fused kernel --------------------------------

def _fused_multires_kernel(x_ref, w1_ref, wres_ref, w3x3_ref, w5x5_ref, sc_ref,
                           o_ref, a1p_ref, sbsp_ref):
    """one_ch -> {residual, conv3x3 -> conv5x5} -> 2x2 maxpool -> LayerNorm -> concat."""
    f32 = jnp.float32
    Hp, Wp, Cin = x_ref.shape[1], x_ref.shape[2], x_ref.shape[3]
    H, W = Hp - 2, Wp - 2
    C = wres_ref.shape[1]
    P = H * W                       # conv-resolution pixels
    Hh, Wh = H // 2, W // 2
    Q = Hh * Wh                     # pooled pixels per branch

    # Folded-BN shifts / LayerNorm params packed in one tiny block.
    sc = sc_ref[...]                # (6, C)
    shift_res = sc[0:1, :]
    shift_sbs = sc[1:2, :]
    shift_obo = sc[2:3, :]
    ln_g = sc[3:4, :]
    ln_b = sc[4:5, :]
    shift_one = sc[5:6, 0:1]        # scalar shift of the 1-channel conv

    # Zero the padded scratches so the halo taps below read zeros ("same" padding).
    a1p_ref[...] = jnp.zeros_like(a1p_ref)
    sbsp_ref[...] = jnp.zeros_like(sbsp_ref)

    # ---- one_ch: Cin -> 1  (VPU taps + lane reduce over Cin) -----------------
    w1 = w1_ref[...]                                    # (9, Cin), BN scale folded in
    acc1 = jnp.zeros((H, W, 1), f32)
    for t in range(9):
        dy, dx = t // 3, t % 3
        xs = x_ref[0, dy:dy + H, dx:dx + W, :]          # (H, W, Cin) shifted window
        acc1 = acc1 + jnp.sum(xs * w1[t:t + 1, :], axis=-1, keepdims=True)
    a1 = jnp.maximum(acc1 + shift_one, 0.0)             # (H, W, 1)
    a1p_ref[1:H + 1, 1:W + 1, :] = a1                   # zero-padded 1-channel map

    # ---- residual_layer (1->C) and conv3x3 (1->C): broadcast VPU taps --------
    wres = wres_ref[...]                                # (9, C)
    w3x3 = w3x3_ref[...]                                # (9, C)
    acc_res = jnp.zeros((P, C), f32)
    acc_sbs = jnp.zeros((P, C), f32)
    for t in range(9):
        dy, dx = t // 3, t % 3
        a_sl = a1p_ref[dy:dy + H, dx:dx + W, :].reshape(P, 1)   # (P, 1)
        acc_res = acc_res + a_sl * wres[t:t + 1, :]             # (P, C)
        acc_sbs = acc_sbs + a_sl * w3x3[t:t + 1, :]
    res = jnp.maximum(acc_res + shift_res, 0.0)          # (P, C)
    sbs = jnp.maximum(acc_sbs + shift_sbs, 0.0)          # (P, C)

    # ---- conv5x5 (C->C): the only real matmul, 9 accumulated MXU dots --------
    sbsp_ref[1:H + 1, 1:W + 1, :] = sbs.reshape(H, W, C)
    acc3 = jnp.zeros((P, C), f32)
    for t in range(9):
        dy, dx = t // 3, t % 3
        xs = sbsp_ref[dy:dy + H, dx:dx + W, :].reshape(P, C)
        acc3 = acc3 + jnp.dot(xs, w5x5_ref[t], preferred_element_type=f32)
    obo = jnp.maximum(acc3 + shift_obo, 0.0)             # (P, C)

    # ---- MaxPool2d(2,2) + flatten(2).transpose(1,2) via exact 0/1 selectors --
    # pooled[q, c] = max_off conv[(q//Wh)*2*W + (q%Wh)*2 + off, c], off in {0,1,W,W+1}
    # (Wh is a power of two here; the selector uses shift/and instead of div/mod.)
    q_idx = jax.lax.broadcasted_iota(jnp.int32, (Q, P), 0)
    p_idx = jax.lax.broadcasted_iota(jnp.int32, (Q, P), 1)
    wh_shift = int(Wh).bit_length() - 1
    base = ((q_idx >> wh_shift) * (2 * W)) + ((q_idx & (Wh - 1)) * 2)

    def pool(x):
        m = None
        for off in (0, 1, W, W + 1):
            sel = (p_idx == (base + off)).astype(f32)            # exact 0/1 (Q, P)
            v = jnp.dot(sel, x, preferred_element_type=f32)      # (Q, C)
            m = v if m is None else jnp.maximum(m, v)
        return m

    def layer_norm(y):                                   # LayerNorm over channels
        mu = jnp.mean(y, axis=-1, keepdims=True)
        var = jnp.mean((y - mu) * (y - mu), axis=-1, keepdims=True)
        return (y - mu) * jax.lax.rsqrt(var + 1e-5) * ln_g + ln_b

    # torch.cat([res_out, obo_out], dim=1): rows [0, Q) then [Q, 2Q).
    o_ref[0, 0:Q, :] = layer_norm(pool(res)).astype(o_ref.dtype)
    o_ref[0, Q:2 * Q, :] = layer_norm(pool(obo)).astype(o_ref.dtype)


# ------------------------------ host wrapper ---------------------------------

def _fold_conv_bn(w, b, gamma, beta, mean, var, eps=1e-5):
    """Fold eval-mode BatchNorm (and the conv bias) into the conv weights + a shift.

    Returns w_taps (9, Cin, Cout) with the BN scale multiplied in (tap index
    t = dy*3 + dx) and shift = (bias - mean) * scale + beta.
    """
    cout, cin = w.shape[0], w.shape[1]
    scale = gamma / jnp.sqrt(var + eps)
    shift = (b - mean) * scale + beta
    w_taps = jnp.transpose(w, (2, 3, 1, 0)).reshape(9, cin, cout) * scale
    return w_taps.astype(jnp.float32), shift.astype(jnp.float32)


def multires_block_15(x_nchw, params):
    """MultiResBlock_15.forward (eval mode) as one fused Pallas TPU kernel."""
    N, Cin, H, W = x_nchw.shape
    assert H % 2 == 0 and W % 2 == 0
    # The in-kernel pool selector assumes W//2 is a power of two (true for these shapes).
    assert ((W // 2) & ((W // 2) - 1)) == 0

    w1_t, sh1 = _fold_conv_bn(*params["one_ch"])          # (9, Cin, 1), (1,)
    wres_t, sh_res = _fold_conv_bn(*params["residual"])   # (9, 1, C),  (C,)
    w3x3_t, sh_sbs = _fold_conv_bn(*params["conv3x3"])    # (9, 1, C),  (C,)
    w5x5_t, sh_obo = _fold_conv_bn(*params["conv5x5"])    # (9, C, C),  (C,)
    ln_g, ln_b = params["norm"]
    C = wres_t.shape[2]

    w1 = w1_t[:, :, 0]                                    # (9, Cin)
    wres = wres_t[:, 0, :]                                # (9, C)
    w3x3 = w3x3_t[:, 0, :]                                # (9, C)

    sc = jnp.zeros((6, C), jnp.float32)
    sc = sc.at[0].set(sh_res).at[1].set(sh_sbs).at[2].set(sh_obo)
    sc = sc.at[3].set(ln_g).at[4].set(ln_b).at[5, 0].set(sh1[0])

    # NCHW -> NHWC; "same" zero-padding applied once to the (tiny) network input.
    x = jnp.transpose(x_nchw, (0, 2, 3, 1)).astype(jnp.float32)
    xp = jnp.pad(x, ((0, 0), (1, 1), (1, 1), (0, 0)))

    Q = (H // 2) * (W // 2)

    return pl.pallas_call(
        _fused_multires_kernel,
        out_shape=jax.ShapeDtypeStruct((N, 2 * Q, C), jnp.float32),
        grid=(N,),
        in_specs=[
            pl.BlockSpec((1, H + 2, W + 2, Cin), lambda n: (n, 0, 0, 0)),
            pl.BlockSpec((9, Cin), lambda n: (0, 0)),
            pl.BlockSpec((9, C), lambda n: (0, 0)),
            pl.BlockSpec((9, C), lambda n: (0, 0)),
            pl.BlockSpec((9, C, C), lambda n: (0, 0, 0)),
            pl.BlockSpec((6, C), lambda n: (0, 0)),
        ],
        out_specs=pl.BlockSpec((1, 2 * Q, C), lambda n: (n, 0, 0)),
        scratch_shapes=[
            pltpu.VMEM((H + 2, W + 2, 1), jnp.float32),   # padded one_ch activation
            pltpu.VMEM((H + 2, W + 2, C), jnp.float32),   # padded conv3x3 activation
        ],
        compiler_params=pltpu.CompilerParams(dimension_semantics=("parallel",)),
    )(xp, w1, wres, w3x3, w5x5_t, sc)


# ------------------------------ parameters -----------------------------------

def init_params(key, in_ch, U):
    def conv_bn(k, cin, cout):
        ks = jax.random.split(k, 6)
        w = 0.1 * jax.random.normal(ks[0], (cout, cin, 3, 3), jnp.float32)
        b = 0.1 * jax.random.normal(ks[1], (cout,), jnp.float32)
        gamma = 1.0 + 0.1 * jax.random.normal(ks[2], (cout,), jnp.float32)
        beta = 0.1 * jax.random.normal(ks[3], (cout,), jnp.float32)
        mean = 0.1 * jax.random.normal(ks[4], (cout,), jnp.float32)
        var = 1.0 + 0.1 * jnp.abs(jax.random.normal(ks[5], (cout,), jnp.float32))
        return (w, b, gamma, beta, mean, var)

    k = jax.random.split(key, 6)
    Wc = U  # alpha = 1
    return {
        "one_ch": conv_bn(k[0], in_ch, 1),
        "residual": conv_bn(k[1], 1, Wc),
        "conv3x3": conv_bn(k[2], 1, Wc),
        "conv5x5": conv_bn(k[3], Wc, Wc),
        # conv7x7 / self.relu exist in __init__ but are unused in forward.
        "norm": (1.0 + 0.1 * jax.random.normal(k[4], (Wc,), jnp.float32),
                 0.1 * jax.random.normal(k[5], (Wc,), jnp.float32)),
    }


# ------------------------------ pure-JAX reference ----------------------------

def _ref_forward(x_nchw, params):
    def conv_bn_relu(x, w, b, g, be, m, v, eps=1e-5):
        y = jax.lax.conv_general_dilated(
            x, w, window_strides=(1, 1), padding=((1, 1), (1, 1)),
            dimension_numbers=("NCHW", "OIHW", "NCHW"), precision="highest")
        y = y + b[None, :, None, None]
        y = (y - m[None, :, None, None]) / jnp.sqrt(v[None, :, None, None] + eps)
        y = y * g[None, :, None, None] + be[None, :, None, None]
        return jnp.maximum(y, 0.0)

    def pool_flatten(y):
        n, c, h, w = y.shape
        y = y.reshape(n, c, h // 2, 2, w // 2, 2).max(axis=(3, 5))
        return y.reshape(n, c, -1).transpose(0, 2, 1)    # flatten(2).transpose(1, 2)

    x = x_nchw.astype(jnp.float32)
    a1 = conv_bn_relu(x, *params["one_ch"])
    res = conv_bn_relu(a1, *params["residual"])
    sbs = conv_bn_relu(a1, *params["conv3x3"])
    obo = conv_bn_relu(sbs, *params["conv5x5"])
    cat = jnp.concatenate([pool_flatten(res), pool_flatten(obo)], axis=1)
    g, b = params["norm"]
    mu = cat.mean(-1, keepdims=True)
    var = ((cat - mu) ** 2).mean(-1, keepdims=True)
    return (cat - mu) / jnp.sqrt(var + 1e-5) * g + b


# ------------------------------ main ------------------------------------------

if __name__ == "__main__":
    key = jax.random.PRNGKey(0)
    kx, kp = jax.random.split(key)

    N, in_ch, H, W, U = 2, 4, 16, 16, 32          # channel width = alpha * U = 32
    x = jax.random.normal(kx, (N, in_ch, H, W), jnp.float32)
    params = init_params(kp, in_ch, U)

    out = jax.jit(multires_block_15)(x, params)
    out = jax.block_until_ready(out)

    ref = _ref_forward(x, params)
    assert out.shape == (N, 2 * (H // 2) * (W // 2), U), out.shape
    assert jnp.allclose(out, ref, rtol=2e-3, atol=2e-3), float(
        jnp.max(jnp.abs(out - ref)))

    print("KERNEL_OK")
</pallas_src>

<mosaic_0001>
module attributes {stable_mosaic.version = 11 : i64} {
  func.func @_fused_multires_kernel(%arg0: i32, %arg1: memref<1x18x18x4xf32, #tpu.memory_space<vmem>>, %arg2: memref<9x4xf32, #tpu.memory_space<vmem>>, %arg3: memref<9x32xf32, #tpu.memory_space<vmem>>, %arg4: memref<9x32xf32, #tpu.memory_space<vmem>>, %arg5: memref<9x32x32xf32, #tpu.memory_space<vmem>>, %arg6: memref<6x32xf32, #tpu.memory_space<vmem>>, %arg7: memref<1x128x32xf32, #tpu.memory_space<vmem>>, %arg8: memref<18x18x1xf32, #tpu.memory_space<vmem>>, %arg9: memref<18x18x32xf32, #tpu.memory_space<vmem>>) attributes {dimension_semantics = [#tpu.dimension_semantics<parallel>], iteration_bounds = array<i64: 2>, scalar_prefetch = 0 : i64, scratch_operands = 2 : i64, tpu.core_type = #tpu.core_type<tc>, window_params = [{transform_indices = @transform_0, window_bounds = array<i64: 1, 18, 18, 4>}, {pipeline_mode = #tpu.pipeline_mode<synchronous>, transform_indices = @transform_1, window_bounds = array<i64: 9, 4>}, {pipeline_mode = #tpu.pipeline_mode<synchronous>, transform_indices = @transform_2, window_bounds = array<i64: 9, 32>}, {pipeline_mode = #tpu.pipeline_mode<synchronous>, transform_indices = @transform_3, window_bounds = array<i64: 9, 32>}, {pipeline_mode = #tpu.pipeline_mode<synchronous>, transform_indices = @transform_4, window_bounds = array<i64: 9, 32, 32>}, {pipeline_mode = #tpu.pipeline_mode<synchronous>, transform_indices = @transform_5, window_bounds = array<i64: 6, 32>}, {transform_indices = @transform_6, window_bounds = array<i64: 1, 128, 32>}]} {
    %c0 = arith.constant 0 : index
    %c0_0 = arith.constant 0 : index
    %0 = vector.load %arg6[%c0, %c0_0] : memref<6x32xf32, #tpu.memory_space<vmem>>, vector<6x32xf32>
    %1 = vector.extract_strided_slice %0 {offsets = [0, 0], sizes = [1, 32], strides = [1, 1]} : vector<6x32xf32> to vector<1x32xf32>
    %2 = vector.extract_strided_slice %0 {offsets = [1, 0], sizes = [1, 32], strides = [1, 1]} : vector<6x32xf32> to vector<1x32xf32>
    %3 = vector.extract_strided_slice %0 {offsets = [2, 0], sizes = [1, 32], strides = [1, 1]} : vector<6x32xf32> to vector<1x32xf32>
    %4 = vector.extract_strided_slice %0 {offsets = [3, 0], sizes = [1, 32], strides = [1, 1]} : vector<6x32xf32> to vector<1x32xf32>
    %5 = vector.extract_strided_slice %0 {offsets = [4, 0], sizes = [1, 32], strides = [1, 1]} : vector<6x32xf32> to vector<1x32xf32>
    %6 = vector.extract_strided_slice %0 {offsets = [5, 0], sizes = [1, 1], strides = [1, 1]} : vector<6x32xf32> to vector<1x1xf32>
    %cst = arith.constant 0.000000e+00 : f32
    %7 = vector.broadcast %cst : f32 to vector<18x18x1xf32>
    %c0_1 = arith.constant 0 : index
    %c0_2 = arith.constant 0 : index
    %c0_3 = arith.constant 0 : index
    %8 = vector.load %arg8[%c0_1, %c0_2, %c0_3] : memref<18x18x1xf32, #tpu.memory_space<vmem>>, vector<18x18x1xf32>
    tpu.vector_store %arg8[%c0_1, %c0_2, %c0_3], %7 {strides = array<i32>} : memref<18x18x1xf32, #tpu.memory_space<vmem>>, vector<18x18x1xf32>,
    %cst_4 = arith.constant 0.000000e+00 : f32
    %9 = vector.broadcast %cst_4 : f32 to vector<18x18x32xf32>
    %c0_5 = arith.constant 0 : index
    %c0_6 = arith.constant 0 : index
    %c0_7 = arith.constant 0 : index
    %10 = vector.load %arg9[%c0_5, %c0_6, %c0_7] : memref<18x18x32xf32, #tpu.memory_space<vmem>>, vector<18x18x32xf32>
    tpu.vector_store %arg9[%c0_5, %c0_6, %c0_7], %9 {strides = array<i32>} : memref<18x18x32xf32, #tpu.memory_space<vmem>>, vector<18x18x32xf32>,
    %c0_8 = arith.constant 0 : index
    %c0_9 = arith.constant 0 : index
    %11 = vector.load %arg2[%c0_8, %c0_9] : memref<9x4xf32, #tpu.memory_space<vmem>>, vector<9x4xf32>
    %cst_10 = arith.constant 0.000000e+00 : f32
    %12 = vector.broadcast %cst_10 : f32 to vector<16x16x1xf32>
    %c0_11 = arith.constant 0 : index
    %c0_12 = arith.constant 0 : index
    %c0_13 = arith.constant 0 : index
    %c0_14 = arith.constant 0 : index
    %13 = vector.load %arg1[%c0_11, %c0_12, %c0_13, %c0_14] : memref<1x18x18x4xf32, #tpu.memory_space<vmem>>, vector<1x16x16x4xf32>
    %14 = vector.shape_cast %13 : vector<1x16x16x4xf32> to vector<16x16x4xf32>
    %15 = vector.extract_strided_slice %11 {offsets = [0, 0], sizes = [1, 4], strides = [1, 1]} : vector<9x4xf32> to vector<1x4xf32>
    %16 = vector.shape_cast %15 : vector<1x4xf32> to vector<1x1x4xf32>
    %17 = vector.broadcast %16 : vector<1x1x4xf32> to vector<16x16x4xf32>
    %18 = arith.mulf %14, %17 : vector<16x16x4xf32>
    %cst_15 = arith.constant dense<0.000000e+00> : vector<16x16xf32>
    %19 = vector.multi_reduction <add>, %18, %cst_15 [2] : vector<16x16x4xf32> to vector<16x16xf32>
    %20 = vector.shape_cast %19 : vector<16x16xf32> to vector<16x16x1xf32>
    %21 = arith.addf %12, %20 : vector<16x16x1xf32>
    %c0_16 = arith.constant 0 : index
    %c0_17 = arith.constant 0 : index
    %c1 = arith.constant 1 : index
    %c0_18 = arith.constant 0 : index
    %22 = vector.load %arg1[%c0_16, %c0_17, %c1, %c0_18] : memref<1x18x18x4xf32, #tpu.memory_space<vmem>>, vector<1x16x16x4xf32>
    %23 = vector.shape_cast %22 : vector<1x16x16x4xf32> to vector<16x16x4xf32>
    %24 = vector.extract_strided_slice %11 {offsets = [1, 0], sizes = [1, 4], strides = [1, 1]} : vector<9x4xf32> to vector<1x4xf32>
    %25 = vector.shape_cast %24 : vector<1x4xf32> to vector<1x1x4xf32>
    %26 = vector.broadcast %25 : vector<1x1x4xf32> to vector<16x16x4xf32>
    %27 = arith.mulf %23, %26 : vector<16x16x4xf32>
    %cst_19 = arith.constant dense<0.000000e+00> : vector<16x16xf32>
    %28 = vector.multi_reduction <add>, %27, %cst_19 [2] : vector<16x16x4xf32> to vector<16x16xf32>
    %29 = vector.shape_cast %28 : vector<16x16xf32> to vector<16x16x1xf32>
    %30 = arith.addf %21, %29 : vector<16x16x1xf32>
    %c0_20 = arith.constant 0 : index
    %c0_21 = arith.constant 0 : index
    %c2 = arith.constant 2 : index
    %c0_22 = arith.constant 0 : index
    %31 = vector.load %arg1[%c0_20, %c0_21, %c2, %c0_22] : memref<1x18x18x4xf32, #tpu.memory_space<vmem>>, vector<1x16x16x4xf32>
    %32 = vector.shape_cast %31 : vector<1x16x16x4xf32> to vector<16x16x4xf32>
    %33 = vector.extract_strided_slice %11 {offsets = [2, 0], sizes = [1, 4], strides = [1, 1]} : vector<9x4xf32> to vector<1x4xf32>
    %34 = vector.shape_cast %33 : vector<1x4xf32> to vector<1x1x4xf32>
    %35 = vector.broadcast %34 : vector<1x1x4xf32> to vector<16x16x4xf32>
    %36 = arith.mulf %32, %35 : vector<16x16x4xf32>
    %cst_23 = arith.constant dense<0.000000e+00> : vector<16x16xf32>
    %37 = vector.multi_reduction <add>, %36, %cst_23 [2] : vector<16x16x4xf32> to vector<16x16xf32>
    %38 = vector.shape_cast %37 : vector<16x16xf32> to vector<16x16x1xf32>
    %39 = arith.addf %30, %38 : vector<16x16x1xf32>
    %c0_24 = arith.constant 0 : index
    %c1_25 = arith.constant 1 : index
    %c0_26 = arith.constant 0 : index
    %c0_27 = arith.constant 0 : index
    %40 = vector.load %arg1[%c0_24, %c1_25, %c0_26, %c0_27] : memref<1x18x18x4xf32, #tpu.memory_space<vmem>>, vector<1x16x16x4xf32>
    %41 = vector.shape_cast %40 : vector<1x16x16x4xf32> to vector<16x16x4xf32>
    %42 = vector.extract_strided_slice %11 {offsets = [3, 0], sizes = [1, 4], strides = [1, 1]} : vector<9x4xf32> to vector<1x4xf32>
    %43 = vector.shape_cast %42 : vector<1x4xf32> to vector<1x1x4xf32>
    %44 = vector.broadcast %43 : vector<1x1x4xf32> to vector<16x16x4xf32>
    %45 = arith.mulf %41, %44 : vector<16x16x4xf32>
    %cst_28 = arith.constant dense<0.000000e+00> : vector<16x16xf32>
    %46 = vector.multi_reduction <add>, %45, %cst_28 [2] : vector<16x16x4xf32> to vector<16x16xf32>
    %47 = vector.shape_cast %46 : vector<16x16xf32> to vector<16x16x1xf32>
    %48 = arith.addf %39, %47 : vector<16x16x1xf32>
    %c0_29 = arith.constant 0 : index
    %c1_30 = arith.constant 1 : index
    %c1_31 = arith.constant 1 : index
    %c0_32 = arith.constant 0 : index
    %49 = vector.load %arg1[%c0_29, %c1_30, %c1_31, %c0_32] : memref<1x18x18x4xf32, #tpu.memory_space<vmem>>, vector<1x16x16x4xf32>
    %50 = vector.shape_cast %49 : vector<1x16x16x4xf32> to vector<16x16x4xf32>
    %51 = vector.extract_strided_slice %11 {offsets = [4, 0], sizes = [1, 4], strides = [1, 1]} : vector<9x4xf32> to vector<1x4xf32>
    %52 = vector.shape_cast %51 : vector<1x4xf32> to vector<1x1x4xf32>
    %53 = vector.broadcast %52 : vector<1x1x4xf32> to vector<16x16x4xf32>
    %54 = arith.mulf %50, %53 : vector<16x16x4xf32>
    %cst_33 = arith.constant dense<0.000000e+00> : vector<16x16xf32>
    %55 = vector.multi_reduction <add>, %54, %cst_33 [2] : vector<16x16x4xf32> to vector<16x16xf32>
    %56 = vector.shape_cast %55 : vector<16x16xf32> to vector<16x16x1xf32>
    %57 = arith.addf %48, %56 : vector<16x16x1xf32>
    %c0_34 = arith.constant 0 : index
    %c1_35 = arith.constant 1 : index
    %c2_36 = arith.constant 2 : index
    %c0_37 = arith.constant 0 : index
    %58 = vector.load %arg1[%c0_34, %c1_35, %c2_36, %c0_37] : memref<1x18x18x4xf32, #tpu.memory_space<vmem>>, vector<1x16x16x4xf32>
    %59 = vector.shape_cast %58 : vector<1x16x16x4xf32> to vector<16x16x4xf32>
    %60 = vector.extract_strided_slice %11 {offsets = [5, 0], sizes = [1, 4], strides = [1, 1]} : vector<9x4xf32> to vector<1x4xf32>
    %61 = vector.shape_cast %60 : vector<1x4xf32> to vector<1x1x4xf32>
    %62 = vector.broadcast %61 : vector<1x1x4xf32> to vector<16x16x4xf32>
    %63 = arith.mulf %59, %62 : vector<16x16x4xf32>
    %cst_38 = arith.constant dense<0.000000e+00> : vector<16x16xf32>
    %64 = vector.multi_reduction <add>, %63, %cst_38 [2] : vector<16x16x4xf32> to vector<16x16xf32>
    %65 = vector.shape_cast %64 : vector<16x16xf32> to vector<16x16x1xf32>
    %66 = arith.addf %57, %65 : vector<16x16x1xf32>
    %c0_39 = arith.constant 0 : index
    %c2_40 = arith.constant 2 : index
    %c0_41 = arith.constant 0 : index
    %c0_42 = arith.constant 0 : index
    %67 = vector.load %arg1[%c0_39, %c2_40, %c0_41, %c0_42] : memref<1x18x18x4xf32, #tpu.memory_space<vmem>>, vector<1x16x16x4xf32>
    %68 = vector.shape_cast %67 : vector<1x16x16x4xf32> to vector<16x16x4xf32>
    %69 = vector.extract_strided_slice %11 {offsets = [6, 0], sizes = [1, 4], strides = [1, 1]} : vector<9x4xf32> to vector<1x4xf32>
    %70 = vector.shape_cast %69 : vector<1x4xf32> to vector<1x1x4xf32>
    %71 = vector.broadcast %70 : vector<1x1x4xf32> to vector<16x16x4xf32>
    %72 = arith.mulf %68, %71 : vector<16x16x4xf32>
    %cst_43 = arith.constant dense<0.000000e+00> : vector<16x16xf32>
    %73 = vector.multi_reduction <add>, %72, %cst_43 [2] : vector<16x16x4xf32> to vector<16x16xf32>
    %74 = vector.shape_cast %73 : vector<16x16xf32> to vector<16x16x1xf32>
    %75 = arith.addf %66, %74 : vector<16x16x1xf32>
    %c0_44 = arith.constant 0 : index
    %c2_45 = arith.constant 2 : index
    %c1_46 = arith.constant 1 : index
    %c0_47 = arith.constant 0 : index
    %76 = vector.load %arg1[%c0_44, %c2_45, %c1_46, %c0_47] : memref<1x18x18x4xf32, #tpu.memory_space<vmem>>, vector<1x16x16x4xf32>
    %77 = vector.shape_cast %76 : vector<1x16x16x4xf32> to vector<16x16x4xf32>
    %78 = vector.extract_strided_slice %11 {offsets = [7, 0], sizes = [1, 4], strides = [1, 1]} : vector<9x4xf32> to vector<1x4xf32>
    %79 = vector.shape_cast %78 : vector<1x4xf32> to vector<1x1x4xf32>
    %80 = vector.broadcast %79 : vector<1x1x4xf32> to vector<16x16x4xf32>
    %81 = arith.mulf %77, %80 : vector<16x16x4xf32>
    %cst_48 = arith.constant dense<0.000000e+00> : vector<16x16xf32>
    %82 = vector.multi_reduction <add>, %81, %cst_48 [2] : vector<16x16x4xf32> to vector<16x16xf32>
    %83 = vector.shape_cast %82 : vector<16x16xf32> to vector<16x16x1xf32>
    %84 = arith.addf %75, %83 : vector<16x16x1xf32>
    %c0_49 = arith.constant 0 : index
    %c2_50 = arith.constant 2 : index
    %c2_51 = arith.constant 2 : index
    %c0_52 = arith.constant 0 : index
    %85 = vector.load %arg1[%c0_49, %c2_50, %c2_51, %c0_52] : memref<1x18x18x4xf32, #tpu.memory_space<vmem>>, vector<1x16x16x4xf32>
    %86 = vector.shape_cast %85 : vector<1x16x16x4xf32> to vector<16x16x4xf32>
    %87 = vector.extract_strided_slice %11 {offsets = [8, 0], sizes = [1, 4], strides = [1, 1]} : vector<9x4xf32> to vector<1x4xf32>
    %88 = vector.shape_cast %87 : vector<1x4xf32> to vector<1x1x4xf32>
    %89 = vector.broadcast %88 : vector<1x1x4xf32> to vector<16x16x4xf32>
    %90 = arith.mulf %86, %89 : vector<16x16x4xf32>
    %cst_53 = arith.constant dense<0.000000e+00> : vector<16x16xf32>
    %91 = vector.multi_reduction <add>, %90, %cst_53 [2] : vector<16x16x4xf32> to vector<16x16xf32>
    %92 = vector.shape_cast %91 : vector<16x16xf32> to vector<16x16x1xf32>
    %93 = arith.addf %84, %92 : vector<16x16x1xf32>
    %94 = vector.shape_cast %6 : vector<1x1xf32> to vector<1x1x1xf32>
    %95 = vector.broadcast %94 : vector<1x1x1xf32> to vector<16x16x1xf32>
    %96 = arith.addf %93, %95 : vector<16x16x1xf32>
    %cst_54 = arith.constant 0.000000e+00 : f32
    %97 = vector.broadcast %cst_54 : f32 to vector<16x16x1xf32>
    %98 = arith.maximumf %96, %97 : vector<16x16x1xf32>
    %c1_55 = arith.constant 1 : index
    %c1_56 = arith.constant 1 : index
    %c0_57 = arith.constant 0 : index
    %99 = vector.load %arg8[%c1_55, %c1_56, %c0_57] : memref<18x18x1xf32, #tpu.memory_space<vmem>>, vector<16x16x1xf32>
    tpu.vector_store %arg8[%c1_55, %c1_56, %c0_57], %98 {strides = array<i32>} : memref<18x18x1xf32, #tpu.memory_space<vmem>>, vector<16x16x1xf32>,
    %c0_58 = arith.constant 0 : index
    %c0_59 = arith.constant 0 : index
    %100 = vector.load %arg3[%c0_58, %c0_59] : memref<9x32xf32, #tpu.memory_space<vmem>>, vector<9x32xf32>
    %c0_60 = arith.constant 0 : index
    %c0_61 = arith.constant 0 : index
    %101 = vector.load %arg4[%c0_60, %c0_61] : memref<9x32xf32, #tpu.memory_space<vmem>>, vector<9x32xf32>
    %cst_62 = arith.constant 0.000000e+00 : f32
    %102 = vector.broadcast %cst_62 : f32 to vector<256x32xf32>
    %cst_63 = arith.constant 0.000000e+00 : f32
    %103 = vector.broadcast %cst_63 : f32 to vector<256x32xf32>
    %c0_64 = arith.constant 0 : index
    %c0_65 = arith.constant 0 : index
    %c0_66 = arith.constant 0 : index
    %104 = vector.load %arg8[%c0_64, %c0_65, %c0_66] : memref<18x18x1xf32, #tpu.memory_space<vmem>>, vector<16x16x1xf32>
    %105 = vector.shape_cast %104 : vector<16x16x1xf32> to vector<256x1xf32>
    %106 = vector.extract_strided_slice %100 {offsets = [0, 0], sizes = [1, 32], strides = [1, 1]} : vector<9x32xf32> to vector<1x32xf32>
    %107 = vector.broadcast %105 : vector<256x1xf32> to vector<256x32xf32>
    %108 = vector.broadcast %106 : vector<1x32xf32> to vector<256x32xf32>
    %109 = arith.mulf %107, %108 : vector<256x32xf32>
    %110 = arith.addf %102, %109 : vector<256x32xf32>
    %111 = vector.extract_strided_slice %101 {offsets = [0, 0], sizes = [1, 32], strides = [1, 1]} : vector<9x32xf32> to vector<1x32xf32>
    %112 = vector.broadcast %105 : vector<256x1xf32> to vector<256x32xf32>
    %113 = vector.broadcast %111 : vector<1x32xf32> to vector<256x32xf32>
    %114 = arith.mulf %112, %113 : vector<256x32xf32>
    %115 = arith.addf %103, %114 : vector<256x32xf32>
    %c0_67 = arith.constant 0 : index
    %c1_68 = arith.constant 1 : index
    %c0_69 = arith.constant 0 : index
    %116 = vector.load %arg8[%c0_67, %c1_68, %c0_69] : memref<18x18x1xf32, #tpu.memory_space<vmem>>, vector<16x16x1xf32>
    %117 = vector.shape_cast %116 : vector<16x16x1xf32> to vector<256x1xf32>
    %118 = vector.extract_strided_slice %100 {offsets = [1, 0], sizes = [1, 32], strides = [1, 1]} : vector<9x32xf32> to vector<1x32xf32>
    %119 = vector.broadcast %117 : vector<256x1xf32> to vector<256x32xf32>
    %120 = vector.broadcast %118 : vector<1x32xf32> to vector<256x32xf32>
    %121 = arith.mulf %119, %120 : vector<256x32xf32>
    %122 = arith.addf %110, %121 : vector<256x32xf32>
    %123 = vector.extract_strided_slice %101 {offsets = [1, 0], sizes = [1, 32], strides = [1, 1]} : vector<9x32xf32> to vector<1x32xf32>
    %124 = vector.broadcast %117 : vector<256x1xf32> to vector<256x32xf32>
    %125 = vector.broadcast %123 : vector<1x32xf32> to vector<256x32xf32>
    %126 = arith.mulf %124, %125 : vector<256x32xf32>
    %127 = arith.addf %115, %126 : vector<256x32xf32>
    %c0_70 = arith.constant 0 : index
    %c2_71 = arith.constant 2 : index
    %c0_72 = arith.constant 0 : index
    %128 = vector.load %arg8[%c0_70, %c2_71, %c0_72] : memref<18x18x1xf32, #tpu.memory_space<vmem>>, vector<16x16x1xf32>
    %129 = vector.shape_cast %128 : vector<16x16x1xf32> to vector<256x1xf32>
    %130 = vector.extract_strided_slice %100 {offsets = [2, 0], sizes = [1, 32], strides = [1, 1]} : vector<9x32xf32> to vector<1x32xf32>
    %131 = vector.broadcast %129 : vector<256x1xf32> to vector<256x32xf32>
    %132 = vector.broadcast %130 : vector<1x32xf32> to vector<256x32xf32>
    %133 = arith.mulf %131, %132 : vector<256x32xf32>
    %134 = arith.addf %122, %133 : vector<256x32xf32>
    %135 = vector.extract_strided_slice %101 {offsets = [2, 0], sizes = [1, 32], strides = [1, 1]} : vector<9x32xf32> to vector<1x32xf32>
    %136 = vector.broadcast %129 : vector<256x1xf32> to vector<256x32xf32>
    %137 = vector.broadcast %135 : vector<1x32xf32> to vector<256x32xf32>
    %138 = arith.mulf %136, %137 : vector<256x32xf32>
    %139 = arith.addf %127, %138 : vector<256x32xf32>
    %c1_73 = arith.constant 1 : index
    %c0_74 = arith.constant 0 : index
    %c0_75 = arith.constant 0 : index
    %140 = vector.load %arg8[%c1_73, %c0_74, %c0_75] : memref<18x18x1xf32, #tpu.memory_space<vmem>>, vector<16x16x1xf32>
    %141 = vector.shape_cast %140 : vector<16x16x1xf32> to vector<256x1xf32>
    %142 = vector.extract_strided_slice %100 {offsets = [3, 0], sizes = [1, 32], strides = [1, 1]} : vector<9x32xf32> to vector<1x32xf32>
    %143 = vector.broadcast %141 : vector<256x1xf32> to vector<256x32xf32>
    %144 = vector.broadcast %142 : vector<1x32xf32> to vector<256x32xf32>
    %145 = arith.mulf %143, %144 : vector<256x32xf32>
    %146 = arith.addf %134, %145 : vector<256x32xf32>
    %147 = vector.extract_strided_slice %101 {offsets = [3, 0], sizes = [1, 32], strides = [1, 1]} : vector<9x32xf32> to vector<1x32xf32>
    %148 = vector.broadcast %141 : vector<256x1xf32> to vector<256x32xf32>
    %149 = vector.broadcast %147 : vector<1x32xf32> to vector<256x32xf32>
    %150 = arith.mulf %148, %149 : vector<256x32xf32>
    %151 = arith.addf %139, %150 : vector<256x32xf32>
    %c1_76 = arith.constant 1 : index
    %c1_77 = arith.constant 1 : index
    %c0_78 = arith.constant 0 : index
    %152 = vector.load %arg8[%c1_76, %c1_77, %c0_78] : memref<18x18x1xf32, #tpu.memory_space<vmem>>, vector<16x16x1xf32>
    %153 = vector.shape_cast %152 : vector<16x16x1xf32> to vector<256x1xf32>
    %154 = vector.extract_strided_slice %100 {offsets = [4, 0], sizes = [1, 32], strides = [1, 1]} : vector<9x32xf32> to vector<1x32xf32>
    %155 = vector.broadcast %153 : vector<256x1xf32> to vector<256x32xf32>
    %156 = vector.broadcast %154 : vector<1x32xf32> to vector<256x32xf32>
    %157 = arith.mulf %155, %156 : vector<256x32xf32>
    %158 = arith.addf %146, %157 : vector<256x32xf32>
    %159 = vector.extract_strided_slice %101 {offsets = [4, 0], sizes = [1, 32], strides = [1, 1]} : vector<9x32xf32> to vector<1x32xf32>
    %160 = vector.broadcast %153 : vector<256x1xf32> to vector<256x32xf32>
    %161 = vector.broadcast %159 : vector<1x32xf32> to vector<256x32xf32>
    %162 = arith.mulf %160, %161 : vector<256x32xf32>
    %163 = arith.addf %151, %162 : vector<256x32xf32>
    %c1_79 = arith.constant 1 : index
    %c2_80 = arith.constant 2 : index
    %c0_81 = arith.constant 0 : index
    %164 = vector.load %arg8[%c1_79, %c2_80, %c0_81] : memref<18x18x1xf32, #tpu.memory_space<vmem>>, vector<16x16x1xf32>
    %165 = vector.shape_cast %164 : vector<16x16x1xf32> to vector<256x1xf32>
    %166 = vector.extract_strided_slice %100 {offsets = [5, 0], sizes = [1, 32], strides = [1, 1]} : vector<9x32xf32> to vector<1x32xf32>
    %167 = vector.broadcast %165 : vector<256x1xf32> to vector<256x32xf32>
    %168 = vector.broadcast %166 : vector<1x32xf32> to vector<256x32xf32>
    %169 = arith.mulf %167, %168 : vector<256x32xf32>
    %170 = arith.addf %158, %169 : vector<256x32xf32>
    %171 = vector.extract_strided_slice %101 {offsets = [5, 0], sizes = [1, 32], strides = [1, 1]} : vector<9x32xf32> to vector<1x32xf32>
    %172 = vector.broadcast %165 : vector<256x1xf32> to vector<256x32xf32>
    %173 = vector.broadcast %171 : vector<1x32xf32> to vector<256x32xf32>
    %174 = arith.mulf %172, %173 : vector<256x32xf32>
    %175 = arith.addf %163, %174 : vector<256x32xf32>
    %c2_82 = arith.constant 2 : index
    %c0_83 = arith.constant 0 : index
    %c0_84 = arith.constant 0 : index
    %176 = vector.load %arg8[%c2_82, %c0_83, %c0_84] : memref<18x18x1xf32, #tpu.memory_space<vmem>>, vector<16x16x1xf32>
    %177 = vector.shape_cast %176 : vector<16x16x1xf32> to vector<256x1xf32>
    %178 = vector.extract_strided_slice %100 {offsets = [6, 0], sizes = [1, 32], strides = [1, 1]} : vector<9x32xf32> to vector<1x32xf32>
    %179 = vector.broadcast %177 : vector<256x1xf32> to vector<256x32xf32>
    %180 = vector.broadcast %178 : vector<1x32xf32> to vector<256x32xf32>
    %181 = arith.mulf %179, %180 : vector<256x32xf32>
    %182 = arith.addf %170, %181 : vector<256x32xf32>
    %183 = vector.extract_strided_slice %101 {offsets = [6, 0], sizes = [1, 32], strides = [1, 1]} : vector<9x32xf32> to vector<1x32xf32>
    %184 = vector.broadcast %177 : vector<256x1xf32> to vector<256x32xf32>
    %185 = vector.broadcast %183 : vector<1x32xf32> to vector<256x32xf32>
    %186 = arith.mulf %184, %185 : vector<256x32xf32>
    %187 = arith.addf %175, %186 : vector<256x32xf32>
    %c2_85 = arith.constant 2 : index
    %c1_86 = arith.constant 1 : index
    %c0_87 = arith.constant 0 : index
    %188 = vector.load %arg8[%c2_85, %c1_86, %c0_87] : memref<18x18x1xf32, #tpu.memory_space<vmem>>, vector<16x16x1xf32>
    %189 = vector.shape_cast %188 : vector<16x16x1xf32> to vector<256x1xf32>
    %190 = vector.extract_strided_slice %100 {offsets = [7, 0], sizes = [1, 32], strides = [1, 1]} : vector<9x32xf32> to vector<1x32xf32>
    %191 = vector.broadcast %189 : vector<256x1xf32> to vector<256x32xf32>
    %192 = vector.broadcast %190 : vector<1x32xf32> to vector<256x32xf32>
    %193 = arith.mulf %191, %192 : vector<256x32xf32>
    %194 = arith.addf %182, %193 : vector<256x32xf32>
    %195 = vector.extract_strided_slice %101 {offsets = [7, 0], sizes = [1, 32], strides = [1, 1]} : vector<9x32xf32> to vector<1x32xf32>
    %196 = vector.broadcast %189 : vector<256x1xf32> to vector<256x32xf32>
    %197 = vector.broadcast %195 : vector<1x32xf32> to vector<256x32xf32>
    %198 = arith.mulf %196, %197 : vector<256x32xf32>
    %199 = arith.addf %187, %198 : vector<256x32xf32>
    %c2_88 = arith.constant 2 : index
    %c2_89 = arith.constant 2 : index
    %c0_90 = arith.constant 0 : index
    %200 = vector.load %arg8[%c2_88, %c2_89, %c0_90] : memref<18x18x1xf32, #tpu.memory_space<vmem>>, vector<16x16x1xf32>
    %201 = vector.shape_cast %200 : vector<16x16x1xf32> to vector<256x1xf32>
    %202 = vector.extract_strided_slice %100 {offsets = [8, 0], sizes = [1, 32], strides = [1, 1]} : vector<9x32xf32> to vector<1x32xf32>
    %203 = vector.broadcast %201 : vector<256x1xf32> to vector<256x32xf32>
    %204 = vector.broadcast %202 : vector<1x32xf32> to vector<256x32xf32>
    %205 = arith.mulf %203, %204 : vector<256x32xf32>
    %206 = arith.addf %194, %205 : vector<256x32xf32>
    %207 = vector.extract_strided_slice %101 {offsets = [8, 0], sizes = [1, 32], strides = [1, 1]} : vector<9x32xf32> to vector<1x32xf32>
    %208 = vector.broadcast %201 : vector<256x1xf32> to vector<256x32xf32>
    %209 = vector.broadcast %207 : vector<1x32xf32> to vector<256x32xf32>
    %210 = arith.mulf %208, %209 : vector<256x32xf32>
    %211 = arith.addf %199, %210 : vector<256x32xf32>
    %212 = vector.broadcast %1 : vector<1x32xf32> to vector<256x32xf32>
    %213 = arith.addf %206, %212 : vector<256x32xf32>
    %cst_91 = arith.constant 0.000000e+00 : f32
    %214 = vector.broadcast %cst_91 : f32 to vector<256x32xf32>
    %215 = arith.maximumf %213, %214 : vector<256x32xf32>
    %216 = vector.broadcast %2 : vector<1x32xf32> to vector<256x32xf32>
    %217 = arith.addf %211, %216 : vector<256x32xf32>
    %cst_92 = arith.constant 0.000000e+00 : f32
    %218 = vector.broadcast %cst_92 : f32 to vector<256x32xf32>
    %219 = arith.maximumf %217, %218 : vector<256x32xf32>
    %220 = vector.shape_cast %219 : vector<256x32xf32> to vector<16x16x32xf32>
    %c1_93 = arith.constant 1 : index
    %c1_94 = arith.constant 1 : index
    %c0_95 = arith.constant 0 : index
    %221 = vector.load %arg9[%c1_93, %c1_94, %c0_95] : memref<18x18x32xf32, #tpu.memory_space<vmem>>, vector<16x16x32xf32>
    tpu.vector_store %arg9[%c1_93, %c1_94, %c0_95], %220 {strides = array<i32>} : memref<18x18x32xf32, #tpu.memory_space<vmem>>, vector<16x16x32xf32>,
    %cst_96 = arith.constant 0.000000e+00 : f32
    %222 = vector.broadcast %cst_96 : f32 to vector<256x32xf32>
    %c0_97 = arith.constant 0 : index
    %c0_98 = arith.constant 0 : index
    %c0_99 = arith.constant 0 : index
    %223 = vector.load %arg9[%c0_97, %c0_98, %c0_99] : memref<18x18x32xf32, #tpu.memory_space<vmem>>, vector<16x16x32xf32>
    %224 = vector.shape_cast %223 : vector<16x16x32xf32> to vector<256x32xf32>
    %c0_100 = arith.constant 0 : index
    %c0_101 = arith.constant 0 : index
    %c0_102 = arith.constant 0 : index
    %225 = vector.load %arg5[%c0_100, %c0_101, %c0_102] : memref<9x32x32xf32, #tpu.memory_space<vmem>>, vector<1x32x32xf32>
    %226 = vector.shape_cast %225 : vector<1x32x32xf32> to vector<32x32xf32>
    %cst_103 = arith.constant dense<0.000000e+00> : vector<256x32xf32>
    %227 = tpu.matmul %224, %226, %cst_103 {dimension_numbers = #tpu.dot_dimension_numbers<[1], [0], [0], [1], [0, 0, 1, 1], [], []>} : vector<256x32xf32>, vector<32x32xf32>, vector<256x32xf32> -> vector<256x32xf32>
    %228 = arith.addf %222, %227 : vector<256x32xf32>
    %c0_104 = arith.constant 0 : index
    %c1_105 = arith.constant 1 : index
    %c0_106 = arith.constant 0 : index
    %229 = vector.load %arg9[%c0_104, %c1_105, %c0_106] : memref<18x18x32xf32, #tpu.memory_space<vmem>>, vector<16x16x32xf32>
    %230 = vector.shape_cast %229 : vector<16x16x32xf32> to vector<256x32xf32>
    %c1_107 = arith.constant 1 : index
    %c0_108 = arith.constant 0 : index
    %c0_109 = arith.constant 0 : index
    %231 = vector.load %arg5[%c1_107, %c0_108, %c0_109] : memref<9x32x32xf32, #tpu.memory_space<vmem>>, vector<1x32x32xf32>
    %232 = vector.shape_cast %231 : vector<1x32x32xf32> to vector<32x32xf32>
    %cst_110 = arith.constant dense<0.000000e+00> : vector<256x32xf32>
    %233 = tpu.matmul %230, %232, %cst_110 {dimension_numbers = #tpu.dot_dimension_numbers<[1], [0], [0], [1], [0, 0, 1, 1], [], []>} : vector<256x32xf32>, vector<32x32xf32>, vector<256x32xf32> -> vector<256x32xf32>
    %234 = arith.addf %228, %233 : vector<256x32xf32>
    %c0_111 = arith.constant 0 : index
    %c2_112 = arith.constant 2 : index
    %c0_113 = arith.constant 0 : index
    %235 = vector.load %arg9[%c0_111, %c2_112, %c0_113] : memref<18x18x32xf32, #tpu.memory_space<vmem>>, vector<16x16x32xf32>
    %236 = vector.shape_cast %235 : vector<16x16x32xf32> to vector<256x32xf32>
    %c2_114 = arith.constant 2 : index
    %c0_115 = arith.constant 0 : index
    %c0_116 = arith.constant 0 : index
    %237 = vector.load %arg5[%c2_114, %c0_115, %c0_116] : memref<9x32x32xf32, #tpu.memory_space<vmem>>, vector<1x32x32xf32>
    %238 = vector.shape_cast %237 : vector<1x32x32xf32> to vector<32x32xf32>
    %cst_117 = arith.constant dense<0.000000e+00> : vector<256x32xf32>
    %239 = tpu.matmul %236, %238, %cst_117 {dimension_numbers = #tpu.dot_dimension_numbers<[1], [0], [0], [1], [0, 0, 1, 1], [], []>} : vector<256x32xf32>, vector<32x32xf32>, vector<256x32xf32> -> vector<256x32xf32>
    %240 = arith.addf %234, %239 : vector<256x32xf32>
    %c1_118 = arith.constant 1 : index
    %c0_119 = arith.constant 0 : index
    %c0_120 = arith.constant 0 : index
    %241 = vector.load %arg9[%c1_118, %c0_119, %c0_120] : memref<18x18x32xf32, #tpu.memory_space<vmem>>, vector<16x16x32xf32>
    %242 = vector.shape_cast %241 : vector<16x16x32xf32> to vector<256x32xf32>
    %c3 = arith.constant 3 : index
    %c0_121 = arith.constant 0 : index
    %c0_122 = arith.constant 0 : index
    %243 = vector.load %arg5[%c3, %c0_121, %c0_122] : memref<9x32x32xf32, #tpu.memory_space<vmem>>, vector<1x32x32xf32>
    %244 = vector.shape_cast %243 : vector<1x32x32xf32> to vector<32x32xf32>
    %cst_123 = arith.constant dense<0.000000e+00> : vector<256x32xf32>
    %245 = tpu.matmul %242, %244, %cst_123 {dimension_numbers = #tpu.dot_dimension_numbers<[1], [0], [0], [1], [0, 0, 1, 1], [], []>} : vector<256x32xf32>, vector<32x32xf32>, vector<256x32xf32> -> vector<256x32xf32>
    %246 = arith.addf %240, %245 : vector<256x32xf32>
    %c1_124 = arith.constant 1 : index
    %c1_125 = arith.constant 1 : index
    %c0_126 = arith.constant 0 : index
    %247 = vector.load %arg9[%c1_124, %c1_125, %c0_126] : memref<18x18x32xf32, #tpu.memory_space<vmem>>, vector<16x16x32xf32>
    %248 = vector.shape_cast %247 : vector<16x16x32xf32> to vector<256x32xf32>
    %c4 = arith.constant 4 : index
    %c0_127 = arith.constant 0 : index
    %c0_128 = arith.constant 0 : index
    %249 = vector.load %arg5[%c4, %c0_127, %c0_128] : memref<9x32x32xf32, #tpu.memory_space<vmem>>, vector<1x32x32xf32>
    %250 = vector.shape_cast %249 : vector<1x32x32xf32> to vector<32x32xf32>
    %cst_129 = arith.constant dense<0.000000e+00> : vector<256x32xf32>
    %251 = tpu.matmul %248, %250, %cst_129 {dimension_numbers = #tpu.dot_dimension_numbers<[1], [0], [0], [1], [0, 0, 1, 1], [], []>} : vector<256x32xf32>, vector<32x32xf32>, vector<256x32xf32> -> vector<256x32xf32>
    %252 = arith.addf %246, %251 : vector<256x32xf32>
    %c1_130 = arith.constant 1 : index
    %c2_131 = arith.constant 2 : index
    %c0_132 = arith.constant 0 : index
    %253 = vector.load %arg9[%c1_130, %c2_131, %c0_132] : memref<18x18x32xf32, #tpu.memory_space<vmem>>, vector<16x16x32xf32>
    %254 = vector.shape_cast %253 : vector<16x16x32xf32> to vector<256x32xf32>
    %c5 = arith.constant 5 : index
    %c0_133 = arith.constant 0 : index
    %c0_134 = arith.constant 0 : index
    %255 = vector.load %arg5[%c5, %c0_133, %c0_134] : memref<9x32x32xf32, #tpu.memory_space<vmem>>, vector<1x32x32xf32>
    %256 = vector.shape_cast %255 : vector<1x32x32xf32> to vector<32x32xf32>
    %cst_135 = arith.constant dense<0.000000e+00> : vector<256x32xf32>
    %257 = tpu.matmul %254, %256, %cst_135 {dimension_numbers = #tpu.dot_dimension_numbers<[1], [0], [0], [1], [0, 0, 1, 1], [], []>} : vector<256x32xf32>, vector<32x32xf32>, vector<256x32xf32> -> vector<256x32xf32>
    %258 = arith.addf %252, %257 : vector<256x32xf32>
    %c2_136 = arith.constant 2 : index
    %c0_137 = arith.constant 0 : index
    %c0_138 = arith.constant 0 : index
    %259 = vector.load %arg9[%c2_136, %c0_137, %c0_138] : memref<18x18x32xf32, #tpu.memory_space<vmem>>, vector<16x16x32xf32>
    %260 = vector.shape_cast %259 : vector<16x16x32xf32> to vector<256x32xf32>
    %c6 = arith.constant 6 : index
    %c0_139 = arith.constant 0 : index
    %c0_140 = arith.constant 0 : index
    %261 = vector.load %arg5[%c6, %c0_139, %c0_140] : memref<9x32x32xf32, #tpu.memory_space<vmem>>, vector<1x32x32xf32>
    %262 = vector.shape_cast %261 : vector<1x32x32xf32> to vector<32x32xf32>
    %cst_141 = arith.constant dense<0.000000e+00> : vector<256x32xf32>
    %263 = tpu.matmul %260, %262, %cst_141 {dimension_numbers = #tpu.dot_dimension_numbers<[1], [0], [0], [1], [0, 0, 1, 1], [], []>} : vector<256x32xf32>, vector<32x32xf32>, vector<256x32xf32> -> vector<256x32xf32>
    %264 = arith.addf %258, %263 : vector<256x32xf32>
    %c2_142 = arith.constant 2 : index
    %c1_143 = arith.constant 1 : index
    %c0_144 = arith.constant 0 : index
    %265 = vector.load %arg9[%c2_142, %c1_143, %c0_144] : memref<18x18x32xf32, #tpu.memory_space<vmem>>, vector<16x16x32xf32>
    %266 = vector.shape_cast %265 : vector<16x16x32xf32> to vector<256x32xf32>
    %c7 = arith.constant 7 : index
    %c0_145 = arith.constant 0 : index
    %c0_146 = arith.constant 0 : index
    %267 = vector.load %arg5[%c7, %c0_145, %c0_146] : memref<9x32x32xf32, #tpu.memory_space<vmem>>, vector<1x32x32xf32>
    %268 = vector.shape_cast %267 : vector<1x32x32xf32> to vector<32x32xf32>
    %cst_147 = arith.constant dense<0.000000e+00> : vector<256x32xf32>
    %269 = tpu.matmul %266, %268, %cst_147 {dimension_numbers = #tpu.dot_dimension_numbers<[1], [0], [0], [1], [0, 0, 1, 1], [], []>} : vector<256x32xf32>, vector<32x32xf32>, vector<256x32xf32> -> vector<256x32xf32>
    %270 = arith.addf %264, %269 : vector<256x32xf32>
    %c2_148 = arith.constant 2 : index
    %c2_149 = arith.constant 2 : index
    %c0_150 = arith.constant 0 : index
    %271 = vector.load %arg9[%c2_148, %c2_149, %c0_150] : memref<18x18x32xf32, #tpu.memory_space<vmem>>, vector<16x16x32xf32>
    %272 = vector.shape_cast %271 : vector<16x16x32xf32> to vector<256x32xf32>
    %c8 = arith.constant 8 : index
    %c0_151 = arith.constant 0 : index
    %c0_152 = arith.constant 0 : index
    %273 = vector.load %arg5[%c8, %c0_151, %c0_152] : memref<9x32x32xf32, #tpu.memory_space<vmem>>, vector<1x32x32xf32>
    %274 = vector.shape_cast %273 : vector<1x32x32xf32> to vector<32x32xf32>
    %cst_153 = arith.constant dense<0.000000e+00> : vector<256x32xf32>
    %275 = tpu.matmul %272, %274, %cst_153 {dimension_numbers = #tpu.dot_dimension_numbers<[1], [0], [0], [1], [0, 0, 1, 1], [], []>} : vector<256x32xf32>, vector<32x32xf32>, vector<256x32xf32> -> vector<256x32xf32>
    %276 = arith.addf %270, %275 : vector<256x32xf32>
    %277 = vector.broadcast %3 : vector<1x32xf32> to vector<256x32xf32>
    %278 = arith.addf %276, %277 : vector<256x32xf32>
    %cst_154 = arith.constant 0.000000e+00 : f32
    %279 = vector.broadcast %cst_154 : f32 to vector<256x32xf32>
    %280 = arith.maximumf %278, %279 : vector<256x32xf32>
    %281 = tpu.iota {dimensions = array<i32: 0>} : vector<64x256xi32>
    %282 = tpu.iota {dimensions = array<i32: 1>} : vector<64x256xi32>
    %c3_i32 = arith.constant 3 : i32
    %283 = vector.broadcast %c3_i32 : i32 to vector<64x256xi32>
    %284 = arith.shrsi %281, %283 : vector<64x256xi32>
    %c32_i32 = arith.constant 32 : i32
    %285 = vector.broadcast %c32_i32 : i32 to vector<64x256xi32>
    %286 = arith.muli %284, %285 : vector<64x256xi32>
    %c7_i32 = arith.constant 7 : i32
    %287 = vector.broadcast %c7_i32 : i32 to vector<64x256xi32>
    %288 = arith.andi %281, %287 : vector<64x256xi32>
    %c2_i32 = arith.constant 2 : i32
    %289 = vector.broadcast %c2_i32 : i32 to vector<64x256xi32>
    %290 = arith.muli %288, %289 : vector<64x256xi32>
    %291 = arith.addi %286, %290 : vector<64x256xi32>
    %c0_i32 = arith.constant 0 : i32
    %292 = vector.broadcast %c0_i32 : i32 to vector<64x256xi32>
    %293 = arith.addi %291, %292 : vector<64x256xi32>
    %294 = arith.cmpi eq, %282, %293 : vector<64x256xi32>
    %295 = arith.extui %294 : vector<64x256xi1> to vector<64x256xi32>
    %296 = arith.sitofp %295 : vector<64x256xi32> to vector<64x256xf32>
    %cst_155 = arith.constant dense<0.000000e+00> : vector<64x32xf32>
    %297 = tpu.matmul %296, %215, %cst_155 {dimension_numbers = #tpu.dot_dimension_numbers<[1], [0], [0], [1], [0, 0, 1, 1], [], []>} : vector<64x256xf32>, vector<256x32xf32>, vector<64x32xf32> -> vector<64x32xf32>
    %c1_i32 = arith.constant 1 : i32
    %298 = vector.broadcast %c1_i32 : i32 to vector<64x256xi32>
    %299 = arith.addi %291, %298 : vector<64x256xi32>
    %300 = arith.cmpi eq, %282, %299 : vector<64x256xi32>
    %301 = arith.extui %300 : vector<64x256xi1> to vector<64x256xi32>
    %302 = arith.sitofp %301 : vector<64x256xi32> to vector<64x256xf32>
    %cst_156 = arith.constant dense<0.000000e+00> : vector<64x32xf32>
    %303 = tpu.matmul %302, %215, %cst_156 {dimension_numbers = #tpu.dot_dimension_numbers<[1], [0], [0], [1], [0, 0, 1, 1], [], []>} : vector<64x256xf32>, vector<256x32xf32>, vector<64x32xf32> -> vector<64x32xf32>
    %304 = arith.maximumf %297, %303 : vector<64x32xf32>
    %c16_i32 = arith.constant 16 : i32
    %305 = vector.broadcast %c16_i32 : i32 to vector<64x256xi32>
    %306 = arith.addi %291, %305 : vector<64x256xi32>
    %307 = arith.cmpi eq, %282, %306 : vector<64x256xi32>
    %308 = arith.extui %307 : vector<64x256xi1> to vector<64x256xi32>
    %309 = arith.sitofp %308 : vector<64x256xi32> to vector<64x256xf32>
    %cst_157 = arith.constant dense<0.000000e+00> : vector<64x32xf32>
    %310 = tpu.matmul %309, %215, %cst_157 {dimension_numbers = #tpu.dot_dimension_numbers<[1], [0], [0], [1], [0, 0, 1, 1], [], []>} : vector<64x256xf32>, vector<256x32xf32>, vector<64x32xf32> -> vector<64x32xf32>
    %311 = arith.maximumf %304, %310 : vector<64x32xf32>
    %c17_i32 = arith.constant 17 : i32
    %312 = vector.broadcast %c17_i32 : i32 to vector<64x256xi32>
    %313 = arith.addi %291, %312 : vector<64x256xi32>
    %314 = arith.cmpi eq, %282, %313 : vector<64x256xi32>
    %315 = arith.extui %314 : vector<64x256xi1> to vector<64x256xi32>
    %316 = arith.sitofp %315 : vector<64x256xi32> to vector<64x256xf32>
    %cst_158 = arith.constant dense<0.000000e+00> : vector<64x32xf32>
    %317 = tpu.matmul %316, %215, %cst_158 {dimension_numbers = #tpu.dot_dimension_numbers<[1], [0], [0], [1], [0, 0, 1, 1], [], []>} : vector<64x256xf32>, vector<256x32xf32>, vector<64x32xf32> -> vector<64x32xf32>
    %318 = arith.maximumf %311, %317 : vector<64x32xf32>
    %cst_159 = arith.constant dense<0.000000e+00> : vector<64xf32>
    %319 = vector.multi_reduction <add>, %318, %cst_159 [1] : vector<64x32xf32> to vector<64xf32>
    %320 = vector.shape_cast %319 : vector<64xf32> to vector<64x1xf32>
    %cst_160 = arith.constant 3.200000e+01 : f32
    %321 = vector.broadcast %cst_160 : f32 to vector<64x1xf32>
    %322 = arith.divf %320, %321 : vector<64x1xf32>
    %323 = vector.broadcast %322 : vector<64x1xf32> to vector<64x32xf32>
    %324 = arith.subf %318, %323 : vector<64x32xf32>
    %325 = vector.broadcast %322 : vector<64x1xf32> to vector<64x32xf32>
    %326 = arith.subf %318, %325 : vector<64x32xf32>
    %327 = arith.mulf %324, %326 : vector<64x32xf32>
    %cst_161 = arith.constant dense<0.000000e+00> : vector<64xf32>
    %328 = vector.multi_reduction <add>, %327, %cst_161 [1] : vector<64x32xf32> to vector<64xf32>
    %329 = vector.shape_cast %328 : vector<64xf32> to vector<64x1xf32>
    %cst_162 = arith.constant 3.200000e+01 : f32
    %330 = vector.broadcast %cst_162 : f32 to vector<64x1xf32>
    %331 = arith.divf %329, %330 : vector<64x1xf32>
    %332 = vector.broadcast %322 : vector<64x1xf32> to vector<64x32xf32>
    %333 = arith.subf %318, %332 : vector<64x32xf32>
    %cst_163 = arith.constant 9.99999974E-6 : f32
    %334 = vector.broadcast %cst_163 : f32 to vector<64x1xf32>
    %335 = arith.addf %331, %334 : vector<64x1xf32>
    %336 = math.rsqrt %335 : vector<64x1xf32>
    %337 = vector.broadcast %336 : vector<64x1xf32> to vector<64x32xf32>
    %338 = arith.mulf %333, %337 : vector<64x32xf32>
    %339 = vector.broadcast %4 : vector<1x32xf32> to vector<64x32xf32>
    %340 = arith.mulf %338, %339 : vector<64x32xf32>
    %341 = vector.broadcast %5 : vector<1x32xf32> to vector<64x32xf32>
    %342 = arith.addf %340, %341 : vector<64x32xf32>
    %c0_164 = arith.constant 0 : index
    %c0_165 = arith.constant 0 : index
    %c0_166 = arith.constant 0 : index
    %343 = vector.load %arg7[%c0_164, %c0_165, %c0_166] : memref<1x128x32xf32, #tpu.memory_space<vmem>>, vector<1x64x32xf32>
    %344 = vector.shape_cast %343 : vector<1x64x32xf32> to vector<64x32xf32>
    %345 = vector.shape_cast %342 : vector<64x32xf32> to vector<1x64x32xf32>
    tpu.vector_store %arg7[%c0_164, %c0_165, %c0_166], %345 {strides = array<i32>} : memref<1x128x32xf32, #tpu.memory_space<vmem>>, vector<1x64x32xf32>,
    %c0_i32_167 = arith.constant 0 : i32
    %346 = vector.broadcast %c0_i32_167 : i32 to vector<64x256xi32>
    %347 = arith.addi %291, %346 : vector<64x256xi32>
    %348 = arith.cmpi eq, %282, %347 : vector<64x256xi32>
    %349 = arith.extui %348 : vector<64x256xi1> to vector<64x256xi32>
    %350 = arith.sitofp %349 : vector<64x256xi32> to vector<64x256xf32>
    %cst_168 = arith.constant dense<0.000000e+00> : vector<64x32xf32>
    %351 = tpu.matmul %350, %280, %cst_168 {dimension_numbers = #tpu.dot_dimension_numbers<[1], [0], [0], [1], [0, 0, 1, 1], [], []>} : vector<64x256xf32>, vector<256x32xf32>, vector<64x32xf32> -> vector<64x32xf32>
    %c1_i32_169 = arith.constant 1 : i32
    %352 = vector.broadcast %c1_i32_169 : i32 to vector<64x256xi32>
    %353 = arith.addi %291, %352 : vector<64x256xi32>
    %354 = arith.cmpi eq, %282, %353 : vector<64x256xi32>
    %355 = arith.extui %354 : vector<64x256xi1> to vector<64x256xi32>
    %356 = arith.sitofp %355 : vector<64x256xi32> to vector<64x256xf32>
    %cst_170 = arith.constant dense<0.000000e+00> : vector<64x32xf32>
    %357 = tpu.matmul %356, %280, %cst_170 {dimension_numbers = #tpu.dot_dimension_numbers<[1], [0], [0], [1], [0, 0, 1, 1], [], []>} : vector<64x256xf32>, vector<256x32xf32>, vector<64x32xf32> -> vector<64x32xf32>
    %358 = arith.maximumf %351, %357 : vector<64x32xf32>
    %c16_i32_171 = arith.constant 16 : i32
    %359 = vector.broadcast %c16_i32_171 : i32 to vector<64x256xi32>
    %360 = arith.addi %291, %359 : vector<64x256xi32>
    %361 = arith.cmpi eq, %282, %360 : vector<64x256xi32>
    %362 = arith.extui %361 : vector<64x256xi1> to vector<64x256xi32>
    %363 = arith.sitofp %362 : vector<64x256xi32> to vector<64x256xf32>
    %cst_172 = arith.constant dense<0.000000e+00> : vector<64x32xf32>
    %364 = tpu.matmul %363, %280, %cst_172 {dimension_numbers = #tpu.dot_dimension_numbers<[1], [0], [0], [1], [0, 0, 1, 1], [], []>} : vector<64x256xf32>, vector<256x32xf32>, vector<64x32xf32> -> vector<64x32xf32>
    %365 = arith.maximumf %358, %364 : vector<64x32xf32>
    %c17_i32_173 = arith.constant 17 : i32
    %366 = vector.broadcast %c17_i32_173 : i32 to vector<64x256xi32>
    %367 = arith.addi %291, %366 : vector<64x256xi32>
    %368 = arith.cmpi eq, %282, %367 : vector<64x256xi32>
    %369 = arith.extui %368 : vector<64x256xi1> to vector<64x256xi32>
    %370 = arith.sitofp %369 : vector<64x256xi32> to vector<64x256xf32>
    %cst_174 = arith.constant dense<0.000000e+00> : vector<64x32xf32>
    %371 = tpu.matmul %370, %280, %cst_174 {dimension_numbers = #tpu.dot_dimension_numbers<[1], [0], [0], [1], [0, 0, 1, 1], [], []>} : vector<64x256xf32>, vector<256x32xf32>, vector<64x32xf32> -> vector<64x32xf32>
    %372 = arith.maximumf %365, %371 : vector<64x32xf32>
    %cst_175 = arith.constant dense<0.000000e+00> : vector<64xf32>
    %373 = vector.multi_reduction <add>, %372, %cst_175 [1] : vector<64x32xf32> to vector<64xf32>
    %374 = vector.shape_cast %373 : vector<64xf32> to vector<64x1xf32>
    %cst_176 = arith.constant 3.200000e+01 : f32
    %375 = vector.broadcast %cst_176 : f32 to vector<64x1xf32>
    %376 = arith.divf %374, %375 : vector<64x1xf32>
    %377 = vector.broadcast %376 : vector<64x1xf32> to vector<64x32xf32>
    %378 = arith.subf %372, %377 : vector<64x32xf32>
    %379 = vector.broadcast %376 : vector<64x1xf32> to vector<64x32xf32>
    %380 = arith.subf %372, %379 : vector<64x32xf32>
    %381 = arith.mulf %378, %380 : vector<64x32xf32>
    %cst_177 = arith.constant dense<0.000000e+00> : vector<64xf32>
    %382 = vector.multi_reduction <add>, %381, %cst_177 [1] : vector<64x32xf32> to vector<64xf32>
    %383 = vector.shape_cast %382 : vector<64xf32> to vector<64x1xf32>
    %cst_178 = arith.constant 3.200000e+01 : f32
    %384 = vector.broadcast %cst_178 : f32 to vector<64x1xf32>
    %385 = arith.divf %383, %384 : vector<64x1xf32>
    %386 = vector.broadcast %376 : vector<64x1xf32> to vector<64x32xf32>
    %387 = arith.subf %372, %386 : vector<64x32xf32>
    %cst_179 = arith.constant 9.99999974E-6 : f32
    %388 = vector.broadcast %cst_179 : f32 to vector<64x1xf32>
    %389 = arith.addf %385, %388 : vector<64x1xf32>
    %390 = math.rsqrt %389 : vector<64x1xf32>
    %391 = vector.broadcast %390 : vector<64x1xf32> to vector<64x32xf32>
    %392 = arith.mulf %387, %391 : vector<64x32xf32>
    %393 = vector.broadcast %4 : vector<1x32xf32> to vector<64x32xf32>
    %394 = arith.mulf %392, %393 : vector<64x32xf32>
    %395 = vector.broadcast %5 : vector<1x32xf32> to vector<64x32xf32>
    %396 = arith.addf %394, %395 : vector<64x32xf32>
    %c0_180 = arith.constant 0 : index
    %c64 = arith.constant 64 : index
    %c0_181 = arith.constant 0 : index
    %397 = vector.load %arg7[%c0_180, %c64, %c0_181] : memref<1x128x32xf32, #tpu.memory_space<vmem>>, vector<1x64x32xf32>
    %398 = vector.shape_cast %397 : vector<1x64x32xf32> to vector<64x32xf32>
    %399 = vector.shape_cast %396 : vector<64x32xf32> to vector<1x64x32xf32>
    tpu.vector_store %arg7[%c0_180, %c64, %c0_181], %399 {strides = array<i32>} : memref<1x128x32xf32, #tpu.memory_space<vmem>>, vector<1x64x32xf32>,
    return
  }
  func.func @transform_0(%arg0: i32) -> (i32, i32, i32, i32) {
    %c0_i32 = arith.constant 0 : i32
    %c0_i32_0 = arith.constant 0 : i32
    %c0_i32_1 = arith.constant 0 : i32
    %c0_i32_2 = arith.constant 0 : i32
    return %arg0, %c0_i32, %c0_i32_0, %c0_i32_1 : i32, i32, i32, i32
  }
  func.func @transform_1(%arg0: i32) -> (i32, i32) {
    %c0_i32 = arith.constant 0 : i32
    %c0_i32_0 = arith.constant 0 : i32
    %c0_i32_1 = arith.constant 0 : i32
    return %c0_i32, %c0_i32_0 : i32, i32
  }
  func.func @transform_2(%arg0: i32) -> (i32, i32) {
    %c0_i32 = arith.constant 0 : i32
    %c0_i32_0 = arith.constant 0 : i32
    %c0_i32_1 = arith.constant 0 : i32
    return %c0_i32, %c0_i32_0 : i32, i32
  }
  func.func @transform_3(%arg0: i32) -> (i32, i32) {
    %c0_i32 = arith.constant 0 : i32
    %c0_i32_0 = arith.constant 0 : i32
    %c0_i32_1 = arith.constant 0 : i32
    return %c0_i32, %c0_i32_0 : i32, i32
  }
  func.func @transform_4(%arg0: i32) -> (i32, i32, i32) {
    %c0_i32 = arith.constant 0 : i32
    %c0_i32_0 = arith.constant 0 : i32
    %c0_i32_1 = arith.constant 0 : i32
    %c0_i32_2 = arith.constant 0 : i32
    return %c0_i32, %c0_i32_0, %c0_i32_1 : i32, i32, i32
  }
  func.func @transform_5(%arg0: i32) -> (i32, i32) {
    %c0_i32 = arith.constant 0 : i32
    %c0_i32_0 = arith.constant 0 : i32
    %c0_i32_1 = arith.constant 0 : i32
    return %c0_i32, %c0_i32_0 : i32, i32
  }
  func.func @transform_6(%arg0: i32) -> (i32, i32, i32) {
    %c0_i32 = arith.constant 0 : i32
    %c0_i32_0 = arith.constant 0 : i32
    %c0_i32_1 = arith.constant 0 : i32
    return %arg0, %c0_i32, %c0_i32_0 : i32, i32, i32
  }
}

</mosaic_0001>

<llo_original>
// kernel: multires_block_15.1
$region0: #{multires_block_15.1}
  #allocation0 [shape = 'u32[]', space=smem, size = 0x4, offset = 0x4, fixed_abs, tag = 'smem constant byte address 0x4 - core index']
  #allocation1 [shape = 'u32[144,128]{1,0:T(1,128)}', space=vmem, size = 0x12000, scoped, tag = 'internal scratch']
  #allocation2 [shape = 'f32[18,18,1]{2,1,0:T(8,128)}', space=vmem, size = 0x36000, scoped, tag = 'scratch operand']
  #allocation3 [shape = 'f32[18,18,32]{2,1,0:T(8,128)}', space=vmem, size = 0x36000, scoped, tag = 'scratch operand']
  %s0 = inlined_call_operand.vmem [shape: f32[2,18,18,4], index: 0, kind: input, shape index: {}]
  %s1 = inlined_call_operand.vmem [shape: f32[9,4], index: 1, kind: input, shape index: {}]
  %s2 = inlined_call_operand.vmem [shape: f32[9,32], index: 2, kind: input, shape index: {}]
  %s3 = inlined_call_operand.vmem [shape: f32[9,32], index: 3, kind: input, shape index: {}]
  %s4 = inlined_call_operand.vmem [shape: f32[9,32,32], index: 4, kind: input, shape index: {}]
  %s5 = inlined_call_operand.vmem [shape: f32[6,32], index: 5, kind: input, shape index: {}]
  %s6 = inlined_call_operand.vmem [shape: f32[2,128,32], index: 6, kind: output, shape index: {}]
  %s7 = sld [smem:[#allocation0]]
  $region57: #{multires_block_15.1} parent=0
    _
  %s9 = ssub.s32 1, %s7
  %s10 = scalar_select 0, %s9, %s7
  loop: start=0, step=1, limit=4
  $region2: #{multires_block_15.1} parent=0 // loop_pre_header
    _
  $region3: #{multires_block_15.1} parent=0 // loop_header
    %s12 = sphi 0, %s16
    %p13 = scmp.ge.s32.totalorder %s12, 4
    %s22 = sphi 0, %s24
    %s25 = sphi 0, %s22
    %s26 = sphi 0, %s25
    %s42 = sphi 0, %s26
    %s46 = sphi 0, %s46
    %s48 = sphi 0, %s46
    %s49 = sphi 0, %s48
    %s63 = sphi 0, %s49
    %s67 = sphi 0, %s67
    %s69 = sphi 0, %s67
    %s70 = sphi 0, %s69
    %s84 = sphi 0, %s70
    %s88 = sphi 0, %s88
    %s90 = sphi 0, %s88
    %s91 = sphi 0, %s90
    %s105 = sphi 0, %s91
    %s109 = sphi 0, %s109
    %s111 = sphi 0, %s109
    %s112 = sphi 0, %s111
    %s126 = sphi 0, %s112
    %s130 = sphi 0, %s130
    %s132 = sphi 0, %s130
    %s133 = sphi 0, %s132
    %s147 = sphi 0, %s133
    %s153 = sphi 0, %s155
    %s156 = sphi 0, %s153
    %s157 = sphi 0, %s156
    %s173 = sphi 0, %s157
  $region4: #{multires_block_15.1} parent=0 // loop_header_branch
    %15 = sbr.rel (%p13) target = $region8
  $region5: #{multires_block_15.1} parent=0 // loop_body
    %s17 = ssub.s32 %s12, 1
    %s18 = ssub.s32 %s12, 2
    %s19 = sadd.s32 %s12, 1
    %s20 = ssub.s32 %s12, %s19
    %p21 = scmp.eq.s32.totalorder %s20, 0
    %s23 = sadd.s32 %s22, 1
    %s24 = scalar_select %p21, %s22, %s23
    %p27 = pneg %p21
    %p28 = scmp.eq.s32.totalorder %s12, 1
    %p29 = por %p27, %p28
    %p30 = scmp.ne.s32.totalorder %s22, %s25
    %p31 = scmp.eq.s32.totalorder %s12, 0
    %p32 = por %p30, %p31
    %p33 = scmp.ne.s32.totalorder %s22, %s25
    %p34 = scmp.eq.s32.totalorder %s17, 1
    %p35 = por %p33, %p34
    %p36 = scmp.ne.s32.totalorder %s25, %s26
    %p37 = scmp.eq.s32.totalorder %s17, 0
    %p38 = por %p36, %p37
    %p39 = scmp.ne.s32.totalorder %s25, %s26
    %p40 = scmp.eq.s32.totalorder %s18, 1
    %p41 = por %p39, %p40
    %p43 = scmp.ne.s32.totalorder %s26, %s42
    %p44 = scmp.eq.s32.totalorder %s18, 0
    %p45 = por %p43, %p44
    %s47 = sadd.s32 %s46, 1
    %p50 = scmp.eq.s32.totalorder %s12, 1
    %p51 = scmp.ne.s32.totalorder %s46, %s48
    %p52 = scmp.eq.s32.totalorder %s12, 0
    %p53 = por %p51, %p52
    %p54 = scmp.ne.s32.totalorder %s46, %s48
    %p55 = scmp.eq.s32.totalorder %s17, 1
    %p56 = por %p54, %p55
    %p57 = scmp.ne.s32.totalorder %s48, %s49
    %p58 = scmp.eq.s32.totalorder %s17, 0
    %p59 = por %p57, %p58
    %p60 = scmp.ne.s32.totalorder %s48, %s49
    %p61 = scmp.eq.s32.totalorder %s18, 1
    %p62 = por %p60, %p61
    %p64 = scmp.ne.s32.totalorder %s49, %s63
    %p65 = scmp.eq.s32.totalorder %s18, 0
    %p66 = por %p64, %p65
    %s68 = sadd.s32 %s67, 1
    %p71 = scmp.eq.s32.totalorder %s12, 1
    %p72 = scmp.ne.s32.totalorder %s67, %s69
    %p73 = scmp.eq.s32.totalorder %s12, 0
    %p74 = por %p72, %p73
    %p75 = scmp.ne.s32.totalorder %s67, %s69
    %p76 = scmp.eq.s32.totalorder %s17, 1
    %p77 = por %p75, %p76
    %p78 = scmp.ne.s32.totalorder %s69, %s70
    %p79 = scmp.eq.s32.totalorder %s17, 0
    %p80 = por %p78, %p79
    %p81 = scmp.ne.s32.totalorder %s69, %s70
    %p82 = scmp.eq.s32.totalorder %s18, 1
    %p83 = por %p81, %p82
    %p85 = scmp.ne.s32.totalorder %s70, %s84
    %p86 = scmp.eq.s32.totalorder %s18, 0
    %p87 = por %p85, %p86
    %s89 = sadd.s32 %s88, 1
    %p92 = scmp.eq.s32.totalorder %s12, 1
    %p93 = scmp.ne.s32.totalorder %s88, %s90
    %p94 = scmp.eq.s32.totalorder %s12, 0
    %p95 = por %p93, %p94
    %p96 = scmp.ne.s32.totalorder %s88, %s90
    %p97 = scmp.eq.s32.totalorder %s17, 1
    %p98 = por %p96, %p97
    %p99 = scmp.ne.s32.totalorder %s90, %s91
    %p100 = scmp.eq.s32.totalorder %s17, 0
    %p101 = por %p99, %p100
    %p102 = scmp.ne.s32.totalorder %s90, %s91
    %p103 = scmp.eq.s32.totalorder %s18, 1
    %p104 = por %p102, %p103
    %p106 = scmp.ne.s32.totalorder %s91, %s105
    %p107 = scmp.eq.s32.totalorder %s18, 0
    %p108 = por %p106, %p107
    %s110 = sadd.s32 %s109, 1
    %p113 = scmp.eq.s32.totalorder %s12, 1
    %p114 = scmp.ne.s32.totalorder %s109, %s111
    %p115 = scmp.eq.s32.totalorder %s12, 0
    %p116 = por %p114, %p115
    %p117 = scmp.ne.s32.totalorder %s109, %s111
    %p118 = scmp.eq.s32.totalorder %s17, 1
    %p119 = por %p117, %p118
    %p120 = scmp.ne.s32.totalorder %s111, %s112
    %p121 = scmp.eq.s32.totalorder %s17, 0
    %p122 = por %p120, %p121
    %p123 = scmp.ne.s32.totalorder %s111, %s112
    %p124 = scmp.eq.s32.totalorder %s18, 1
    %p125 = por %p123, %p124
    %p127 = scmp.ne.s32.totalorder %s112, %s126
    %p128 = scmp.eq.s32.totalorder %s18, 0
    %p129 = por %p127, %p128
    %s131 = sadd.s32 %s130, 1
    %p134 = scmp.eq.s32.totalorder %s12, 1
    %p135 = scmp.ne.s32.totalorder %s130, %s132
    %p136 = scmp.eq.s32.totalorder %s12, 0
    %p137 = por %p135, %p136
    %p138 = scmp.ne.s32.totalorder %s130, %s132
    %p139 = scmp.eq.s32.totalorder %s17, 1
    %p140 = por %p138, %p139
    %p141 = scmp.ne.s32.totalorder %s132, %s133
    %p142 = scmp.eq.s32.totalorder %s17, 0
    %p143 = por %p141, %p142
    %p144 = scmp.ne.s32.totalorder %s132, %s133
    %p145 = scmp.eq.s32.totalorder %s18, 1
    %p146 = por %p144, %p145
    %p148 = scmp.ne.s32.totalorder %s133, %s147
    %p149 = scmp.eq.s32.totalorder %s18, 0
    %p150 = por %p148, %p149
    %s151 = ssub.s32 %s12, %s19
    %p152 = scmp.eq.s32.totalorder %s151, 0
    %s154 = sadd.s32 %s153, 1
    %s155 = scalar_select %p152, %s153, %s154
    %p158 = pneg %p152
    %p159 = scmp.eq.s32.totalorder %s12, 1
    %p160 = por %p158, %p159
    %p161 = scmp.ne.s32.totalorder %s153, %s156
    %p162 = scmp.eq.s32.totalorder %s12, 0
    %p163 = por %p161, %p162
    %p164 = scmp.ne.s32.totalorder %s153, %s156
    %p165 = scmp.eq.s32.totalorder %s17, 1
    %p166 = por %p164, %p165
    %p167 = scmp.ne.s32.totalorder %s156, %s157
    %p168 = scmp.eq.s32.totalorder %s17, 0
    %p169 = por %p167, %p168
    %p170 = scmp.ne.s32.totalorder %s156, %s157
    %p171 = scmp.eq.s32.totalorder %s18, 1
    %p172 = por %p170, %p171
    %p174 = scmp.ne.s32.totalorder %s157, %s173
    %p175 = scmp.eq.s32.totalorder %s18, 0
    %p176 = por %p174, %p175
    %p177 = scmp.le.s32.totalorder 1, %s12
    %p178 = scmp.lt.s32.totalorder %s12, 3
    %p179 = pnand %p177, %p178
    %p180 = pneg %p179
    // Predicated region
    $region9: #{multires_block_15.1} parent=5 // pred_check
      _
    $region10: #{multires_block_15.1} parent=5 // pred_check_branch
      %182 = sbr.rel (%p179) target = $region12
    $region11: #{multires_block_15.1} parent=5 // pred_region
      %s183 = ssub.s32 %s12, 1
      // Predicated region
      $region13: #{multires_block_15.1} parent=11 // pred_check
        %p184 = pneg %p59
      $region14: #{multires_block_15.1} parent=11 // pred_check_branch
        %186 = sbr.rel (%p184) target = $region16
      $region15: #{multires_block_15.1} parent=11 // pred_region
        _
      $region16: #{multires_block_15.1} parent=11 // pred_fallthru
        _
      // Predicated region
      $region17: #{multires_block_15.1} parent=11 // pred_check
        %p187 = pneg %p80
      $region18: #{multires_block_15.1} parent=11 // pred_check_branch
        %189 = sbr.rel (%p187) target = $region20
      $region19: #{multires_block_15.1} parent=11 // pred_region
        _
      $region20: #{multires_block_15.1} parent=11 // pred_fallthru
        _
      // Predicated region
      $region21: #{multires_block_15.1} parent=11 // pred_check
        %p190 = pneg %p101
      $region22: #{multires_block_15.1} parent=11 // pred_check_branch
        %192 = sbr.rel (%p190) target = $region24
      $region23: #{multires_block_15.1} parent=11 // pred_region
        _
      $region24: #{multires_block_15.1} parent=11 // pred_fallthru
        _
      // Predicated region
      $region25: #{multires_block_15.1} parent=11 // pred_check
        %p193 = pneg %p122
      $region26: #{multires_block_15.1} parent=11 // pred_check_branch
        %195 = sbr.rel (%p193) target = $region28
      $region27: #{multires_block_15.1} parent=11 // pred_region
        _
      $region28: #{multires_block_15.1} parent=11 // pred_fallthru
        _
      // Predicated region
      $region29: #{multires_block_15.1} parent=11 // pred_check
        %p196 = pneg %p143
      $region30: #{multires_block_15.1} parent=11 // pred_check_branch
        %198 = sbr.rel (%p196) target = $region32
      $region31: #{multires_block_15.1} parent=11 // pred_region
        _
      $region32: #{multires_block_15.1} parent=11 // pred_fallthru
        _
    $region12: #{multires_block_15.1} parent=5 // pred_fallthru
      _
    %p199 = scmp.lt.s32.totalorder %s12, 2
    // Predicated region
    $region33: #{multires_block_15.1} parent=5 // pred_check
      %p200 = pneg %p199
    $region34: #{multires_block_15.1} parent=5 // pred_check_branch
      %202 = sbr.rel (%p200) target = $region36
    $region35: #{multires_block_15.1} parent=5 // pred_region
      // Predicated region
      $region37: #{multires_block_15.1} parent=35 // pred_check
        %p203 = pneg %p32
      $region38: #{multires_block_15.1} parent=35 // pred_check_branch
        %205 = sbr.rel (%p203) target = $region40
      $region39: #{multires_block_15.1} parent=35 // pred_region
        %p206 = scmp.lt.s32.totalorder %s12, 1
        %s207 = scalar_select %p206, %s12, 1
        %s208 = smul.addr %s207, 54
        %s209 = smul.addr %s208, 8
        %s210 = scalar_lea.vmem %s0, %s209
      $region40: #{multires_block_15.1} parent=35 // pred_fallthru
        _
    $region36: #{multires_block_15.1} parent=5 // pred_fallthru
      _
    %p211 = scmp.le.s32.totalorder 1, %s12
    %p212 = scmp.lt.s32.totalorder %s12, 3
    %p213 = pnand %p211, %p212
    %p214 = pneg %p213
    // Predicated region
    $region41: #{multires_block_15.1} parent=5 // pred_check
      _
    $region42: #{multires_block_15.1} parent=5 // pred_check_branch
      %216 = sbr.rel (%p213) target = $region44
    $region43: #{multires_block_15.1} parent=5 // pred_region
      %s217 = ssub.s32 %s12, 1
      %p218 = scmp.lt.s32.totalorder %s17, 1
      %s219 = scalar_select %p218, %s17, 1
      %s220 = smul.addr %s219, 54
      %s221 = smul.addr %s220, 8
      %s222 = scalar_lea.vmem %s0, %s221
      %p223 = pneg %p38
      %p224 = pneg %p35
      %p225 = pneg %p59
      %p226 = pneg %p56
      %p227 = pneg %p80
      %p228 = pneg %p77
      %p229 = pneg %p101
      %p230 = pneg %p98
      %p231 = pneg %p122
      %p232 = pneg %p119
      %p233 = pneg %p143
      %p234 = pneg %p140
      %p235 = pneg %p169
      %p236 = pneg %p166
      %p237 = scmp.lt.s32.totalorder %s17, 1
      %s238 = scalar_select %p237, %s17, 1
      %s239 = smul.addr %s238, 16
      %s240 = smul.addr %s239, 8
      %s241 = scalar_lea.vmem %s6, %s240
      %p242 = scmp.lt.s32.totalorder %s17, 1
      %s243 = scalar_select %p242, %s17, 1
      %s244 = smul.addr %s243, 54
      %s245 = smul.addr %s244, 8
      %s246 = scalar_lea.vmem %s0, %s245
      %p247 = scmp.lt.s32.totalorder %s17, 1
      %s248 = scalar_select %p247, %s17, 1
      %s249 = smul.addr %s248, 16
      %s250 = smul.addr %s249, 8
      %s251 = scalar_lea.vmem %s6, %s250
      %v252 = vld [vmem:[%s5] sm:$0x3f]
      %vm253 = vcmask 7168
      %254 = vst.msk [vmem:[#allocation2] sm:$0xff] %vm253, 0.0
      %255 = vst.msk [vmem:[#allocation2 + $0x8] sm:$0xff] %vm253, 0.0
      %vm256 = vcmask 1024
      %257 = vst.msk [vmem:[#allocation2 + $0x10] sm:$0x3] %vm256, 0.0
      %258 = vst.msk [vmem:[#allocation2 + $0x18] sm:$0xff] %vm253, 0.0
      %259 = vst.msk [vmem:[#allocation2 + $0x20] sm:$0xff] %vm253, 0.0
      %260 = vst.msk [vmem:[#allocation2 + $0x28] sm:$0x3] %vm256, 0.0
      %261 = vst.msk [vmem:[#allocation2 + $0x30] sm:$0xff] %vm253, 0.0
      %262 = vst.msk [vmem:[#allocation2 + $0x38] sm:$0xff] %vm253, 0.0
      %263 = vst.msk [vmem:[#allocation2 + $0x40] sm:$0x3] %vm256, 0.0
      %264 = vst.msk [vmem:[#allocation2 + $0x48] sm:$0xff] %vm253, 0.0
      %265 = vst.msk [vmem:[#allocation2 + $0x50] sm:$0xff] %vm253, 0.0
      %266 = vst.msk [vmem:[#allocation2 + $0x58] sm:$0x3] %vm256, 0.0
      %267 = vst.msk [vmem:[#allocation2 + $0x60] sm:$0xff] %vm253, 0.0
      %268 = vst.msk [vmem:[#allocation2 + $0x68] sm:$0xff] %vm253, 0.0
      %269 = vst.msk [vmem:[#allocation2 + $0x70] sm:$0x3] %vm256, 0.0
      %270 = vst.msk [vmem:[#allocation2 + $0x78] sm:$0xff] %vm253, 0.0
      %271 = vst.msk [vmem:[#allocation2 + $0x80] sm:$0xff] %vm253, 0.0
      %272 = vst.msk [vmem:[#allocation2 + $0x88] sm:$0x3] %vm256, 0.0
      %273 = vst.msk [vmem:[#allocation2 + $0x90] sm:$0xff] %vm253, 0.0
      %274 = vst.msk [vmem:[#allocation2 + $0x98] sm:$0xff] %vm253, 0.0
      %275 = vst.msk [vmem:[#allocation2 + $0xa0] sm:$0x3] %vm256, 0.0
      %276 = vst.msk [vmem:[#allocation2 + $0xa8] sm:$0xff] %vm253, 0.0
      %277 = vst.msk [vmem:[#allocation2 + $0xb0] sm:$0xff] %vm253, 0.0
      %278 = vst.msk [vmem:[#allocation2 + $0xb8] sm:$0x3] %vm256, 0.0
      %279 = vst.msk [vmem:[#allocation2 + $0xc0] sm:$0xff] %vm253, 0.0
      %280 = vst.msk [vmem:[#allocation2 + $0xc8] sm:$0xff] %vm253, 0.0
      %281 = vst.msk [vmem:[#allocation2 + $0xd0] sm:$0x3] %vm256, 0.0
      %282 = vst.msk [vmem:[#allocation2 + $0xd8] sm:$0xff] %vm253, 0.0
      %283 = vst.msk [vmem:[#allocation2 + $0xe0] sm:$0xff] %vm253, 0.0
      %284 = vst.msk [vmem:[#allocation2 + $0xe8] sm:$0x3] %vm256, 0.0
      %285 = vst.msk [vmem:[#allocation2 + $0xf0] sm:$0xff] %vm253, 0.0
      %286 = vst.msk [vmem:[#allocation2 + $0xf8] sm:$0xff] %vm253, 0.0
      %287 = vst.msk [vmem:[#allocation2 + $0x100] sm:$0x3] %vm256, 0.0
      %288 = vst.msk [vmem:[#allocation2 + $0x108] sm:$0xff] %vm253, 0.0
      %289 = vst.msk [vmem:[#allocation2 + $0x110] sm:$0xff] %vm253, 0.0
      %290 = vst.msk [vmem:[#allocation2 + $0x118] sm:$0x3] %vm256, 0.0
      %291 = vst.msk [vmem:[#allocation2 + $0x120] sm:$0xff] %vm253, 0.0
      %292 = vst.msk [vmem:[#allocation2 + $0x128] sm:$0xff] %vm253, 0.0
      %293 = vst.msk [vmem:[#allocation2 + $0x130] sm:$0x3] %vm256, 0.0
      %294 = vst.msk [vmem:[#allocation2 + $0x138] sm:$0xff] %vm253, 0.0
      %295 = vst.msk [vmem:[#allocation2 + $0x140] sm:$0xff] %vm253, 0.0
      %296 = vst.msk [vmem:[#allocation2 + $0x148] sm:$0x3] %vm256, 0.0
      %297 = vst.msk [vmem:[#allocation2 + $0x150] sm:$0xff] %vm253, 0.0
      %298 = vst.msk [vmem:[#allocation2 + $0x158] sm:$0xff] %vm253, 0.0
      %299 = vst.msk [vmem:[#allocation2 + $0x160] sm:$0x3] %vm256, 0.0
      %300 = vst.msk [vmem:[#allocation2 + $0x168] sm:$0xff] %vm253, 0.0
      %301 = vst.msk [vmem:[#allocation2 + $0x170] sm:$0xff] %vm253, 0.0
      %302 = vst.msk [vmem:[#allocation2 + $0x178] sm:$0x3] %vm256, 0.0
      %303 = vst.msk [vmem:[#allocation2 + $0x180] sm:$0xff] %vm253, 0.0
      %304 = vst.msk [vmem:[#allocation2 + $0x188] sm:$0xff] %vm253, 0.0
      %305 = vst.msk [vmem:[#allocation2 + $0x190] sm:$0x3] %vm256, 0.0
      %306 = vst.msk [vmem:[#allocation2 + $0x198] sm:$0xff] %vm253, 0.0
      %307 = vst.msk [vmem:[#allocation2 + $0x1a0] sm:$0xff] %vm253, 0.0
      %308 = vst.msk [vmem:[#allocation2 + $0x1a8] sm:$0x3] %vm256, 0.0
      %vm309 = vcmask 261120
      %310 = vst.msk [vmem:[#allocation3] sm:$0xff] %vm309, 0.0
      %311 = vst.msk [vmem:[#allocation3 + $0x8] sm:$0xff] %vm309, 0.0
      %vm312 = vcmask 254976
      %313 = vst.msk [vmem:[#allocation3 + $0x10] sm:$0x3] %vm312, 0.0
      %314 = vst.msk [vmem:[#allocation3 + $0x18] sm:$0xff] %vm309, 0.0
      %315 = vst.msk [vmem:[#allocation3 + $0x20] sm:$0xff] %vm309, 0.0
      %316 = vst.msk [vmem:[#allocation3 + $0x28] sm:$0x3] %vm312, 0.0
      %317 = vst.msk [vmem:[#allocation3 + $0x30] sm:$0xff] %vm309, 0.0
      %318 = vst.msk [vmem:[#allocation3 + $0x38] sm:$0xff] %vm309, 0.0
      %319 = vst.msk [vmem:[#allocation3 + $0x40] sm:$0x3] %vm312, 0.0
      %320 = vst.msk [vmem:[#allocation3 + $0x48] sm:$0xff] %vm309, 0.0
      %321 = vst.msk [vmem:[#allocation3 + $0x50] sm:$0xff] %vm309, 0.0
      %322 = vst.msk [vmem:[#allocation3 + $0x58] sm:$0x3] %vm312, 0.0
      %323 = vst.msk [vmem:[#allocation3 + $0x60] sm:$0xff] %vm309, 0.0
      %324 = vst.msk [vmem:[#allocation3 + $0x68] sm:$0xff] %vm309, 0.0
      %325 = vst.msk [vmem:[#allocation3 + $0x70] sm:$0x3] %vm312, 0.0
      %326 = vst.msk [vmem:[#allocation3 + $0x78] sm:$0xff] %vm309, 0.0
      %327 = vst.msk [vmem:[#allocation3 + $0x80] sm:$0xff] %vm309, 0.0
      %328 = vst.msk [vmem:[#allocation3 + $0x88] sm:$0x3] %vm312, 0.0
      %329 = vst.msk [vmem:[#allocation3 + $0x90] sm:$0xff] %vm309, 0.0
      %330 = vst.msk [vmem:[#allocation3 + $0x98] sm:$0xff] %vm309, 0.0
      %331 = vst.msk [vmem:[#allocation3 + $0xa0] sm:$0x3] %vm312, 0.0
      %332 = vst.msk [vmem:[#allocation3 + $0xa8] sm:$0xff] %vm309, 0.0
      %333 = vst.msk [vmem:[#allocation3 + $0xb0] sm:$0xff] %vm309, 0.0
      %334 = vst.msk [vmem:[#allocation3 + $0xb8] sm:$0x3] %vm312, 0.0
      %335 = vst.msk [vmem:[#allocation3 + $0xc0] sm:$0xff] %vm309, 0.0
      %336 = vst.msk [vmem:[#allocation3 + $0xc8] sm:$0xff] %vm309, 0.0
      %337 = vst.msk [vmem:[#allocation3 + $0xd0] sm:$0x3] %vm312, 0.0
      %338 = vst.msk [vmem:[#allocation3 + $0xd8] sm:$0xff] %vm309, 0.0
      %339 = vst.msk [vmem:[#allocation3 + $0xe0] sm:$0xff] %vm309, 0.0
      %340 = vst.msk [vmem:[#allocation3 + $0xe8] sm:$0x3] %vm312, 0.0
      %341 = vst.msk [vmem:[#allocation3 + $0xf0] sm:$0xff] %vm309, 0.0
      %342 = vst.msk [vmem:[#allocation3 + $0xf8] sm:$0xff] %vm309, 0.0
      %343 = vst.msk [vmem:[#allocation3 + $0x100] sm:$0x3] %vm312, 0.0
      %344 = vst.msk [vmem:[#allocation3 + $0x108] sm:$0xff] %vm309, 0.0
      %345 = vst.msk [vmem:[#allocation3 + $0x110] sm:$0xff] %vm309, 0.0
      %346 = vst.msk [vmem:[#allocation3 + $0x118] sm:$0x3] %vm312, 0.0
      %347 = vst.msk [vmem:[#allocation3 + $0x120] sm:$0xff] %vm309, 0.0
      %348 = vst.msk [vmem:[#allocation3 + $0x128] sm:$0xff] %vm309, 0.0
      %349 = vst.msk [vmem:[#allocation3 + $0x130] sm:$0x3] %vm312, 0.0
      %350 = vst.msk [vmem:[#allocation3 + $0x138] sm:$0xff] %vm309, 0.0
      %351 = vst.msk [vmem:[#allocation3 + $0x140] sm:$0xff] %vm309, 0.0
      %352 = vst.msk [vmem:[#allocation3 + $0x148] sm:$0x3] %vm312, 0.0
      %353 = vst.msk [vmem:[#allocation3 + $0x150] sm:$0xff] %vm309, 0.0
      %354 = vst.msk [vmem:[#allocation3 + $0x158] sm:$0xff] %vm309, 0.0
      %355 = vst.msk [vmem:[#allocation3 + $0x160] sm:$0x3] %vm312, 0.0
      %356 = vst.msk [vmem:[#allocation3 + $0x168] sm:$0xff] %vm309, 0.0
      %357 = vst.msk [vmem:[#allocation3 + $0x170] sm:$0xff] %vm309, 0.0
      %358 = vst.msk [vmem:[#allocation3 + $0x178] sm:$0x3] %vm312, 0.0
      %359 = vst.msk [vmem:[#allocation3 + $0x180] sm:$0xff] %vm309, 0.0
      %360 = vst.msk [vmem:[#allocation3 + $0x188] sm:$0xff] %vm309, 0.0
      %361 = vst.msk [vmem:[#allocation3 + $0x190] sm:$0x3] %vm312, 0.0
      %362 = vst.msk [vmem:[#allocation3 + $0x198] sm:$0xff] %vm309, 0.0
      %363 = vst.msk [vmem:[#allocation3 + $0x1a0] sm:$0xff] %vm309, 0.0
      %364 = vst.msk [vmem:[#allocation3 + $0x1a8] sm:$0x3] %vm312, 0.0
      %v365 = vld [vmem:[%s1] sm:$0xff]
      %v366 = vld [vmem:[%s1 + $0x8] sm:$0x1]
      %v367 = vld [vmem:[%s246] sm:$0xff]
      %v368 = vld [vmem:[%s246 + $0x8] sm:$0xff]
      %v369 = vld [vmem:[%s246 + $0x18] sm:$0xff]
      %v370 = vld [vmem:[%s246 + $0x20] sm:$0xff]
      %v371 = vld [vmem:[%s246 + $0x30] sm:$0xff]
      %v372 = vld [vmem:[%s246 + $0x38] sm:$0xff]
      %v373 = vld [vmem:[%s246 + $0x48] sm:$0xff]
      %v374 = vld [vmem:[%s246 + $0x50] sm:$0xff]
      %v375 = vld [vmem:[%s246 + $0x60] sm:$0xff]
      %v376 = vld [vmem:[%s246 + $0x68] sm:$0xff]
      %v377 = vld [vmem:[%s246 + $0x78] sm:$0xff]
      %v378 = vld [vmem:[%s246 + $0x80] sm:$0xff]
      %v379 = vld [vmem:[%s246 + $0x90] sm:$0xff]
      %v380 = vld [vmem:[%s246 + $0x98] sm:$0xff]
      %v381 = vld [vmem:[%s246 + $0xa8] sm:$0xff]
      %v382 = vld [vmem:[%s246 + $0xb0] sm:$0xff]
      %v383 = vld [vmem:[%s246 + $0xc0] sm:$0xff]
      %v384 = vld [vmem:[%s246 + $0xc8] sm:$0xff]
      %v385 = vld [vmem:[%s246 + $0xd8] sm:$0xff]
      %v386 = vld [vmem:[%s246 + $0xe0] sm:$0xff]
      %v387 = vld [vmem:[%s246 + $0xf0] sm:$0xff]
      %v388 = vld [vmem:[%s246 + $0xf8] sm:$0xff]
      %v389 = vld [vmem:[%s246 + $0x108] sm:$0xff]
      %v390 = vld [vmem:[%s246 + $0x110] sm:$0xff]
      %v391 = vld [vmem:[%s246 + $0x120] sm:$0xff]
      %v392 = vld [vmem:[%s246 + $0x128] sm:$0xff]
      %v393 = vld [vmem:[%s246 + $0x138] sm:$0xff]
      %v394 = vld [vmem:[%s246 + $0x140] sm:$0xff]
      %v395 = vld [vmem:[%s246 + $0x150] sm:$0xff]
      %v396 = vld [vmem:[%s246 + $0x158] sm:$0xff]
      %v397 = vld [vmem:[%s246 + $0x168] sm:$0xff]
      %v398 = vld [vmem:[%s246 + $0x170] sm:$0xff]
      %v399 = vlaneseq
      %v400 = vshrl.u32 %v399, 7
      %v401 = vsub.s32 0, %v400
      %v402 = vrot.slane %v365, %v401
      %v403 = vmul.f32 %v367, %v402
      %v404 = vmul.f32 %v368, %v402
      %v405 = vmul.f32 %v369, %v402
      %v406 = vmul.f32 %v370, %v402
      %v407 = vmul.f32 %v371, %v402
      %v408 = vmul.f32 %v372, %v402
      %v409 = vmul.f32 %v373, %v402
      %v410 = vmul.f32 %v374, %v402
      %v411 = vmul.f32 %v375, %v402
      %v412 = vmul.f32 %v376, %v402
      %v413 = vmul.f32 %v377, %v402
      %v414 = vmul.f32 %v378, %v402
      %v415 = vmul.f32 %v379, %v402
      %v416 = vmul.f32 %v380, %v402
      %v417 = vmul.f32 %v381, %v402
      %v418 = vmul.f32 %v382, %v402
      %v419 = vmul.f32 %v383, %v402
      %v420 = vmul.f32 %v384, %v402
      %v421 = vmul.f32 %v385, %v402
      %v422 = vmul.f32 %v386, %v402
      %v423 = vmul.f32 %v387, %v402
      %v424 = vmul.f32 %v388, %v402
      %v425 = vmul.f32 %v389, %v402
      %v426 = vmul.f32 %v390, %v402
      %v427 = vmul.f32 %v391, %v402
      %v428 = vmul.f32 %v392, %v402
      %v429 = vmul.f32 %v393, %v402
      %v430 = vmul.f32 %v394, %v402
      %v431 = vmul.f32 %v395, %v402
      %v432 = vmul.f32 %v396, %v402
      %v433 = vmul.f32 %v397, %v402
      %v434 = vmul.f32 %v398, %v402
      %vm435 = vcmask 31744
      %v436 = vsel %vm435, %v403, 0.0
      %437 = vadd.xlane.f32.xlu0 %v436
      %v438 = vpop.xlane.xlu0 %437
      %v439 = vsel %vm435, %v404, 0.0
      %440 = vadd.xlane.f32.xlu0 %v439
      %v441 = vpop.xlane.xlu0 %440
      %v442 = vsel %vm435, %v405, 0.0
      %443 = vadd.xlane.f32.xlu0 %v442
      %v444 = vpop.xlane.xlu0 %443
      %v445 = vsel %vm435, %v406, 0.0
      %446 = vadd.xlane.f32.xlu0 %v445
      %v447 = vpop.xlane.xlu0 %446
      %v448 = vsel %vm435, %v407, 0.0
      %449 = vadd.xlane.f32.xlu0 %v448
      %v450 = vpop.xlane.xlu0 %449
      %v451 = vsel %vm435, %v408, 0.0
      %452 = vadd.xlane.f32.xlu0 %v451
      %v453 = vpop.xlane.xlu0 %452
      %v454 = vsel %vm435, %v409, 0.0
      %455 = vadd.xlane.f32.xlu0 %v454
      %v456 = vpop.xlane.xlu0 %455
      %v457 = vsel %vm435, %v410, 0.0
      %458 = vadd.xlane.f32.xlu0 %v457
      %v459 = vpop.xlane.xlu0 %458
      %v460 = vsel %vm435, %v411, 0.0
      %461 = vadd.xlane.f32.xlu0 %v460
      %v462 = vpop.xlane.xlu0 %461
      %v463 = vsel %vm435, %v412, 0.0
      %464 = vadd.xlane.f32.xlu0 %v463
      %v465 = vpop.xlane.xlu0 %464
      %v466 = vsel %vm435, %v413, 0.0
      %467 = vadd.xlane.f32.xlu0 %v466
      %v468 = vpop.xlane.xlu0 %467
      %v469 = vsel %vm435, %v414, 0.0
      %470 = vadd.xlane.f32.xlu0 %v469
      %v471 = vpop.xlane.xlu0 %470
      %v472 = vsel %vm435, %v415, 0.0
      %473 = vadd.xlane.f32.xlu0 %v472
      %v474 = vpop.xlane.xlu0 %473
      %v475 = vsel %vm435, %v416, 0.0
      %476 = vadd.xlane.f32.xlu0 %v475
      %v477 = vpop.xlane.xlu0 %476
      %v478 = vsel %vm435, %v417, 0.0
      %479 = vadd.xlane.f32.xlu0 %v478
      %v480 = vpop.xlane.xlu0 %479
      %v481 = vsel %vm435, %v418, 0.0
      %482 = vadd.xlane.f32.xlu0 %v481
      %v483 = vpop.xlane.xlu0 %482
      %v484 = vsel %vm435, %v419, 0.0
      %485 = vadd.xlane.f32.xlu0 %v484
      %v486 = vpop.xlane.xlu0 %485
      %v487 = vsel %vm435, %v420, 0.0
      %488 = vadd.xlane.f32.xlu0 %v487
      %v489 = vpop.xlane.xlu0 %488
      %v490 = vsel %vm435, %v421, 0.0
      %491 = vadd.xlane.f32.xlu0 %v490
      %v492 = vpop.xlane.xlu0 %491
      %v493 = vsel %vm435, %v422, 0.0
      %494 = vadd.xlane.f32.xlu0 %v493
      %v495 = vpop.xlane.xlu0 %494
      %v496 = vsel %vm435, %v423, 0.0
      %497 = vadd.xlane.f32.xlu0 %v496
      %v498 = vpop.xlane.xlu0 %497
      %v499 = vsel %vm435, %v424, 0.0
      %500 = vadd.xlane.f32.xlu0 %v499
      %v501 = vpop.xlane.xlu0 %500
      %v502 = vsel %vm435, %v425, 0.0
      %503 = vadd.xlane.f32.xlu0 %v502
      %v504 = vpop.xlane.xlu0 %503
      %v505 = vsel %vm435, %v426, 0.0
      %506 = vadd.xlane.f32.xlu0 %v505
      %v507 = vpop.xlane.xlu0 %506
      %v508 = vsel %vm435, %v427, 0.0
      %509 = vadd.xlane.f32.xlu0 %v508
      %v510 = vpop.xlane.xlu0 %509
      %v511 = vsel %vm435, %v428, 0.0
      %512 = vadd.xlane.f32.xlu0 %v511
      %v513 = vpop.xlane.xlu0 %512
      %v514 = vsel %vm435, %v429, 0.0
      %515 = vadd.xlane.f32.xlu0 %v514
      %v516 = vpop.xlane.xlu0 %515
      %v517 = vsel %vm435, %v430, 0.0
      %518 = vadd.xlane.f32.xlu0 %v517
      %v519 = vpop.xlane.xlu0 %518
      %v520 = vsel %vm435, %v431, 0.0
      %521 = vadd.xlane.f32.xlu0 %v520
      %v522 = vpop.xlane.xlu0 %521
      %v523 = vsel %vm435, %v432, 0.0
      %524 = vadd.xlane.f32.xlu0 %v523
      %v525 = vpop.xlane.xlu0 %524
      %v526 = vsel %vm435, %v433, 0.0
      %527 = vadd.xlane.f32.xlu0 %v526
      %v528 = vpop.xlane.xlu0 %527
      %v529 = vsel %vm435, %v434, 0.0
      %530 = vadd.xlane.f32.xlu0 %v529
      %v531 = vpop.xlane.xlu0 %530
      %v532 = vadd.f32 %v438, 0.0
      %v533 = vadd.f32 %v441, 0.0
      %v534 = vadd.f32 %v444, 0.0
      %v535 = vadd.f32 %v447, 0.0
      %v536 = vadd.f32 %v450, 0.0
      %v537 = vadd.f32 %v453, 0.0
      %v538 = vadd.f32 %v456, 0.0
      %v539 = vadd.f32 %v459, 0.0
      %v540 = vadd.f32 %v462, 0.0
      %v541 = vadd.f32 %v465, 0.0
      %v542 = vadd.f32 %v468, 0.0
      %v543 = vadd.f32 %v471, 0.0
      %v544 = vadd.f32 %v474, 0.0
      %v545 = vadd.f32 %v477, 0.0
      %v546 = vadd.f32 %v480, 0.0
      %v547 = vadd.f32 %v483, 0.0
      %v548 = vadd.f32 %v486, 0.0
      %v549 = vadd.f32 %v489, 0.0
      %v550 = vadd.f32 %v492, 0.0
      %v551 = vadd.f32 %v495, 0.0
      %v552 = vadd.f32 %v498, 0.0
      %v553 = vadd.f32 %v501, 0.0
      %v554 = vadd.f32 %v504, 0.0
      %v555 = vadd.f32 %v507, 0.0
      %v556 = vadd.f32 %v510, 0.0
      %v557 = vadd.f32 %v513, 0.0
      %v558 = vadd.f32 %v516, 0.0
      %v559 = vadd.f32 %v519, 0.0
      %v560 = vadd.f32 %v522, 0.0
      %v561 = vadd.f32 %v525, 0.0
      %v562 = vadd.f32 %v528, 0.0
      %v563 = vadd.f32 %v531, 0.0
      %v564 = vld [vmem:[%s246 + $0x1] sm:$0xff]
      %v565 = vld [vmem:[%s246 + $0x9] sm:$0xff]
      %v566 = vld [vmem:[%s246 + $0x19] sm:$0xff]
      %v567 = vld [vmem:[%s246 + $0x21] sm:$0xff]
      %v568 = vld [vmem:[%s246 + $0x31] sm:$0xff]
      %v569 = vld [vmem:[%s246 + $0x39] sm:$0xff]
      %v570 = vld [vmem:[%s246 + $0x49] sm:$0xff]
      %v571 = vld [vmem:[%s246 + $0x51] sm:$0xff]
      %v572 = vld [vmem:[%s246 + $0x61] sm:$0xff]
      %v573 = vld [vmem:[%s246 + $0x69] sm:$0xff]
      %v574 = vld [vmem:[%s246 + $0x79] sm:$0xff]
      %v575 = vld [vmem:[%s246 + $0x81] sm:$0xff]
      %v576 = vld [vmem:[%s246 + $0x91] sm:$0xff]
      %v577 = vld [vmem:[%s246 + $0x99] sm:$0xff]
      %v578 = vld [vmem:[%s246 + $0xa9] sm:$0xff]
      %v579 = vld [vmem:[%s246 + $0xb1] sm:$0xff]
      %v580 = vld [vmem:[%s246 + $0xc1] sm:$0xff]
      %v581 = vld [vmem:[%s246 + $0xc9] sm:$0xff]
      %v582 = vld [vmem:[%s246 + $0xd9] sm:$0xff]
      %v583 = vld [vmem:[%s246 + $0xe1] sm:$0xff]
      %v584 = vld [vmem:[%s246 + $0xf1] sm:$0xff]
      %v585 = vld [vmem:[%s246 + $0xf9] sm:$0xff]
      %v586 = vld [vmem:[%s246 + $0x109] sm:$0xff]
      %v587 = vld [vmem:[%s246 + $0x111] sm:$0xff]
      %v588 = vld [vmem:[%s246 + $0x121] sm:$0xff]
      %v589 = vld [vmem:[%s246 + $0x129] sm:$0xff]
      %v590 = vld [vmem:[%s246 + $0x139] sm:$0xff]
      %v591 = vld [vmem:[%s246 + $0x141] sm:$0xff]
      %v592 = vld [vmem:[%s246 + $0x151] sm:$0xff]
      %v593 = vld [vmem:[%s246 + $0x159] sm:$0xff]
      %v594 = vld [vmem:[%s246 + $0x169] sm:$0xff]
      %v595 = vld [vmem:[%s246 + $0x171] sm:$0xff]
      %v596 = vlaneseq
      %v597 = vshrl.u32 %v596, 7
      %v598 = vsub.s32 1, %v597
      %v599 = vrot.slane %v365, %v598
      %v600 = vmul.f32 %v564, %v599
      %v601 = vmul.f32 %v565, %v599
      %v602 = vmul.f32 %v566, %v599
      %v603 = vmul.f32 %v567, %v599
      %v604 = vmul.f32 %v568, %v599
      %v605 = vmul.f32 %v569, %v599
      %v606 = vmul.f32 %v570, %v599
      %v607 = vmul.f32 %v571, %v599
      %v608 = vmul.f32 %v572, %v599
      %v609 = vmul.f32 %v573, %v599
      %v610 = vmul.f32 %v574, %v599
      %v611 = vmul.f32 %v575, %v599
      %v612 = vmul.f32 %v576, %v599
      %v613 = vmul.f32 %v577, %v599
      %v614 = vmul.f32 %v578, %v599
      %v615 = vmul.f32 %v579, %v599
      %v616 = vmul.f32 %v580, %v599
      %v617 = vmul.f32 %v581, %v599
      %v618 = vmul.f32 %v582, %v599
      %v619 = vmul.f32 %v583, %v599
      %v620 = vmul.f32 %v584, %v599
      %v621 = vmul.f32 %v585, %v599
      %v622 = vmul.f32 %v586, %v599
      %v623 = vmul.f32 %v587, %v599
      %v624 = vmul.f32 %v588, %v599
      %v625 = vmul.f32 %v589, %v599
      %v626 = vmul.f32 %v590, %v599
      %v627 = vmul.f32 %v591, %v599
      %v628 = vmul.f32 %v592, %v599
      %v629 = vmul.f32 %v593, %v599
      %v630 = vmul.f32 %v594, %v599
      %v631 = vmul.f32 %v595, %v599
      %v632 = vsel %vm435, %v600, 0.0
      %633 = vadd.xlane.f32.xlu0 %v632
      %v634 = vpop.xlane.xlu0 %633
      %v635 = vsel %vm435, %v601, 0.0
      %636 = vadd.xlane.f32.xlu0 %v635
      %v637 = vpop.xlane.xlu0 %636
      %v638 = vsel %vm435, %v602, 0.0
      %639 = vadd.xlane.f32.xlu0 %v638
      %v640 = vpop.xlane.xlu0 %639
      %v641 = vsel %vm435, %v603, 0.0
      %642 = vadd.xlane.f32.xlu0 %v641
      %v643 = vpop.xlane.xlu0 %642
      %v644 = vsel %vm435, %v604, 0.0
      %645 = vadd.xlane.f32.xlu0 %v644
      %v646 = vpop.xlane.xlu0 %645
      %v647 = vsel %vm435, %v605, 0.0
      %648 = vadd.xlane.f32.xlu0 %v647
      %v649 = vpop.xlane.xlu0 %648
      %v650 = vsel %vm435, %v606, 0.0
      %651 = vadd.xlane.f32.xlu0 %v650
      %v652 = vpop.xlane.xlu0 %651
      %v653 = vsel %vm435, %v607, 0.0
      %654 = vadd.xlane.f32.xlu0 %v653
      %v655 = vpop.xlane.xlu0 %654
      %v656 = vsel %vm435, %v608, 0.0
      %657 = vadd.xlane.f32.xlu0 %v656
      %v658 = vpop.xlane.xlu0 %657
      %v659 = vsel %vm435, %v609, 0.0
      %660 = vadd.xlane.f32.xlu0 %v659
      %v661 = vpop.xlane.xlu0 %660
      %v662 = vsel %vm435, %v610, 0.0
      %663 = vadd.xlane.f32.xlu0 %v662
      %v664 = vpop.xlane.xlu0 %663
      %v665 = vsel %vm435, %v611, 0.0
      %666 = vadd.xlane.f32.xlu0 %v665
      %v667 = vpop.xlane.xlu0 %666
      %v668 = vsel %vm435, %v612, 0.0
      %669 = vadd.xlane.f32.xlu0 %v668
      %v670 = vpop.xlane.xlu0 %669
      %v671 = vsel %vm435, %v613, 0.0
      %672 = vadd.xlane.f32.xlu0 %v671
      %v673 = vpop.xlane.xlu0 %672
      %v674 = vsel %vm435, %v614, 0.0
      %675 = vadd.xlane.f32.xlu0 %v674
      %v676 = vpop.xlane.xlu0 %675
      %v677 = vsel %vm435, %v615, 0.0
      %678 = vadd.xlane.f32.xlu0 %v677
      %v679 = vpop.xlane.xlu0 %678
      %v680 = vsel %vm435, %v616, 0.0
      %681 = vadd.xlane.f32.xlu0 %v680
      %v682 = vpop.xlane.xlu0 %681
      %v683 = vsel %vm435, %v617, 0.0
      %684 = vadd.xlane.f32.xlu0 %v683
      %v685 = vpop.xlane.xlu0 %684
      %v686 = vsel %vm435, %v618, 0.0
      %687 = vadd.xlane.f32.xlu0 %v686
      %v688 = vpop.xlane.xlu0 %687
      %v689 = vsel %vm435, %v619, 0.0
      %690 = vadd.xlane.f32.xlu0 %v689
      %v691 = vpop.xlane.xlu0 %690
      %v692 = vsel %vm435, %v620, 0.0
      %693 = vadd.xlane.f32.xlu0 %v692
      %v694 = vpop.xlane.xlu0 %693
      %v695 = vsel %vm435, %v621, 0.0
      %696 = vadd.xlane.f32.xlu0 %v695
      %v697 = vpop.xlane.xlu0 %696
      %v698 = vsel %vm435, %v622, 0.0
      %699 = vadd.xlane.f32.xlu0 %v698
      %v700 = vpop.xlane.xlu0 %699
      %v701 = vsel %vm435, %v623, 0.0
      %702 = vadd.xlane.f32.xlu0 %v701
      %v703 = vpop.xlane.xlu0 %702
      %v704 = vsel %vm435, %v624, 0.0
      %705 = vadd.xlane.f32.xlu0 %v704
      %v706 = vpop.xlane.xlu0 %705
      %v707 = vsel %vm435, %v625, 0.0
      %708 = vadd.xlane.f32.xlu0 %v707
      %v709 = vpop.xlane.xlu0 %708
      %v710 = vsel %vm435, %v626, 0.0
      %711 = vadd.xlane.f32.xlu0 %v710
      %v712 = vpop.xlane.xlu0 %711
      %v713 = vsel %vm435, %v627, 0.0
      %714 = vadd.xlane.f32.xlu0 %v713
      %v715 = vpop.xlane.xlu0 %714
      %v716 = vsel %vm435, %v628, 0.0
      %717 = vadd.xlane.f32.xlu0 %v716
      %v718 = vpop.xlane.xlu0 %717
      %v719 = vsel %vm435, %v629, 0.0
      %720 = vadd.xlane.f32.xlu0 %v719
      %v721 = vpop.xlane.xlu0 %720
      %v722 = vsel %vm435, %v630, 0.0
      %723 = vadd.xlane.f32.xlu0 %v722
      %v724 = vpop.xlane.xlu0 %723
      %v725 = vsel %vm435, %v631, 0.0
      %726 = vadd.xlane.f32.xlu0 %v725
      %v727 = vpop.xlane.xlu0 %726
      %v728 = vadd.f32 %v532, %v634
      %v729 = vadd.f32 %v533, %v637
      %v730 = vadd.f32 %v534, %v640
      %v731 = vadd.f32 %v535, %v643
      %v732 = vadd.f32 %v536, %v646
      %v733 = vadd.f32 %v537, %v649
      %v734 = vadd.f32 %v538, %v652
      %v735 = vadd.f32 %v539, %v655
      %v736 = vadd.f32 %v540, %v658
      %v737 = vadd.f32 %v541, %v661
      %v738 = vadd.f32 %v542, %v664
      %v739 = vadd.f32 %v543, %v667
      %v740 = vadd.f32 %v544, %v670
      %v741 = vadd.f32 %v545, %v673
      %v742 = vadd.f32 %v546, %v676
      %v743 = vadd.f32 %v547, %v679
      %v744 = vadd.f32 %v548, %v682
      %v745 = vadd.f32 %v549, %v685
      %v746 = vadd.f32 %v550, %v688
      %v747 = vadd.f32 %v551, %v691
      %v748 = vadd.f32 %v552, %v694
      %v749 = vadd.f32 %v553, %v697
      %v750 = vadd.f32 %v554, %v700
      %v751 = vadd.f32 %v555, %v703
      %v752 = vadd.f32 %v556, %v706
      %v753 = vadd.f32 %v557, %v709
      %v754 = vadd.f32 %v558, %v712
      %v755 = vadd.f32 %v559, %v715
      %v756 = vadd.f32 %v560, %v718
      %v757 = vadd.f32 %v561, %v721
      %v758 = vadd.f32 %v562, %v724
      %v759 = vadd.f32 %v563, %v727
      %v760 = vld [vmem:[%s246 + $0x2] sm:$0xff]
      %v761 = vld [vmem:[%s246 + $0xa] sm:$0xff]
      %v762 = vld [vmem:[%s246 + $0x1a] sm:$0xff]
      %v763 = vld [vmem:[%s246 + $0x22] sm:$0xff]
      %v764 = vld [vmem:[%s246 + $0x32] sm:$0xff]
      %v765 = vld [vmem:[%s246 + $0x3a] sm:$0xff]
      %v766 = vld [vmem:[%s246 + $0x4a] sm:$0xff]
      %v767 = vld [vmem:[%s246 + $0x52] sm:$0xff]
      %v768 = vld [vmem:[%s246 + $0x62] sm:$0xff]
      %v769 = vld [vmem:[%s246 + $0x6a] sm:$0xff]
      %v770 = vld [vmem:[%s246 + $0x7a] sm:$0xff]
      %v771 = vld [vmem:[%s246 + $0x82] sm:$0xff]
      %v772 = vld [vmem:[%s246 + $0x92] sm:$0xff]
      %v773 = vld [vmem:[%s246 + $0x9a] sm:$0xff]
      %v774 = vld [vmem:[%s246 + $0xaa] sm:$0xff]
      %v775 = vld [vmem:[%s246 + $0xb2] sm:$0xff]
      %v776 = vld [vmem:[%s246 + $0xc2] sm:$0xff]
      %v777 = vld [vmem:[%s246 + $0xca] sm:$0xff]
      %v778 = vld [vmem:[%s246 + $0xda] sm:$0xff]
      %v779 = vld [vmem:[%s246 + $0xe2] sm:$0xff]
      %v780 = vld [vmem:[%s246 + $0xf2] sm:$0xff]
      %v781 = vld [vmem:[%s246 + $0xfa] sm:$0xff]
      %v782 = vld [vmem:[%s246 + $0x10a] sm:$0xff]
      %v783 = vld [vmem:[%s246 + $0x112] sm:$0xff]
      %v784 = vld [vmem:[%s246 + $0x122] sm:$0xff]
      %v785 = vld [vmem:[%s246 + $0x12a] sm:$0xff]
      %v786 = vld [vmem:[%s246 + $0x13a] sm:$0xff]
      %v787 = vld [vmem:[%s246 + $0x142] sm:$0xff]
      %v788 = vld [vmem:[%s246 + $0x152] sm:$0xff]
      %v789 = vld [vmem:[%s246 + $0x15a] sm:$0xff]
      %v790 = vld [vmem:[%s246 + $0x16a] sm:$0xff]
      %v791 = vld [vmem:[%s246 + $0x172] sm:$0xff]
      %v792 = vlaneseq
      %v793 = vshrl.u32 %v792, 7
      %v794 = vsub.s32 2, %v793
      %v795 = vrot.slane %v365, %v794
      %v796 = vmul.f32 %v760, %v795
      %v797 = vmul.f32 %v761, %v795
      %v798 = vmul.f32 %v762, %v795
      %v799 = vmul.f32 %v763, %v795
      %v800 = vmul.f32 %v764, %v795
      %v801 = vmul.f32 %v765, %v795
      %v802 = vmul.f32 %v766, %v795
      %v803 = vmul.f32 %v767, %v795
      %v804 = vmul.f32 %v768, %v795
      %v805 = vmul.f32 %v769, %v795
      %v806 = vmul.f32 %v770, %v795
      %v807 = vmul.f32 %v771, %v795
      %v808 = vmul.f32 %v772, %v795
      %v809 = vmul.f32 %v773, %v795
      %v810 = vmul.f32 %v774, %v795
      %v811 = vmul.f32 %v775, %v795
      %v812 = vmul.f32 %v776, %v795
      %v813 = vmul.f32 %v777, %v795
      %v814 = vmul.f32 %v778, %v795
      %v815 = vmul.f32 %v779, %v795
      %v816 = vmul.f32 %v780, %v795
      %v817 = vmul.f32 %v781, %v795
      %v818 = vmul.f32 %v782, %v795
      %v819 = vmul.f32 %v783, %v795
      %v820 = vmul.f32 %v784, %v795
      %v821 = vmul.f32 %v785, %v795
      %v822 = vmul.f32 %v786, %v795
      %v823 = vmul.f32 %v787, %v795
      %v824 = vmul.f32 %v788, %v795
      %v825 = vmul.f32 %v789, %v795
      %v826 = vmul.f32 %v790, %v795
      %v827 = vmul.f32 %v791, %v795
      %v828 = vsel %vm435, %v796, 0.0
      %829 = vadd.xlane.f32.xlu0 %v828
      %v830 = vpop.xlane.xlu0 %829
      %v831 = vsel %vm435, %v797, 0.0
      %832 = vadd.xlane.f32.xlu0 %v831
      %v833 = vpop.xlane.xlu0 %832
      %v834 = vsel %vm435, %v798, 0.0
      %835 = vadd.xlane.f32.xlu0 %v834
      %v836 = vpop.xlane.xlu0 %835
      %v837 = vsel %vm435, %v799, 0.0
      %838 = vadd.xlane.f32.xlu0 %v837
      %v839 = vpop.xlane.xlu0 %838
      %v840 = vsel %vm435, %v800, 0.0
      %841 = vadd.xlane.f32.xlu0 %v840
      %v842 = vpop.xlane.xlu0 %841
      %v843 = vsel %vm435, %v801, 0.0
      %844 = vadd.xlane.f32.xlu0 %v843
      %v845 = vpop.xlane.xlu0 %844
      %v846 = vsel %vm435, %v802, 0.0
      %847 = vadd.xlane.f32.xlu0 %v846
      %v848 = vpop.xlane.xlu0 %847
      %v849 = vsel %vm435, %v803, 0.0
      %850 = vadd.xlane.f32.xlu0 %v849
      %v851 = vpop.xlane.xlu0 %850
      %v852 = vsel %vm435, %v804, 0.0
      %853 = vadd.xlane.f32.xlu0 %v852
      %v854 = vpop.xlane.xlu0 %853
      %v855 = vsel %vm435, %v805, 0.0
      %856 = vadd.xlane.f32.xlu0 %v855
      %v857 = vpop.xlane.xlu0 %856
      %v858 = vsel %vm435, %v806, 0.0
      %859 = vadd.xlane.f32.xlu0 %v858
      %v860 = vpop.xlane.xlu0 %859
      %v861 = vsel %vm435, %v807, 0.0
      %862 = vadd.xlane.f32.xlu0 %v861
      %v863 = vpop.xlane.xlu0 %862
      %v864 = vsel %vm435, %v808, 0.0
      %865 = vadd.xlane.f32.xlu0 %v864
      %v866 = vpop.xlane.xlu0 %865
      %v867 = vsel %vm435, %v809, 0.0
      %868 = vadd.xlane.f32.xlu0 %v867
      %v869 = vpop.xlane.xlu0 %868
      %v870 = vsel %vm435, %v810, 0.0
      %871 = vadd.xlane.f32.xlu0 %v870
      %v872 = vpop.xlane.xlu0 %871
      %v873 = vsel %vm435, %v811, 0.0
      %874 = vadd.xlane.f32.xlu0 %v873
      %v875 = vpop.xlane.xlu0 %874
      %v876 = vsel %vm435, %v812, 0.0
      %877 = vadd.xlane.f32.xlu0 %v876
      %v878 = vpop.xlane.xlu0 %877
      %v879 = vsel %vm435, %v813, 0.0
      %880 = vadd.xlane.f32.xlu0 %v879
      %v881 = vpop.xlane.xlu0 %880
      %v882 = vsel %vm435, %v814, 0.0
      %883 = vadd.xlane.f32.xlu0 %v882
      %v884 = vpop.xlane.xlu0 %883
      %v885 = vsel %vm435, %v815, 0.0
      %886 = vadd.xlane.f32.xlu0 %v885
      %v887 = vpop.xlane.xlu0 %886
      %v888 = vsel %vm435, %v816, 0.0
      %889 = vadd.xlane.f32.xlu0 %v888
      %v890 = vpop.xlane.xlu0 %889
      %v891 = vsel %vm435, %v817, 0.0
      %892 = vadd.xlane.f32.xlu0 %v891
      %v893 = vpop.xlane.xlu0 %892
      %v894 = vsel %vm435, %v818, 0.0
      %895 = vadd.xlane.f32.xlu0 %v894
      %v896 = vpop.xlane.xlu0 %895
      %v897 = vsel %vm435, %v819, 0.0
      %898 = vadd.xlane.f32.xlu0 %v897
      %v899 = vpop.xlane.xlu0 %898
      %v900 = vsel %vm435, %v820, 0.0
      %901 = vadd.xlane.f32.xlu0 %v900
      %v902 = vpop.xlane.xlu0 %901
      %v903 = vsel %vm435, %v821, 0.0
      %904 = vadd.xlane.f32.xlu0 %v903
      %v905 = vpop.xlane.xlu0 %904
      %v906 = vsel %vm435, %v822, 0.0
      %907 = vadd.xlane.f32.xlu0 %v906
      %v908 = vpop.xlane.xlu0 %907
      %v909 = vsel %vm435, %v823, 0.0
      %910 = vadd.xlane.f32.xlu0 %v909
      %v911 = vpop.xlane.xlu0 %910
      %v912 = vsel %vm435, %v824, 0.0
      %913 = vadd.xlane.f32.xlu0 %v912
      %v914 = vpop.xlane.xlu0 %913
      %v915 = vsel %vm435, %v825, 0.0
      %916 = vadd.xlane.f32.xlu0 %v915
      %v917 = vpop.xlane.xlu0 %916
      %v918 = vsel %vm435, %v826, 0.0
      %919 = vadd.xlane.f32.xlu0 %v918
      %v920 = vpop.xlane.xlu0 %919
      %v921 = vsel %vm435, %v827, 0.0
      %922 = vadd.xlane.f32.xlu0 %v921
      %v923 = vpop.xlane.xlu0 %922
      %v924 = vadd.f32 %v728, %v830
      %v925 = vadd.f32 %v729, %v833
      %v926 = vadd.f32 %v730, %v836
      %v927 = vadd.f32 %v731, %v839
      %v928 = vadd.f32 %v732, %v842
      %v929 = vadd.f32 %v733, %v845
      %v930 = vadd.f32 %v734, %v848
      %v931 = vadd.f32 %v735, %v851
      %v932 = vadd.f32 %v736, %v854
      %v933 = vadd.f32 %v737, %v857
      %v934 = vadd.f32 %v738, %v860
      %v935 = vadd.f32 %v739, %v863
      %v936 = vadd.f32 %v740, %v866
      %v937 = vadd.f32 %v741, %v869
      %v938 = vadd.f32 %v742, %v872
      %v939 = vadd.f32 %v743, %v875
      %v940 = vadd.f32 %v744, %v878
      %v941 = vadd.f32 %v745, %v881
      %v942 = vadd.f32 %v746, %v884
      %v943 = vadd.f32 %v747, %v887
      %v944 = vadd.f32 %v748, %v890
      %v945 = vadd.f32 %v749, %v893
      %v946 = vadd.f32 %v750, %v896
      %v947 = vadd.f32 %v751, %v899
      %v948 = vadd.f32 %v752, %v902
      %v949 = vadd.f32 %v753, %v905
      %v950 = vadd.f32 %v754, %v908
      %v951 = vadd.f32 %v755, %v911
      %v952 = vadd.f32 %v756, %v914
      %v953 = vadd.f32 %v757, %v917
      %v954 = vadd.f32 %v758, %v920
      %v955 = vadd.f32 %v759, %v923
      %s956 = scalar_lea.vmem %s246, 24
      %v957 = vld [vmem:[%s956] sm:$0xff]
      %v958 = vld [vmem:[%s956 + $0x8] sm:$0xff]
      %v959 = vld [vmem:[%s956 + $0x18] sm:$0xff]
      %v960 = vld [vmem:[%s956 + $0x20] sm:$0xff]
      %v961 = vld [vmem:[%s956 + $0x30] sm:$0xff]
      %v962 = vld [vmem:[%s956 + $0x38] sm:$0xff]
      %v963 = vld [vmem:[%s956 + $0x48] sm:$0xff]
      %v964 = vld [vmem:[%s956 + $0x50] sm:$0xff]
      %v965 = vld [vmem:[%s956 + $0x60] sm:$0xff]
      %v966 = vld [vmem:[%s956 + $0x68] sm:$0xff]
      %v967 = vld [vmem:[%s956 + $0x78] sm:$0xff]
      %v968 = vld [vmem:[%s956 + $0x80] sm:$0xff]
      %v969 = vld [vmem:[%s956 + $0x90] sm:$0xff]
      %v970 = vld [vmem:[%s956 + $0x98] sm:$0xff]
      %v971 = vld [vmem:[%s956 + $0xa8] sm:$0xff]
      %v972 = vld [vmem:[%s956 + $0xb0] sm:$0xff]
      %v973 = vld [vmem:[%s956 + $0xc0] sm:$0xff]
      %v974 = vld [vmem:[%s956 + $0xc8] sm:$0xff]
      %v975 = vld [vmem:[%s956 + $0xd8] sm:$0xff]
      %v976 = vld [vmem:[%s956 + $0xe0] sm:$0xff]
      %v977 = vld [vmem:[%s956 + $0xf0] sm:$0xff]
      %v978 = vld [vmem:[%s956 + $0xf8] sm:$0xff]
      %v979 = vld [vmem:[%s956 + $0x108] sm:$0xff]
      %v980 = vld [vmem:[%s956 + $0x110] sm:$0xff]
      %v981 = vld [vmem:[%s956 + $0x120] sm:$0xff]
      %v982 = vld [vmem:[%s956 + $0x128] sm:$0xff]
      %v983 = vld [vmem:[%s956 + $0x138] sm:$0xff]
      %v984 = vld [vmem:[%s956 + $0x140] sm:$0xff]
      %v985 = vld [vmem:[%s956 + $0x150] sm:$0xff]
      %v986 = vld [vmem:[%s956 + $0x158] sm:$0xff]
      %v987 = vld [vmem:[%s956 + $0x168] sm:$0xff]
      %v988 = vld [vmem:[%s956 + $0x170] sm:$0xff]
      %v989 = vlaneseq
      %v990 = vshrl.u32 %v989, 7
      %v991 = vsub.s32 3, %v990
      %v992 = vrot.slane %v365, %v991
      %v993 = vmul.f32 %v957, %v992
      %v994 = vmul.f32 %v958, %v992
      %v995 = vmul.f32 %v959, %v992
      %v996 = vmul.f32 %v960, %v992
      %v997 = vmul.f32 %v961, %v992
      %v998 = vmul.f32 %v962, %v992
      %v999 = vmul.f32 %v963, %v992
      %v1000 = vmul.f32 %v964, %v992
      %v1001 = vmul.f32 %v965, %v992
      %v1002 = vmul.f32 %v966, %v992
      %v1003 = vmul.f32 %v967, %v992
      %v1004 = vmul.f32 %v968, %v992
      %v1005 = vmul.f32 %v969, %v992
      %v1006 = vmul.f32 %v970, %v992
      %v1007 = vmul.f32 %v971, %v992
      %v1008 = vmul.f32 %v972, %v992
      %v1009 = vmul.f32 %v973, %v992
      %v1010 = vmul.f32 %v974, %v992
      %v1011 = vmul.f32 %v975, %v992
      %v1012 = vmul.f32 %v976, %v992
      %v1013 = vmul.f32 %v977, %v992
      %v1014 = vmul.f32 %v978, %v992
      %v1015 = vmul.f32 %v979, %v992
      %v1016 = vmul.f32 %v980, %v992
      %v1017 = vmul.f32 %v981, %v992
      %v1018 = vmul.f32 %v982, %v992
      %v1019 = vmul.f32 %v983, %v992
      %v1020 = vmul.f32 %v984, %v992
      %v1021 = vmul.f32 %v985, %v992
      %v1022 = vmul.f32 %v986, %v992
      %v1023 = vmul.f32 %v987, %v992
      %v1024 = vmul.f32 %v988, %v992
      %v1025 = vsel %vm435, %v993, 0.0
      %1026 = vadd.xlane.f32.xlu0 %v1025
      %v1027 = vpop.xlane.xlu0 %1026
      %v1028 = vsel %vm435, %v994, 0.0
      %1029 = vadd.xlane.f32.xlu0 %v1028
      %v1030 = vpop.xlane.xlu0 %1029
      %v1031 = vsel %vm435, %v995, 0.0
      %1032 = vadd.xlane.f32.xlu0 %v1031
      %v1033 = vpop.xlane.xlu0 %1032
      %v1034 = vsel %vm435, %v996, 0.0
      %1035 = vadd.xlane.f32.xlu0 %v1034
      %v1036 = vpop.xlane.xlu0 %1035
      %v1037 = vsel %vm435, %v997, 0.0
      %1038 = vadd.xlane.f32.xlu0 %v1037
      %v1039 = vpop.xlane.xlu0 %1038
      %v1040 = vsel %vm435, %v998, 0.0
      %1041 = vadd.xlane.f32.xlu0 %v1040
      %v1042 = vpop.xlane.xlu0 %1041
      %v1043 = vsel %vm435, %v999, 0.0
      %1044 = vadd.xlane.f32.xlu0 %v1043
      %v1045 = vpop.xlane.xlu0 %1044
      %v1046 = vsel %vm435, %v1000, 0.0
      %1047 = vadd.xlane.f32.xlu0 %v1046
      %v1048 = vpop.xlane.xlu0 %1047
      %v1049 = vsel %vm435, %v1001, 0.0
      %1050 = vadd.xlane.f32.xlu0 %v1049
      %v1051 = vpop.xlane.xlu0 %1050
      %v1052 = vsel %vm435, %v1002, 0.0
      %1053 = vadd.xlane.f32.xlu0 %v1052
      %v1054 = vpop.xlane.xlu0 %1053
      %v1055 = vsel %vm435, %v1003, 0.0
      %1056 = vadd.xlane.f32.xlu0 %v1055
      %v1057 = vpop.xlane.xlu0 %1056
      %v1058 = vsel %vm435, %v1004, 0.0
      %1059 = vadd.xlane.f32.xlu0 %v1058
      %v1060 = vpop.xlane.xlu0 %1059
      %v1061 = vsel %vm435, %v1005, 0.0
      %1062 = vadd.xlane.f32.xlu0 %v1061
      %v1063 = vpop.xlane.xlu0 %1062
      %v1064 = vsel %vm435, %v1006, 0.0
      %1065 = vadd.xlane.f32.xlu0 %v1064
      %v1066 = vpop.xlane.xlu0 %1065
      %v1067 = vsel %vm435, %v1007, 0.0
      %1068 = vadd.xlane.f32.xlu0 %v1067
      %v1069 = vpop.xlane.xlu0 %1068
      %v1070 = vsel %vm435, %v1008, 0.0
      %1071 = vadd.xlane.f32.xlu0 %v1070
      %v1072 = vpop.xlane.xlu0 %1071
      %v1073 = vsel %vm435, %v1009, 0.0
      %1074 = vadd.xlane.f32.xlu0 %v1073
      %v1075 = vpop.xlane.xlu0 %1074
      %v1076 = vsel %vm435, %v1010, 0.0
      %1077 = vadd.xlane.f32.xlu0 %v1076
      %v1078 = vpop.xlane.xlu0 %1077
      %v1079 = vsel %vm435, %v1011, 0.0
      %1080 = vadd.xlane.f32.xlu0 %v1079
      %v1081 = vpop.xlane.xlu0 %1080
      %v1082 = vsel %vm435, %v1012, 0.0
      %1083 = vadd.xlane.f32.xlu0 %v1082
      %v1084 = vpop.xlane.xlu0 %1083
      %v1085 = vsel %vm435, %v1013, 0.0
      %1086 = vadd.xlane.f32.xlu0 %v1085
      %v1087 = vpop.xlane.xlu0 %1086
      %v1088 = vsel %vm435, %v1014, 0.0
      %1089 = vadd.xlane.f32.xlu0 %v1088
      %v1090 = vpop.xlane.xlu0 %1089
      %v1091 = vsel %vm435, %v1015, 0.0
      %1092 = vadd.xlane.f32.xlu0 %v1091
      %v1093 = vpop.xlane.xlu0 %1092
      %v1094 = vsel %vm435, %v1016, 0.0
      %1095 = vadd.xlane.f32.xlu0 %v1094
      %v1096 = vpop.xlane.xlu0 %1095
      %v1097 = vsel %vm435, %v1017, 0.0
      %1098 = vadd.xlane.f32.xlu0 %v1097
      %v1099 = vpop.xlane.xlu0 %1098
      %v1100 = vsel %vm435, %v1018, 0.0
      %1101 = vadd.xlane.f32.xlu0 %v1100
      %v1102 = vpop.xlane.xlu0 %1101
      %v1103 = vsel %vm435, %v1019, 0.0
      %1104 = vadd.xlane.f32.xlu0 %v1103
      %v1105 = vpop.xlane.xlu0 %1104
      %v1106 = vsel %vm435, %v1020, 0.0
      %1107 = vadd.xlane.f32.xlu0 %v1106
      %v1108 = vpop.xlane.xlu0 %1107
      %v1109 = vsel %vm435, %v1021, 0.0
      %1110 = vadd.xlane.f32.xlu0 %v1109
      %v1111 = vpop.xlane.xlu0 %1110
      %v1112 = vsel %vm435, %v1022, 0.0
      %1113 = vadd.xlane.f32.xlu0 %v1112
      %v1114 = vpop.xlane.xlu0 %1113
      %v1115 = vsel %vm435, %v1023, 0.0
      %1116 = vadd.xlane.f32.xlu0 %v1115
      %v1117 = vpop.xlane.xlu0 %1116
      %v1118 = vsel %vm435, %v1024, 0.0
      %1119 = vadd.xlane.f32.xlu0 %v1118
      %v1120 = vpop.xlane.xlu0 %1119
      %v1121 = vadd.f32 %v924, %v1027
      %v1122 = vadd.f32 %v925, %v1030
      %v1123 = vadd.f32 %v926, %v1033
      %v1124 = vadd.f32 %v927, %v1036
      %v1125 = vadd.f32 %v928, %v1039
      %v1126 = vadd.f32 %v929, %v1042
      %v1127 = vadd.f32 %v930, %v1045
      %v1128 = vadd.f32 %v931, %v1048
      %v1129 = vadd.f32 %v932, %v1051
      %v1130 = vadd.f32 %v933, %v1054
      %v1131 = vadd.f32 %v934, %v1057
      %v1132 = vadd.f32 %v935, %v1060
      %v1133 = vadd.f32 %v936, %v1063
      %v1134 = vadd.f32 %v937, %v1066
      %v1135 = vadd.f32 %v938, %v1069
      %v1136 = vadd.f32 %v939, %v1072
      %v1137 = vadd.f32 %v940, %v1075
      %v1138 = vadd.f32 %v941, %v1078
      %v1139 = vadd.f32 %v942, %v1081
      %v1140 = vadd.f32 %v943, %v1084
      %v1141 = vadd.f32 %v944, %v1087
      %v1142 = vadd.f32 %v945, %v1090
      %v1143 = vadd.f32 %v946, %v1093
      %v1144 = vadd.f32 %v947, %v1096
      %v1145 = vadd.f32 %v948, %v1099
      %v1146 = vadd.f32 %v949, %v1102
      %v1147 = vadd.f32 %v950, %v1105
      %v1148 = vadd.f32 %v951, %v1108
      %v1149 = vadd.f32 %v952, %v1111
      %v1150 = vadd.f32 %v953, %v1114
      %v1151 = vadd.f32 %v954, %v1117
      %v1152 = vadd.f32 %v955, %v1120
      %v1153 = vld [vmem:[%s956 + $0x1] sm:$0xff]
      %v1154 = vld [vmem:[%s956 + $0x9] sm:$0xff]
      %v1155 = vld [vmem:[%s956 + $0x19] sm:$0xff]
      %v1156 = vld [vmem:[%s956 + $0x21] sm:$0xff]
      %v1157 = vld [vmem:[%s956 + $0x31] sm:$0xff]
      %v1158 = vld [vmem:[%s956 + $0x39] sm:$0xff]
      %v1159 = vld [vmem:[%s956 + $0x49] sm:$0xff]
      %v1160 = vld [vmem:[%s956 + $0x51] sm:$0xff]
      %v1161 = vld [vmem:[%s956 + $0x61] sm:$0xff]
      %v1162 = vld [vmem:[%s956 + $0x69] sm:$0xff]
      %v1163 = vld [vmem:[%s956 + $0x79] sm:$0xff]
      %v1164 = vld [vmem:[%s956 + $0x81] sm:$0xff]
      %v1165 = vld [vmem:[%s956 + $0x91] sm:$0xff]
      %v1166 = vld [vmem:[%s956 + $0x99] sm:$0xff]
      %v1167 = vld [vmem:[%s956 + $0xa9] sm:$0xff]
      %v1168 = vld [vmem:[%s956 + $0xb1] sm:$0xff]
      %v1169 = vld [vmem:[%s956 + $0xc1] sm:$0xff]
      %v1170 = vld [vmem:[%s956 + $0xc9] sm:$0xff]
      %v1171 = vld [vmem:[%s956 + $0xd9] sm:$0xff]
      %v1172 = vld [vmem:[%s956 + $0xe1] sm:$0xff]
      %v1173 = vld [vmem:[%s956 + $0xf1] sm:$0xff]
      %v1174 = vld [vmem:[%s956 + $0xf9] sm:$0xff]
      %v1175 = vld [vmem:[%s956 + $0x109] sm:$0xff]
      %v1176 = vld [vmem:[%s956 + $0x111] sm:$0xff]
      %v1177 = vld [vmem:[%s956 + $0x121] sm:$0xff]
      %v1178 = vld [vmem:[%s956 + $0x129] sm:$0xff]
      %v1179 = vld [vmem:[%s956 + $0x139] sm:$0xff]
      %v1180 = vld [vmem:[%s956 + $0x141] sm:$0xff]
      %v1181 = vld [vmem:[%s956 + $0x151] sm:$0xff]
      %v1182 = vld [vmem:[%s956 + $0x159] sm:$0xff]
      %v1183 = vld [vmem:[%s956 + $0x169] sm:$0xff]
      %v1184 = vld [vmem:[%s956 + $0x171] sm:$0xff]
      %v1185 = vlaneseq
      %v1186 = vshrl.u32 %v1185, 7
      %v1187 = vsub.s32 4, %v1186
      %v1188 = vrot.slane %v365, %v1187
      %v1189 = vmul.f32 %v1153, %v1188
      %v1190 = vmul.f32 %v1154, %v1188
      %v1191 = vmul.f32 %v1155, %v1188
      %v1192 = vmul.f32 %v1156, %v1188
      %v1193 = vmul.f32 %v1157, %v1188
      %v1194 = vmul.f32 %v1158, %v1188
      %v1195 = vmul.f32 %v1159, %v1188
      %v1196 = vmul.f32 %v1160, %v1188
      %v1197 = vmul.f32 %v1161, %v1188
      %v1198 = vmul.f32 %v1162, %v1188
      %v1199 = vmul.f32 %v1163, %v1188
      %v1200 = vmul.f32 %v1164, %v1188
      %v1201 = vmul.f32 %v1165, %v1188
      %v1202 = vmul.f32 %v1166, %v1188
      %v1203 = vmul.f32 %v1167, %v1188
      %v1204 = vmul.f32 %v1168, %v1188
      %v1205 = vmul.f32 %v1169, %v1188
      %v1206 = vmul.f32 %v1170, %v1188
      %v1207 = vmul.f32 %v1171, %v1188
      %v1208 = vmul.f32 %v1172, %v1188
      %v1209 = vmul.f32 %v1173, %v1188
      %v1210 = vmul.f32 %v1174, %v1188
      %v1211 = vmul.f32 %v1175, %v1188
      %v1212 = vmul.f32 %v1176, %v1188
      %v1213 = vmul.f32 %v1177, %v1188
      %v1214 = vmul.f32 %v1178, %v1188
      %v1215 = vmul.f32 %v1179, %v1188
      %v1216 = vmul.f32 %v1180, %v1188
      %v1217 = vmul.f32 %v1181, %v1188
      %v1218 = vmul.f32 %v1182, %v1188
      %v1219 = vmul.f32 %v1183, %v1188
      %v1220 = vmul.f32 %v1184, %v1188
      %v1221 = vsel %vm435, %v1189, 0.0
      %1222 = vadd.xlane.f32.xlu0 %v1221
      %v1223 = vpop.xlane.xlu0 %1222
      %v1224 = vsel %vm435, %v1190, 0.0
      %1225 = vadd.xlane.f32.xlu0 %v1224
      %v1226 = vpop.xlane.xlu0 %1225
      %v1227 = vsel %vm435, %v1191, 0.0
      %1228 = vadd.xlane.f32.xlu0 %v1227
      %v1229 = vpop.xlane.xlu0 %1228
      %v1230 = vsel %vm435, %v1192, 0.0
      %1231 = vadd.xlane.f32.xlu0 %v1230
      %v1232 = vpop.xlane.xlu0 %1231
      %v1233 = vsel %vm435, %v1193, 0.0
      %1234 = vadd.xlane.f32.xlu0 %v1233
      %v1235 = vpop.xlane.xlu0 %1234
      %v1236 = vsel %vm435, %v1194, 0.0
      %1237 = vadd.xlane.f32.xlu0 %v1236
      %v1238 = vpop.xlane.xlu0 %1237
      %v1239 = vsel %vm435, %v1195, 0.0
      %1240 = vadd.xlane.f32.xlu0 %v1239
      %v1241 = vpop.xlane.xlu0 %1240
      %v1242 = vsel %vm435, %v1196, 0.0
      %1243 = vadd.xlane.f32.xlu0 %v1242
      %v1244 = vpop.xlane.xlu0 %1243
      %v1245 = vsel %vm435, %v1197, 0.0
      %1246 = vadd.xlane.f32.xlu0 %v1245
      %v1247 = vpop.xlane.xlu0 %1246
      %v1248 = vsel %vm435, %v1198, 0.0
      %1249 = vadd.xlane.f32.xlu0 %v1248
      %v1250 = vpop.xlane.xlu0 %1249
      %v1251 = vsel %vm435, %v1199, 0.0
      %1252 = vadd.xlane.f32.xlu0 %v1251
      %v1253 = vpop.xlane.xlu0 %1252
      %v1254 = vsel %vm435, %v1200, 0.0
      %1255 = vadd.xlane.f32.xlu0 %v1254
      %v1256 = vpop.xlane.xlu0 %1255
      %v1257 = vsel %vm435, %v1201, 0.0
      %1258 = vadd.xlane.f32.xlu0 %v1257
      %v1259 = vpop.xlane.xlu0 %1258
      %v1260 = vsel %vm435, %v1202, 0.0
      %1261 = vadd.xlane.f32.xlu0 %v1260
      %v1262 = vpop.xlane.xlu0 %1261
      %v1263 = vsel %vm435, %v1203, 0.0
      %1264 = vadd.xlane.f32.xlu0 %v1263
      %v1265 = vpop.xlane.xlu0 %1264
      %v1266 = vsel %vm435, %v1204, 0.0
      %1267 = vadd.xlane.f32.xlu0 %v1266
      %v1268 = vpop.xlane.xlu0 %1267
      %v1269 = vsel %vm435, %v1205, 0.0
      %1270 = vadd.xlane.f32.xlu0 %v1269
      %v1271 = vpop.xlane.xlu0 %1270
      %v1272 = vsel %vm435, %v1206, 0.0
      %1273 = vadd.xlane.f32.xlu0 %v1272
      %v1274 = vpop.xlane.xlu0 %1273
      %v1275 = vsel %vm435, %v1207, 0.0
      %1276 = vadd.xlane.f32.xlu0 %v1275
      %v1277 = vpop.xlane.xlu0 %1276
      %v1278 = vsel %vm435, %v1208, 0.0
      %1279 = vadd.xlane.f32.xlu0 %v1278
      %v1280 = vpop.xlane.xlu0 %1279
      %v1281 = vsel %vm435, %v1209, 0.0
      %1282 = vadd.xlane.f32.xlu0 %v1281
      %v1283 = vpop.xlane.xlu0 %1282
      %v1284 = vsel %vm435, %v1210, 0.0
      %1285 = vadd.xlane.f32.xlu0 %v1284
      %v1286 = vpop.xlane.xlu0 %1285
      %v1287 = vsel %vm435, %v1211, 0.0
      %1288 = vadd.xlane.f32.xlu0 %v1287
      %v1289 = vpop.xlane.xlu0 %1288
      %v1290 = vsel %vm435, %v1212, 0.0
      %1291 = vadd.xlane.f32.xlu0 %v1290
      %v1292 = vpop.xlane.xlu0 %1291
      %v1293 = vsel %vm435, %v1213, 0.0
      %1294 = vadd.xlane.f32.xlu0 %v1293
      %v1295 = vpop.xlane.xlu0 %1294
      %v1296 = vsel %vm435, %v1214, 0.0
      %1297 = vadd.xlane.f32.xlu0 %v1296
      %v1298 = vpop.xlane.xlu0 %1297
      %v1299 = vsel %vm435, %v1215, 0.0
      %1300 = vadd.xlane.f32.xlu0 %v1299
      %v1301 = vpop.xlane.xlu0 %1300
      %v1302 = vsel %vm435, %v1216, 0.0
      %1303 = vadd.xlane.f32.xlu0 %v1302
      %v1304 = vpop.xlane.xlu0 %1303
      %v1305 = vsel %vm435, %v1217, 0.0
      %1306 = vadd.xlane.f32.xlu0 %v1305
      %v1307 = vpop.xlane.xlu0 %1306
      %v1308 = vsel %vm435, %v1218, 0.0
      %1309 = vadd.xlane.f32.xlu0 %v1308
      %v1310 = vpop.xlane.xlu0 %1309
      %v1311 = vsel %vm435, %v1219, 0.0
      %1312 = vadd.xlane.f32.xlu0 %v1311
      %v1313 = vpop.xlane.xlu0 %1312
      %v1314 = vsel %vm435, %v1220, 0.0
      %1315 = vadd.xlane.f32.xlu0 %v1314
      %v1316 = vpop.xlane.xlu0 %1315
      %v1317 = vadd.f32 %v1121, %v1223
      %v1318 = vadd.f32 %v1122, %v1226
      %v1319 = vadd.f32 %v1123, %v1229
      %v1320 = vadd.f32 %v1124, %v1232
      %v1321 = vadd.f32 %v1125, %v1235
      %v1322 = vadd.f32 %v1126, %v1238
      %v1323 = vadd.f32 %v1127, %v1241
      %v1324 = vadd.f32 %v1128, %v1244
      %v1325 = vadd.f32 %v1129, %v1247
      %v1326 = vadd.f32 %v1130, %v1250
      %v1327 = vadd.f32 %v1131, %v1253
      %v1328 = vadd.f32 %v1132, %v1256
      %v1329 = vadd.f32 %v1133, %v1259
      %v1330 = vadd.f32 %v1134, %v1262
      %v1331 = vadd.f32 %v1135, %v1265
      %v1332 = vadd.f32 %v1136, %v1268
      %v1333 = vadd.f32 %v1137, %v1271
      %v1334 = vadd.f32 %v1138, %v1274
      %v1335 = vadd.f32 %v1139, %v1277
      %v1336 = vadd.f32 %v1140, %v1280
      %v1337 = vadd.f32 %v1141, %v1283
      %v1338 = vadd.f32 %v1142, %v1286
      %v1339 = vadd.f32 %v1143, %v1289
      %v1340 = vadd.f32 %v1144, %v1292
      %v1341 = vadd.f32 %v1145, %v1295
      %v1342 = vadd.f32 %v1146, %v1298
      %v1343 = vadd.f32 %v1147, %v1301
      %v1344 = vadd.f32 %v1148, %v1304
      %v1345 = vadd.f32 %v1149, %v1307
      %v1346 = vadd.f32 %v1150, %v1310
      %v1347 = vadd.f32 %v1151, %v1313
      %v1348 = vadd.f32 %v1152, %v1316
      %v1349 = vld [vmem:[%s956 + $0x2] sm:$0xff]
      %v1350 = vld [vmem:[%s956 + $0xa] sm:$0xff]
      %v1351 = vld [vmem:[%s956 + $0x1a] sm:$0xff]
      %v1352 = vld [vmem:[%s956 + $0x22] sm:$0xff]
      %v1353 = vld [vmem:[%s956 + $0x32] sm:$0xff]
      %v1354 = vld [vmem:[%s956 + $0x3a] sm:$0xff]
      %v1355 = vld [vmem:[%s956 + $0x4a] sm:$0xff]
      %v1356 = vld [vmem:[%s956 + $0x52] sm:$0xff]
      %v1357 = vld [vmem:[%s956 + $0x62] sm:$0xff]
      %v1358 = vld [vmem:[%s956 + $0x6a] sm:$0xff]
      %v1359 = vld [vmem:[%s956 + $0x7a] sm:$0xff]
      %v1360 = vld [vmem:[%s956 + $0x82] sm:$0xff]
      %v1361 = vld [vmem:[%s956 + $0x92] sm:$0xff]
      %v1362 = vld [vmem:[%s956 + $0x9a] sm:$0xff]
      %v1363 = vld [vmem:[%s956 + $0xaa] sm:$0xff]
      %v1364 = vld [vmem:[%s956 + $0xb2] sm:$0xff]
      %v1365 = vld [vmem:[%s956 + $0xc2] sm:$0xff]
      %v1366 = vld [vmem:[%s956 + $0xca] sm:$0xff]
      %v1367 = vld [vmem:[%s956 + $0xda] sm:$0xff]
      %v1368 = vld [vmem:[%s956 + $0xe2] sm:$0xff]
      %v1369 = vld [vmem:[%s956 + $0xf2] sm:$0xff]
      %v1370 = vld [vmem:[%s956 + $0xfa] sm:$0xff]
      %v1371 = vld [vmem:[%s956 + $0x10a] sm:$0xff]
      %v1372 = vld [vmem:[%s956 + $0x112] sm:$0xff]
      %v1373 = vld [vmem:[%s956 + $0x122] sm:$0xff]
      %v1374 = vld [vmem:[%s956 + $0x12a] sm:$0xff]
      %v1375 = vld [vmem:[%s956 + $0x13a] sm:$0xff]
      %v1376 = vld [vmem:[%s956 + $0x142] sm:$0xff]
      %v1377 = vld [vmem:[%s956 + $0x152] sm:$0xff]
      %v1378 = vld [vmem:[%s956 + $0x15a] sm:$0xff]
      %v1379 = vld [vmem:[%s956 + $0x16a] sm:$0xff]
      %v1380 = vld [vmem:[%s956 + $0x172] sm:$0xff]
      %v1381 = vlaneseq
      %v1382 = vshrl.u32 %v1381, 7
      %v1383 = vsub.s32 5, %v1382
      %v1384 = vrot.slane %v365, %v1383
      %v1385 = vmul.f32 %v1349, %v1384
      %v1386 = vmul.f32 %v1350, %v1384
      %v1387 = vmul.f32 %v1351, %v1384
      %v1388 = vmul.f32 %v1352, %v1384
      %v1389 = vmul.f32 %v1353, %v1384
      %v1390 = vmul.f32 %v1354, %v1384
      %v1391 = vmul.f32 %v1355, %v1384
      %v1392 = vmul.f32 %v1356, %v1384
      %v1393 = vmul.f32 %v1357, %v1384
      %v1394 = vmul.f32 %v1358, %v1384
      %v1395 = vmul.f32 %v1359, %v1384
      %v1396 = vmul.f32 %v1360, %v1384
      %v1397 = vmul.f32 %v1361, %v1384
      %v1398 = vmul.f32 %v1362, %v1384
      %v1399 = vmul.f32 %v1363, %v1384
      %v1400 = vmul.f32 %v1364, %v1384
      %v1401 = vmul.f32 %v1365, %v1384
      %v1402 = vmul.f32 %v1366, %v1384
      %v1403 = vmul.f32 %v1367, %v1384
      %v1404 = vmul.f32 %v1368, %v1384
      %v1405 = vmul.f32 %v1369, %v1384
      %v1406 = vmul.f32 %v1370, %v1384
      %v1407 = vmul.f32 %v1371, %v1384
      %v1408 = vmul.f32 %v1372, %v1384
      %v1409 = vmul.f32 %v1373, %v1384
      %v1410 = vmul.f32 %v1374, %v1384
      %v1411 = vmul.f32 %v1375, %v1384
      %v1412 = vmul.f32 %v1376, %v1384
      %v1413 = vmul.f32 %v1377, %v1384
      %v1414 = vmul.f32 %v1378, %v1384
      %v1415 = vmul.f32 %v1379, %v1384
      %v1416 = vmul.f32 %v1380, %v1384
      %v1417 = vsel %vm435, %v1385, 0.0
      %1418 = vadd.xlane.f32.xlu0 %v1417
      %v1419 = vpop.xlane.xlu0 %1418
      %v1420 = vsel %vm435, %v1386, 0.0
      %1421 = vadd.xlane.f32.xlu0 %v1420
      %v1422 = vpop.xlane.xlu0 %1421
      %v1423 = vsel %vm435, %v1387, 0.0
      %1424 = vadd.xlane.f32.xlu0 %v1423
      %v1425 = vpop.xlane.xlu0 %1424
      %v1426 = vsel %vm435, %v1388, 0.0
      %1427 = vadd.xlane.f32.xlu0 %v1426
      %v1428 = vpop.xlane.xlu0 %1427
      %v1429 = vsel %vm435, %v1389, 0.0
      %1430 = vadd.xlane.f32.xlu0 %v1429
      %v1431 = vpop.xlane.xlu0 %1430
      %v1432 = vsel %vm435, %v1390, 0.0
      %1433 = vadd.xlane.f32.xlu0 %v1432
      %v1434 = vpop.xlane.xlu0 %1433
      %v1435 = vsel %vm435, %v1391, 0.0
      %1436 = vadd.xlane.f32.xlu0 %v1435
      %v1437 = vpop.xlane.xlu0 %1436
      %v1438 = vsel %vm435, %v1392, 0.0
      %1439 = vadd.xlane.f32.xlu0 %v1438
      %v1440 = vpop.xlane.xlu0 %1439
      %v1441 = vsel %vm435, %v1393, 0.0
      %1442 = vadd.xlane.f32.xlu0 %v1441
      %v1443 = vpop.xlane.xlu0 %1442
      %v1444 = vsel %vm435, %v1394, 0.0
      %1445 = vadd.xlane.f32.xlu0 %v1444
      %v1446 = vpop.xlane.xlu0 %1445
      %v1447 = vsel %vm435, %v1395, 0.0
      %1448 = vadd.xlane.f32.xlu0 %v1447
      %v1449 = vpop.xlane.xlu0 %1448
      %v1450 = vsel %vm435, %v1396, 0.0
      %1451 = vadd.xlane.f32.xlu0 %v1450
      %v1452 = vpop.xlane.xlu0 %1451
      %v1453 = vsel %vm435, %v1397, 0.0
      %1454 = vadd.xlane.f32.xlu0 %v1453
      %v1455 = vpop.xlane.xlu0 %1454
      %v1456 = vsel %vm435, %v1398, 0.0
      %1457 = vadd.xlane.f32.xlu0 %v1456
      %v1458 = vpop.xlane.xlu0 %1457
      %v1459 = vsel %vm435, %v1399, 0.0
      %1460 = vadd.xlane.f32.xlu0 %v1459
      %v1461 = vpop.xlane.xlu0 %1460
      %v1462 = vsel %vm435, %v1400, 0.0
      %1463 = vadd.xlane.f32.xlu0 %v1462
      %v1464 = vpop.xlane.xlu0 %1463
      %v1465 = vsel %vm435, %v1401, 0.0
      %1466 = vadd.xlane.f32.xlu0 %v1465
      %v1467 = vpop.xlane.xlu0 %1466
      %v1468 = vsel %vm435, %v1402, 0.0
      %1469 = vadd.xlane.f32.xlu0 %v1468
      %v1470 = vpop.xlane.xlu0 %1469
      %v1471 = vsel %vm435, %v1403, 0.0
      %1472 = vadd.xlane.f32.xlu0 %v1471
      %v1473 = vpop.xlane.xlu0 %1472
      %v1474 = vsel %vm435, %v1404, 0.0
      %1475 = vadd.xlane.f32.xlu0 %v1474
      %v1476 = vpop.xlane.xlu0 %1475
      %v1477 = vsel %vm435, %v1405, 0.0
      %1478 = vadd.xlane.f32.xlu0 %v1477
      %v1479 = vpop.xlane.xlu0 %1478
      %v1480 = vsel %vm435, %v1406, 0.0
      %1481 = vadd.xlane.f32.xlu0 %v1480
      %v1482 = vpop.xlane.xlu0 %1481
      %v1483 = vsel %vm435, %v1407, 0.0
      %1484 = vadd.xlane.f32.xlu0 %v1483
      %v1485 = vpop.xlane.xlu0 %1484
      %v1486 = vsel %vm435, %v1408, 0.0
      %1487 = vadd.xlane.f32.xlu0 %v1486
      %v1488 = vpop.xlane.xlu0 %1487
      %v1489 = vsel %vm435, %v1409, 0.0
      %1490 = vadd.xlane.f32.xlu0 %v1489
      %v1491 = vpop.xlane.xlu0 %1490
      %v1492 = vsel %vm435, %v1410, 0.0
      %1493 = vadd.xlane.f32.xlu0 %v1492
      %v1494 = vpop.xlane.xlu0 %1493
      %v1495 = vsel %vm435, %v1411, 0.0
      %1496 = vadd.xlane.f32.xlu0 %v1495
      %v1497 = vpop.xlane.xlu0 %1496
      %v1498 = vsel %vm435, %v1412, 0.0
      %1499 = vadd.xlane.f32.xlu0 %v1498
      %v1500 = vpop.xlane.xlu0 %1499
      %v1501 = vsel %vm435, %v1413, 0.0
      %1502 = vadd.xlane.f32.xlu0 %v1501
      %v1503 = vpop.xlane.xlu0 %1502
      %v1504 = vsel %vm435, %v1414, 0.0
      %1505 = vadd.xlane.f32.xlu0 %v1504
      %v1506 = vpop.xlane.xlu0 %1505
      %v1507 = vsel %vm435, %v1415, 0.0
      %1508 = vadd.xlane.f32.xlu0 %v1507
      %v1509 = vpop.xlane.xlu0 %1508
      %v1510 = vsel %vm435, %v1416, 0.0
      %1511 = vadd.xlane.f32.xlu0 %v1510
      %v1512 = vpop.xlane.xlu0 %1511
      %v1513 = vadd.f32 %v1317, %v1419
      %v1514 = vadd.f32 %v1318, %v1422
      %v1515 = vadd.f32 %v1319, %v1425
      %v1516 = vadd.f32 %v1320, %v1428
      %v1517 = vadd.f32 %v1321, %v1431
      %v1518 = vadd.f32 %v1322, %v1434
      %v1519 = vadd.f32 %v1323, %v1437
      %v1520 = vadd.f32 %v1324, %v1440
      %v1521 = vadd.f32 %v1325, %v1443
      %v1522 = vadd.f32 %v1326, %v1446
      %v1523 = vadd.f32 %v1327, %v1449
      %v1524 = vadd.f32 %v1328, %v1452
      %v1525 = vadd.f32 %v1329, %v1455
      %v1526 = vadd.f32 %v1330, %v1458
      %v1527 = vadd.f32 %v1331, %v1461
      %v1528 = vadd.f32 %v1332, %v1464
      %v1529 = vadd.f32 %v1333, %v1467
      %v1530 = vadd.f32 %v1334, %v1470
      %v1531 = vadd.f32 %v1335, %v1473
      %v1532 = vadd.f32 %v1336, %v1476
      %v1533 = vadd.f32 %v1337, %v1479
      %v1534 = vadd.f32 %v1338, %v1482
      %v1535 = vadd.f32 %v1339, %v1485
      %v1536 = vadd.f32 %v1340, %v1488
      %v1537 = vadd.f32 %v1341, %v1491
      %v1538 = vadd.f32 %v1342, %v1494
      %v1539 = vadd.f32 %v1343, %v1497
      %v1540 = vadd.f32 %v1344, %v1500
      %v1541 = vadd.f32 %v1345, %v1503
      %v1542 = vadd.f32 %v1346, %v1506
      %v1543 = vadd.f32 %v1347, %v1509
      %v1544 = vadd.f32 %v1348, %v1512
      %s1545 = scalar_lea.vmem %s246, 48
      %v1546 = vld [vmem:[%s1545] sm:$0xff]
      %v1547 = vld [vmem:[%s1545 + $0x8] sm:$0xff]
      %v1548 = vld [vmem:[%s1545 + $0x18] sm:$0xff]
      %v1549 = vld [vmem:[%s1545 + $0x20] sm:$0xff]
      %v1550 = vld [vmem:[%s1545 + $0x30] sm:$0xff]
      %v1551 = vld [vmem:[%s1545 + $0x38] sm:$0xff]
      %v1552 = vld [vmem:[%s1545 + $0x48] sm:$0xff]
      %v1553 = vld [vmem:[%s1545 + $0x50] sm:$0xff]
      %v1554 = vld [vmem:[%s1545 + $0x60] sm:$0xff]
      %v1555 = vld [vmem:[%s1545 + $0x68] sm:$0xff]
      %v1556 = vld [vmem:[%s1545 + $0x78] sm:$0xff]
      %v1557 = vld [vmem:[%s1545 + $0x80] sm:$0xff]
      %v1558 = vld [vmem:[%s1545 + $0x90] sm:$0xff]
      %v1559 = vld [vmem:[%s1545 + $0x98] sm:$0xff]
      %v1560 = vld [vmem:[%s1545 + $0xa8] sm:$0xff]
      %v1561 = vld [vmem:[%s1545 + $0xb0] sm:$0xff]
      %v1562 = vld [vmem:[%s1545 + $0xc0] sm:$0xff]
      %v1563 = vld [vmem:[%s1545 + $0xc8] sm:$0xff]
      %v1564 = vld [vmem:[%s1545 + $0xd8] sm:$0xff]
      %v1565 = vld [vmem:[%s1545 + $0xe0] sm:$0xff]
      %v1566 = vld [vmem:[%s1545 + $0xf0] sm:$0xff]
      %v1567 = vld [vmem:[%s1545 + $0xf8] sm:$0xff]
      %v1568 = vld [vmem:[%s1545 + $0x108] sm:$0xff]
      %v1569 = vld [vmem:[%s1545 + $0x110] sm:$0xff]
      %v1570 = vld [vmem:[%s1545 + $0x120] sm:$0xff]
      %v1571 = vld [vmem:[%s1545 + $0x128] sm:$0xff]
      %v1572 = vld [vmem:[%s1545 + $0x138] sm:$0xff]
      %v1573 = vld [vmem:[%s1545 + $0x140] sm:$0xff]
      %v1574 = vld [vmem:[%s1545 + $0x150] sm:$0xff]
      %v1575 = vld [vmem:[%s1545 + $0x158] sm:$0xff]
      %v1576 = vld [vmem:[%s1545 + $0x168] sm:$0xff]
      %v1577 = vld [vmem:[%s1545 + $0x170] sm:$0xff]
      %v1578 = vlaneseq
      %v1579 = vshrl.u32 %v1578, 7
      %v1580 = vsub.s32 6, %v1579
      %v1581 = vrot.slane %v365, %v1580
      %v1582 = vmul.f32 %v1546, %v1581
      %v1583 = vmul.f32 %v1547, %v1581
      %v1584 = vmul.f32 %v1548, %v1581
      %v1585 = vmul.f32 %v1549, %v1581
      %v1586 = vmul.f32 %v1550, %v1581
      %v1587 = vmul.f32 %v1551, %v1581
      %v1588 = vmul.f32 %v1552, %v1581
      %v1589 = vmul.f32 %v1553, %v1581
      %v1590 = vmul.f32 %v1554, %v1581
      %v1591 = vmul.f32 %v1555, %v1581
      %v1592 = vmul.f32 %v1556, %v1581
      %v1593 = vmul.f32 %v1557, %v1581
      %v1594 = vmul.f32 %v1558, %v1581
      %v1595 = vmul.f32 %v1559, %v1581
      %v1596 = vmul.f32 %v1560, %v1581
      %v1597 = vmul.f32 %v1561, %v1581
      %v1598 = vmul.f32 %v1562, %v1581
      %v1599 = vmul.f32 %v1563, %v1581
      %v1600 = vmul.f32 %v1564, %v1581
      %v1601 = vmul.f32 %v1565, %v1581
      %v1602 = vmul.f32 %v1566, %v1581
      %v1603 = vmul.f32 %v1567, %v1581
      %v1604 = vmul.f32 %v1568, %v1581
      %v1605 = vmul.f32 %v1569, %v1581
      %v1606 = vmul.f32 %v1570, %v1581
      %v1607 = vmul.f32 %v1571, %v1581
      %v1608 = vmul.f32 %v1572, %v1581
      %v1609 = vmul.f32 %v1573, %v1581
      %v1610 = vmul.f32 %v1574, %v1581
      %v1611 = vmul.f32 %v1575, %v1581
      %v1612 = vmul.f32 %v1576, %v1581
      %v1613 = vmul.f32 %v1577, %v1581
      %v1614 = vsel %vm435, %v1582, 0.0
      %1615 = vadd.xlane.f32.xlu0 %v1614
      %v1616 = vpop.xlane.xlu0 %1615
      %v1617 = vsel %vm435, %v1583, 0.0
      %1618 = vadd.xlane.f32.xlu0 %v1617
      %v1619 = vpop.xlane.xlu0 %1618
      %v1620 = vsel %vm435, %v1584, 0.0
      %1621 = vadd.xlane.f32.xlu0 %v1620
      %v1622 = vpop.xlane.xlu0 %1621
      %v1623 = vsel %vm435, %v1585, 0.0
      %1624 = vadd.xlane.f32.xlu0 %v1623
      %v1625 = vpop.xlane.xlu0 %1624
      %v1626 = vsel %vm435, %v1586, 0.0
      %1627 = vadd.xlane.f32.xlu0 %v1626
      %v1628 = vpop.xlane.xlu0 %1627
      %v1629 = vsel %vm435, %v1587, 0.0
      %1630 = vadd.xlane.f32.xlu0 %v1629
      %v1631 = vpop.xlane.xlu0 %1630
      %v1632 = vsel %vm435, %v1588, 0.0
      %1633 = vadd.xlane.f32.xlu0 %v1632
      %v1634 = vpop.xlane.xlu0 %1633
      %v1635 = vsel %vm435, %v1589, 0.0
      %1636 = vadd.xlane.f32.xlu0 %v1635
      %v1637 = vpop.xlane.xlu0 %1636
      %v1638 = vsel %vm435, %v1590, 0.0
      %1639 = vadd.xlane.f32.xlu0 %v1638
      %v1640 = vpop.xlane.xlu0 %1639
      %v1641 = vsel %vm435, %v1591, 0.0
      %1642 = vadd.xlane.f32.xlu0 %v1641
      %v1643 = vpop.xlane.xlu0 %1642
      %v1644 = vsel %vm435, %v1592, 0.0
      %1645 = vadd.xlane.f32.xlu0 %v1644
      %v1646 = vpop.xlane.xlu0 %1645
      %v1647 = vsel %vm435, %v1593, 0.0
      %1648 = vadd.xlane.f32.xlu0 %v1647
      %v1649 = vpop.xlane.xlu0 %1648
      %v1650 = vsel %vm435, %v1594, 0.0
      %1651 = vadd.xlane.f32.xlu0 %v1650
      %v1652 = vpop.xlane.xlu0 %1651
      %v1653 = vsel %vm435, %v1595, 0.0
      %1654 = vadd.xlane.f32.xlu0 %v1653
      %v1655 = vpop.xlane.xlu0 %1654
      %v1656 = vsel %vm435, %v1596, 0.0
      %1657 = vadd.xlane.f32.xlu0 %v1656
      %v1658 = vpop.xlane.xlu0 %1657
      %v1659 = vsel %vm435, %v1597, 0.0
      %1660 = vadd.xlane.f32.xlu0 %v1659
      %v1661 = vpop.xlane.xlu0 %1660
      %v1662 = vsel %vm435, %v1598, 0.0
      %1663 = vadd.xlane.f32.xlu0 %v1662
      %v1664 = vpop.xlane.xlu0 %1663
      %v1665 = vsel %vm435, %v1599, 0.0
      %1666 = vadd.xlane.f32.xlu0 %v1665
      %v1667 = vpop.xlane.xlu0 %1666
      %v1668 = vsel %vm435, %v1600, 0.0
      %1669 = vadd.xlane.f32.xlu0 %v1668
      %v1670 = vpop.xlane.xlu0 %1669
      %v1671 = vsel %vm435, %v1601, 0.0
      %1672 = vadd.xlane.f32.xlu0 %v1671
      %v1673 = vpop.xlane.xlu0 %1672
      %v1674 = vsel %vm435, %v1602, 0.0
      %1675 = vadd.xlane.f32.xlu0 %v1674
      %v1676 = vpop.xlane.xlu0 %1675
      %v1677 = vsel %vm435, %v1603, 0.0
      %1678 = vadd.xlane.f32.xlu0 %v1677
      %v1679 = vpop.xlane.xlu0 %1678
      %v1680 = vsel %vm435, %v1604, 0.0
      %1681 = vadd.xlane.f32.xlu0 %v1680
      %v1682 = vpop.xlane.xlu0 %1681
      %v1683 = vsel %vm435, %v1605, 0.0
      %1684 = vadd.xlane.f32.xlu0 %v1683
      %v1685 = vpop.xlane.xlu0 %1684
      %v1686 = vsel %vm435, %v1606, 0.0
      %1687 = vadd.xlane.f32.xlu0 %v1686
      %v1688 = vpop.xlane.xlu0 %1687
      %v1689 = vsel %vm435, %v1607, 0.0
      %1690 = vadd.xlane.f32.xlu0 %v1689
      %v1691 = vpop.xlane.xlu0 %1690
      %v1692 = vsel %vm435, %v1608, 0.0
      %1693 = vadd.xlane.f32.xlu0 %v1692
      %v1694 = vpop.xlane.xlu0 %1693
      %v1695 = vsel %vm435, %v1609, 0.0
      %1696 = vadd.xlane.f32.xlu0 %v1695
      %v1697 = vpop.xlane.xlu0 %1696
      %v1698 = vsel %vm435, %v1610, 0.0
      %1699 = vadd.xlane.f32.xlu0 %v1698
      %v1700 = vpop.xlane.xlu0 %1699
      %v1701 = vsel %vm435, %v1611, 0.0
      %1702 = vadd.xlane.f32.xlu0 %v1701
      %v1703 = vpop.xlane.xlu0 %1702
      %v1704 = vsel %vm435, %v1612, 0.0
      %1705 = vadd.xlane.f32.xlu0 %v1704
      %v1706 = vpop.xlane.xlu0 %1705
      %v1707 = vsel %vm435, %v1613, 0.0
      %1708 = vadd.xlane.f32.xlu0 %v1707
      %v1709 = vpop.xlane.xlu0 %1708
      %v1710 = vadd.f32 %v1513, %v1616
      %v1711 = vadd.f32 %v1514, %v1619
      %v1712 = vadd.f32 %v1515, %v1622
      %v1713 = vadd.f32 %v1516, %v1625
      %v1714 = vadd.f32 %v1517, %v1628
      %v1715 = vadd.f32 %v1518, %v1631
      %v1716 = vadd.f32 %v1519, %v1634
      %v1717 = vadd.f32 %v1520, %v1637
      %v1718 = vadd.f32 %v1521, %v1640
      %v1719 = vadd.f32 %v1522, %v1643
      %v1720 = vadd.f32 %v1523, %v1646
      %v1721 = vadd.f32 %v1524, %v1649
      %v1722 = vadd.f32 %v1525, %v1652
      %v1723 = vadd.f32 %v1526, %v1655
      %v1724 = vadd.f32 %v1527, %v1658
      %v1725 = vadd.f32 %v1528, %v1661
      %v1726 = vadd.f32 %v1529, %v1664
      %v1727 = vadd.f32 %v1530, %v1667
      %v1728 = vadd.f32 %v1531, %v1670
      %v1729 = vadd.f32 %v1532, %v1673
      %v1730 = vadd.f32 %v1533, %v1676
      %v1731 = vadd.f32 %v1534, %v1679
      %v1732 = vadd.f32 %v1535, %v1682
      %v1733 = vadd.f32 %v1536, %v1685
      %v1734 = vadd.f32 %v1537, %v1688
      %v1735 = vadd.f32 %v1538, %v1691
      %v1736 = vadd.f32 %v1539, %v1694
      %v1737 = vadd.f32 %v1540, %v1697
      %v1738 = vadd.f32 %v1541, %v1700
      %v1739 = vadd.f32 %v1542, %v1703
      %v1740 = vadd.f32 %v1543, %v1706
      %v1741 = vadd.f32 %v1544, %v1709
      %v1742 = vld [vmem:[%s1545 + $0x1] sm:$0xff]
      %v1743 = vld [vmem:[%s1545 + $0x9] sm:$0xff]
      %v1744 = vld [vmem:[%s1545 + $0x19] sm:$0xff]
      %v1745 = vld [vmem:[%s1545 + $0x21] sm:$0xff]
      %v1746 = vld [vmem:[%s1545 + $0x31] sm:$0xff]
      %v1747 = vld [vmem:[%s1545 + $0x39] sm:$0xff]
      %v1748 = vld [vmem:[%s1545 + $0x49] sm:$0xff]
      %v1749 = vld [vmem:[%s1545 + $0x51] sm:$0xff]
      %v1750 = vld [vmem:[%s1545 + $0x61] sm:$0xff]
      %v1751 = vld [vmem:[%s1545 + $0x69] sm:$0xff]
      %v1752 = vld [vmem:[%s1545 + $0x79] sm:$0xff]
      %v1753 = vld [vmem:[%s1545 + $0x81] sm:$0xff]
      %v1754 = vld [vmem:[%s1545 + $0x91] sm:$0xff]
      %v1755 = vld [vmem:[%s1545 + $0x99] sm:$0xff]
      %v1756 = vld [vmem:[%s1545 + $0xa9] sm:$0xff]
      %v1757 = vld [vmem:[%s1545 + $0xb1] sm:$0xff]
      %v1758 = vld [vmem:[%s1545 + $0xc1] sm:$0xff]
      %v1759 = vld [vmem:[%s1545 + $0xc9] sm:$0xff]
      %v1760 = vld [vmem:[%s1545 + $0xd9] sm:$0xff]
      %v1761 = vld [vmem:[%s1545 + $0xe1] sm:$0xff]
      %v1762 = vld [vmem:[%s1545 + $0xf1] sm:$0xff]
      %v1763 = vld [vmem:[%s1545 + $0xf9] sm:$0xff]
      %v1764 = vld [vmem:[%s1545 + $0x109] sm:$0xff]
      %v1765 = vld [vmem:[%s1545 + $0x111] sm:$0xff]
      %v1766 = vld [vmem:[%s1545 + $0x121] sm:$0xff]
      %v1767 = vld [vmem:[%s1545 + $0x129] sm:$0xff]
      %v1768 = vld [vmem:[%s1545 + $0x139] sm:$0xff]
      %v1769 = vld [vmem:[%s1545 + $0x141] sm:$0xff]
      %v1770 = vld [vmem:[%s1545 + $0x151] sm:$0xff]
      %v1771 = vld [vmem:[%s1545 + $0x159] sm:$0xff]
      %v1772 = vld [vmem:[%s1545 + $0x169] sm:$0xff]
      %v1773 = vld [vmem:[%s1545 + $0x171] sm:$0xff]
      %v1774 = vlaneseq
      %v1775 = vshrl.u32 %v1774, 7
      %v1776 = vsub.s32 7, %v1775
      %v1777 = vrot.slane %v365, %v1776
      %v1778 = vmul.f32 %v1742, %v1777
      %v1779 = vmul.f32 %v1743, %v1777
      %v1780 = vmul.f32 %v1744, %v1777
      %v1781 = vmul.f32 %v1745, %v1777
      %v1782 = vmul.f32 %v1746, %v1777
      %v1783 = vmul.f32 %v1747, %v1777
      %v1784 = vmul.f32 %v1748, %v1777
      %v1785 = vmul.f32 %v1749, %v1777
      %v1786 = vmul.f32 %v1750, %v1777
      %v1787 = vmul.f32 %v1751, %v1777
      %v1788 = vmul.f32 %v1752, %v1777
      %v1789 = vmul.f32 %v1753, %v1777
      %v1790 = vmul.f32 %v1754, %v1777
      %v1791 = vmul.f32 %v1755, %v1777
      %v1792 = vmul.f32 %v1756, %v1777
      %v1793 = vmul.f32 %v1757, %v1777
      %v1794 = vmul.f32 %v1758, %v1777
      %v1795 = vmul.f32 %v1759, %v1777
      %v1796 = vmul.f32 %v1760, %v1777
      %v1797 = vmul.f32 %v1761, %v1777
      %v1798 = vmul.f32 %v1762, %v1777
      %v1799 = vmul.f32 %v1763, %v1777
      %v1800 = vmul.f32 %v1764, %v1777
      %v1801 = vmul.f32 %v1765, %v1777
      %v1802 = vmul.f32 %v1766, %v1777
      %v1803 = vmul.f32 %v1767, %v1777
      %v1804 = vmul.f32 %v1768, %v1777
      %v1805 = vmul.f32 %v1769, %v1777
      %v1806 = vmul.f32 %v1770, %v1777
      %v1807 = vmul.f32 %v1771, %v1777
      %v1808 = vmul.f32 %v1772, %v1777
      %v1809 = vmul.f32 %v1773, %v1777
      %v1810 = vsel %vm435, %v1778, 0.0
      %1811 = vadd.xlane.f32.xlu0 %v1810
      %v1812 = vpop.xlane.xlu0 %1811
      %v1813 = vsel %vm435, %v1779, 0.0
      %1814 = vadd.xlane.f32.xlu0 %v1813
      %v1815 = vpop.xlane.xlu0 %1814
      %v1816 = vsel %vm435, %v1780, 0.0
      %1817 = vadd.xlane.f32.xlu0 %v1816
      %v1818 = vpop.xlane.xlu0 %1817
      %v1819 = vsel %vm435, %v1781, 0.0
      %1820 = vadd.xlane.f32.xlu0 %v1819
      %v1821 = vpop.xlane.xlu0 %1820
      %v1822 = vsel %vm435, %v1782, 0.0
      %1823 = vadd.xlane.f32.xlu0 %v1822
      %v1824 = vpop.xlane.xlu0 %1823
      %v1825 = vsel %vm435, %v1783, 0.0
      %1826 = vadd.xlane.f32.xlu0 %v1825
      %v1827 = vpop.xlane.xlu0 %1826
      %v1828 = vsel %vm435, %v1784, 0.0
      %1829 = vadd.xlane.f32.xlu0 %v1828
      %v1830 = vpop.xlane.xlu0 %1829
      %v1831 = vsel %vm435, %v1785, 0.0
      %1832 = vadd.xlane.f32.xlu0 %v1831
      %v1833 = vpop.xlane.xlu0 %1832
      %v1834 = vsel %vm435, %v1786, 0.0
      %1835 = vadd.xlane.f32.xlu0 %v1834
      %v1836 = vpop.xlane.xlu0 %1835
      %v1837 = vsel %vm435, %v1787, 0.0
      %1838 = vadd.xlane.f32.xlu0 %v1837
      %v1839 = vpop.xlane.xlu0 %1838
      %v1840 = vsel %vm435, %v1788, 0.0
      %1841 = vadd.xlane.f32.xlu0 %v1840
      %v1842 = vpop.xlane.xlu0 %1841
      %v1843 = vsel %vm435, %v1789, 0.0
      %1844 = vadd.xlane.f32.xlu0 %v1843
      %v1845 = vpop.xlane.xlu0 %1844
      %v1846 = vsel %vm435, %v1790, 0.0
      %1847 = vadd.xlane.f32.xlu0 %v1846
      %v1848 = vpop.xlane.xlu0 %1847
      %v1849 = vsel %vm435, %v1791, 0.0
      %1850 = vadd.xlane.f32.xlu0 %v1849
      %v1851 = vpop.xlane.xlu0 %1850
      %v1852 = vsel %vm435, %v1792, 0.0
      %1853 = vadd.xlane.f32.xlu0 %v1852
      %v1854 = vpop.xlane.xlu0 %1853
      %v1855 = vsel %vm435, %v1793, 0.0
      %1856 = vadd.xlane.f32.xlu0 %v1855
      %v1857 = vpop.xlane.xlu0 %1856
      %v1858 = vsel %vm435, %v1794, 0.0
      %1859 = vadd.xlane.f32.xlu0 %v1858
      %v1860 = vpop.xlane.xlu0 %1859
      %v1861 = vsel %vm435, %v1795, 0.0
      %1862 = vadd.xlane.f32.xlu0 %v1861
      %v1863 = vpop.xlane.xlu0 %1862
      %v1864 = vsel %vm435, %v1796, 0.0
      %1865 = vadd.xlane.f32.xlu0 %v1864
      %v1866 = vpop.xlane.xlu0 %1865
      %v1867 = vsel %vm435, %v1797, 0.0
      %1868 = vadd.xlane.f32.xlu0 %v1867
      %v1869 = vpop.xlane.xlu0 %1868
      %v1870 = vsel %vm435, %v1798, 0.0
      %1871 = vadd.xlane.f32.xlu0 %v1870
      %v1872 = vpop.xlane.xlu0 %1871
      %v1873 = vsel %vm435, %v1799, 0.0
      %1874 = vadd.xlane.f32.xlu0 %v1873
      %v1875 = vpop.xlane.xlu0 %1874
      %v1876 = vsel %vm435, %v1800, 0.0
      %1877 = vadd.xlane.f32.xlu0 %v1876
      %v1878 = vpop.xlane.xlu0 %1877
      %v1879 = vsel %vm435, %v1801, 0.0
      %1880 = vadd.xlane.f32.xlu0 %v1879
      %v1881 = vpop.xlane.xlu0 %1880
      %v1882 = vsel %vm435, %v1802, 0.0
      %1883 = vadd.xlane.f32.xlu0 %v1882
      %v1884 = vpop.xlane.xlu0 %1883
      %v1885 = vsel %vm435, %v1803, 0.0
      %1886 = vadd.xlane.f32.xlu0 %v1885
      %v1887 = vpop.xlane.xlu0 %1886
      %v1888 = vsel %vm435, %v1804, 0.0
      %1889 = vadd.xlane.f32.xlu0 %v1888
      %v1890 = vpop.xlane.xlu0 %1889
      %v1891 = vsel %vm435, %v1805, 0.0
      %1892 = vadd.xlane.f32.xlu0 %v1891
      %v1893 = vpop.xlane.xlu0 %1892
      %v1894 = vsel %vm435, %v1806, 0.0
      %1895 = vadd.xlane.f32.xlu0 %v1894
      %v1896 = vpop.xlane.xlu0 %1895
      %v1897 = vsel %vm435, %v1807, 0.0
      %1898 = vadd.xlane.f32.xlu0 %v1897
      %v1899 = vpop.xlane.xlu0 %1898
      %v1900 = vsel %vm435, %v1808, 0.0
      %1901 = vadd.xlane.f32.xlu0 %v1900
      %v1902 = vpop.xlane.xlu0 %1901
      %v1903 = vsel %vm435, %v1809, 0.0
      %1904 = vadd.xlane.f32.xlu0 %v1903
      %v1905 = vpop.xlane.xlu0 %1904
      %v1906 = vadd.f32 %v1710, %v1812
      %v1907 = vadd.f32 %v1711, %v1815
      %v1908 = vadd.f32 %v1712, %v1818
      %v1909 = vadd.f32 %v1713, %v1821
      %v1910 = vadd.f32 %v1714, %v1824
      %v1911 = vadd.f32 %v1715, %v1827
      %v1912 = vadd.f32 %v1716, %v1830
      %v1913 = vadd.f32 %v1717, %v1833
      %v1914 = vadd.f32 %v1718, %v1836
      %v1915 = vadd.f32 %v1719, %v1839
      %v1916 = vadd.f32 %v1720, %v1842
      %v1917 = vadd.f32 %v1721, %v1845
      %v1918 = vadd.f32 %v1722, %v1848
      %v1919 = vadd.f32 %v1723, %v1851
      %v1920 = vadd.f32 %v1724, %v1854
      %v1921 = vadd.f32 %v1725, %v1857
      %v1922 = vadd.f32 %v1726, %v1860
      %v1923 = vadd.f32 %v1727, %v1863
      %v1924 = vadd.f32 %v1728, %v1866
      %v1925 = vadd.f32 %v1729, %v1869
      %v1926 = vadd.f32 %v1730, %v1872
      %v1927 = vadd.f32 %v1731, %v1875
      %v1928 = vadd.f32 %v1732, %v1878
      %v1929 = vadd.f32 %v1733, %v1881
      %v1930 = vadd.f32 %v1734, %v1884
      %v1931 = vadd.f32 %v1735, %v1887
      %v1932 = vadd.f32 %v1736, %v1890
      %v1933 = vadd.f32 %v1737, %v1893
      %v1934 = vadd.f32 %v1738, %v1896
      %v1935 = vadd.f32 %v1739, %v1899
      %v1936 = vadd.f32 %v1740, %v1902
      %v1937 = vadd.f32 %v1741, %v1905
      %v1938 = vld [vmem:[%s1545 + $0x2] sm:$0xff]
      %v1939 = vld [vmem:[%s1545 + $0xa] sm:$0xff]
      %v1940 = vld [vmem:[%s1545 + $0x1a] sm:$0xff]
      %v1941 = vld [vmem:[%s1545 + $0x22] sm:$0xff]
      %v1942 = vld [vmem:[%s1545 + $0x32] sm:$0xff]
      %v1943 = vld [vmem:[%s1545 + $0x3a] sm:$0xff]
      %v1944 = vld [vmem:[%s1545 + $0x4a] sm:$0xff]
      %v1945 = vld [vmem:[%s1545 + $0x52] sm:$0xff]
      %v1946 = vld [vmem:[%s1545 + $0x62] sm:$0xff]
      %v1947 = vld [vmem:[%s1545 + $0x6a] sm:$0xff]
      %v1948 = vld [vmem:[%s1545 + $0x7a] sm:$0xff]
      %v1949 = vld [vmem:[%s1545 + $0x82] sm:$0xff]
      %v1950 = vld [vmem:[%s1545 + $0x92] sm:$0xff]
      %v1951 = vld [vmem:[%s1545 + $0x9a] sm:$0xff]
      %v1952 = vld [vmem:[%s1545 + $0xaa] sm:$0xff]
      %v1953 = vld [vmem:[%s1545 + $0xb2] sm:$0xff]
      %v1954 = vld [vmem:[%s1545 + $0xc2] sm:$0xff]
      %v1955 = vld [vmem:[%s1545 + $0xca] sm:$0xff]
      %v1956 = vld [vmem:[%s1545 + $0xda] sm:$0xff]
      %v1957 = vld [vmem:[%s1545 + $0xe2] sm:$0xff]
      %v1958 = vld [vmem:[%s1545 + $0xf2] sm:$0xff]
      %v1959 = vld [vmem:[%s1545 + $0xfa] sm:$0xff]
      %v1960 = vld [vmem:[%s1545 + $0x10a] sm:$0xff]
      %v1961 = vld [vmem:[%s1545 + $0x112] sm:$0xff]
      %v1962 = vld [vmem:[%s1545 + $0x122] sm:$0xff]
      %v1963 = vld [vmem:[%s1545 + $0x12a] sm:$0xff]
      %v1964 = vld [vmem:[%s1545 + $0x13a] sm:$0xff]
      %v1965 = vld [vmem:[%s1545 + $0x142] sm:$0xff]
      %v1966 = vld [vmem:[%s1545 + $0x152] sm:$0xff]
      %v1967 = vld [vmem:[%s1545 + $0x15a] sm:$0xff]
      %v1968 = vld [vmem:[%s1545 + $0x16a] sm:$0xff]
      %v1969 = vld [vmem:[%s1545 + $0x172] sm:$0xff]
      %v1970 = vlaneseq
      %v1971 = vshrl.u32 %v1970, 7
      %v1972 = vsub.s32 0, %v1971
      %v1973 = vrot.slane %v366, %v1972
      %v1974 = vmul.f32 %v1938, %v1973
      %v1975 = vmul.f32 %v1939, %v1973
      %v1976 = vmul.f32 %v1940, %v1973
      %v1977 = vmul.f32 %v1941, %v1973
      %v1978 = vmul.f32 %v1942, %v1973
      %v1979 = vmul.f32 %v1943, %v1973
      %v1980 = vmul.f32 %v1944, %v1973
      %v1981 = vmul.f32 %v1945, %v1973
      %v1982 = vmul.f32 %v1946, %v1973
      %v1983 = vmul.f32 %v1947, %v1973
      %v1984 = vmul.f32 %v1948, %v1973
      %v1985 = vmul.f32 %v1949, %v1973
      %v1986 = vmul.f32 %v1950, %v1973
      %v1987 = vmul.f32 %v1951, %v1973
      %v1988 = vmul.f32 %v1952, %v1973
      %v1989 = vmul.f32 %v1953, %v1973
      %v1990 = vmul.f32 %v1954, %v1973
      %v1991 = vmul.f32 %v1955, %v1973
      %v1992 = vmul.f32 %v1956, %v1973
      %v1993 = vmul.f32 %v1957, %v1973
      %v1994 = vmul.f32 %v1958, %v1973
      %v1995 = vmul.f32 %v1959, %v1973
      %v1996 = vmul.f32 %v1960, %v1973
      %v1997 = vmul.f32 %v1961, %v1973
      %v1998 = vmul.f32 %v1962, %v1973
      %v1999 = vmul.f32 %v1963, %v1973
      %v2000 = vmul.f32 %v1964, %v1973
      %v2001 = vmul.f32 %v1965, %v1973
      %v2002 = vmul.f32 %v1966, %v1973
      %v2003 = vmul.f32 %v1967, %v1973
      %v2004 = vmul.f32 %v1968, %v1973
      %v2005 = vmul.f32 %v1969, %v1973
      %v2006 = vsel %vm435, %v1974, 0.0
      %2007 = vadd.xlane.f32.xlu0 %v2006
      %v2008 = vpop.xlane.xlu0 %2007
      %v2009 = vsel %vm435, %v1975, 0.0
      %2010 = vadd.xlane.f32.xlu0 %v2009
      %v2011 = vpop.xlane.xlu0 %2010
      %v2012 = vsel %vm435, %v1976, 0.0
      %2013 = vadd.xlane.f32.xlu0 %v2012
      %v2014 = vpop.xlane.xlu0 %2013
      %v2015 = vsel %vm435, %v1977, 0.0
      %2016 = vadd.xlane.f32.xlu0 %v2015
      %v2017 = vpop.xlane.xlu0 %2016
      %v2018 = vsel %vm435, %v1978, 0.0
      %2019 = vadd.xlane.f32.xlu0 %v2018
      %v2020 = vpop.xlane.xlu0 %2019
      %v2021 = vsel %vm435, %v1979, 0.0
      %2022 = vadd.xlane.f32.xlu0 %v2021
      %v2023 = vpop.xlane.xlu0 %2022
      %v2024 = vsel %vm435, %v1980, 0.0
      %2025 = vadd.xlane.f32.xlu0 %v2024
      %v2026 = vpop.xlane.xlu0 %2025
      %v2027 = vsel %vm435, %v1981, 0.0
      %2028 = vadd.xlane.f32.xlu0 %v2027
      %v2029 = vpop.xlane.xlu0 %2028
      %v2030 = vsel %vm435, %v1982, 0.0
      %2031 = vadd.xlane.f32.xlu0 %v2030
      %v2032 = vpop.xlane.xlu0 %2031
      %v2033 = vsel %vm435, %v1983, 0.0
      %2034 = vadd.xlane.f32.xlu0 %v2033
      %v2035 = vpop.xlane.xlu0 %2034
      %v2036 = vsel %vm435, %v1984, 0.0
      %2037 = vadd.xlane.f32.xlu0 %v2036
      %v2038 = vpop.xlane.xlu0 %2037
      %v2039 = vsel %vm435, %v1985, 0.0
      %2040 = vadd.xlane.f32.xlu0 %v2039
      %v2041 = vpop.xlane.xlu0 %2040
      %v2042 = vsel %vm435, %v1986, 0.0
      %2043 = vadd.xlane.f32.xlu0 %v2042
      %v2044 = vpop.xlane.xlu0 %2043
      %v2045 = vsel %vm435, %v1987, 0.0
      %2046 = vadd.xlane.f32.xlu0 %v2045
      %v2047 = vpop.xlane.xlu0 %2046
      %v2048 = vsel %vm435, %v1988, 0.0
      %2049 = vadd.xlane.f32.xlu0 %v2048
      %v2050 = vpop.xlane.xlu0 %2049
      %v2051 = vsel %vm435, %v1989, 0.0
      %2052 = vadd.xlane.f32.xlu0 %v2051
      %v2053 = vpop.xlane.xlu0 %2052
      %v2054 = vsel %vm435, %v1990, 0.0
      %2055 = vadd.xlane.f32.xlu0 %v2054
      %v2056 = vpop.xlane.xlu0 %2055
      %v2057 = vsel %vm435, %v1991, 0.0
      %2058 = vadd.xlane.f32.xlu0 %v2057
      %v2059 = vpop.xlane.xlu0 %2058
      %v2060 = vsel %vm435, %v1992, 0.0
      %2061 = vadd.xlane.f32.xlu0 %v2060
      %v2062 = vpop.xlane.xlu0 %2061
      %v2063 = vsel %vm435, %v1993, 0.0
      %2064 = vadd.xlane.f32.xlu0 %v2063
      %v2065 = vpop.xlane.xlu0 %2064
      %v2066 = vsel %vm435, %v1994, 0.0
      %2067 = vadd.xlane.f32.xlu0 %v2066
      %v2068 = vpop.xlane.xlu0 %2067
      %v2069 = vsel %vm435, %v1995, 0.0
      %2070 = vadd.xlane.f32.xlu0 %v2069
      %v2071 = vpop.xlane.xlu0 %2070
      %v2072 = vsel %vm435, %v1996, 0.0
      %2073 = vadd.xlane.f32.xlu0 %v2072
      %v2074 = vpop.xlane.xlu0 %2073
      %v2075 = vsel %vm435, %v1997, 0.0
      %2076 = vadd.xlane.f32.xlu0 %v2075
      %v2077 = vpop.xlane.xlu0 %2076
      %v2078 = vsel %vm435, %v1998, 0.0
      %2079 = vadd.xlane.f32.xlu0 %v2078
      %v2080 = vpop.xlane.xlu0 %2079
      %v2081 = vsel %vm435, %v1999, 0.0
      %2082 = vadd.xlane.f32.xlu0 %v2081
      %v2083 = vpop.xlane.xlu0 %2082
      %v2084 = vsel %vm435, %v2000, 0.0
      %2085 = vadd.xlane.f32.xlu0 %v2084
      %v2086 = vpop.xlane.xlu0 %2085
      %v2087 = vsel %vm435, %v2001, 0.0
      %2088 = vadd.xlane.f32.xlu0 %v2087
      %v2089 = vpop.xlane.xlu0 %2088
      %v2090 = vsel %vm435, %v2002, 0.0
      %2091 = vadd.xlane.f32.xlu0 %v2090
      %v2092 = vpop.xlane.xlu0 %2091
      %v2093 = vsel %vm435, %v2003, 0.0
      %2094 = vadd.xlane.f32.xlu0 %v2093
      %v2095 = vpop.xlane.xlu0 %2094
      %v2096 = vsel %vm435, %v2004, 0.0
      %2097 = vadd.xlane.f32.xlu0 %v2096
      %v2098 = vpop.xlane.xlu0 %2097
      %v2099 = vsel %vm435, %v2005, 0.0
      %2100 = vadd.xlane.f32.xlu0 %v2099
      %v2101 = vpop.xlane.xlu0 %2100
      %v2102 = vadd.f32 %v1906, %v2008
      %v2103 = vadd.f32 %v1907, %v2011
      %v2104 = vadd.f32 %v1908, %v2014
      %v2105 = vadd.f32 %v1909, %v2017
      %v2106 = vadd.f32 %v1910, %v2020
      %v2107 = vadd.f32 %v1911, %v2023
      %v2108 = vadd.f32 %v1912, %v2026
      %v2109 = vadd.f32 %v1913, %v2029
      %v2110 = vadd.f32 %v1914, %v2032
      %v2111 = vadd.f32 %v1915, %v2035
      %v2112 = vadd.f32 %v1916, %v2038
      %v2113 = vadd.f32 %v1917, %v2041
      %v2114 = vadd.f32 %v1918, %v2044
      %v2115 = vadd.f32 %v1919, %v2047
      %v2116 = vadd.f32 %v1920, %v2050
      %v2117 = vadd.f32 %v1921, %v2053
      %v2118 = vadd.f32 %v1922, %v2056
      %v2119 = vadd.f32 %v1923, %v2059
      %v2120 = vadd.f32 %v1924, %v2062
      %v2121 = vadd.f32 %v1925, %v2065
      %v2122 = vadd.f32 %v1926, %v2068
      %v2123 = vadd.f32 %v1927, %v2071
      %v2124 = vadd.f32 %v1928, %v2074
      %v2125 = vadd.f32 %v1929, %v2077
      %v2126 = vadd.f32 %v1930, %v2080
      %v2127 = vadd.f32 %v1931, %v2083
      %v2128 = vadd.f32 %v1932, %v2086
      %v2129 = vadd.f32 %v1933, %v2089
      %v2130 = vadd.f32 %v1934, %v2092
      %v2131 = vadd.f32 %v1935, %v2095
      %v2132 = vadd.f32 %v1936, %v2098
      %v2133 = vadd.f32 %v1937, %v2101
      %v2134 = vlaneseq
      %v2135 = vshrl.u32 %v2134, 7
      %v2136 = vsub.s32 5, %v2135
      %v2137 = vrot.slane %v252, %v2136
      %v2138 = vadd.f32 %v2102, %v2137
      %v2139 = vadd.f32 %v2103, %v2137
      %v2140 = vadd.f32 %v2104, %v2137
      %v2141 = vadd.f32 %v2105, %v2137
      %v2142 = vadd.f32 %v2106, %v2137
      %v2143 = vadd.f32 %v2107, %v2137
      %v2144 = vadd.f32 %v2108, %v2137
      %v2145 = vadd.f32 %v2109, %v2137
      %v2146 = vadd.f32 %v2110, %v2137
      %v2147 = vadd.f32 %v2111, %v2137
      %v2148 = vadd.f32 %v2112, %v2137
      %v2149 = vadd.f32 %v2113, %v2137
      %v2150 = vadd.f32 %v2114, %v2137
      %v2151 = vadd.f32 %v2115, %v2137
      %v2152 = vadd.f32 %v2116, %v2137
      %v2153 = vadd.f32 %v2117, %v2137
      %v2154 = vadd.f32 %v2118, %v2137
      %v2155 = vadd.f32 %v2119, %v2137
      %v2156 = vadd.f32 %v2120, %v2137
      %v2157 = vadd.f32 %v2121, %v2137
      %v2158 = vadd.f32 %v2122, %v2137
      %v2159 = vadd.f32 %v2123, %v2137
      %v2160 = vadd.f32 %v2124, %v2137
      %v2161 = vadd.f32 %v2125, %v2137
      %v2162 = vadd.f32 %v2126, %v2137
      %v2163 = vadd.f32 %v2127, %v2137
      %v2164 = vadd.f32 %v2128, %v2137
      %v2165 = vadd.f32 %v2129, %v2137
      %v2166 = vadd.f32 %v2130, %v2137
      %v2167 = vadd.f32 %v2131, %v2137
      %v2168 = vadd.f32 %v2132, %v2137
      %v2169 = vadd.f32 %v2133, %v2137
      %v2170 = vmax.f32 %v2138, 0.0
      %v2171 = vmax.f32 %v2139, 0.0
      %v2172 = vmax.f32 %v2140, 0.0
      %v2173 = vmax.f32 %v2141, 0.0
      %v2174 = vmax.f32 %v2142, 0.0
      %v2175 = vmax.f32 %v2143, 0.0
      %v2176 = vmax.f32 %v2144, 0.0
      %v2177 = vmax.f32 %v2145, 0.0
      %v2178 = vmax.f32 %v2146, 0.0
      %v2179 = vmax.f32 %v2147, 0.0
      %v2180 = vmax.f32 %v2148, 0.0
      %v2181 = vmax.f32 %v2149, 0.0
      %v2182 = vmax.f32 %v2150, 0.0
      %v2183 = vmax.f32 %v2151, 0.0
      %v2184 = vmax.f32 %v2152, 0.0
      %v2185 = vmax.f32 %v2153, 0.0
      %v2186 = vmax.f32 %v2154, 0.0
      %v2187 = vmax.f32 %v2155, 0.0
      %v2188 = vmax.f32 %v2156, 0.0
      %v2189 = vmax.f32 %v2157, 0.0
      %v2190 = vmax.f32 %v2158, 0.0
      %v2191 = vmax.f32 %v2159, 0.0
      %v2192 = vmax.f32 %v2160, 0.0
      %v2193 = vmax.f32 %v2161, 0.0
      %v2194 = vmax.f32 %v2162, 0.0
      %v2195 = vmax.f32 %v2163, 0.0
      %v2196 = vmax.f32 %v2164, 0.0
      %v2197 = vmax.f32 %v2165, 0.0
      %v2198 = vmax.f32 %v2166, 0.0
      %v2199 = vmax.f32 %v2167, 0.0
      %v2200 = vmax.f32 %v2168, 0.0
      %v2201 = vmax.f32 %v2169, 0.0
      %s2202 = scalar_lea.vmem [#allocation2], 24
      %2203 = vst.msk [vmem:[%s2202 + $0x1] sm:$0xff] %vm253, %v2170
      %2204 = vst.msk [vmem:[%s2202 + $0x9] sm:$0xff] %vm253, %v2171
      %2205 = vst.msk [vmem:[%s2202 + $0x19] sm:$0xff] %vm253, %v2172
      %2206 = vst.msk [vmem:[%s2202 + $0x21] sm:$0xff] %vm253, %v2173
      %2207 = vst.msk [vmem:[%s2202 + $0x31] sm:$0xff] %vm253, %v2174
      %2208 = vst.msk [vmem:[%s2202 + $0x39] sm:$0xff] %vm253, %v2175
      %2209 = vst.msk [vmem:[%s2202 + $0x49] sm:$0xff] %vm253, %v2176
      %2210 = vst.msk [vmem:[%s2202 + $0x51] sm:$0xff] %vm253, %v2177
      %2211 = vst.msk [vmem:[%s2202 + $0x61] sm:$0xff] %vm253, %v2178
      %2212 = vst.msk [vmem:[%s2202 + $0x69] sm:$0xff] %vm253, %v2179
      %2213 = vst.msk [vmem:[%s2202 + $0x79] sm:$0xff] %vm253, %v2180
      %2214 = vst.msk [vmem:[%s2202 + $0x81] sm:$0xff] %vm253, %v2181
      %2215 = vst.msk [vmem:[%s2202 + $0x91] sm:$0xff] %vm253, %v2182
      %2216 = vst.msk [vmem:[%s2202 + $0x99] sm:$0xff] %vm253, %v2183
      %2217 = vst.msk [vmem:[%s2202 + $0xa9] sm:$0xff] %vm253, %v2184
      %2218 = vst.msk [vmem:[%s2202 + $0xb1] sm:$0xff] %vm253, %v2185
      %2219 = vst.msk [vmem:[%s2202 + $0xc1] sm:$0xff] %vm253, %v2186
      %2220 = vst.msk [vmem:[%s2202 + $0xc9] sm:$0xff] %vm253, %v2187
      %2221 = vst.msk [vmem:[%s2202 + $0xd9] sm:$0xff] %vm253, %v2188
      %2222 = vst.msk [vmem:[%s2202 + $0xe1] sm:$0xff] %vm253, %v2189
      %2223 = vst.msk [vmem:[%s2202 + $0xf1] sm:$0xff] %vm253, %v2190
      %2224 = vst.msk [vmem:[%s2202 + $0xf9] sm:$0xff] %vm253, %v2191
      %2225 = vst.msk [vmem:[%s2202 + $0x109] sm:$0xff] %vm253, %v2192
      %2226 = vst.msk [vmem:[%s2202 + $0x111] sm:$0xff] %vm253, %v2193
      %2227 = vst.msk [vmem:[%s2202 + $0x121] sm:$0xff] %vm253, %v2194
      %2228 = vst.msk [vmem:[%s2202 + $0x129] sm:$0xff] %vm253, %v2195
      %2229 = vst.msk [vmem:[%s2202 + $0x139] sm:$0xff] %vm253, %v2196
      %2230 = vst.msk [vmem:[%s2202 + $0x141] sm:$0xff] %vm253, %v2197
      %2231 = vst.msk [vmem:[%s2202 + $0x151] sm:$0xff] %vm253, %v2198
      %2232 = vst.msk [vmem:[%s2202 + $0x159] sm:$0xff] %vm253, %v2199
      %2233 = vst.msk [vmem:[%s2202 + $0x169] sm:$0xff] %vm253, %v2200
      %2234 = vst.msk [vmem:[%s2202 + $0x171] sm:$0xff] %vm253, %v2201
      %v2235 = vld [vmem:[%s2] sm:$0xff]
      %v2236 = vld [vmem:[%s2 + $0x8] sm:$0x1]
      %v2237 = vld [vmem:[%s3] sm:$0xff]
      %v2238 = vld [vmem:[%s3 + $0x8] sm:$0x1]
      %v2239 = vld [vmem:[#allocation2] sm:$0xff]
      %v2240 = vld [vmem:[#allocation2 + $0x8] sm:$0xff]
      %v2241 = vld [vmem:[#allocation2 + $0x18] sm:$0xff]
      %v2242 = vld [vmem:[#allocation2 + $0x20] sm:$0xff]
      %v2243 = vld [vmem:[#allocation2 + $0x30] sm:$0xff]
      %v2244 = vld [vmem:[#allocation2 + $0x38] sm:$0xff]
      %v2245 = vld [vmem:[#allocation2 + $0x48] sm:$0xff]
      %v2246 = vld [vmem:[#allocation2 + $0x50] sm:$0xff]
      %v2247 = vld [vmem:[#allocation2 + $0x60] sm:$0xff]
      %v2248 = vld [vmem:[#allocation2 + $0x68] sm:$0xff]
      %v2249 = vld [vmem:[#allocation2 + $0x78] sm:$0xff]
      %v2250 = vld [vmem:[#allocation2 + $0x80] sm:$0xff]
      %v2251 = vld [vmem:[#allocation2 + $0x90] sm:$0xff]
      %v2252 = vld [vmem:[#allocation2 + $0x98] sm:$0xff]
      %v2253 = vld [vmem:[#allocation2 + $0xa8] sm:$0xff]
      %v2254 = vld [vmem:[#allocation2 + $0xb0] sm:$0xff]
      %v2255 = vld [vmem:[#allocation2 + $0xc0] sm:$0xff]
      %v2256 = vld [vmem:[#allocation2 + $0xc8] sm:$0xff]
      %v2257 = vld [vmem:[#allocation2 + $0xd8] sm:$0xff]
      %v2258 = vld [vmem:[#allocation2 + $0xe0] sm:$0xff]
      %v2259 = vld [vmem:[#allocation2 + $0xf0] sm:$0xff]
      %v2260 = vld [vmem:[#allocation2 + $0xf8] sm:$0xff]
      %v2261 = vld [vmem:[#allocation2 + $0x108] sm:$0xff]
      %v2262 = vld [vmem:[#allocation2 + $0x110] sm:$0xff]
      %v2263 = vld [vmem:[#allocation2 + $0x120] sm:$0xff]
      %v2264 = vld [vmem:[#allocation2 + $0x128] sm:$0xff]
      %v2265 = vld [vmem:[#allocation2 + $0x138] sm:$0xff]
      %v2266 = vld [vmem:[#allocation2 + $0x140] sm:$0xff]
      %v2267 = vld [vmem:[#allocation2 + $0x150] sm:$0xff]
      %v2268 = vld [vmem:[#allocation2 + $0x158] sm:$0xff]
      %v2269 = vld [vmem:[#allocation2 + $0x168] sm:$0xff]
      %v2270 = vld [vmem:[#allocation2 + $0x170] sm:$0xff]
      %2272 = vset.pattern.permute.xlu0 0
      %2273 = vperm.xlu0 %2272, %v2239
      %v2274 = vpop.permute.xlu0 %2273
      %2277 = vset.pattern.permute.xlu0 0
      %2278 = vperm.xlu0 %2277, %v2240
      %v2279 = vpop.permute.xlu0 %2278
      %2282 = vset.pattern.permute.xlu0 0
      %2283 = vperm.xlu0 %2282, %v2241
      %v2284 = vpop.permute.xlu0 %2283
      %2287 = vset.pattern.permute.xlu0 0
      %2288 = vperm.xlu0 %2287, %v2242
      %v2289 = vpop.permute.xlu0 %2288
      %2292 = vset.pattern.permute.xlu0 0
      %2293 = vperm.xlu0 %2292, %v2243
      %v2294 = vpop.permute.xlu0 %2293
      %2297 = vset.pattern.permute.xlu0 0
      %2298 = vperm.xlu0 %2297, %v2244
      %v2299 = vpop.permute.xlu0 %2298
      %2302 = vset.pattern.permute.xlu0 0
      %2303 = vperm.xlu0 %2302, %v2245
      %v2304 = vpop.permute.xlu0 %2303
      %2307 = vset.pattern.permute.xlu0 0
      %2308 = vperm.xlu0 %2307, %v2246
      %v2309 = vpop.permute.xlu0 %2308
      %2312 = vset.pattern.permute.xlu0 0
      %2313 = vperm.xlu0 %2312, %v2247
      %v2314 = vpop.permute.xlu0 %2313
      %2317 = vset.pattern.permute.xlu0 0
      %2318 = vperm.xlu0 %2317, %v2248
      %v2319 = vpop.permute.xlu0 %2318
      %2322 = vset.pattern.permute.xlu0 0
      %2323 = vperm.xlu0 %2322, %v2249
      %v2324 = vpop.permute.xlu0 %2323
      %2327 = vset.pattern.permute.xlu0 0
      %2328 = vperm.xlu0 %2327, %v2250
      %v2329 = vpop.permute.xlu0 %2328
      %2332 = vset.pattern.permute.xlu0 0
      %2333 = vperm.xlu0 %2332, %v2251
      %v2334 = vpop.permute.xlu0 %2333
      %2337 = vset.pattern.permute.xlu0 0
      %2338 = vperm.xlu0 %2337, %v2252
      %v2339 = vpop.permute.xlu0 %2338
      %2342 = vset.pattern.permute.xlu0 0
      %2343 = vperm.xlu0 %2342, %v2253
      %v2344 = vpop.permute.xlu0 %2343
      %2347 = vset.pattern.permute.xlu0 0
      %2348 = vperm.xlu0 %2347, %v2254
      %v2349 = vpop.permute.xlu0 %2348
      %2352 = vset.pattern.permute.xlu0 0
      %2353 = vperm.xlu0 %2352, %v2255
      %v2354 = vpop.permute.xlu0 %2353
      %2357 = vset.pattern.permute.xlu0 0
      %2358 = vperm.xlu0 %2357, %v2256
      %v2359 = vpop.permute.xlu0 %2358
      %2362 = vset.pattern.permute.xlu0 0
      %2363 = vperm.xlu0 %2362, %v2257
      %v2364 = vpop.permute.xlu0 %2363
      %2367 = vset.pattern.permute.xlu0 0
      %2368 = vperm.xlu0 %2367, %v2258
      %v2369 = vpop.permute.xlu0 %2368
      %2372 = vset.pattern.permute.xlu0 0
      %2373 = vperm.xlu0 %2372, %v2259
      %v2374 = vpop.permute.xlu0 %2373
      %2377 = vset.pattern.permute.xlu0 0
      %2378 = vperm.xlu0 %2377, %v2260
      %v2379 = vpop.permute.xlu0 %2378
      %2382 = vset.pattern.permute.xlu0 0
      %2383 = vperm.xlu0 %2382, %v2261
      %v2384 = vpop.permute.xlu0 %2383
      %2387 = vset.pattern.permute.xlu0 0
      %2388 = vperm.xlu0 %2387, %v2262
      %v2389 = vpop.permute.xlu0 %2388
      %2392 = vset.pattern.permute.xlu0 0
      %2393 = vperm.xlu0 %2392, %v2263
      %v2394 = vpop.permute.xlu0 %2393
      %2397 = vset.pattern.permute.xlu0 0
      %2398 = vperm.xlu0 %2397, %v2264
      %v2399 = vpop.permute.xlu0 %2398
      %2402 = vset.pattern.permute.xlu0 0
      %2403 = vperm.xlu0 %2402, %v2265
      %v2404 = vpop.permute.xlu0 %2403
      %2407 = vset.pattern.permute.xlu0 0
      %2408 = vperm.xlu0 %2407, %v2266
      %v2409 = vpop.permute.xlu0 %2408
      %2412 = vset.pattern.permute.xlu0 0
      %2413 = vperm.xlu0 %2412, %v2267
      %v2414 = vpop.permute.xlu0 %2413
      %2417 = vset.pattern.permute.xlu0 0
      %2418 = vperm.xlu0 %2417, %v2268
      %v2419 = vpop.permute.xlu0 %2418
      %2422 = vset.pattern.permute.xlu0 0
      %2423 = vperm.xlu0 %2422, %v2269
      %v2424 = vpop.permute.xlu0 %2423
      %2427 = vset.pattern.permute.xlu0 0
      %2428 = vperm.xlu0 %2427, %v2270
      %v2429 = vpop.permute.xlu0 %2428
      %v2431 = vlaneseq
      %v2432 = vshrl.u32 %v2431, 7
      %v2433 = vsub.s32 0, %v2432
      %v2434 = vrot.slane %v2235, %v2433
      %v2435 = vmul.f32 %v2274, %v2434
      %v2436 = vmul.f32 %v2279, %v2434
      %v2437 = vmul.f32 %v2284, %v2434
      %v2438 = vmul.f32 %v2289, %v2434
      %v2439 = vmul.f32 %v2294, %v2434
      %v2440 = vmul.f32 %v2299, %v2434
      %v2441 = vmul.f32 %v2304, %v2434
      %v2442 = vmul.f32 %v2309, %v2434
      %v2443 = vmul.f32 %v2314, %v2434
      %v2444 = vmul.f32 %v2319, %v2434
      %v2445 = vmul.f32 %v2324, %v2434
      %v2446 = vmul.f32 %v2329, %v2434
      %v2447 = vmul.f32 %v2334, %v2434
      %v2448 = vmul.f32 %v2339, %v2434
      %v2449 = vmul.f32 %v2344, %v2434
      %v2450 = vmul.f32 %v2349, %v2434
      %v2451 = vmul.f32 %v2354, %v2434
      %v2452 = vmul.f32 %v2359, %v2434
      %v2453 = vmul.f32 %v2364, %v2434
      %v2454 = vmul.f32 %v2369, %v2434
      %v2455 = vmul.f32 %v2374, %v2434
      %v2456 = vmul.f32 %v2379, %v2434
      %v2457 = vmul.f32 %v2384, %v2434
      %v2458 = vmul.f32 %v2389, %v2434
      %v2459 = vmul.f32 %v2394, %v2434
      %v2460 = vmul.f32 %v2399, %v2434
      %v2461 = vmul.f32 %v2404, %v2434
      %v2462 = vmul.f32 %v2409, %v2434
      %v2463 = vmul.f32 %v2414, %v2434
      %v2464 = vmul.f32 %v2419, %v2434
      %v2465 = vmul.f32 %v2424, %v2434
      %v2466 = vmul.f32 %v2429, %v2434
      %v2467 = vadd.f32 %v2435, 0.0
      %v2468 = vadd.f32 %v2436, 0.0
      %v2469 = vadd.f32 %v2437, 0.0
      %v2470 = vadd.f32 %v2438, 0.0
      %v2471 = vadd.f32 %v2439, 0.0
      %v2472 = vadd.f32 %v2440, 0.0
      %v2473 = vadd.f32 %v2441, 0.0
      %v2474 = vadd.f32 %v2442, 0.0
      %v2475 = vadd.f32 %v2443, 0.0
      %v2476 = vadd.f32 %v2444, 0.0
      %v2477 = vadd.f32 %v2445, 0.0
      %v2478 = vadd.f32 %v2446, 0.0
      %v2479 = vadd.f32 %v2447, 0.0
      %v2480 = vadd.f32 %v2448, 0.0
      %v2481 = vadd.f32 %v2449, 0.0
      %v2482 = vadd.f32 %v2450, 0.0
      %v2483 = vadd.f32 %v2451, 0.0
      %v2484 = vadd.f32 %v2452, 0.0
      %v2485 = vadd.f32 %v2453, 0.0
      %v2486 = vadd.f32 %v2454, 0.0
      %v2487 = vadd.f32 %v2455, 0.0
      %v2488 = vadd.f32 %v2456, 0.0
      %v2489 = vadd.f32 %v2457, 0.0
      %v2490 = vadd.f32 %v2458, 0.0
      %v2491 = vadd.f32 %v2459, 0.0
      %v2492 = vadd.f32 %v2460, 0.0
      %v2493 = vadd.f32 %v2461, 0.0
      %v2494 = vadd.f32 %v2462, 0.0
      %v2495 = vadd.f32 %v2463, 0.0
      %v2496 = vadd.f32 %v2464, 0.0
      %v2497 = vadd.f32 %v2465, 0.0
      %v2498 = vadd.f32 %v2466, 0.0
      %v2499 = vlaneseq
      %v2500 = vshrl.u32 %v2499, 7
      %v2501 = vsub.s32 0, %v2500
      %v2502 = vrot.slane %v2237, %v2501
      %v2503 = vmul.f32 %v2274, %v2502
      %v2504 = vmul.f32 %v2279, %v2502
      %v2505 = vmul.f32 %v2284, %v2502
      %v2506 = vmul.f32 %v2289, %v2502
      %v2507 = vmul.f32 %v2294, %v2502
      %v2508 = vmul.f32 %v2299, %v2502
      %v2509 = vmul.f32 %v2304, %v2502
      %v2510 = vmul.f32 %v2309, %v2502
      %v2511 = vmul.f32 %v2314, %v2502
      %v2512 = vmul.f32 %v2319, %v2502
      %v2513 = vmul.f32 %v2324, %v2502
      %v2514 = vmul.f32 %v2329, %v2502
      %v2515 = vmul.f32 %v2334, %v2502
      %v2516 = vmul.f32 %v2339, %v2502
      %v2517 = vmul.f32 %v2344, %v2502
      %v2518 = vmul.f32 %v2349, %v2502
      %v2519 = vmul.f32 %v2354, %v2502
      %v2520 = vmul.f32 %v2359, %v2502
      %v2521 = vmul.f32 %v2364, %v2502
      %v2522 = vmul.f32 %v2369, %v2502
      %v2523 = vmul.f32 %v2374, %v2502
      %v2524 = vmul.f32 %v2379, %v2502
      %v2525 = vmul.f32 %v2384, %v2502
      %v2526 = vmul.f32 %v2389, %v2502
      %v2527 = vmul.f32 %v2394, %v2502
      %v2528 = vmul.f32 %v2399, %v2502
      %v2529 = vmul.f32 %v2404, %v2502
      %v2530 = vmul.f32 %v2409, %v2502
      %v2531 = vmul.f32 %v2414, %v2502
      %v2532 = vmul.f32 %v2419, %v2502
      %v2533 = vmul.f32 %v2424, %v2502
      %v2534 = vmul.f32 %v2429, %v2502
      %v2535 = vadd.f32 %v2503, 0.0
      %v2536 = vadd.f32 %v2504, 0.0
      %v2537 = vadd.f32 %v2505, 0.0
      %v2538 = vadd.f32 %v2506, 0.0
      %v2539 = vadd.f32 %v2507, 0.0
      %v2540 = vadd.f32 %v2508, 0.0
      %v2541 = vadd.f32 %v2509, 0.0
      %v2542 = vadd.f32 %v2510, 0.0
      %v2543 = vadd.f32 %v2511, 0.0
      %v2544 = vadd.f32 %v2512, 0.0
      %v2545 = vadd.f32 %v2513, 0.0
      %v2546 = vadd.f32 %v2514, 0.0
      %v2547 = vadd.f32 %v2515, 0.0
      %v2548 = vadd.f32 %v2516, 0.0
      %v2549 = vadd.f32 %v2517, 0.0
      %v2550 = vadd.f32 %v2518, 0.0
      %v2551 = vadd.f32 %v2519, 0.0
      %v2552 = vadd.f32 %v2520, 0.0
      %v2553 = vadd.f32 %v2521, 0.0
      %v2554 = vadd.f32 %v2522, 0.0
      %v2555 = vadd.f32 %v2523, 0.0
      %v2556 = vadd.f32 %v2524, 0.0
      %v2557 = vadd.f32 %v2525, 0.0
      %v2558 = vadd.f32 %v2526, 0.0
      %v2559 = vadd.f32 %v2527, 0.0
      %v2560 = vadd.f32 %v2528, 0.0
      %v2561 = vadd.f32 %v2529, 0.0
      %v2562 = vadd.f32 %v2530, 0.0
      %v2563 = vadd.f32 %v2531, 0.0
      %v2564 = vadd.f32 %v2532, 0.0
      %v2565 = vadd.f32 %v2533, 0.0
      %v2566 = vadd.f32 %v2534, 0.0
      %v2567 = vld [vmem:[#allocation2 + $0x1] sm:$0xff]
      %v2568 = vld [vmem:[#allocation2 + $0x9] sm:$0xff]
      %v2569 = vld [vmem:[#allocation2 + $0x19] sm:$0xff]
      %v2570 = vld [vmem:[#allocation2 + $0x21] sm:$0xff]
      %v2571 = vld [vmem:[#allocation2 + $0x31] sm:$0xff]
      %v2572 = vld [vmem:[#allocation2 + $0x39] sm:$0xff]
      %v2573 = vld [vmem:[#allocation2 + $0x49] sm:$0xff]
      %v2574 = vld [vmem:[#allocation2 + $0x51] sm:$0xff]
      %v2575 = vld [vmem:[#allocation2 + $0x61] sm:$0xff]
      %v2576 = vld [vmem:[#allocation2 + $0x69] sm:$0xff]
      %v2577 = vld [vmem:[#allocation2 + $0x79] sm:$0xff]
      %v2578 = vld [vmem:[#allocation2 + $0x81] sm:$0xff]
      %v2579 = vld [vmem:[#allocation2 + $0x91] sm:$0xff]
      %v2580 = vld [vmem:[#allocation2 + $0x99] sm:$0xff]
      %v2581 = vld [vmem:[#allocation2 + $0xa9] sm:$0xff]
      %v2582 = vld [vmem:[#allocation2 + $0xb1] sm:$0xff]
      %v2583 = vld [vmem:[#allocation2 + $0xc1] sm:$0xff]
      %v2584 = vld [vmem:[#allocation2 + $0xc9] sm:$0xff]
      %v2585 = vld [vmem:[#allocation2 + $0xd9] sm:$0xff]
      %v2586 = vld [vmem:[#allocation2 + $0xe1] sm:$0xff]
      %v2587 = vld [vmem:[#allocation2 + $0xf1] sm:$0xff]
      %v2588 = vld [vmem:[#allocation2 + $0xf9] sm:$0xff]
      %v2589 = vld [vmem:[#allocation2 + $0x109] sm:$0xff]
      %v2590 = vld [vmem:[#allocation2 + $0x111] sm:$0xff]
      %v2591 = vld [vmem:[#allocation2 + $0x121] sm:$0xff]
      %v2592 = vld [vmem:[#allocation2 + $0x129] sm:$0xff]
      %v2593 = vld [vmem:[#allocation2 + $0x139] sm:$0xff]
      %v2594 = vld [vmem:[#allocation2 + $0x141] sm:$0xff]
      %v2595 = vld [vmem:[#allocation2 + $0x151] sm:$0xff]
      %v2596 = vld [vmem:[#allocation2 + $0x159] sm:$0xff]
      %v2597 = vld [vmem:[#allocation2 + $0x169] sm:$0xff]
      %v2598 = vld [vmem:[#allocation2 + $0x171] sm:$0xff]
      %2600 = vset.pattern.permute.xlu0 0
      %2601 = vperm.xlu0 %2600, %v2567
      %v2602 = vpop.permute.xlu0 %2601
      %2605 = vset.pattern.permute.xlu0 0
      %2606 = vperm.xlu0 %2605, %v2568
      %v2607 = vpop.permute.xlu0 %2606
      %2610 = vset.pattern.permute.xlu0 0
      %2611 = vperm.xlu0 %2610, %v2569
      %v2612 = vpop.permute.xlu0 %2611
      %2615 = vset.pattern.permute.xlu0 0
      %2616 = vperm.xlu0 %2615, %v2570
      %v2617 = vpop.permute.xlu0 %2616
      %2620 = vset.pattern.permute.xlu0 0
      %2621 = vperm.xlu0 %2620, %v2571
      %v2622 = vpop.permute.xlu0 %2621
      %2625 = vset.pattern.permute.xlu0 0
      %2626 = vperm.xlu0 %2625, %v2572
      %v2627 = vpop.permute.xlu0 %2626
      %2630 = vset.pattern.permute.xlu0 0
      %2631 = vperm.xlu0 %2630, %v2573
      %v2632 = vpop.permute.xlu0 %2631
      %2635 = vset.pattern.permute.xlu0 0
      %2636 = vperm.xlu0 %2635, %v2574
      %v2637 = vpop.permute.xlu0 %2636
      %2640 = vset.pattern.permute.xlu0 0
      %2641 = vperm.xlu0 %2640, %v2575
      %v2642 = vpop.permute.xlu0 %2641
      %2645 = vset.pattern.permute.xlu0 0
      %2646 = vperm.xlu0 %2645, %v2576
      %v2647 = vpop.permute.xlu0 %2646
      %2650 = vset.pattern.permute.xlu0 0
      %2651 = vperm.xlu0 %2650, %v2577
      %v2652 = vpop.permute.xlu0 %2651
      %2655 = vset.pattern.permute.xlu0 0
      %2656 = vperm.xlu0 %2655, %v2578
      %v2657 = vpop.permute.xlu0 %2656
      %2660 = vset.pattern.permute.xlu0 0
      %2661 = vperm.xlu0 %2660, %v2579
      %v2662 = vpop.permute.xlu0 %2661
      %2665 = vset.pattern.permute.xlu0 0
      %2666 = vperm.xlu0 %2665, %v2580
      %v2667 = vpop.permute.xlu0 %2666
      %2670 = vset.pattern.permute.xlu0 0
      %2671 = vperm.xlu0 %2670, %v2581
      %v2672 = vpop.permute.xlu0 %2671
      %2675 = vset.pattern.permute.xlu0 0
      %2676 = vperm.xlu0 %2675, %v2582
      %v2677 = vpop.permute.xlu0 %2676
      %2680 = vset.pattern.permute.xlu0 0
      %2681 = vperm.xlu0 %2680, %v2583
      %v2682 = vpop.permute.xlu0 %2681
      %2685 = vset.pattern.permute.xlu0 0
      %2686 = vperm.xlu0 %2685, %v2584
      %v2687 = vpop.permute.xlu0 %2686
      %2690 = vset.pattern.permute.xlu0 0
      %2691 = vperm.xlu0 %2690, %v2585
      %v2692 = vpop.permute.xlu0 %2691
      %2695 = vset.pattern.permute.xlu0 0
      %2696 = vperm.xlu0 %2695, %v2586
      %v2697 = vpop.permute.xlu0 %2696
      %2700 = vset.pattern.permute.xlu0 0
      %2701 = vperm.xlu0 %2700, %v2587
      %v2702 = vpop.permute.xlu0 %2701
      %2705 = vset.pattern.permute.xlu0 0
      %2706 = vperm.xlu0 %2705, %v2588
      %v2707 = vpop.permute.xlu0 %2706
      %2710 = vset.pattern.permute.xlu0 0
      %2711 = vperm.xlu0 %2710, %v2589
      %v2712 = vpop.permute.xlu0 %2711
      %2715 = vset.pattern.permute.xlu0 0
      %2716 = vperm.xlu0 %2715, %v2590
      %v2717 = vpop.permute.xlu0 %2716
      %2720 = vset.pattern.permute.xlu0 0
      %2721 = vperm.xlu0 %2720, %v2591
      %v2722 = vpop.permute.xlu0 %2721
      %2725 = vset.pattern.permute.xlu0 0
      %2726 = vperm.xlu0 %2725, %v2592
      %v2727 = vpop.permute.xlu0 %2726
      %2730 = vset.pattern.permute.xlu0 0
      %2731 = vperm.xlu0 %2730, %v2593
      %v2732 = vpop.permute.xlu0 %2731
      %2735 = vset.pattern.permute.xlu0 0
      %2736 = vperm.xlu0 %2735, %v2594
      %v2737 = vpop.permute.xlu0 %2736
      %2740 = vset.pattern.permute.xlu0 0
      %2741 = vperm.xlu0 %2740, %v2595
      %v2742 = vpop.permute.xlu0 %2741
      %2745 = vset.pattern.permute.xlu0 0
      %2746 = vperm.xlu0 %2745, %v2596
      %v2747 = vpop.permute.xlu0 %2746
      %2750 = vset.pattern.permute.xlu0 0
      %2751 = vperm.xlu0 %2750, %v2597
      %v2752 = vpop.permute.xlu0 %2751
      %2755 = vset.pattern.permute.xlu0 0
      %2756 = vperm.xlu0 %2755, %v2598
      %v2757 = vpop.permute.xlu0 %2756
      %v2759 = vlaneseq
      %v2760 = vshrl.u32 %v2759, 7
      %v2761 = vsub.s32 1, %v2760
      %v2762 = vrot.slane %v2235, %v2761
      %v2763 = vmul.f32 %v2602, %v2762
      %v2764 = vmul.f32 %v2607, %v2762
      %v2765 = vmul.f32 %v2612, %v2762
      %v2766 = vmul.f32 %v2617, %v2762
      %v2767 = vmul.f32 %v2622, %v2762
      %v2768 = vmul.f32 %v2627, %v2762
      %v2769 = vmul.f32 %v2632, %v2762
      %v2770 = vmul.f32 %v2637, %v2762
      %v2771 = vmul.f32 %v2642, %v2762
      %v2772 = vmul.f32 %v2647, %v2762
      %v2773 = vmul.f32 %v2652, %v2762
      %v2774 = vmul.f32 %v2657, %v2762
      %v2775 = vmul.f32 %v2662, %v2762
      %v2776 = vmul.f32 %v2667, %v2762
      %v2777 = vmul.f32 %v2672, %v2762
      %v2778 = vmul.f32 %v2677, %v2762
      %v2779 = vmul.f32 %v2682, %v2762
      %v2780 = vmul.f32 %v2687, %v2762
      %v2781 = vmul.f32 %v2692, %v2762
      %v2782 = vmul.f32 %v2697, %v2762
      %v2783 = vmul.f32 %v2702, %v2762
      %v2784 = vmul.f32 %v2707, %v2762
      %v2785 = vmul.f32 %v2712, %v2762
      %v2786 = vmul.f32 %v2717, %v2762
      %v2787 = vmul.f32 %v2722, %v2762
      %v2788 = vmul.f32 %v2727, %v2762
      %v2789 = vmul.f32 %v2732, %v2762
      %v2790 = vmul.f32 %v2737, %v2762
      %v2791 = vmul.f32 %v2742, %v2762
      %v2792 = vmul.f32 %v2747, %v2762
      %v2793 = vmul.f32 %v2752, %v2762
      %v2794 = vmul.f32 %v2757, %v2762
      %v2795 = vadd.f32 %v2467, %v2763
      %v2796 = vadd.f32 %v2468, %v2764
      %v2797 = vadd.f32 %v2469, %v2765
      %v2798 = vadd.f32 %v2470, %v2766
      %v2799 = vadd.f32 %v2471, %v2767
      %v2800 = vadd.f32 %v2472, %v2768
      %v2801 = vadd.f32 %v2473, %v2769
      %v2802 = vadd.f32 %v2474, %v2770
      %v2803 = vadd.f32 %v2475, %v2771
      %v2804 = vadd.f32 %v2476, %v2772
      %v2805 = vadd.f32 %v2477, %v2773
      %v2806 = vadd.f32 %v2478, %v2774
      %v2807 = vadd.f32 %v2479, %v2775
      %v2808 = vadd.f32 %v2480, %v2776
      %v2809 = vadd.f32 %v2481, %v2777
      %v2810 = vadd.f32 %v2482, %v2778
      %v2811 = vadd.f32 %v2483, %v2779
      %v2812 = vadd.f32 %v2484, %v2780
      %v2813 = vadd.f32 %v2485, %v2781
      %v2814 = vadd.f32 %v2486, %v2782
      %v2815 = vadd.f32 %v2487, %v2783
      %v2816 = vadd.f32 %v2488, %v2784
      %v2817 = vadd.f32 %v2489, %v2785
      %v2818 = vadd.f32 %v2490, %v2786
      %v2819 = vadd.f32 %v2491, %v2787
      %v2820 = vadd.f32 %v2492, %v2788
      %v2821 = vadd.f32 %v2493, %v2789
      %v2822 = vadd.f32 %v2494, %v2790
      %v2823 = vadd.f32 %v2495, %v2791
      %v2824 = vadd.f32 %v2496, %v2792
      %v2825 = vadd.f32 %v2497, %v2793
      %v2826 = vadd.f32 %v2498, %v2794
      %v2827 = vlaneseq
      %v2828 = vshrl.u32 %v2827, 7
      %v2829 = vsub.s32 1, %v2828
      %v2830 = vrot.slane %v2237, %v2829
      %v2831 = vmul.f32 %v2602, %v2830
      %v2832 = vmul.f32 %v2607, %v2830
      %v2833 = vmul.f32 %v2612, %v2830
      %v2834 = vmul.f32 %v2617, %v2830
      %v2835 = vmul.f32 %v2622, %v2830
      %v2836 = vmul.f32 %v2627, %v2830
      %v2837 = vmul.f32 %v2632, %v2830
      %v2838 = vmul.f32 %v2637, %v2830
      %v2839 = vmul.f32 %v2642, %v2830
      %v2840 = vmul.f32 %v2647, %v2830
      %v2841 = vmul.f32 %v2652, %v2830
      %v2842 = vmul.f32 %v2657, %v2830
      %v2843 = vmul.f32 %v2662, %v2830
      %v2844 = vmul.f32 %v2667, %v2830
      %v2845 = vmul.f32 %v2672, %v2830
      %v2846 = vmul.f32 %v2677, %v2830
      %v2847 = vmul.f32 %v2682, %v2830
      %v2848 = vmul.f32 %v2687, %v2830
      %v2849 = vmul.f32 %v2692, %v2830
      %v2850 = vmul.f32 %v2697, %v2830
      %v2851 = vmul.f32 %v2702, %v2830
      %v2852 = vmul.f32 %v2707, %v2830
      %v2853 = vmul.f32 %v2712, %v2830
      %v2854 = vmul.f32 %v2717, %v2830
      %v2855 = vmul.f32 %v2722, %v2830
      %v2856 = vmul.f32 %v2727, %v2830
      %v2857 = vmul.f32 %v2732, %v2830
      %v2858 = vmul.f32 %v2737, %v2830
      %v2859 = vmul.f32 %v2742, %v2830
      %v2860 = vmul.f32 %v2747, %v2830
      %v2861 = vmul.f32 %v2752, %v2830
      %v2862 = vmul.f32 %v2757, %v2830
      %v2863 = vadd.f32 %v2535, %v2831
      %v2864 = vadd.f32 %v2536, %v2832
      %v2865 = vadd.f32 %v2537, %v2833
      %v2866 = vadd.f32 %v2538, %v2834
      %v2867 = vadd.f32 %v2539, %v2835
      %v2868 = vadd.f32 %v2540, %v2836
      %v2869 = vadd.f32 %v2541, %v2837
      %v2870 = vadd.f32 %v2542, %v2838
      %v2871 = vadd.f32 %v2543, %v2839
      %v2872 = vadd.f32 %v2544, %v2840
      %v2873 = vadd.f32 %v2545, %v2841
      %v2874 = vadd.f32 %v2546, %v2842
      %v2875 = vadd.f32 %v2547, %v2843
      %v2876 = vadd.f32 %v2548, %v2844
      %v2877 = vadd.f32 %v2549, %v2845
      %v2878 = vadd.f32 %v2550, %v2846
      %v2879 = vadd.f32 %v2551, %v2847
      %v2880 = vadd.f32 %v2552, %v2848
      %v2881 = vadd.f32 %v2553, %v2849
      %v2882 = vadd.f32 %v2554, %v2850
      %v2883 = vadd.f32 %v2555, %v2851
      %v2884 = vadd.f32 %v2556, %v2852
      %v2885 = vadd.f32 %v2557, %v2853
      %v2886 = vadd.f32 %v2558, %v2854
      %v2887 = vadd.f32 %v2559, %v2855
      %v2888 = vadd.f32 %v2560, %v2856
      %v2889 = vadd.f32 %v2561, %v2857
      %v2890 = vadd.f32 %v2562, %v2858
      %v2891 = vadd.f32 %v2563, %v2859
      %v2892 = vadd.f32 %v2564, %v2860
      %v2893 = vadd.f32 %v2565, %v2861
      %v2894 = vadd.f32 %v2566, %v2862
      %v2895 = vld [vmem:[#allocation2 + $0x2] sm:$0xff]
      %v2896 = vld [vmem:[#allocation2 + $0xa] sm:$0xff]
      %v2897 = vld [vmem:[#allocation2 + $0x1a] sm:$0xff]
      %v2898 = vld [vmem:[#allocation2 + $0x22] sm:$0xff]
      %v2899 = vld [vmem:[#allocation2 + $0x32] sm:$0xff]
      %v2900 = vld [vmem:[#allocation2 + $0x3a] sm:$0xff]
      %v2901 = vld [vmem:[#allocation2 + $0x4a] sm:$0xff]
      %v2902 = vld [vmem:[#allocation2 + $0x52] sm:$0xff]
      %v2903 = vld [vmem:[#allocation2 + $0x62] sm:$0xff]
      %v2904 = vld [vmem:[#allocation2 + $0x6a] sm:$0xff]
      %v2905 = vld [vmem:[#allocation2 + $0x7a] sm:$0xff]
      %v2906 = vld [vmem:[#allocation2 + $0x82] sm:$0xff]
      %v2907 = vld [vmem:[#allocation2 + $0x92] sm:$0xff]
      %v2908 = vld [vmem:[#allocation2 + $0x9a] sm:$0xff]
      %v2909 = vld [vmem:[#allocation2 + $0xaa] sm:$0xff]
      %v2910 = vld [vmem:[#allocation2 + $0xb2] sm:$0xff]
      %v2911 = vld [vmem:[#allocation2 + $0xc2] sm:$0xff]
      %v2912 = vld [vmem:[#allocation2 + $0xca] sm:$0xff]
      %v2913 = vld [vmem:[#allocation2 + $0xda] sm:$0xff]
      %v2914 = vld [vmem:[#allocation2 + $0xe2] sm:$0xff]
      %v2915 = vld [vmem:[#allocation2 + $0xf2] sm:$0xff]
      %v2916 = vld [vmem:[#allocation2 + $0xfa] sm:$0xff]
      %v2917 = vld [vmem:[#allocation2 + $0x10a] sm:$0xff]
      %v2918 = vld [vmem:[#allocation2 + $0x112] sm:$0xff]
      %v2919 = vld [vmem:[#allocation2 + $0x122] sm:$0xff]
      %v2920 = vld [vmem:[#allocation2 + $0x12a] sm:$0xff]
      %v2921 = vld [vmem:[#allocation2 + $0x13a] sm:$0xff]
      %v2922 = vld [vmem:[#allocation2 + $0x142] sm:$0xff]
      %v2923 = vld [vmem:[#allocation2 + $0x152] sm:$0xff]
      %v2924 = vld [vmem:[#allocation2 + $0x15a] sm:$0xff]
      %v2925 = vld [vmem:[#allocation2 + $0x16a] sm:$0xff]
      %v2926 = vld [vmem:[#allocation2 + $0x172] sm:$0xff]
      %2928 = vset.pattern.permute.xlu0 0
      %2929 = vperm.xlu0 %2928, %v2895
      %v2930 = vpop.permute.xlu0 %2929
      %2933 = vset.pattern.permute.xlu0 0
      %2934 = vperm.xlu0 %2933, %v2896
      %v2935 = vpop.permute.xlu0 %2934
      %2938 = vset.pattern.permute.xlu0 0
      %2939 = vperm.xlu0 %2938, %v2897
      %v2940 = vpop.permute.xlu0 %2939
      %2943 = vset.pattern.permute.xlu0 0
      %2944 = vperm.xlu0 %2943, %v2898
      %v2945 = vpop.permute.xlu0 %2944
      %2948 = vset.pattern.permute.xlu0 0
      %2949 = vperm.xlu0 %2948, %v2899
      %v2950 = vpop.permute.xlu0 %2949
      %2953 = vset.pattern.permute.xlu0 0
      %2954 = vperm.xlu0 %2953, %v2900
      %v2955 = vpop.permute.xlu0 %2954
      %2958 = vset.pattern.permute.xlu0 0
      %2959 = vperm.xlu0 %2958, %v2901
      %v2960 = vpop.permute.xlu0 %2959
      %2963 = vset.pattern.permute.xlu0 0
      %2964 = vperm.xlu0 %2963, %v2902
      %v2965 = vpop.permute.xlu0 %2964
      %2968 = vset.pattern.permute.xlu0 0
      %2969 = vperm.xlu0 %2968, %v2903
      %v2970 = vpop.permute.xlu0 %2969
      %2973 = vset.pattern.permute.xlu0 0
      %2974 = vperm.xlu0 %2973, %v2904
      %v2975 = vpop.permute.xlu0 %2974
      %2978 = vset.pattern.permute.xlu0 0
      %2979 = vperm.xlu0 %2978, %v2905
      %v2980 = vpop.permute.xlu0 %2979
      %2983 = vset.pattern.permute.xlu0 0
      %2984 = vperm.xlu0 %2983, %v2906
      %v2985 = vpop.permute.xlu0 %2984
      %2988 = vset.pattern.permute.xlu0 0
      %2989 = vperm.xlu0 %2988, %v2907
      %v2990 = vpop.permute.xlu0 %2989
      %2993 = vset.pattern.permute.xlu0 0
      %2994 = vperm.xlu0 %2993, %v2908
      %v2995 = vpop.permute.xlu0 %2994
      %2998 = vset.pattern.permute.xlu0 0
      %2999 = vperm.xlu0 %2998, %v2909
      %v3000 = vpop.permute.xlu0 %2999
      %3003 = vset.pattern.permute.xlu0 0
      %3004 = vperm.xlu0 %3003, %v2910
      %v3005 = vpop.permute.xlu0 %3004
      %3008 = vset.pattern.permute.xlu0 0
      %3009 = vperm.xlu0 %3008, %v2911
      %v3010 = vpop.permute.xlu0 %3009
      %3013 = vset.pattern.permute.xlu0 0
      %3014 = vperm.xlu0 %3013, %v2912
      %v3015 = vpop.permute.xlu0 %3014
      %3018 = vset.pattern.permute.xlu0 0
      %3019 = vperm.xlu0 %3018, %v2913
      %v3020 = vpop.permute.xlu0 %3019
      %3023 = vset.pattern.permute.xlu0 0
      %3024 = vperm.xlu0 %3023, %v2914
      %v3025 = vpop.permute.xlu0 %3024
      %3028 = vset.pattern.permute.xlu0 0
      %3029 = vperm.xlu0 %3028, %v2915
      %v3030 = vpop.permute.xlu0 %3029
      %3033 = vset.pattern.permute.xlu0 0
      %3034 = vperm.xlu0 %3033, %v2916
      %v3035 = vpop.permute.xlu0 %3034
      %3038 = vset.pattern.permute.xlu0 0
      %3039 = vperm.xlu0 %3038, %v2917
      %v3040 = vpop.permute.xlu0 %3039
      %3043 = vset.pattern.permute.xlu0 0
      %3044 = vperm.xlu0 %3043, %v2918
      %v3045 = vpop.permute.xlu0 %3044
      %3048 = vset.pattern.permute.xlu0 0
      %3049 = vperm.xlu0 %3048, %v2919
      %v3050 = vpop.permute.xlu0 %3049
      %3053 = vset.pattern.permute.xlu0 0
      %3054 = vperm.xlu0 %3053, %v2920
      %v3055 = vpop.permute.xlu0 %3054
      %3058 = vset.pattern.permute.xlu0 0
      %3059 = vperm.xlu0 %3058, %v2921
      %v3060 = vpop.permute.xlu0 %3059
      %3063 = vset.pattern.permute.xlu0 0
      %3064 = vperm.xlu0 %3063, %v2922
      %v3065 = vpop.permute.xlu0 %3064
      %3068 = vset.pattern.permute.xlu0 0
      %3069 = vperm.xlu0 %3068, %v2923
      %v3070 = vpop.permute.xlu0 %3069
      %3073 = vset.pattern.permute.xlu0 0
      %3074 = vperm.xlu0 %3073, %v2924
      %v3075 = vpop.permute.xlu0 %3074
      %3078 = vset.pattern.permute.xlu0 0
      %3079 = vperm.xlu0 %3078, %v2925
      %v3080 = vpop.permute.xlu0 %3079
      %3083 = vset.pattern.permute.xlu0 0
      %3084 = vperm.xlu0 %3083, %v2926
      %v3085 = vpop.permute.xlu0 %3084
      %v3087 = vlaneseq
      %v3088 = vshrl.u32 %v3087, 7
      %v3089 = vsub.s32 2, %v3088
      %v3090 = vrot.slane %v2235, %v3089
      %v3091 = vmul.f32 %v2930, %v3090
      %v3092 = vmul.f32 %v2935, %v3090
      %v3093 = vmul.f32 %v2940, %v3090
      %v3094 = vmul.f32 %v2945, %v3090
      %v3095 = vmul.f32 %v2950, %v3090
      %v3096 = vmul.f32 %v2955, %v3090
      %v3097 = vmul.f32 %v2960, %v3090
      %v3098 = vmul.f32 %v2965, %v3090
      %v3099 = vmul.f32 %v2970, %v3090
      %v3100 = vmul.f32 %v2975, %v3090
      %v3101 = vmul.f32 %v2980, %v3090
      %v3102 = vmul.f32 %v2985, %v3090
      %v3103 = vmul.f32 %v2990, %v3090
      %v3104 = vmul.f32 %v2995, %v3090
      %v3105 = vmul.f32 %v3000, %v3090
      %v3106 = vmul.f32 %v3005, %v3090
      %v3107 = vmul.f32 %v3010, %v3090
      %v3108 = vmul.f32 %v3015, %v3090
      %v3109 = vmul.f32 %v3020, %v3090
      %v3110 = vmul.f32 %v3025, %v3090
      %v3111 = vmul.f32 %v3030, %v3090
      %v3112 = vmul.f32 %v3035, %v3090
      %v3113 = vmul.f32 %v3040, %v3090
      %v3114 = vmul.f32 %v3045, %v3090
      %v3115 = vmul.f32 %v3050, %v3090
      %v3116 = vmul.f32 %v3055, %v3090
      %v3117 = vmul.f32 %v3060, %v3090
      %v3118 = vmul.f32 %v3065, %v3090
      %v3119 = vmul.f32 %v3070, %v3090
      %v3120 = vmul.f32 %v3075, %v3090
      %v3121 = vmul.f32 %v3080, %v3090
      %v3122 = vmul.f32 %v3085, %v3090
      %v3123 = vadd.f32 %v2795, %v3091
      %v3124 = vadd.f32 %v2796, %v3092
      %v3125 = vadd.f32 %v2797, %v3093
      %v3126 = vadd.f32 %v2798, %v3094
      %v3127 = vadd.f32 %v2799, %v3095
      %v3128 = vadd.f32 %v2800, %v3096
      %v3129 = vadd.f32 %v2801, %v3097
      %v3130 = vadd.f32 %v2802, %v3098
      %v3131 = vadd.f32 %v2803, %v3099
      %v3132 = vadd.f32 %v2804, %v3100
      %v3133 = vadd.f32 %v2805, %v3101
      %v3134 = vadd.f32 %v2806, %v3102
      %v3135 = vadd.f32 %v2807, %v3103
      %v3136 = vadd.f32 %v2808, %v3104
      %v3137 = vadd.f32 %v2809, %v3105
      %v3138 = vadd.f32 %v2810, %v3106
      %v3139 = vadd.f32 %v2811, %v3107
      %v3140 = vadd.f32 %v2812, %v3108
      %v3141 = vadd.f32 %v2813, %v3109
      %v3142 = vadd.f32 %v2814, %v3110
      %v3143 = vadd.f32 %v2815, %v3111
      %v3144 = vadd.f32 %v2816, %v3112
      %v3145 = vadd.f32 %v2817, %v3113
      %v3146 = vadd.f32 %v2818, %v3114
      %v3147 = vadd.f32 %v2819, %v3115
      %v3148 = vadd.f32 %v2820, %v3116
      %v3149 = vadd.f32 %v2821, %v3117
      %v3150 = vadd.f32 %v2822, %v3118
      %v3151 = vadd.f32 %v2823, %v3119
      %v3152 = vadd.f32 %v2824, %v3120
      %v3153 = vadd.f32 %v2825, %v3121
      %v3154 = vadd.f32 %v2826, %v3122
      %v3155 = vlaneseq
      %v3156 = vshrl.u32 %v3155, 7
      %v3157 = vsub.s32 2, %v3156
      %v3158 = vrot.slane %v2237, %v3157
      %v3159 = vmul.f32 %v2930, %v3158
      %v3160 = vmul.f32 %v2935, %v3158
      %v3161 = vmul.f32 %v2940, %v3158
      %v3162 = vmul.f32 %v2945, %v3158
      %v3163 = vmul.f32 %v2950, %v3158
      %v3164 = vmul.f32 %v2955, %v3158
      %v3165 = vmul.f32 %v2960, %v3158
      %v3166 = vmul.f32 %v2965, %v3158
      %v3167 = vmul.f32 %v2970, %v3158
      %v3168 = vmul.f32 %v2975, %v3158
      %v3169 = vmul.f32 %v2980, %v3158
      %v3170 = vmul.f32 %v2985, %v3158
      %v3171 = vmul.f32 %v2990, %v3158
      %v3172 = vmul.f32 %v2995, %v3158
      %v3173 = vmul.f32 %v3000, %v3158
      %v3174 = vmul.f32 %v3005, %v3158
      %v3175 = vmul.f32 %v3010, %v3158
      %v3176 = vmul.f32 %v3015, %v3158
      %v3177 = vmul.f32 %v3020, %v3158
      %v3178 = vmul.f32 %v3025, %v3158
      %v3179 = vmul.f32 %v3030, %v3158
      %v3180 = vmul.f32 %v3035, %v3158
      %v3181 = vmul.f32 %v3040, %v3158
      %v3182 = vmul.f32 %v3045, %v3158
      %v3183 = vmul.f32 %v3050, %v3158
      %v3184 = vmul.f32 %v3055, %v3158
      %v3185 = vmul.f32 %v3060, %v3158
      %v3186 = vmul.f32 %v3065, %v3158
      %v3187 = vmul.f32 %v3070, %v3158
      %v3188 = vmul.f32 %v3075, %v3158
      %v3189 = vmul.f32 %v3080, %v3158
      %v3190 = vmul.f32 %v3085, %v3158
      %v3191 = vadd.f32 %v2863, %v3159
      %v3192 = vadd.f32 %v2864, %v3160
      %v3193 = vadd.f32 %v2865, %v3161
      %v3194 = vadd.f32 %v2866, %v3162
      %v3195 = vadd.f32 %v2867, %v3163
      %v3196 = vadd.f32 %v2868, %v3164
      %v3197 = vadd.f32 %v2869, %v3165
      %v3198 = vadd.f32 %v2870, %v3166
      %v3199 = vadd.f32 %v2871, %v3167
      %v3200 = vadd.f32 %v2872, %v3168
      %v3201 = vadd.f32 %v2873, %v3169
      %v3202 = vadd.f32 %v2874, %v3170
      %v3203 = vadd.f32 %v2875, %v3171
      %v3204 = vadd.f32 %v2876, %v3172
      %v3205 = vadd.f32 %v2877, %v3173
      %v3206 = vadd.f32 %v2878, %v3174
      %v3207 = vadd.f32 %v2879, %v3175
      %v3208 = vadd.f32 %v2880, %v3176
      %v3209 = vadd.f32 %v2881, %v3177
      %v3210 = vadd.f32 %v2882, %v3178
      %v3211 = vadd.f32 %v2883, %v3179
      %v3212 = vadd.f32 %v2884, %v3180
      %v3213 = vadd.f32 %v2885, %v3181
      %v3214 = vadd.f32 %v2886, %v3182
      %v3215 = vadd.f32 %v2887, %v3183
      %v3216 = vadd.f32 %v2888, %v3184
      %v3217 = vadd.f32 %v2889, %v3185
      %v3218 = vadd.f32 %v2890, %v3186
      %v3219 = vadd.f32 %v2891, %v3187
      %v3220 = vadd.f32 %v2892, %v3188
      %v3221 = vadd.f32 %v2893, %v3189
      %v3222 = vadd.f32 %v2894, %v3190
      %v3223 = vld [vmem:[%s2202] sm:$0xff]
      %v3224 = vld [vmem:[%s2202 + $0x8] sm:$0xff]
      %v3225 = vld [vmem:[%s2202 + $0x18] sm:$0xff]
      %v3226 = vld [vmem:[%s2202 + $0x20] sm:$0xff]
      %v3227 = vld [vmem:[%s2202 + $0x30] sm:$0xff]
      %v3228 = vld [vmem:[%s2202 + $0x38] sm:$0xff]
      %v3229 = vld [vmem:[%s2202 + $0x48] sm:$0xff]
      %v3230 = vld [vmem:[%s2202 + $0x50] sm:$0xff]
      %v3231 = vld [vmem:[%s2202 + $0x60] sm:$0xff]
      %v3232 = vld [vmem:[%s2202 + $0x68] sm:$0xff]
      %v3233 = vld [vmem:[%s2202 + $0x78] sm:$0xff]
      %v3234 = vld [vmem:[%s2202 + $0x80] sm:$0xff]
      %v3235 = vld [vmem:[%s2202 + $0x90] sm:$0xff]
      %v3236 = vld [vmem:[%s2202 + $0x98] sm:$0xff]
      %v3237 = vld [vmem:[%s2202 + $0xa8] sm:$0xff]
      %v3238 = vld [vmem:[%s2202 + $0xb0] sm:$0xff]
      %v3239 = vld [vmem:[%s2202 + $0xc0] sm:$0xff]
      %v3240 = vld [vmem:[%s2202 + $0xc8] sm:$0xff]
      %v3241 = vld [vmem:[%s2202 + $0xd8] sm:$0xff]
      %v3242 = vld [vmem:[%s2202 + $0xe0] sm:$0xff]
      %v3243 = vld [vmem:[%s2202 + $0xf0] sm:$0xff]
      %v3244 = vld [vmem:[%s2202 + $0xf8] sm:$0xff]
      %v3245 = vld [vmem:[%s2202 + $0x108] sm:$0xff]
      %v3246 = vld [vmem:[%s2202 + $0x110] sm:$0xff]
      %v3247 = vld [vmem:[%s2202 + $0x120] sm:$0xff]
      %v3248 = vld [vmem:[%s2202 + $0x128] sm:$0xff]
      %v3249 = vld [vmem:[%s2202 + $0x138] sm:$0xff]
      %v3250 = vld [vmem:[%s2202 + $0x140] sm:$0xff]
      %v3251 = vld [vmem:[%s2202 + $0x150] sm:$0xff]
      %v3252 = vld [vmem:[%s2202 + $0x158] sm:$0xff]
      %v3253 = vld [vmem:[%s2202 + $0x168] sm:$0xff]
      %v3254 = vld [vmem:[%s2202 + $0x170] sm:$0xff]
      %3256 = vset.pattern.permute.xlu0 0
      %3257 = vperm.xlu0 %3256, %v3223
      %v3258 = vpop.permute.xlu0 %3257
      %3261 = vset.pattern.permute.xlu0 0
      %3262 = vperm.xlu0 %3261, %v3224
      %v3263 = vpop.permute.xlu0 %3262
      %3266 = vset.pattern.permute.xlu0 0
      %3267 = vperm.xlu0 %3266, %v3225
      %v3268 = vpop.permute.xlu0 %3267
      %3271 = vset.pattern.permute.xlu0 0
      %3272 = vperm.xlu0 %3271, %v3226
      %v3273 = vpop.permute.xlu0 %3272
      %3276 = vset.pattern.permute.xlu0 0
      %3277 = vperm.xlu0 %3276, %v3227
      %v3278 = vpop.permute.xlu0 %3277
      %3281 = vset.pattern.permute.xlu0 0
      %3282 = vperm.xlu0 %3281, %v3228
      %v3283 = vpop.permute.xlu0 %3282
      %3286 = vset.pattern.permute.xlu0 0
      %3287 = vperm.xlu0 %3286, %v3229
      %v3288 = vpop.permute.xlu0 %3287
      %3291 = vset.pattern.permute.xlu0 0
      %3292 = vperm.xlu0 %3291, %v3230
      %v3293 = vpop.permute.xlu0 %3292
      %3296 = vset.pattern.permute.xlu0 0
      %3297 = vperm.xlu0 %3296, %v3231
      %v3298 = vpop.permute.xlu0 %3297
      %3301 = vset.pattern.permute.xlu0 0
      %3302 = vperm.xlu0 %3301, %v3232
      %v3303 = vpop.permute.xlu0 %3302
      %3306 = vset.pattern.permute.xlu0 0
      %3307 = vperm.xlu0 %3306, %v3233
      %v3308 = vpop.permute.xlu0 %3307
      %3311 = vset.pattern.permute.xlu0 0
      %3312 = vperm.xlu0 %3311, %v3234
      %v3313 = vpop.permute.xlu0 %3312
      %3316 = vset.pattern.permute.xlu0 0
      %3317 = vperm.xlu0 %3316, %v3235
      %v3318 = vpop.permute.xlu0 %3317
      %3321 = vset.pattern.permute.xlu0 0
      %3322 = vperm.xlu0 %3321, %v3236
      %v3323 = vpop.permute.xlu0 %3322
      %3326 = vset.pattern.permute.xlu0 0
      %3327 = vperm.xlu0 %3326, %v3237
      %v3328 = vpop.permute.xlu0 %3327
      %3331 = vset.pattern.permute.xlu0 0
      %3332 = vperm.xlu0 %3331, %v3238
      %v3333 = vpop.permute.xlu0 %3332
      %3336 = vset.pattern.permute.xlu0 0
      %3337 = vperm.xlu0 %3336, %v3239
      %v3338 = vpop.permute.xlu0 %3337
      %3341 = vset.pattern.permute.xlu0 0
      %3342 = vperm.xlu0 %3341, %v3240
      %v3343 = vpop.permute.xlu0 %3342
      %3346 = vset.pattern.permute.xlu0 0
      %3347 = vperm.xlu0 %3346, %v3241
      %v3348 = vpop.permute.xlu0 %3347
      %3351 = vset.pattern.permute.xlu0 0
      %3352 = vperm.xlu0 %3351, %v3242
      %v3353 = vpop.permute.xlu0 %3352
      %3356 = vset.pattern.permute.xlu0 0
      %3357 = vperm.xlu0 %3356, %v3243
      %v3358 = vpop.permute.xlu0 %3357
      %3361 = vset.pattern.permute.xlu0 0
      %3362 = vperm.xlu0 %3361, %v3244
      %v3363 = vpop.permute.xlu0 %3362
      %3366 = vset.pattern.permute.xlu0 0
      %3367 = vperm.xlu0 %3366, %v3245
      %v3368 = vpop.permute.xlu0 %3367
      %3371 = vset.pattern.permute.xlu0 0
      %3372 = vperm.xlu0 %3371, %v3246
      %v3373 = vpop.permute.xlu0 %3372
      %3376 = vset.pattern.permute.xlu0 0
      %3377 = vperm.xlu0 %3376, %v3247
      %v3378 = vpop.permute.xlu0 %3377
      %3381 = vset.pattern.permute.xlu0 0
      %3382 = vperm.xlu0 %3381, %v3248
      %v3383 = vpop.permute.xlu0 %3382
      %3386 = vset.pattern.permute.xlu0 0
      %3387 = vperm.xlu0 %3386, %v3249
      %v3388 = vpop.permute.xlu0 %3387
      %3391 = vset.pattern.permute.xlu0 0
      %3392 = vperm.xlu0 %3391, %v3250
      %v3393 = vpop.permute.xlu0 %3392
      %3396 = vset.pattern.permute.xlu0 0
      %3397 = vperm.xlu0 %3396, %v3251
      %v3398 = vpop.permute.xlu0 %3397
      %3401 = vset.pattern.permute.xlu0 0
      %3402 = vperm.xlu0 %3401, %v3252
      %v3403 = vpop.permute.xlu0 %3402
      %3406 = vset.pattern.permute.xlu0 0
      %3407 = vperm.xlu0 %3406, %v3253
      %v3408 = vpop.permute.xlu0 %3407
      %3411 = vset.pattern.permute.xlu0 0
      %3412 = vperm.xlu0 %3411, %v3254
      %v3413 = vpop.permute.xlu0 %3412
      %v3415 = vlaneseq
      %v3416 = vshrl.u32 %v3415, 7
      %v3417 = vsub.s32 3, %v3416
      %v3418 = vrot.slane %v2235, %v3417
      %v3419 = vmul.f32 %v3258, %v3418
      %v3420 = vmul.f32 %v3263, %v3418
      %v3421 = vmul.f32 %v3268, %v3418
      %v3422 = vmul.f32 %v3273, %v3418
      %v3423 = vmul.f32 %v3278, %v3418
      %v3424 = vmul.f32 %v3283, %v3418
      %v3425 = vmul.f32 %v3288, %v3418
      %v3426 = vmul.f32 %v3293, %v3418
      %v3427 = vmul.f32 %v3298, %v3418
      %v3428 = vmul.f32 %v3303, %v3418
      %v3429 = vmul.f32 %v3308, %v3418
      %v3430 = vmul.f32 %v3313, %v3418
      %v3431 = vmul.f32 %v3318, %v3418
      %v3432 = vmul.f32 %v3323, %v3418
      %v3433 = vmul.f32 %v3328, %v3418
      %v3434 = vmul.f32 %v3333, %v3418
      %v3435 = vmul.f32 %v3338, %v3418
      %v3436 = vmul.f32 %v3343, %v3418
      %v3437 = vmul.f32 %v3348, %v3418
      %v3438 = vmul.f32 %v3353, %v3418
      %v3439 = vmul.f32 %v3358, %v3418
      %v3440 = vmul.f32 %v3363, %v3418
      %v3441 = vmul.f32 %v3368, %v3418
      %v3442 = vmul.f32 %v3373, %v3418
      %v3443 = vmul.f32 %v3378, %v3418
      %v3444 = vmul.f32 %v3383, %v3418
      %v3445 = vmul.f32 %v3388, %v3418
      %v3446 = vmul.f32 %v3393, %v3418
      %v3447 = vmul.f32 %v3398, %v3418
      %v3448 = vmul.f32 %v3403, %v3418
      %v3449 = vmul.f32 %v3408, %v3418
      %v3450 = vmul.f32 %v3413, %v3418
      %v3451 = vadd.f32 %v3123, %v3419
      %v3452 = vadd.f32 %v3124, %v3420
      %v3453 = vadd.f32 %v3125, %v3421
      %v3454 = vadd.f32 %v3126, %v3422
      %v3455 = vadd.f32 %v3127, %v3423
      %v3456 = vadd.f32 %v3128, %v3424
      %v3457 = vadd.f32 %v3129, %v3425
      %v3458 = vadd.f32 %v3130, %v3426
      %v3459 = vadd.f32 %v3131, %v3427
      %v3460 = vadd.f32 %v3132, %v3428
      %v3461 = vadd.f32 %v3133, %v3429
      %v3462 = vadd.f32 %v3134, %v3430
      %v3463 = vadd.f32 %v3135, %v3431
      %v3464 = vadd.f32 %v3136, %v3432
      %v3465 = vadd.f32 %v3137, %v3433
      %v3466 = vadd.f32 %v3138, %v3434
      %v3467 = vadd.f32 %v3139, %v3435
      %v3468 = vadd.f32 %v3140, %v3436
      %v3469 = vadd.f32 %v3141, %v3437
      %v3470 = vadd.f32 %v3142, %v3438
      %v3471 = vadd.f32 %v3143, %v3439
      %v3472 = vadd.f32 %v3144, %v3440
      %v3473 = vadd.f32 %v3145, %v3441
      %v3474 = vadd.f32 %v3146, %v3442
      %v3475 = vadd.f32 %v3147, %v3443
      %v3476 = vadd.f32 %v3148, %v3444
      %v3477 = vadd.f32 %v3149, %v3445
      %v3478 = vadd.f32 %v3150, %v3446
      %v3479 = vadd.f32 %v3151, %v3447
      %v3480 = vadd.f32 %v3152, %v3448
      %v3481 = vadd.f32 %v3153, %v3449
      %v3482 = vadd.f32 %v3154, %v3450
      %v3483 = vlaneseq
      %v3484 = vshrl.u32 %v3483, 7
      %v3485 = vsub.s32 3, %v3484
      %v3486 = vrot.slane %v2237, %v3485
      %v3487 = vmul.f32 %v3258, %v3486
      %v3488 = vmul.f32 %v3263, %v3486
      %v3489 = vmul.f32 %v3268, %v3486
      %v3490 = vmul.f32 %v3273, %v3486
      %v3491 = vmul.f32 %v3278, %v3486
      %v3492 = vmul.f32 %v3283, %v3486
      %v3493 = vmul.f32 %v3288, %v3486
      %v3494 = vmul.f32 %v3293, %v3486
      %v3495 = vmul.f32 %v3298, %v3486
      %v3496 = vmul.f32 %v3303, %v3486
      %v3497 = vmul.f32 %v3308, %v3486
      %v3498 = vmul.f32 %v3313, %v3486
      %v3499 = vmul.f32 %v3318, %v3486
      %v3500 = vmul.f32 %v3323, %v3486
      %v3501 = vmul.f32 %v3328, %v3486
      %v3502 = vmul.f32 %v3333, %v3486
      %v3503 = vmul.f32 %v3338, %v3486
      %v3504 = vmul.f32 %v3343, %v3486
      %v3505 = vmul.f32 %v3348, %v3486
      %v3506 = vmul.f32 %v3353, %v3486
      %v3507 = vmul.f32 %v3358, %v3486
      %v3508 = vmul.f32 %v3363, %v3486
      %v3509 = vmul.f32 %v3368, %v3486
      %v3510 = vmul.f32 %v3373, %v3486
      %v3511 = vmul.f32 %v3378, %v3486
      %v3512 = vmul.f32 %v3383, %v3486
      %v3513 = vmul.f32 %v3388, %v3486
      %v3514 = vmul.f32 %v3393, %v3486
      %v3515 = vmul.f32 %v3398, %v3486
      %v3516 = vmul.f32 %v3403, %v3486
      %v3517 = vmul.f32 %v3408, %v3486
      %v3518 = vmul.f32 %v3413, %v3486
      %v3519 = vadd.f32 %v3191, %v3487
      %v3520 = vadd.f32 %v3192, %v3488
      %v3521 = vadd.f32 %v3193, %v3489
      %v3522 = vadd.f32 %v3194, %v3490
      %v3523 = vadd.f32 %v3195, %v3491
      %v3524 = vadd.f32 %v3196, %v3492
      %v3525 = vadd.f32 %v3197, %v3493
      %v3526 = vadd.f32 %v3198, %v3494
      %v3527 = vadd.f32 %v3199, %v3495
      %v3528 = vadd.f32 %v3200, %v3496
      %v3529 = vadd.f32 %v3201, %v3497
      %v3530 = vadd.f32 %v3202, %v3498
      %v3531 = vadd.f32 %v3203, %v3499
      %v3532 = vadd.f32 %v3204, %v3500
      %v3533 = vadd.f32 %v3205, %v3501
      %v3534 = vadd.f32 %v3206, %v3502
      %v3535 = vadd.f32 %v3207, %v3503
      %v3536 = vadd.f32 %v3208, %v3504
      %v3537 = vadd.f32 %v3209, %v3505
      %v3538 = vadd.f32 %v3210, %v3506
      %v3539 = vadd.f32 %v3211, %v3507
      %v3540 = vadd.f32 %v3212, %v3508
      %v3541 = vadd.f32 %v3213, %v3509
      %v3542 = vadd.f32 %v3214, %v3510
      %v3543 = vadd.f32 %v3215, %v3511
      %v3544 = vadd.f32 %v3216, %v3512
      %v3545 = vadd.f32 %v3217, %v3513
      %v3546 = vadd.f32 %v3218, %v3514
      %v3547 = vadd.f32 %v3219, %v3515
      %v3548 = vadd.f32 %v3220, %v3516
      %v3549 = vadd.f32 %v3221, %v3517
      %v3550 = vadd.f32 %v3222, %v3518
      %v3551 = vld [vmem:[%s2202 + $0x1] sm:$0xff]
      %v3552 = vld [vmem:[%s2202 + $0x9] sm:$0xff]
      %v3553 = vld [vmem:[%s2202 + $0x19] sm:$0xff]
      %v3554 = vld [vmem:[%s2202 + $0x21] sm:$0xff]
      %v3555 = vld [vmem:[%s2202 + $0x31] sm:$0xff]
      %v3556 = vld [vmem:[%s2202 + $0x39] sm:$0xff]
      %v3557 = vld [vmem:[%s2202 + $0x49] sm:$0xff]
      %v3558 = vld [vmem:[%s2202 + $0x51] sm:$0xff]
      %v3559 = vld [vmem:[%s2202 + $0x61] sm:$0xff]
      %v3560 = vld [vmem:[%s2202 + $0x69] sm:$0xff]
      %v3561 = vld [vmem:[%s2202 + $0x79] sm:$0xff]
      %v3562 = vld [vmem:[%s2202 + $0x81] sm:$0xff]
      %v3563 = vld [vmem:[%s2202 + $0x91] sm:$0xff]
      %v3564 = vld [vmem:[%s2202 + $0x99] sm:$0xff]
      %v3565 = vld [vmem:[%s2202 + $0xa9] sm:$0xff]
      %v3566 = vld [vmem:[%s2202 + $0xb1] sm:$0xff]
      %v3567 = vld [vmem:[%s2202 + $0xc1] sm:$0xff]
      %v3568 = vld [vmem:[%s2202 + $0xc9] sm:$0xff]
      %v3569 = vld [vmem:[%s2202 + $0xd9] sm:$0xff]
      %v3570 = vld [vmem:[%s2202 + $0xe1] sm:$0xff]
      %v3571 = vld [vmem:[%s2202 + $0xf1] sm:$0xff]
      %v3572 = vld [vmem:[%s2202 + $0xf9] sm:$0xff]
      %v3573 = vld [vmem:[%s2202 + $0x109] sm:$0xff]
      %v3574 = vld [vmem:[%s2202 + $0x111] sm:$0xff]
      %v3575 = vld [vmem:[%s2202 + $0x121] sm:$0xff]
      %v3576 = vld [vmem:[%s2202 + $0x129] sm:$0xff]
      %v3577 = vld [vmem:[%s2202 + $0x139] sm:$0xff]
      %v3578 = vld [vmem:[%s2202 + $0x141] sm:$0xff]
      %v3579 = vld [vmem:[%s2202 + $0x151] sm:$0xff]
      %v3580 = vld [vmem:[%s2202 + $0x159] sm:$0xff]
      %v3581 = vld [vmem:[%s2202 + $0x169] sm:$0xff]
      %v3582 = vld [vmem:[%s2202 + $0x171] sm:$0xff]
      %3584 = vset.pattern.permute.xlu0 0
      %3585 = vperm.xlu0 %3584, %v3551
      %v3586 = vpop.permute.xlu0 %3585
      %3589 = vset.pattern.permute.xlu0 0
      %3590 = vperm.xlu0 %3589, %v3552
      %v3591 = vpop.permute.xlu0 %3590
      %3594 = vset.pattern.permute.xlu0 0
      %3595 = vperm.xlu0 %3594, %v3553
      %v3596 = vpop.permute.xlu0 %3595
      %3599 = vset.pattern.permute.xlu0 0
      %3600 = vperm.xlu0 %3599, %v3554
      %v3601 = vpop.permute.xlu0 %3600
      %3604 = vset.pattern.permute.xlu0 0
      %3605 = vperm.xlu0 %3604, %v3555
      %v3606 = vpop.permute.xlu0 %3605
      %3609 = vset.pattern.permute.xlu0 0
      %3610 = vperm.xlu0 %3609, %v3556
      %v3611 = vpop.permute.xlu0 %3610
      %3614 = vset.pattern.permute.xlu0 0
      %3615 = vperm.xlu0 %3614, %v3557
      %v3616 = vpop.permute.xlu0 %3615
      %3619 = vset.pattern.permute.xlu0 0
      %3620 = vperm.xlu0 %3619, %v3558
      %v3621 = vpop.permute.xlu0 %3620
      %3624 = vset.pattern.permute.xlu0 0
      %3625 = vperm.xlu0 %3624, %v3559
      %v3626 = vpop.permute.xlu0 %3625
      %3629 = vset.pattern.permute.xlu0 0
      %3630 = vperm.xlu0 %3629, %v3560
      %v3631 = vpop.permute.xlu0 %3630
      %3634 = vset.pattern.permute.xlu0 0
      %3635 = vperm.xlu0 %3634, %v3561
      %v3636 = vpop.permute.xlu0 %3635
      %3639 = vset.pattern.permute.xlu0 0
      %3640 = vperm.xlu0 %3639, %v3562
      %v3641 = vpop.permute.xlu0 %3640
      %3644 = vset.pattern.permute.xlu0 0
      %3645 = vperm.xlu0 %3644, %v3563
      %v3646 = vpop.permute.xlu0 %3645
      %3649 = vset.pattern.permute.xlu0 0
      %3650 = vperm.xlu0 %3649, %v3564
      %v3651 = vpop.permute.xlu0 %3650
      %3654 = vset.pattern.permute.xlu0 0
      %3655 = vperm.xlu0 %3654, %v3565
      %v3656 = vpop.permute.xlu0 %3655
      %3659 = vset.pattern.permute.xlu0 0
      %3660 = vperm.xlu0 %3659, %v3566
      %v3661 = vpop.permute.xlu0 %3660
      %3664 = vset.pattern.permute.xlu0 0
      %3665 = vperm.xlu0 %3664, %v3567
      %v3666 = vpop.permute.xlu0 %3665
      %3669 = vset.pattern.permute.xlu0 0
      %3670 = vperm.xlu0 %3669, %v3568
      %v3671 = vpop.permute.xlu0 %3670
      %3674 = vset.pattern.permute.xlu0 0
      %3675 = vperm.xlu0 %3674, %v3569
      %v3676 = vpop.permute.xlu0 %3675
      %3679 = vset.pattern.permute.xlu0 0
      %3680 = vperm.xlu0 %3679, %v3570
      %v3681 = vpop.permute.xlu0 %3680
      %3684 = vset.pattern.permute.xlu0 0
      %3685 = vperm.xlu0 %3684, %v3571
      %v3686 = vpop.permute.xlu0 %3685
      %3689 = vset.pattern.permute.xlu0 0
      %3690 = vperm.xlu0 %3689, %v3572
      %v3691 = vpop.permute.xlu0 %3690
      %3694 = vset.pattern.permute.xlu0 0
      %3695 = vperm.xlu0 %3694, %v3573
      %v3696 = vpop.permute.xlu0 %3695
      %3699 = vset.pattern.permute.xlu0 0
      %3700 = vperm.xlu0 %3699, %v3574
      %v3701 = vpop.permute.xlu0 %3700
      %3704 = vset.pattern.permute.xlu0 0
      %3705 = vperm.xlu0 %3704, %v3575
      %v3706 = vpop.permute.xlu0 %3705
      %3709 = vset.pattern.permute.xlu0 0
      %3710 = vperm.xlu0 %3709, %v3576
      %v3711 = vpop.permute.xlu0 %3710
      %3714 = vset.pattern.permute.xlu0 0
      %3715 = vperm.xlu0 %3714, %v3577
      %v3716 = vpop.permute.xlu0 %3715
      %3719 = vset.pattern.permute.xlu0 0
      %3720 = vperm.xlu0 %3719, %v3578
      %v3721 = vpop.permute.xlu0 %3720
      %3724 = vset.pattern.permute.xlu0 0
      %3725 = vperm.xlu0 %3724, %v3579
      %v3726 = vpop.permute.xlu0 %3725
      %3729 = vset.pattern.permute.xlu0 0
      %3730 = vperm.xlu0 %3729, %v3580
      %v3731 = vpop.permute.xlu0 %3730
      %3734 = vset.pattern.permute.xlu0 0
      %3735 = vperm.xlu0 %3734, %v3581
      %v3736 = vpop.permute.xlu0 %3735
      %3739 = vset.pattern.permute.xlu0 0
      %3740 = vperm.xlu0 %3739, %v3582
      %v3741 = vpop.permute.xlu0 %3740
      %v3743 = vlaneseq
      %v3744 = vshrl.u32 %v3743, 7
      %v3745 = vsub.s32 4, %v3744
      %v3746 = vrot.slane %v2235, %v3745
      %v3747 = vmul.f32 %v3586, %v3746
      %v3748 = vmul.f32 %v3591, %v3746
      %v3749 = vmul.f32 %v3596, %v3746
      %v3750 = vmul.f32 %v3601, %v3746
      %v3751 = vmul.f32 %v3606, %v3746
      %v3752 = vmul.f32 %v3611, %v3746
      %v3753 = vmul.f32 %v3616, %v3746
      %v3754 = vmul.f32 %v3621, %v3746
      %v3755 = vmul.f32 %v3626, %v3746
      %v3756 = vmul.f32 %v3631, %v3746
      %v3757 = vmul.f32 %v3636, %v3746
      %v3758 = vmul.f32 %v3641, %v3746
      %v3759 = vmul.f32 %v3646, %v3746
      %v3760 = vmul.f32 %v3651, %v3746
      %v3761 = vmul.f32 %v3656, %v3746
      %v3762 = vmul.f32 %v3661, %v3746
      %v3763 = vmul.f32 %v3666, %v3746
      %v3764 = vmul.f32 %v3671, %v3746
      %v3765 = vmul.f32 %v3676, %v3746
      %v3766 = vmul.f32 %v3681, %v3746
      %v3767 = vmul.f32 %v3686, %v3746
      %v3768 = vmul.f32 %v3691, %v3746
      %v3769 = vmul.f32 %v3696, %v3746
      %v3770 = vmul.f32 %v3701, %v3746
      %v3771 = vmul.f32 %v3706, %v3746
      %v3772 = vmul.f32 %v3711, %v3746
      %v3773 = vmul.f32 %v3716, %v3746
      %v3774 = vmul.f32 %v3721, %v3746
      %v3775 = vmul.f32 %v3726, %v3746
      %v3776 = vmul.f32 %v3731, %v3746
      %v3777 = vmul.f32 %v3736, %v3746
      %v3778 = vmul.f32 %v3741, %v3746
      %v3779 = vadd.f32 %v3451, %v3747
      %v3780 = vadd.f32 %v3452, %v3748
      %v3781 = vadd.f32 %v3453, %v3749
      %v3782 = vadd.f32 %v3454, %v3750
      %v3783 = vadd.f32 %v3455, %v3751
      %v3784 = vadd.f32 %v3456, %v3752
      %v3785 = vadd.f32 %v3457, %v3753
      %v3786 = vadd.f32 %v3458, %v3754
      %v3787 = vadd.f32 %v3459, %v3755
      %v3788 = vadd.f32 %v3460, %v3756
      %v3789 = vadd.f32 %v3461, %v3757
      %v3790 = vadd.f32 %v3462, %v3758
      %v3791 = vadd.f32 %v3463, %v3759
      %v3792 = vadd.f32 %v3464, %v3760
      %v3793 = vadd.f32 %v3465, %v3761
      %v3794 = vadd.f32 %v3466, %v3762
      %v3795 = vadd.f32 %v3467, %v3763
      %v3796 = vadd.f32 %v3468, %v3764
      %v3797 = vadd.f32 %v3469, %v3765
      %v3798 = vadd.f32 %v3470, %v3766
      %v3799 = vadd.f32 %v3471, %v3767
      %v3800 = vadd.f32 %v3472, %v3768
      %v3801 = vadd.f32 %v3473, %v3769
      %v3802 = vadd.f32 %v3474, %v3770
      %v3803 = vadd.f32 %v3475, %v3771
      %v3804 = vadd.f32 %v3476, %v3772
      %v3805 = vadd.f32 %v3477, %v3773
      %v3806 = vadd.f32 %v3478, %v3774
      %v3807 = vadd.f32 %v3479, %v3775
      %v3808 = vadd.f32 %v3480, %v3776
      %v3809 = vadd.f32 %v3481, %v3777
      %v3810 = vadd.f32 %v3482, %v3778
      %v3811 = vlaneseq
      %v3812 = vshrl.u32 %v3811, 7
      %v3813 = vsub.s32 4, %v3812
      %v3814 = vrot.slane %v2237, %v3813
      %v3815 = vmul.f32 %v3586, %v3814
      %v3816 = vmul.f32 %v3591, %v3814
      %v3817 = vmul.f32 %v3596, %v3814
      %v3818 = vmul.f32 %v3601, %v3814
      %v3819 = vmul.f32 %v3606, %v3814
      %v3820 = vmul.f32 %v3611, %v3814
      %v3821 = vmul.f32 %v3616, %v3814
      %v3822 = vmul.f32 %v3621, %v3814
      %v3823 = vmul.f32 %v3626, %v3814
      %v3824 = vmul.f32 %v3631, %v3814
      %v3825 = vmul.f32 %v3636, %v3814
      %v3826 = vmul.f32 %v3641, %v3814
      %v3827 = vmul.f32 %v3646, %v3814
      %v3828 = vmul.f32 %v3651, %v3814
      %v3829 = vmul.f32 %v3656, %v3814
      %v3830 = vmul.f32 %v3661, %v3814
      %v3831 = vmul.f32 %v3666, %v3814
      %v3832 = vmul.f32 %v3671, %v3814
      %v3833 = vmul.f32 %v3676, %v3814
      %v3834 = vmul.f32 %v3681, %v3814
      %v3835 = vmul.f32 %v3686, %v3814
      %v3836 = vmul.f32 %v3691, %v3814
      %v3837 = vmul.f32 %v3696, %v3814
      %v3838 = vmul.f32 %v3701, %v3814
      %v3839 = vmul.f32 %v3706, %v3814
      %v3840 = vmul.f32 %v3711, %v3814
      %v3841 = vmul.f32 %v3716, %v3814
      %v3842 = vmul.f32 %v3721, %v3814
      %v3843 = vmul.f32 %v3726, %v3814
      %v3844 = vmul.f32 %v3731, %v3814
      %v3845 = vmul.f32 %v3736, %v3814
      %v3846 = vmul.f32 %v3741, %v3814
      %v3847 = vadd.f32 %v3519, %v3815
      %v3848 = vadd.f32 %v3520, %v3816
      %v3849 = vadd.f32 %v3521, %v3817
      %v3850 = vadd.f32 %v3522, %v3818
      %v3851 = vadd.f32 %v3523, %v3819
      %v3852 = vadd.f32 %v3524, %v3820
      %v3853 = vadd.f32 %v3525, %v3821
      %v3854 = vadd.f32 %v3526, %v3822
      %v3855 = vadd.f32 %v3527, %v3823
      %v3856 = vadd.f32 %v3528, %v3824
      %v3857 = vadd.f32 %v3529, %v3825
      %v3858 = vadd.f32 %v3530, %v3826
      %v3859 = vadd.f32 %v3531, %v3827
      %v3860 = vadd.f32 %v3532, %v3828
      %v3861 = vadd.f32 %v3533, %v3829
      %v3862 = vadd.f32 %v3534, %v3830
      %v3863 = vadd.f32 %v3535, %v3831
      %v3864 = vadd.f32 %v3536, %v3832
      %v3865 = vadd.f32 %v3537, %v3833
      %v3866 = vadd.f32 %v3538, %v3834
      %v3867 = vadd.f32 %v3539, %v3835
      %v3868 = vadd.f32 %v3540, %v3836
      %v3869 = vadd.f32 %v3541, %v3837
      %v3870 = vadd.f32 %v3542, %v3838
      %v3871 = vadd.f32 %v3543, %v3839
      %v3872 = vadd.f32 %v3544, %v3840
      %v3873 = vadd.f32 %v3545, %v3841
      %v3874 = vadd.f32 %v3546, %v3842
      %v3875 = vadd.f32 %v3547, %v3843
      %v3876 = vadd.f32 %v3548, %v3844
      %v3877 = vadd.f32 %v3549, %v3845
      %v3878 = vadd.f32 %v3550, %v3846
      %v3879 = vld [vmem:[%s2202 + $0x2] sm:$0xff]
      %v3880 = vld [vmem:[%s2202 + $0xa] sm:$0xff]
      %v3881 = vld [vmem:[%s2202 + $0x1a] sm:$0xff]
      %v3882 = vld [vmem:[%s2202 + $0x22] sm:$0xff]
      %v3883 = vld [vmem:[%s2202 + $0x32] sm:$0xff]
      %v3884 = vld [vmem:[%s2202 + $0x3a] sm:$0xff]
      %v3885 = vld [vmem:[%s2202 + $0x4a] sm:$0xff]
      %v3886 = vld [vmem:[%s2202 + $0x52] sm:$0xff]
      %v3887 = vld [vmem:[%s2202 + $0x62] sm:$0xff]
      %v3888 = vld [vmem:[%s2202 + $0x6a] sm:$0xff]
      %v3889 = vld [vmem:[%s2202 + $0x7a] sm:$0xff]
      %v3890 = vld [vmem:[%s2202 + $0x82] sm:$0xff]
      %v3891 = vld [vmem:[%s2202 + $0x92] sm:$0xff]
      %v3892 = vld [vmem:[%s2202 + $0x9a] sm:$0xff]
      %v3893 = vld [vmem:[%s2202 + $0xaa] sm:$0xff]
      %v3894 = vld [vmem:[%s2202 + $0xb2] sm:$0xff]
      %v3895 = vld [vmem:[%s2202 + $0xc2] sm:$0xff]
      %v3896 = vld [vmem:[%s2202 + $0xca] sm:$0xff]
      %v3897 = vld [vmem:[%s2202 + $0xda] sm:$0xff]
      %v3898 = vld [vmem:[%s2202 + $0xe2] sm:$0xff]
      %v3899 = vld [vmem:[%s2202 + $0xf2] sm:$0xff]
      %v3900 = vld [vmem:[%s2202 + $0xfa] sm:$0xff]
      %v3901 = vld [vmem:[%s2202 + $0x10a] sm:$0xff]
      %v3902 = vld [vmem:[%s2202 + $0x112] sm:$0xff]
      %v3903 = vld [vmem:[%s2202 + $0x122] sm:$0xff]
      %v3904 = vld [vmem:[%s2202 + $0x12a] sm:$0xff]
      %v3905 = vld [vmem:[%s2202 + $0x13a] sm:$0xff]
      %v3906 = vld [vmem:[%s2202 + $0x142] sm:$0xff]
      %v3907 = vld [vmem:[%s2202 + $0x152] sm:$0xff]
      %v3908 = vld [vmem:[%s2202 + $0x15a] sm:$0xff]
      %v3909 = vld [vmem:[%s2202 + $0x16a] sm:$0xff]
      %v3910 = vld [vmem:[%s2202 + $0x172] sm:$0xff]
      %3912 = vset.pattern.permute.xlu0 0
      %3913 = vperm.xlu0 %3912, %v3879
      %v3914 = vpop.permute.xlu0 %3913
      %3917 = vset.pattern.permute.xlu0 0
      %3918 = vperm.xlu0 %3917, %v3880
      %v3919 = vpop.permute.xlu0 %3918
      %3922 = vset.pattern.permute.xlu0 0
      %3923 = vperm.xlu0 %3922, %v3881
      %v3924 = vpop.permute.xlu0 %3923
      %3927 = vset.pattern.permute.xlu0 0
      %3928 = vperm.xlu0 %3927, %v3882
      %v3929 = vpop.permute.xlu0 %3928
      %3932 = vset.pattern.permute.xlu0 0
      %3933 = vperm.xlu0 %3932, %v3883
      %v3934 = vpop.permute.xlu0 %3933
      %3937 = vset.pattern.permute.xlu0 0
      %3938 = vperm.xlu0 %3937, %v3884
      %v3939 = vpop.permute.xlu0 %3938
      %3942 = vset.pattern.permute.xlu0 0
      %3943 = vperm.xlu0 %3942, %v3885
      %v3944 = vpop.permute.xlu0 %3943
      %3947 = vset.pattern.permute.xlu0 0
      %3948 = vperm.xlu0 %3947, %v3886
      %v3949 = vpop.permute.xlu0 %3948
      %3952 = vset.pattern.permute.xlu0 0
      %3953 = vperm.xlu0 %3952, %v3887
      %v3954 = vpop.permute.xlu0 %3953
      %3957 = vset.pattern.permute.xlu0 0
      %3958 = vperm.xlu0 %3957, %v3888
      %v3959 = vpop.permute.xlu0 %3958
      %3962 = vset.pattern.permute.xlu0 0
      %3963 = vperm.xlu0 %3962, %v3889
      %v3964 = vpop.permute.xlu0 %3963
      %3967 = vset.pattern.permute.xlu0 0
      %3968 = vperm.xlu0 %3967, %v3890
      %v3969 = vpop.permute.xlu0 %3968
      %3972 = vset.pattern.permute.xlu0 0
      %3973 = vperm.xlu0 %3972, %v3891
      %v3974 = vpop.permute.xlu0 %3973
      %3977 = vset.pattern.permute.xlu0 0
      %3978 = vperm.xlu0 %3977, %v3892
      %v3979 = vpop.permute.xlu0 %3978
      %3982 = vset.pattern.permute.xlu0 0
      %3983 = vperm.xlu0 %3982, %v3893
      %v3984 = vpop.permute.xlu0 %3983
      %3987 = vset.pattern.permute.xlu0 0
      %3988 = vperm.xlu0 %3987, %v3894
      %v3989 = vpop.permute.xlu0 %3988
      %3992 = vset.pattern.permute.xlu0 0
      %3993 = vperm.xlu0 %3992, %v3895
      %v3994 = vpop.permute.xlu0 %3993
      %3997 = vset.pattern.permute.xlu0 0
      %3998 = vperm.xlu0 %3997, %v3896
      %v3999 = vpop.permute.xlu0 %3998
      %4002 = vset.pattern.permute.xlu0 0
      %4003 = vperm.xlu0 %4002, %v3897
      %v4004 = vpop.permute.xlu0 %4003
      %4007 = vset.pattern.permute.xlu0 0
      %4008 = vperm.xlu0 %4007, %v3898
      %v4009 = vpop.permute.xlu0 %4008
      %4012 = vset.pattern.permute.xlu0 0
      %4013 = vperm.xlu0 %4012, %v3899
      %v4014 = vpop.permute.xlu0 %4013
      %4017 = vset.pattern.permute.xlu0 0
      %4018 = vperm.xlu0 %4017, %v3900
      %v4019 = vpop.permute.xlu0 %4018
      %4022 = vset.pattern.permute.xlu0 0
      %4023 = vperm.xlu0 %4022, %v3901
      %v4024 = vpop.permute.xlu0 %4023
      %4027 = vset.pattern.permute.xlu0 0
      %4028 = vperm.xlu0 %4027, %v3902
      %v4029 = vpop.permute.xlu0 %4028
      %4032 = vset.pattern.permute.xlu0 0
      %4033 = vperm.xlu0 %4032, %v3903
      %v4034 = vpop.permute.xlu0 %4033
      %4037 = vset.pattern.permute.xlu0 0
      %4038 = vperm.xlu0 %4037, %v3904
      %v4039 = vpop.permute.xlu0 %4038
      %4042 = vset.pattern.permute.xlu0 0
      %4043 = vperm.xlu0 %4042, %v3905
      %v4044 = vpop.permute.xlu0 %4043
      %4047 = vset.pattern.permute.xlu0 0
      %4048 = vperm.xlu0 %4047, %v3906
      %v4049 = vpop.permute.xlu0 %4048
      %4052 = vset.pattern.permute.xlu0 0
      %4053 = vperm.xlu0 %4052, %v3907
      %v4054 = vpop.permute.xlu0 %4053
      %4057 = vset.pattern.permute.xlu0 0
      %4058 = vperm.xlu0 %4057, %v3908
      %v4059 = vpop.permute.xlu0 %4058
      %4062 = vset.pattern.permute.xlu0 0
      %4063 = vperm.xlu0 %4062, %v3909
      %v4064 = vpop.permute.xlu0 %4063
      %4067 = vset.pattern.permute.xlu0 0
      %4068 = vperm.xlu0 %4067, %v3910
      %v4069 = vpop.permute.xlu0 %4068
      %v4071 = vlaneseq
      %v4072 = vshrl.u32 %v4071, 7
      %v4073 = vsub.s32 5, %v4072
      %v4074 = vrot.slane %v2235, %v4073
      %v4075 = vmul.f32 %v3914, %v4074
      %v4076 = vmul.f32 %v3919, %v4074
      %v4077 = vmul.f32 %v3924, %v4074
      %v4078 = vmul.f32 %v3929, %v4074
      %v4079 = vmul.f32 %v3934, %v4074
      %v4080 = vmul.f32 %v3939, %v4074
      %v4081 = vmul.f32 %v3944, %v4074
      %v4082 = vmul.f32 %v3949, %v4074
      %v4083 = vmul.f32 %v3954, %v4074
      %v4084 = vmul.f32 %v3959, %v4074
      %v4085 = vmul.f32 %v3964, %v4074
      %v4086 = vmul.f32 %v3969, %v4074
      %v4087 = vmul.f32 %v3974, %v4074
      %v4088 = vmul.f32 %v3979, %v4074
      %v4089 = vmul.f32 %v3984, %v4074
      %v4090 = vmul.f32 %v3989, %v4074
      %v4091 = vmul.f32 %v3994, %v4074
      %v4092 = vmul.f32 %v3999, %v4074
      %v4093 = vmul.f32 %v4004, %v4074
      %v4094 = vmul.f32 %v4009, %v4074
      %v4095 = vmul.f32 %v4014, %v4074
      %v4096 = vmul.f32 %v4019, %v4074
      %v4097 = vmul.f32 %v4024, %v4074
      %v4098 = vmul.f32 %v4029, %v4074
      %v4099 = vmul.f32 %v4034, %v4074
      %v4100 = vmul.f32 %v4039, %v4074
      %v4101 = vmul.f32 %v4044, %v4074
      %v4102 = vmul.f32 %v4049, %v4074
      %v4103 = vmul.f32 %v4054, %v4074
      %v4104 = vmul.f32 %v4059, %v4074
      %v4105 = vmul.f32 %v4064, %v4074
      %v4106 = vmul.f32 %v4069, %v4074
      %v4107 = vadd.f32 %v3779, %v4075
      %v4108 = vadd.f32 %v3780, %v4076
      %v4109 = vadd.f32 %v3781, %v4077
      %v4110 = vadd.f32 %v3782, %v4078
      %v4111 = vadd.f32 %v3783, %v4079
      %v4112 = vadd.f32 %v3784, %v4080
      %v4113 = vadd.f32 %v3785, %v4081
      %v4114 = vadd.f32 %v3786, %v4082
      %v4115 = vadd.f32 %v3787, %v4083
      %v4116 = vadd.f32 %v3788, %v4084
      %v4117 = vadd.f32 %v3789, %v4085
      %v4118 = vadd.f32 %v3790, %v4086
      %v4119 = vadd.f32 %v3791, %v4087
      %v4120 = vadd.f32 %v3792, %v4088
      %v4121 = vadd.f32 %v3793, %v4089
      %v4122 = vadd.f32 %v3794, %v4090
      %v4123 = vadd.f32 %v3795, %v4091
      %v4124 = vadd.f32 %v3796, %v4092
      %v4125 = vadd.f32 %v3797, %v4093
      %v4126 = vadd.f32 %v3798, %v4094
      %v4127 = vadd.f32 %v3799, %v4095
      %v4128 = vadd.f32 %v3800, %v4096
      %v4129 = vadd.f32 %v3801, %v4097
      %v4130 = vadd.f32 %v3802, %v4098
      %v4131 = vadd.f32 %v3803, %v4099
      %v4132 = vadd.f32 %v3804, %v4100
      %v4133 = vadd.f32 %v3805, %v4101
      %v4134 = vadd.f32 %v3806, %v4102
      %v4135 = vadd.f32 %v3807, %v4103
      %v4136 = vadd.f32 %v3808, %v4104
      %v4137 = vadd.f32 %v3809, %v4105
      %v4138 = vadd.f32 %v3810, %v4106
      %v4139 = vlaneseq
      %v4140 = vshrl.u32 %v4139, 7
      %v4141 = vsub.s32 5, %v4140
      %v4142 = vrot.slane %v2237, %v4141
      %v4143 = vmul.f32 %v3914, %v4142
      %v4144 = vmul.f32 %v3919, %v4142
      %v4145 = vmul.f32 %v3924, %v4142
      %v4146 = vmul.f32 %v3929, %v4142
      %v4147 = vmul.f32 %v3934, %v4142
      %v4148 = vmul.f32 %v3939, %v4142
      %v4149 = vmul.f32 %v3944, %v4142
      %v4150 = vmul.f32 %v3949, %v4142
      %v4151 = vmul.f32 %v3954, %v4142
      %v4152 = vmul.f32 %v3959, %v4142
      %v4153 = vmul.f32 %v3964, %v4142
      %v4154 = vmul.f32 %v3969, %v4142
      %v4155 = vmul.f32 %v3974, %v4142
      %v4156 = vmul.f32 %v3979, %v4142
      %v4157 = vmul.f32 %v3984, %v4142
      %v4158 = vmul.f32 %v3989, %v4142
      %v4159 = vmul.f32 %v3994, %v4142
      %v4160 = vmul.f32 %v3999, %v4142
      %v4161 = vmul.f32 %v4004, %v4142
      %v4162 = vmul.f32 %v4009, %v4142
      %v4163 = vmul.f32 %v4014, %v4142
      %v4164 = vmul.f32 %v4019, %v4142
      %v4165 = vmul.f32 %v4024, %v4142
      %v4166 = vmul.f32 %v4029, %v4142
      %v4167 = vmul.f32 %v4034, %v4142
      %v4168 = vmul.f32 %v4039, %v4142
      %v4169 = vmul.f32 %v4044, %v4142
      %v4170 = vmul.f32 %v4049, %v4142
      %v4171 = vmul.f32 %v4054, %v4142
      %v4172 = vmul.f32 %v4059, %v4142
      %v4173 = vmul.f32 %v4064, %v4142
      %v4174 = vmul.f32 %v4069, %v4142
      %v4175 = vadd.f32 %v3847, %v4143
      %v4176 = vadd.f32 %v3848, %v4144
      %v4177 = vadd.f32 %v3849, %v4145
      %v4178 = vadd.f32 %v3850, %v4146
      %v4179 = vadd.f32 %v3851, %v4147
      %v4180 = vadd.f32 %v3852, %v4148
      %v4181 = vadd.f32 %v3853, %v4149
      %v4182 = vadd.f32 %v3854, %v4150
      %v4183 = vadd.f32 %v3855, %v4151
      %v4184 = vadd.f32 %v3856, %v4152
      %v4185 = vadd.f32 %v3857, %v4153
      %v4186 = vadd.f32 %v3858, %v4154
      %v4187 = vadd.f32 %v3859, %v4155
      %v4188 = vadd.f32 %v3860, %v4156
      %v4189 = vadd.f32 %v3861, %v4157
      %v4190 = vadd.f32 %v3862, %v4158
      %v4191 = vadd.f32 %v3863, %v4159
      %v4192 = vadd.f32 %v3864, %v4160
      %v4193 = vadd.f32 %v3865, %v4161
      %v4194 = vadd.f32 %v3866, %v4162
      %v4195 = vadd.f32 %v3867, %v4163
      %v4196 = vadd.f32 %v3868, %v4164
      %v4197 = vadd.f32 %v3869, %v4165
      %v4198 = vadd.f32 %v3870, %v4166
      %v4199 = vadd.f32 %v3871, %v4167
      %v4200 = vadd.f32 %v3872, %v4168
      %v4201 = vadd.f32 %v3873, %v4169
      %v4202 = vadd.f32 %v3874, %v4170
      %v4203 = vadd.f32 %v3875, %v4171
      %v4204 = vadd.f32 %v3876, %v4172
      %v4205 = vadd.f32 %v3877, %v4173
      %v4206 = vadd.f32 %v3878, %v4174
      %s4207 = scalar_lea.vmem [#allocation2], 48
      %v4208 = vld [vmem:[%s4207] sm:$0xff]
      %v4209 = vld [vmem:[%s4207 + $0x8] sm:$0xff]
      %v4210 = vld [vmem:[%s4207 + $0x18] sm:$0xff]
      %v4211 = vld [vmem:[%s4207 + $0x20] sm:$0xff]
      %v4212 = vld [vmem:[%s4207 + $0x30] sm:$0xff]
      %v4213 = vld [vmem:[%s4207 + $0x38] sm:$0xff]
      %v4214 = vld [vmem:[%s4207 + $0x48] sm:$0xff]
      %v4215 = vld [vmem:[%s4207 + $0x50] sm:$0xff]
      %v4216 = vld [vmem:[%s4207 + $0x60] sm:$0xff]
      %v4217 = vld [vmem:[%s4207 + $0x68] sm:$0xff]
      %v4218 = vld [vmem:[%s4207 + $0x78] sm:$0xff]
      %v4219 = vld [vmem:[%s4207 + $0x80] sm:$0xff]
      %v4220 = vld [vmem:[%s4207 + $0x90] sm:$0xff]
      %v4221 = vld [vmem:[%s4207 + $0x98] sm:$0xff]
      %v4222 = vld [vmem:[%s4207 + $0xa8] sm:$0xff]
      %v4223 = vld [vmem:[%s4207 + $0xb0] sm:$0xff]
      %v4224 = vld [vmem:[%s4207 + $0xc0] sm:$0xff]
      %v4225 = vld [vmem:[%s4207 + $0xc8] sm:$0xff]
      %v4226 = vld [vmem:[%s4207 + $0xd8] sm:$0xff]
      %v4227 = vld [vmem:[%s4207 + $0xe0] sm:$0xff]
      %v4228 = vld [vmem:[%s4207 + $0xf0] sm:$0xff]
      %v4229 = vld [vmem:[%s4207 + $0xf8] sm:$0xff]
      %v4230 = vld [vmem:[%s4207 + $0x108] sm:$0xff]
      %v4231 = vld [vmem:[%s4207 + $0x110] sm:$0xff]
      %v4232 = vld [vmem:[%s4207 + $0x120] sm:$0xff]
      %v4233 = vld [vmem:[%s4207 + $0x128] sm:$0xff]
      %v4234 = vld [vmem:[%s4207 + $0x138] sm:$0xff]
      %v4235 = vld [vmem:[%s4207 + $0x140] sm:$0xff]
      %v4236 = vld [vmem:[%s4207 + $0x150] sm:$0xff]
      %v4237 = vld [vmem:[%s4207 + $0x158] sm:$0xff]
      %v4238 = vld [vmem:[%s4207 + $0x168] sm:$0xff]
      %v4239 = vld [vmem:[%s4207 + $0x170] sm:$0xff]
      %4241 = vset.pattern.permute.xlu0 0
      %4242 = vperm.xlu0 %4241, %v4208
      %v4243 = vpop.permute.xlu0 %4242
      %4246 = vset.pattern.permute.xlu0 0
      %4247 = vperm.xlu0 %4246, %v4209
      %v4248 = vpop.permute.xlu0 %4247
      %4251 = vset.pattern.permute.xlu0 0
      %4252 = vperm.xlu0 %4251, %v4210
      %v4253 = vpop.permute.xlu0 %4252
      %4256 = vset.pattern.permute.xlu0 0
      %4257 = vperm.xlu0 %4256, %v4211
      %v4258 = vpop.permute.xlu0 %4257
      %4261 = vset.pattern.permute.xlu0 0
      %4262 = vperm.xlu0 %4261, %v4212
      %v4263 = vpop.permute.xlu0 %4262
      %4266 = vset.pattern.permute.xlu0 0
      %4267 = vperm.xlu0 %4266, %v4213
      %v4268 = vpop.permute.xlu0 %4267
      %4271 = vset.pattern.permute.xlu0 0
      %4272 = vperm.xlu0 %4271, %v4214
      %v4273 = vpop.permute.xlu0 %4272
      %4276 = vset.pattern.permute.xlu0 0
      %4277 = vperm.xlu0 %4276, %v4215
      %v4278 = vpop.permute.xlu0 %4277
      %4281 = vset.pattern.permute.xlu0 0
      %4282 = vperm.xlu0 %4281, %v4216
      %v4283 = vpop.permute.xlu0 %4282
      %4286 = vset.pattern.permute.xlu0 0
      %4287 = vperm.xlu0 %4286, %v4217
      %v4288 = vpop.permute.xlu0 %4287
      %4291 = vset.pattern.permute.xlu0 0
      %4292 = vperm.xlu0 %4291, %v4218
      %v4293 = vpop.permute.xlu0 %4292
      %4296 = vset.pattern.permute.xlu0 0
      %4297 = vperm.xlu0 %4296, %v4219
      %v4298 = vpop.permute.xlu0 %4297
      %4301 = vset.pattern.permute.xlu0 0
      %4302 = vperm.xlu0 %4301, %v4220
      %v4303 = vpop.permute.xlu0 %4302
      %4306 = vset.pattern.permute.xlu0 0
      %4307 = vperm.xlu0 %4306, %v4221
      %v4308 = vpop.permute.xlu0 %4307
      %4311 = vset.pattern.permute.xlu0 0
      %4312 = vperm.xlu0 %4311, %v4222
      %v4313 = vpop.permute.xlu0 %4312
      %4316 = vset.pattern.permute.xlu0 0
      %4317 = vperm.xlu0 %4316, %v4223
      %v4318 = vpop.permute.xlu0 %4317
      %4321 = vset.pattern.permute.xlu0 0
      %4322 = vperm.xlu0 %4321, %v4224
      %v4323 = vpop.permute.xlu0 %4322
      %4326 = vset.pattern.permute.xlu0 0
      %4327 = vperm.xlu0 %4326, %v4225
      %v4328 = vpop.permute.xlu0 %4327
      %4331 = vset.pattern.permute.xlu0 0
      %4332 = vperm.xlu0 %4331, %v4226
      %v4333 = vpop.permute.xlu0 %4332
      %4336 = vset.pattern.permute.xlu0 0
      %4337 = vperm.xlu0 %4336, %v4227
      %v4338 = vpop.permute.xlu0 %4337
      %4341 = vset.pattern.permute.xlu0 0
      %4342 = vperm.xlu0 %4341, %v4228
      %v4343 = vpop.permute.xlu0 %4342
      %4346 = vset.pattern.permute.xlu0 0
      %4347 = vperm.xlu0 %4346, %v4229
      %v4348 = vpop.permute.xlu0 %4347
      %4351 = vset.pattern.permute.xlu0 0
      %4352 = vperm.xlu0 %4351, %v4230
      %v4353 = vpop.permute.xlu0 %4352
      %4356 = vset.pattern.permute.xlu0 0
      %4357 = vperm.xlu0 %4356, %v4231
      %v4358 = vpop.permute.xlu0 %4357
      %4361 = vset.pattern.permute.xlu0 0
      %4362 = vperm.xlu0 %4361, %v4232
      %v4363 = vpop.permute.xlu0 %4362
      %4366 = vset.pattern.permute.xlu0 0
      %4367 = vperm.xlu0 %4366, %v4233
      %v4368 = vpop.permute.xlu0 %4367
      %4371 = vset.pattern.permute.xlu0 0
      %4372 = vperm.xlu0 %4371, %v4234
      %v4373 = vpop.permute.xlu0 %4372
      %4376 = vset.pattern.permute.xlu0 0
      %4377 = vperm.xlu0 %4376, %v4235
      %v4378 = vpop.permute.xlu0 %4377
      %4381 = vset.pattern.permute.xlu0 0
      %4382 = vperm.xlu0 %4381, %v4236
      %v4383 = vpop.permute.xlu0 %4382
      %4386 = vset.pattern.permute.xlu0 0
      %4387 = vperm.xlu0 %4386, %v4237
      %v4388 = vpop.permute.xlu0 %4387
      %4391 = vset.pattern.permute.xlu0 0
      %4392 = vperm.xlu0 %4391, %v4238
      %v4393 = vpop.permute.xlu0 %4392
      %4396 = vset.pattern.permute.xlu0 0
      %4397 = vperm.xlu0 %4396, %v4239
      %v4398 = vpop.permute.xlu0 %4397
      %v4400 = vlaneseq
      %v4401 = vshrl.u32 %v4400, 7
      %v4402 = vsub.s32 6, %v4401
      %v4403 = vrot.slane %v2235, %v4402
      %v4404 = vmul.f32 %v4243, %v4403
      %v4405 = vmul.f32 %v4248, %v4403
      %v4406 = vmul.f32 %v4253, %v4403
      %v4407 = vmul.f32 %v4258, %v4403
      %v4408 = vmul.f32 %v4263, %v4403
      %v4409 = vmul.f32 %v4268, %v4403
      %v4410 = vmul.f32 %v4273, %v4403
      %v4411 = vmul.f32 %v4278, %v4403
      %v4412 = vmul.f32 %v4283, %v4403
      %v4413 = vmul.f32 %v4288, %v4403
      %v4414 = vmul.f32 %v4293, %v4403
      %v4415 = vmul.f32 %v4298, %v4403
      %v4416 = vmul.f32 %v4303, %v4403
      %v4417 = vmul.f32 %v4308, %v4403
      %v4418 = vmul.f32 %v4313, %v4403
      %v4419 = vmul.f32 %v4318, %v4403
      %v4420 = vmul.f32 %v4323, %v4403
      %v4421 = vmul.f32 %v4328, %v4403
      %v4422 = vmul.f32 %v4333, %v4403
      %v4423 = vmul.f32 %v4338, %v4403
      %v4424 = vmul.f32 %v4343, %v4403
      %v4425 = vmul.f32 %v4348, %v4403
      %v4426 = vmul.f32 %v4353, %v4403
      %v4427 = vmul.f32 %v4358, %v4403
      %v4428 = vmul.f32 %v4363, %v4403
      %v4429 = vmul.f32 %v4368, %v4403
      %v4430 = vmul.f32 %v4373, %v4403
      %v4431 = vmul.f32 %v4378, %v4403
      %v4432 = vmul.f32 %v4383, %v4403
      %v4433 = vmul.f32 %v4388, %v4403
      %v4434 = vmul.f32 %v4393, %v4403
      %v4435 = vmul.f32 %v4398, %v4403
      %v4436 = vadd.f32 %v4107, %v4404
      %v4437 = vadd.f32 %v4108, %v4405
      %v4438 = vadd.f32 %v4109, %v4406
      %v4439 = vadd.f32 %v4110, %v4407
      %v4440 = vadd.f32 %v4111, %v4408
      %v4441 = vadd.f32 %v4112, %v4409
      %v4442 = vadd.f32 %v4113, %v4410
      %v4443 = vadd.f32 %v4114, %v4411
      %v4444 = vadd.f32 %v4115, %v4412
      %v4445 = vadd.f32 %v4116, %v4413
      %v4446 = vadd.f32 %v4117, %v4414
      %v4447 = vadd.f32 %v4118, %v4415
      %v4448 = vadd.f32 %v4119, %v4416
      %v4449 = vadd.f32 %v4120, %v4417
      %v4450 = vadd.f32 %v4121, %v4418
      %v4451 = vadd.f32 %v4122, %v4419
      %v4452 = vadd.f32 %v4123, %v4420
      %v4453 = vadd.f32 %v4124, %v4421
      %v4454 = vadd.f32 %v4125, %v4422
      %v4455 = vadd.f32 %v4126, %v4423
      %v4456 = vadd.f32 %v4127, %v4424
      %v4457 = vadd.f32 %v4128, %v4425
      %v4458 = vadd.f32 %v4129, %v4426
      %v4459 = vadd.f32 %v4130, %v4427
      %v4460 = vadd.f32 %v4131, %v4428
      %v4461 = vadd.f32 %v4132, %v4429
      %v4462 = vadd.f32 %v4133, %v4430
      %v4463 = vadd.f32 %v4134, %v4431
      %v4464 = vadd.f32 %v4135, %v4432
      %v4465 = vadd.f32 %v4136, %v4433
      %v4466 = vadd.f32 %v4137, %v4434
      %v4467 = vadd.f32 %v4138, %v4435
      %v4468 = vlaneseq
      %v4469 = vshrl.u32 %v4468, 7
      %v4470 = vsub.s32 6, %v4469
      %v4471 = vrot.slane %v2237, %v4470
      %v4472 = vmul.f32 %v4243, %v4471
      %v4473 = vmul.f32 %v4248, %v4471
      %v4474 = vmul.f32 %v4253, %v4471
      %v4475 = vmul.f32 %v4258, %v4471
      %v4476 = vmul.f32 %v4263, %v4471
      %v4477 = vmul.f32 %v4268, %v4471
      %v4478 = vmul.f32 %v4273, %v4471
      %v4479 = vmul.f32 %v4278, %v4471
      %v4480 = vmul.f32 %v4283, %v4471
      %v4481 = vmul.f32 %v4288, %v4471
      %v4482 = vmul.f32 %v4293, %v4471
      %v4483 = vmul.f32 %v4298, %v4471
      %v4484 = vmul.f32 %v4303, %v4471
      %v4485 = vmul.f32 %v4308, %v4471
      %v4486 = vmul.f32 %v4313, %v4471
      %v4487 = vmul.f32 %v4318, %v4471
      %v4488 = vmul.f32 %v4323, %v4471
      %v4489 = vmul.f32 %v4328, %v4471
      %v4490 = vmul.f32 %v4333, %v4471
      %v4491 = vmul.f32 %v4338, %v4471
      %v4492 = vmul.f32 %v4343, %v4471
      %v4493 = vmul.f32 %v4348, %v4471
      %v4494 = vmul.f32 %v4353, %v4471
      %v4495 = vmul.f32 %v4358, %v4471
      %v4496 = vmul.f32 %v4363, %v4471
      %v4497 = vmul.f32 %v4368, %v4471
      %v4498 = vmul.f32 %v4373, %v4471
      %v4499 = vmul.f32 %v4378, %v4471
      %v4500 = vmul.f32 %v4383, %v4471
      %v4501 = vmul.f32 %v4388, %v4471
      %v4502 = vmul.f32 %v4393, %v4471
      %v4503 = vmul.f32 %v4398, %v4471
      %v4504 = vadd.f32 %v4175, %v4472
      %v4505 = vadd.f32 %v4176, %v4473
      %v4506 = vadd.f32 %v4177, %v4474
      %v4507 = vadd.f32 %v4178, %v4475
      %v4508 = vadd.f32 %v4179, %v4476
      %v4509 = vadd.f32 %v4180, %v4477
      %v4510 = vadd.f32 %v4181, %v4478
      %v4511 = vadd.f32 %v4182, %v4479
      %v4512 = vadd.f32 %v4183, %v4480
      %v4513 = vadd.f32 %v4184, %v4481
      %v4514 = vadd.f32 %v4185, %v4482
      %v4515 = vadd.f32 %v4186, %v4483
      %v4516 = vadd.f32 %v4187, %v4484
      %v4517 = vadd.f32 %v4188, %v4485
      %v4518 = vadd.f32 %v4189, %v4486
      %v4519 = vadd.f32 %v4190, %v4487
      %v4520 = vadd.f32 %v4191, %v4488
      %v4521 = vadd.f32 %v4192, %v4489
      %v4522 = vadd.f32 %v4193, %v4490
      %v4523 = vadd.f32 %v4194, %v4491
      %v4524 = vadd.f32 %v4195, %v4492
      %v4525 = vadd.f32 %v4196, %v4493
      %v4526 = vadd.f32 %v4197, %v4494
      %v4527 = vadd.f32 %v4198, %v4495
      %v4528 = vadd.f32 %v4199, %v4496
      %v4529 = vadd.f32 %v4200, %v4497
      %v4530 = vadd.f32 %v4201, %v4498
      %v4531 = vadd.f32 %v4202, %v4499
      %v4532 = vadd.f32 %v4203, %v4500
      %v4533 = vadd.f32 %v4204, %v4501
      %v4534 = vadd.f32 %v4205, %v4502
      %v4535 = vadd.f32 %v4206, %v4503
      %v4536 = vld [vmem:[%s4207 + $0x1] sm:$0xff]
      %v4537 = vld [vmem:[%s4207 + $0x9] sm:$0xff]
      %v4538 = vld [vmem:[%s4207 + $0x19] sm:$0xff]
      %v4539 = vld [vmem:[%s4207 + $0x21] sm:$0xff]
      %v4540 = vld [vmem:[%s4207 + $0x31] sm:$0xff]
      %v4541 = vld [vmem:[%s4207 + $0x39] sm:$0xff]
      %v4542 = vld [vmem:[%s4207 + $0x49] sm:$0xff]
      %v4543 = vld [vmem:[%s4207 + $0x51] sm:$0xff]
      %v4544 = vld [vmem:[%s4207 + $0x61] sm:$0xff]
      %v4545 = vld [vmem:[%s4207 + $0x69] sm:$0xff]
      %v4546 = vld [vmem:[%s4207 + $0x79] sm:$0xff]
      %v4547 = vld [vmem:[%s4207 + $0x81] sm:$0xff]
      %v4548 = vld [vmem:[%s4207 + $0x91] sm:$0xff]
      %v4549 = vld [vmem:[%s4207 + $0x99] sm:$0xff]
      %v4550 = vld [vmem:[%s4207 + $0xa9] sm:$0xff]
      %v4551 = vld [vmem:[%s4207 + $0xb1] sm:$0xff]
      %v4552 = vld [vmem:[%s4207 + $0xc1] sm:$0xff]
      %v4553 = vld [vmem:[%s4207 + $0xc9] sm:$0xff]
      %v4554 = vld [vmem:[%s4207 + $0xd9] sm:$0xff]
      %v4555 = vld [vmem:[%s4207 + $0xe1] sm:$0xff]
      %v4556 = vld [vmem:[%s4207 + $0xf1] sm:$0xff]
      %v4557 = vld [vmem:[%s4207 + $0xf9] sm:$0xff]
      %v4558 = vld [vmem:[%s4207 + $0x109] sm:$0xff]
      %v4559 = vld [vmem:[%s4207 + $0x111] sm:$0xff]
      %v4560 = vld [vmem:[%s4207 + $0x121] sm:$0xff]
      %v4561 = vld [vmem:[%s4207 + $0x129] sm:$0xff]
      %v4562 = vld [vmem:[%s4207 + $0x139] sm:$0xff]
      %v4563 = vld [vmem:[%s4207 + $0x141] sm:$0xff]
      %v4564 = vld [vmem:[%s4207 + $0x151] sm:$0xff]
      %v4565 = vld [vmem:[%s4207 + $0x159] sm:$0xff]
      %v4566 = vld [vmem:[%s4207 + $0x169] sm:$0xff]
      %v4567 = vld [vmem:[%s4207 + $0x171] sm:$0xff]
      %4569 = vset.pattern.permute.xlu0 0
      %4570 = vperm.xlu0 %4569, %v4536
      %v4571 = vpop.permute.xlu0 %4570
      %4574 = vset.pattern.permute.xlu0 0
      %4575 = vperm.xlu0 %4574, %v4537
      %v4576 = vpop.permute.xlu0 %4575
      %4579 = vset.pattern.permute.xlu0 0
      %4580 = vperm.xlu0 %4579, %v4538
      %v4581 = vpop.permute.xlu0 %4580
      %4584 = vset.pattern.permute.xlu0 0
      %4585 = vperm.xlu0 %4584, %v4539
      %v4586 = vpop.permute.xlu0 %4585
      %4589 = vset.pattern.permute.xlu0 0
      %4590 = vperm.xlu0 %4589, %v4540
      %v4591 = vpop.permute.xlu0 %4590
      %4594 = vset.pattern.permute.xlu0 0
      %4595 = vperm.xlu0 %4594, %v4541
      %v4596 = vpop.permute.xlu0 %4595
      %4599 = vset.pattern.permute.xlu0 0
      %4600 = vperm.xlu0 %4599, %v4542
      %v4601 = vpop.permute.xlu0 %4600
      %4604 = vset.pattern.permute.xlu0 0
      %4605 = vperm.xlu0 %4604, %v4543
      %v4606 = vpop.permute.xlu0 %4605
      %4609 = vset.pattern.permute.xlu0 0
      %4610 = vperm.xlu0 %4609, %v4544
      %v4611 = vpop.permute.xlu0 %4610
      %4614 = vset.pattern.permute.xlu0 0
      %4615 = vperm.xlu0 %4614, %v4545
      %v4616 = vpop.permute.xlu0 %4615
      %4619 = vset.pattern.permute.xlu0 0
      %4620 = vperm.xlu0 %4619, %v4546
      %v4621 = vpop.permute.xlu0 %4620
      %4624 = vset.pattern.permute.xlu0 0
      %4625 = vperm.xlu0 %4624, %v4547
      %v4626 = vpop.permute.xlu0 %4625
      %4629 = vset.pattern.permute.xlu0 0
      %4630 = vperm.xlu0 %4629, %v4548
      %v4631 = vpop.permute.xlu0 %4630
      %4634 = vset.pattern.permute.xlu0 0
      %4635 = vperm.xlu0 %4634, %v4549
      %v4636 = vpop.permute.xlu0 %4635
      %4639 = vset.pattern.permute.xlu0 0
      %4640 = vperm.xlu0 %4639, %v4550
      %v4641 = vpop.permute.xlu0 %4640
      %4644 = vset.pattern.permute.xlu0 0
      %4645 = vperm.xlu0 %4644, %v4551
      %v4646 = vpop.permute.xlu0 %4645
      %4649 = vset.pattern.permute.xlu0 0
      %4650 = vperm.xlu0 %4649, %v4552
      %v4651 = vpop.permute.xlu0 %4650
      %4654 = vset.pattern.permute.xlu0 0
      %4655 = vperm.xlu0 %4654, %v4553
      %v4656 = vpop.permute.xlu0 %4655
      %4659 = vset.pattern.permute.xlu0 0
      %4660 = vperm.xlu0 %4659, %v4554
      %v4661 = vpop.permute.xlu0 %4660
      %4664 = vset.pattern.permute.xlu0 0
      %4665 = vperm.xlu0 %4664, %v4555
      %v4666 = vpop.permute.xlu0 %4665
      %4669 = vset.pattern.permute.xlu0 0
      %4670 = vperm.xlu0 %4669, %v4556
      %v4671 = vpop.permute.xlu0 %4670
      %4674 = vset.pattern.permute.xlu0 0
      %4675 = vperm.xlu0 %4674, %v4557
      %v4676 = vpop.permute.xlu0 %4675
      %4679 = vset.pattern.permute.xlu0 0
      %4680 = vperm.xlu0 %4679, %v4558
      %v4681 = vpop.permute.xlu0 %4680
      %4684 = vset.pattern.permute.xlu0 0
      %4685 = vperm.xlu0 %4684, %v4559
      %v4686 = vpop.permute.xlu0 %4685
      %4689 = vset.pattern.permute.xlu0 0
      %4690 = vperm.xlu0 %4689, %v4560
      %v4691 = vpop.permute.xlu0 %4690
      %4694 = vset.pattern.permute.xlu0 0
      %4695 = vperm.xlu0 %4694, %v4561
      %v4696 = vpop.permute.xlu0 %4695
      %4699 = vset.pattern.permute.xlu0 0
      %4700 = vperm.xlu0 %4699, %v4562
      %v4701 = vpop.permute.xlu0 %4700
      %4704 = vset.pattern.permute.xlu0 0
      %4705 = vperm.xlu0 %4704, %v4563
      %v4706 = vpop.permute.xlu0 %4705
      %4709 = vset.pattern.permute.xlu0 0
      %4710 = vperm.xlu0 %4709, %v4564
      %v4711 = vpop.permute.xlu0 %4710
      %4714 = vset.pattern.permute.xlu0 0
      %4715 = vperm.xlu0 %4714, %v4565
      %v4716 = vpop.permute.xlu0 %4715
      %4719 = vset.pattern.permute.xlu0 0
      %4720 = vperm.xlu0 %4719, %v4566
      %v4721 = vpop.permute.xlu0 %4720
      %4724 = vset.pattern.permute.xlu0 0
      %4725 = vperm.xlu0 %4724, %v4567
      %v4726 = vpop.permute.xlu0 %4725
      %v4728 = vlaneseq
      %v4729 = vshrl.u32 %v4728, 7
      %v4730 = vsub.s32 7, %v4729
      %v4731 = vrot.slane %v2235, %v4730
      %v4732 = vmul.f32 %v4571, %v4731
      %v4733 = vmul.f32 %v4576, %v4731
      %v4734 = vmul.f32 %v4581, %v4731
      %v4735 = vmul.f32 %v4586, %v4731
      %v4736 = vmul.f32 %v4591, %v4731
      %v4737 = vmul.f32 %v4596, %v4731
      %v4738 = vmul.f32 %v4601, %v4731
      %v4739 = vmul.f32 %v4606, %v4731
      %v4740 = vmul.f32 %v4611, %v4731
      %v4741 = vmul.f32 %v4616, %v4731
      %v4742 = vmul.f32 %v4621, %v4731
      %v4743 = vmul.f32 %v4626, %v4731
      %v4744 = vmul.f32 %v4631, %v4731
      %v4745 = vmul.f32 %v4636, %v4731
      %v4746 = vmul.f32 %v4641, %v4731
      %v4747 = vmul.f32 %v4646, %v4731
      %v4748 = vmul.f32 %v4651, %v4731
      %v4749 = vmul.f32 %v4656, %v4731
      %v4750 = vmul.f32 %v4661, %v4731
      %v4751 = vmul.f32 %v4666, %v4731
      %v4752 = vmul.f32 %v4671, %v4731
      %v4753 = vmul.f32 %v4676, %v4731
      %v4754 = vmul.f32 %v4681, %v4731
      %v4755 = vmul.f32 %v4686, %v4731
      %v4756 = vmul.f32 %v4691, %v4731
      %v4757 = vmul.f32 %v4696, %v4731
      %v4758 = vmul.f32 %v4701, %v4731
      %v4759 = vmul.f32 %v4706, %v4731
      %v4760 = vmul.f32 %v4711, %v4731
      %v4761 = vmul.f32 %v4716, %v4731
      %v4762 = vmul.f32 %v4721, %v4731
      %v4763 = vmul.f32 %v4726, %v4731
      %v4764 = vadd.f32 %v4436, %v4732
      %v4765 = vadd.f32 %v4437, %v4733
      %v4766 = vadd.f32 %v4438, %v4734
      %v4767 = vadd.f32 %v4439, %v4735
      %v4768 = vadd.f32 %v4440, %v4736
      %v4769 = vadd.f32 %v4441, %v4737
      %v4770 = vadd.f32 %v4442, %v4738
      %v4771 = vadd.f32 %v4443, %v4739
      %v4772 = vadd.f32 %v4444, %v4740
      %v4773 = vadd.f32 %v4445, %v4741
      %v4774 = vadd.f32 %v4446, %v4742
      %v4775 = vadd.f32 %v4447, %v4743
      %v4776 = vadd.f32 %v4448, %v4744
      %v4777 = vadd.f32 %v4449, %v4745
      %v4778 = vadd.f32 %v4450, %v4746
      %v4779 = vadd.f32 %v4451, %v4747
      %v4780 = vadd.f32 %v4452, %v4748
      %v4781 = vadd.f32 %v4453, %v4749
      %v4782 = vadd.f32 %v4454, %v4750
      %v4783 = vadd.f32 %v4455, %v4751
      %v4784 = vadd.f32 %v4456, %v4752
      %v4785 = vadd.f32 %v4457, %v4753
      %v4786 = vadd.f32 %v4458, %v4754
      %v4787 = vadd.f32 %v4459, %v4755
      %v4788 = vadd.f32 %v4460, %v4756
      %v4789 = vadd.f32 %v4461, %v4757
      %v4790 = vadd.f32 %v4462, %v4758
      %v4791 = vadd.f32 %v4463, %v4759
      %v4792 = vadd.f32 %v4464, %v4760
      %v4793 = vadd.f32 %v4465, %v4761
      %v4794 = vadd.f32 %v4466, %v4762
      %v4795 = vadd.f32 %v4467, %v4763
      %v4796 = vlaneseq
      %v4797 = vshrl.u32 %v4796, 7
      %v4798 = vsub.s32 7, %v4797
      %v4799 = vrot.slane %v2237, %v4798
      %v4800 = vmul.f32 %v4571, %v4799
      %v4801 = vmul.f32 %v4576, %v4799
      %v4802 = vmul.f32 %v4581, %v4799
      %v4803 = vmul.f32 %v4586, %v4799
      %v4804 = vmul.f32 %v4591, %v4799
      %v4805 = vmul.f32 %v4596, %v4799
      %v4806 = vmul.f32 %v4601, %v4799
      %v4807 = vmul.f32 %v4606, %v4799
      %v4808 = vmul.f32 %v4611, %v4799
      %v4809 = vmul.f32 %v4616, %v4799
      %v4810 = vmul.f32 %v4621, %v4799
      %v4811 = vmul.f32 %v4626, %v4799
      %v4812 = vmul.f32 %v4631, %v4799
      %v4813 = vmul.f32 %v4636, %v4799
      %v4814 = vmul.f32 %v4641, %v4799
      %v4815 = vmul.f32 %v4646, %v4799
      %v4816 = vmul.f32 %v4651, %v4799
      %v4817 = vmul.f32 %v4656, %v4799
      %v4818 = vmul.f32 %v4661, %v4799
      %v4819 = vmul.f32 %v4666, %v4799
      %v4820 = vmul.f32 %v4671, %v4799
      %v4821 = vmul.f32 %v4676, %v4799
      %v4822 = vmul.f32 %v4681, %v4799
      %v4823 = vmul.f32 %v4686, %v4799
      %v4824 = vmul.f32 %v4691, %v4799
      %v4825 = vmul.f32 %v4696, %v4799
      %v4826 = vmul.f32 %v4701, %v4799
      %v4827 = vmul.f32 %v4706, %v4799
      %v4828 = vmul.f32 %v4711, %v4799
      %v4829 = vmul.f32 %v4716, %v4799
      %v4830 = vmul.f32 %v4721, %v4799
      %v4831 = vmul.f32 %v4726, %v4799
      %v4832 = vadd.f32 %v4504, %v4800
      %v4833 = vadd.f32 %v4505, %v4801
      %v4834 = vadd.f32 %v4506, %v4802
      %v4835 = vadd.f32 %v4507, %v4803
      %v4836 = vadd.f32 %v4508, %v4804
      %v4837 = vadd.f32 %v4509, %v4805
      %v4838 = vadd.f32 %v4510, %v4806
      %v4839 = vadd.f32 %v4511, %v4807
      %v4840 = vadd.f32 %v4512, %v4808
      %v4841 = vadd.f32 %v4513, %v4809
      %v4842 = vadd.f32 %v4514, %v4810
      %v4843 = vadd.f32 %v4515, %v4811
      %v4844 = vadd.f32 %v4516, %v4812
      %v4845 = vadd.f32 %v4517, %v4813
      %v4846 = vadd.f32 %v4518, %v4814
      %v4847 = vadd.f32 %v4519, %v4815
      %v4848 = vadd.f32 %v4520, %v4816
      %v4849 = vadd.f32 %v4521, %v4817
      %v4850 = vadd.f32 %v4522, %v4818
      %v4851 = vadd.f32 %v4523, %v4819
      %v4852 = vadd.f32 %v4524, %v4820
      %v4853 = vadd.f32 %v4525, %v4821
      %v4854 = vadd.f32 %v4526, %v4822
      %v4855 = vadd.f32 %v4527, %v4823
      %v4856 = vadd.f32 %v4528, %v4824
      %v4857 = vadd.f32 %v4529, %v4825
      %v4858 = vadd.f32 %v4530, %v4826
      %v4859 = vadd.f32 %v4531, %v4827
      %v4860 = vadd.f32 %v4532, %v4828
      %v4861 = vadd.f32 %v4533, %v4829
      %v4862 = vadd.f32 %v4534, %v4830
      %v4863 = vadd.f32 %v4535, %v4831
      %v4864 = vld [vmem:[%s4207 + $0x2] sm:$0xff]
      %v4865 = vld [vmem:[%s4207 + $0xa] sm:$0xff]
      %v4866 = vld [vmem:[%s4207 + $0x1a] sm:$0xff]
      %v4867 = vld [vmem:[%s4207 + $0x22] sm:$0xff]
      %v4868 = vld [vmem:[%s4207 + $0x32] sm:$0xff]
      %v4869 = vld [vmem:[%s4207 + $0x3a] sm:$0xff]
      %v4870 = vld [vmem:[%s4207 + $0x4a] sm:$0xff]
      %v4871 = vld [vmem:[%s4207 + $0x52] sm:$0xff]
      %v4872 = vld [vmem:[%s4207 + $0x62] sm:$0xff]
      %v4873 = vld [vmem:[%s4207 + $0x6a] sm:$0xff]
      %v4874 = vld [vmem:[%s4207 + $0x7a] sm:$0xff]
      %v4875 = vld [vmem:[%s4207 + $0x82] sm:$0xff]
      %v4876 = vld [vmem:[%s4207 + $0x92] sm:$0xff]
      %v4877 = vld [vmem:[%s4207 + $0x9a] sm:$0xff]
      %v4878 = vld [vmem:[%s4207 + $0xaa] sm:$0xff]
      %v4879 = vld [vmem:[%s4207 + $0xb2] sm:$0xff]
      %v4880 = vld [vmem:[%s4207 + $0xc2] sm:$0xff]
      %v4881 = vld [vmem:[%s4207 + $0xca] sm:$0xff]
      %v4882 = vld [vmem:[%s4207 + $0xda] sm:$0xff]
      %v4883 = vld [vmem:[%s4207 + $0xe2] sm:$0xff]
      %v4884 = vld [vmem:[%s4207 + $0xf2] sm:$0xff]
      %v4885 = vld [vmem:[%s4207 + $0xfa] sm:$0xff]
      %v4886 = vld [vmem:[%s4207 + $0x10a] sm:$0xff]
      %v4887 = vld [vmem:[%s4207 + $0x112] sm:$0xff]
      %v4888 = vld [vmem:[%s4207 + $0x122] sm:$0xff]
      %v4889 = vld [vmem:[%s4207 + $0x12a] sm:$0xff]
      %v4890 = vld [vmem:[%s4207 + $0x13a] sm:$0xff]
      %v4891 = vld [vmem:[%s4207 + $0x142] sm:$0xff]
      %v4892 = vld [vmem:[%s4207 + $0x152] sm:$0xff]
      %v4893 = vld [vmem:[%s4207 + $0x15a] sm:$0xff]
      %v4894 = vld [vmem:[%s4207 + $0x16a] sm:$0xff]
      %v4895 = vld [vmem:[%s4207 + $0x172] sm:$0xff]
      %4897 = vset.pattern.permute.xlu0 0
      %4898 = vperm.xlu0 %4897, %v4864
      %v4899 = vpop.permute.xlu0 %4898
      %4902 = vset.pattern.permute.xlu0 0
      %4903 = vperm.xlu0 %4902, %v4865
      %v4904 = vpop.permute.xlu0 %4903
      %4907 = vset.pattern.permute.xlu0 0
      %4908 = vperm.xlu0 %4907, %v4866
      %v4909 = vpop.permute.xlu0 %4908
      %4912 = vset.pattern.permute.xlu0 0
      %4913 = vperm.xlu0 %4912, %v4867
      %v4914 = vpop.permute.xlu0 %4913
      %4917 = vset.pattern.permute.xlu0 0
      %4918 = vperm.xlu0 %4917, %v4868
      %v4919 = vpop.permute.xlu0 %4918
      %4922 = vset.pattern.permute.xlu0 0
      %4923 = vperm.xlu0 %4922, %v4869
      %v4924 = vpop.permute.xlu0 %4923
      %4927 = vset.pattern.permute.xlu0 0
      %4928 = vperm.xlu0 %4927, %v4870
      %v4929 = vpop.permute.xlu0 %4928
      %4932 = vset.pattern.permute.xlu0 0
      %4933 = vperm.xlu0 %4932, %v4871
      %v4934 = vpop.permute.xlu0 %4933
      %4937 = vset.pattern.permute.xlu0 0
      %4938 = vperm.xlu0 %4937, %v4872
      %v4939 = vpop.permute.xlu0 %4938
      %4942 = vset.pattern.permute.xlu0 0
      %4943 = vperm.xlu0 %4942, %v4873
      %v4944 = vpop.permute.xlu0 %4943
      %4947 = vset.pattern.permute.xlu0 0
      %4948 = vperm.xlu0 %4947, %v4874
      %v4949 = vpop.permute.xlu0 %4948
      %4952 = vset.pattern.permute.xlu0 0
      %4953 = vperm.xlu0 %4952, %v4875
      %v4954 = vpop.permute.xlu0 %4953
      %4957 = vset.pattern.permute.xlu0 0
      %4958 = vperm.xlu0 %4957, %v4876
      %v4959 = vpop.permute.xlu0 %4958
      %4962 = vset.pattern.permute.xlu0 0
      %4963 = vperm.xlu0 %4962, %v4877
      %v4964 = vpop.permute.xlu0 %4963
      %4967 = vset.pattern.permute.xlu0 0
      %4968 = vperm.xlu0 %4967, %v4878
      %v4969 = vpop.permute.xlu0 %4968
      %4972 = vset.pattern.permute.xlu0 0
      %4973 = vperm.xlu0 %4972, %v4879
      %v4974 = vpop.permute.xlu0 %4973
      %4977 = vset.pattern.permute.xlu0 0
      %4978 = vperm.xlu0 %4977, %v4880
      %v4979 = vpop.permute.xlu0 %4978
      %4982 = vset.pattern.permute.xlu0 0
      %4983 = vperm.xlu0 %4982, %v4881
      %v4984 = vpop.permute.xlu0 %4983
      %4987 = vset.pattern.permute.xlu0 0
      %4988 = vperm.xlu0 %4987, %v4882
      %v4989 = vpop.permute.xlu0 %4988
      %4992 = vset.pattern.permute.xlu0 0
      %4993 = vperm.xlu0 %4992, %v4883
      %v4994 = vpop.permute.xlu0 %4993
      %4997 = vset.pattern.permute.xlu0 0
      %4998 = vperm.xlu0 %4997, %v4884
      %v4999 = vpop.permute.xlu0 %4998
      %5002 = vset.pattern.permute.xlu0 0
      %5003 = vperm.xlu0 %5002, %v4885
      %v5004 = vpop.permute.xlu0 %5003
      %5007 = vset.pattern.permute.xlu0 0
      %5008 = vperm.xlu0 %5007, %v4886
      %v5009 = vpop.permute.xlu0 %5008
      %5012 = vset.pattern.permute.xlu0 0
      %5013 = vperm.xlu0 %5012, %v4887
      %v5014 = vpop.permute.xlu0 %5013
      %5017 = vset.pattern.permute.xlu0 0
      %5018 = vperm.xlu0 %5017, %v4888
      %v5019 = vpop.permute.xlu0 %5018
      %5022 = vset.pattern.permute.xlu0 0
      %5023 = vperm.xlu0 %5022, %v4889
      %v5024 = vpop.permute.xlu0 %5023
      %5027 = vset.pattern.permute.xlu0 0
      %5028 = vperm.xlu0 %5027, %v4890
      %v5029 = vpop.permute.xlu0 %5028
      %5032 = vset.pattern.permute.xlu0 0
      %5033 = vperm.xlu0 %5032, %v4891
      %v5034 = vpop.permute.xlu0 %5033
      %5037 = vset.pattern.permute.xlu0 0
      %5038 = vperm.xlu0 %5037, %v4892
      %v5039 = vpop.permute.xlu0 %5038
      %5042 = vset.pattern.permute.xlu0 0
      %5043 = vperm.xlu0 %5042, %v4893
      %v5044 = vpop.permute.xlu0 %5043
      %5047 = vset.pattern.permute.xlu0 0
      %5048 = vperm.xlu0 %5047, %v4894
      %v5049 = vpop.permute.xlu0 %5048
      %5052 = vset.pattern.permute.xlu0 0
      %5053 = vperm.xlu0 %5052, %v4895
      %v5054 = vpop.permute.xlu0 %5053
      %v5056 = vlaneseq
      %v5057 = vshrl.u32 %v5056, 7
      %v5058 = vsub.s32 0, %v5057
      %v5059 = vrot.slane %v2236, %v5058
      %v5060 = vmul.f32 %v4899, %v5059
      %v5061 = vmul.f32 %v4904, %v5059
      %v5062 = vmul.f32 %v4909, %v5059
      %v5063 = vmul.f32 %v4914, %v5059
      %v5064 = vmul.f32 %v4919, %v5059
      %v5065 = vmul.f32 %v4924, %v5059
      %v5066 = vmul.f32 %v4929, %v5059
      %v5067 = vmul.f32 %v4934, %v5059
      %v5068 = vmul.f32 %v4939, %v5059
      %v5069 = vmul.f32 %v4944, %v5059
      %v5070 = vmul.f32 %v4949, %v5059
      %v5071 = vmul.f32 %v4954, %v5059
      %v5072 = vmul.f32 %v4959, %v5059
      %v5073 = vmul.f32 %v4964, %v5059
      %v5074 = vmul.f32 %v4969, %v5059
      %v5075 = vmul.f32 %v4974, %v5059
      %v5076 = vmul.f32 %v4979, %v5059
      %v5077 = vmul.f32 %v4984, %v5059
      %v5078 = vmul.f32 %v4989, %v5059
      %v5079 = vmul.f32 %v4994, %v5059
      %v5080 = vmul.f32 %v4999, %v5059
      %v5081 = vmul.f32 %v5004, %v5059
      %v5082 = vmul.f32 %v5009, %v5059
      %v5083 = vmul.f32 %v5014, %v5059
      %v5084 = vmul.f32 %v5019, %v5059
      %v5085 = vmul.f32 %v5024, %v5059
      %v5086 = vmul.f32 %v5029, %v5059
      %v5087 = vmul.f32 %v5034, %v5059
      %v5088 = vmul.f32 %v5039, %v5059
      %v5089 = vmul.f32 %v5044, %v5059
      %v5090 = vmul.f32 %v5049, %v5059
      %v5091 = vmul.f32 %v5054, %v5059
      %v5092 = vadd.f32 %v4764, %v5060
      %v5093 = vadd.f32 %v4765, %v5061
      %v5094 = vadd.f32 %v4766, %v5062
      %v5095 = vadd.f32 %v4767, %v5063
      %v5096 = vadd.f32 %v4768, %v5064
      %v5097 = vadd.f32 %v4769, %v5065
      %v5098 = vadd.f32 %v4770, %v5066
      %v5099 = vadd.f32 %v4771, %v5067
      %v5100 = vadd.f32 %v4772, %v5068
      %v5101 = vadd.f32 %v4773, %v5069
      %v5102 = vadd.f32 %v4774, %v5070
      %v5103 = vadd.f32 %v4775, %v5071
      %v5104 = vadd.f32 %v4776, %v5072
      %v5105 = vadd.f32 %v4777, %v5073
      %v5106 = vadd.f32 %v4778, %v5074
      %v5107 = vadd.f32 %v4779, %v5075
      %v5108 = vadd.f32 %v4780, %v5076
      %v5109 = vadd.f32 %v4781, %v5077
      %v5110 = vadd.f32 %v4782, %v5078
      %v5111 = vadd.f32 %v4783, %v5079
      %v5112 = vadd.f32 %v4784, %v5080
      %v5113 = vadd.f32 %v4785, %v5081
      %v5114 = vadd.f32 %v4786, %v5082
      %v5115 = vadd.f32 %v4787, %v5083
      %v5116 = vadd.f32 %v4788, %v5084
      %v5117 = vadd.f32 %v4789, %v5085
      %v5118 = vadd.f32 %v4790, %v5086
      %v5119 = vadd.f32 %v4791, %v5087
      %v5120 = vadd.f32 %v4792, %v5088
      %v5121 = vadd.f32 %v4793, %v5089
      %v5122 = vadd.f32 %v4794, %v5090
      %v5123 = vadd.f32 %v4795, %v5091
      %v5124 = vlaneseq
      %v5125 = vshrl.u32 %v5124, 7
      %v5126 = vsub.s32 0, %v5125
      %v5127 = vrot.slane %v2238, %v5126
      %v5128 = vmul.f32 %v4899, %v5127
      %v5129 = vmul.f32 %v4904, %v5127
      %v5130 = vmul.f32 %v4909, %v5127
      %v5131 = vmul.f32 %v4914, %v5127
      %v5132 = vmul.f32 %v4919, %v5127
      %v5133 = vmul.f32 %v4924, %v5127
      %v5134 = vmul.f32 %v4929, %v5127
      %v5135 = vmul.f32 %v4934, %v5127
      %v5136 = vmul.f32 %v4939, %v5127
      %v5137 = vmul.f32 %v4944, %v5127
      %v5138 = vmul.f32 %v4949, %v5127
      %v5139 = vmul.f32 %v4954, %v5127
      %v5140 = vmul.f32 %v4959, %v5127
      %v5141 = vmul.f32 %v4964, %v5127
      %v5142 = vmul.f32 %v4969, %v5127
      %v5143 = vmul.f32 %v4974, %v5127
      %v5144 = vmul.f32 %v4979, %v5127
      %v5145 = vmul.f32 %v4984, %v5127
      %v5146 = vmul.f32 %v4989, %v5127
      %v5147 = vmul.f32 %v4994, %v5127
      %v5148 = vmul.f32 %v4999, %v5127
      %v5149 = vmul.f32 %v5004, %v5127
      %v5150 = vmul.f32 %v5009, %v5127
      %v5151 = vmul.f32 %v5014, %v5127
      %v5152 = vmul.f32 %v5019, %v5127
      %v5153 = vmul.f32 %v5024, %v5127
      %v5154 = vmul.f32 %v5029, %v5127
      %v5155 = vmul.f32 %v5034, %v5127
      %v5156 = vmul.f32 %v5039, %v5127
      %v5157 = vmul.f32 %v5044, %v5127
      %v5158 = vmul.f32 %v5049, %v5127
      %v5159 = vmul.f32 %v5054, %v5127
      %v5160 = vadd.f32 %v4832, %v5128
      %v5161 = vadd.f32 %v4833, %v5129
      %v5162 = vadd.f32 %v4834, %v5130
      %v5163 = vadd.f32 %v4835, %v5131
      %v5164 = vadd.f32 %v4836, %v5132
      %v5165 = vadd.f32 %v4837, %v5133
      %v5166 = vadd.f32 %v4838, %v5134
      %v5167 = vadd.f32 %v4839, %v5135
      %v5168 = vadd.f32 %v4840, %v5136
      %v5169 = vadd.f32 %v4841, %v5137
      %v5170 = vadd.f32 %v4842, %v5138
      %v5171 = vadd.f32 %v4843, %v5139
      %v5172 = vadd.f32 %v4844, %v5140
      %v5173 = vadd.f32 %v4845, %v5141
      %v5174 = vadd.f32 %v4846, %v5142
      %v5175 = vadd.f32 %v4847, %v5143
      %v5176 = vadd.f32 %v4848, %v5144
      %v5177 = vadd.f32 %v4849, %v5145
      %v5178 = vadd.f32 %v4850, %v5146
      %v5179 = vadd.f32 %v4851, %v5147
      %v5180 = vadd.f32 %v4852, %v5148
      %v5181 = vadd.f32 %v4853, %v5149
      %v5182 = vadd.f32 %v4854, %v5150
      %v5183 = vadd.f32 %v4855, %v5151
      %v5184 = vadd.f32 %v4856, %v5152
      %v5185 = vadd.f32 %v4857, %v5153
      %v5186 = vadd.f32 %v4858, %v5154
      %v5187 = vadd.f32 %v4859, %v5155
      %v5188 = vadd.f32 %v4860, %v5156
      %v5189 = vadd.f32 %v4861, %v5157
      %v5190 = vadd.f32 %v4862, %v5158
      %v5191 = vadd.f32 %v4863, %v5159
      %v5192 = vlaneseq
      %v5193 = vshrl.u32 %v5192, 7
      %v5194 = vsub.s32 0, %v5193
      %v5195 = vrot.slane %v252, %v5194
      %v5196 = vadd.f32 %v5092, %v5195
      %v5197 = vadd.f32 %v5093, %v5195
      %v5198 = vadd.f32 %v5094, %v5195
      %v5199 = vadd.f32 %v5095, %v5195
      %v5200 = vadd.f32 %v5096, %v5195
      %v5201 = vadd.f32 %v5097, %v5195
      %v5202 = vadd.f32 %v5098, %v5195
      %v5203 = vadd.f32 %v5099, %v5195
      %v5204 = vadd.f32 %v5100, %v5195
      %v5205 = vadd.f32 %v5101, %v5195
      %v5206 = vadd.f32 %v5102, %v5195
      %v5207 = vadd.f32 %v5103, %v5195
      %v5208 = vadd.f32 %v5104, %v5195
      %v5209 = vadd.f32 %v5105, %v5195
      %v5210 = vadd.f32 %v5106, %v5195
      %v5211 = vadd.f32 %v5107, %v5195
      %v5212 = vadd.f32 %v5108, %v5195
      %v5213 = vadd.f32 %v5109, %v5195
      %v5214 = vadd.f32 %v5110, %v5195
      %v5215 = vadd.f32 %v5111, %v5195
      %v5216 = vadd.f32 %v5112, %v5195
      %v5217 = vadd.f32 %v5113, %v5195
      %v5218 = vadd.f32 %v5114, %v5195
      %v5219 = vadd.f32 %v5115, %v5195
      %v5220 = vadd.f32 %v5116, %v5195
      %v5221 = vadd.f32 %v5117, %v5195
      %v5222 = vadd.f32 %v5118, %v5195
      %v5223 = vadd.f32 %v5119, %v5195
      %v5224 = vadd.f32 %v5120, %v5195
      %v5225 = vadd.f32 %v5121, %v5195
      %v5226 = vadd.f32 %v5122, %v5195
      %v5227 = vadd.f32 %v5123, %v5195
      %v5228 = vmax.f32 %v5196, 0.0
      %v5229 = vmax.f32 %v5197, 0.0
      %v5230 = vmax.f32 %v5198, 0.0
      %v5231 = vmax.f32 %v5199, 0.0
      %v5232 = vmax.f32 %v5200, 0.0
      %v5233 = vmax.f32 %v5201, 0.0
      %v5234 = vmax.f32 %v5202, 0.0
      %v5235 = vmax.f32 %v5203, 0.0
      %v5236 = vmax.f32 %v5204, 0.0
      %v5237 = vmax.f32 %v5205, 0.0
      %v5238 = vmax.f32 %v5206, 0.0
      %v5239 = vmax.f32 %v5207, 0.0
      %v5240 = vmax.f32 %v5208, 0.0
      %v5241 = vmax.f32 %v5209, 0.0
      %v5242 = vmax.f32 %v5210, 0.0
      %v5243 = vmax.f32 %v5211, 0.0
      %v5244 = vmax.f32 %v5212, 0.0
      %v5245 = vmax.f32 %v5213, 0.0
      %v5246 = vmax.f32 %v5214, 0.0
      %v5247 = vmax.f32 %v5215, 0.0
      %v5248 = vmax.f32 %v5216, 0.0
      %v5249 = vmax.f32 %v5217, 0.0
      %v5250 = vmax.f32 %v5218, 0.0
      %v5251 = vmax.f32 %v5219, 0.0
      %v5252 = vmax.f32 %v5220, 0.0
      %v5253 = vmax.f32 %v5221, 0.0
      %v5254 = vmax.f32 %v5222, 0.0
      %v5255 = vmax.f32 %v5223, 0.0
      %v5256 = vmax.f32 %v5224, 0.0
      %v5257 = vmax.f32 %v5225, 0.0
      %v5258 = vmax.f32 %v5226, 0.0
      %v5259 = vmax.f32 %v5227, 0.0
      %v5260 = vlaneseq
      %v5261 = vshrl.u32 %v5260, 7
      %v5262 = vsub.s32 1, %v5261
      %v5263 = vrot.slane %v252, %v5262
      %v5264 = vadd.f32 %v5160, %v5263
      %v5265 = vadd.f32 %v5161, %v5263
      %v5266 = vadd.f32 %v5162, %v5263
      %v5267 = vadd.f32 %v5163, %v5263
      %v5268 = vadd.f32 %v5164, %v5263
      %v5269 = vadd.f32 %v5165, %v5263
      %v5270 = vadd.f32 %v5166, %v5263
      %v5271 = vadd.f32 %v5167, %v5263
      %v5272 = vadd.f32 %v5168, %v5263
      %v5273 = vadd.f32 %v5169, %v5263
      %v5274 = vadd.f32 %v5170, %v5263
      %v5275 = vadd.f32 %v5171, %v5263
      %v5276 = vadd.f32 %v5172, %v5263
      %v5277 = vadd.f32 %v5173, %v5263
      %v5278 = vadd.f32 %v5174, %v5263
      %v5279 = vadd.f32 %v5175, %v5263
      %v5280 = vadd.f32 %v5176, %v5263
      %v5281 = vadd.f32 %v5177, %v5263
      %v5282 = vadd.f32 %v5178, %v5263
      %v5283 = vadd.f32 %v5179, %v5263
      %v5284 = vadd.f32 %v5180, %v5263
      %v5285 = vadd.f32 %v5181, %v5263
      %v5286 = vadd.f32 %v5182, %v5263
      %v5287 = vadd.f32 %v5183, %v5263
      %v5288 = vadd.f32 %v5184, %v5263
      %v5289 = vadd.f32 %v5185, %v5263
      %v5290 = vadd.f32 %v5186, %v5263
      %v5291 = vadd.f32 %v5187, %v5263
      %v5292 = vadd.f32 %v5188, %v5263
      %v5293 = vadd.f32 %v5189, %v5263
      %v5294 = vadd.f32 %v5190, %v5263
      %v5295 = vadd.f32 %v5191, %v5263
      %v5296 = vmax.f32 %v5264, 0.0
      %v5297 = vmax.f32 %v5265, 0.0
      %v5298 = vmax.f32 %v5266, 0.0
      %v5299 = vmax.f32 %v5267, 0.0
      %v5300 = vmax.f32 %v5268, 0.0
      %v5301 = vmax.f32 %v5269, 0.0
      %v5302 = vmax.f32 %v5270, 0.0
      %v5303 = vmax.f32 %v5271, 0.0
      %v5304 = vmax.f32 %v5272, 0.0
      %v5305 = vmax.f32 %v5273, 0.0
      %v5306 = vmax.f32 %v5274, 0.0
      %v5307 = vmax.f32 %v5275, 0.0
      %v5308 = vmax.f32 %v5276, 0.0
      %v5309 = vmax.f32 %v5277, 0.0
      %v5310 = vmax.f32 %v5278, 0.0
      %v5311 = vmax.f32 %v5279, 0.0
      %v5312 = vmax.f32 %v5280, 0.0
      %v5313 = vmax.f32 %v5281, 0.0
      %v5314 = vmax.f32 %v5282, 0.0
      %v5315 = vmax.f32 %v5283, 0.0
      %v5316 = vmax.f32 %v5284, 0.0
      %v5317 = vmax.f32 %v5285, 0.0
      %v5318 = vmax.f32 %v5286, 0.0
      %v5319 = vmax.f32 %v5287, 0.0
      %v5320 = vmax.f32 %v5288, 0.0
      %v5321 = vmax.f32 %v5289, 0.0
      %v5322 = vmax.f32 %v5290, 0.0
      %v5323 = vmax.f32 %v5291, 0.0
      %v5324 = vmax.f32 %v5292, 0.0
      %v5325 = vmax.f32 %v5293, 0.0
      %v5326 = vmax.f32 %v5294, 0.0
      %v5327 = vmax.f32 %v5295, 0.0
      %s5328 = scalar_lea.vmem [#allocation3], 24
      %5329 = vst.msk [vmem:[%s5328 + $0x1] sm:$0xff] %vm309, %v5296
      %5330 = vst.msk [vmem:[%s5328 + $0x9] sm:$0xff] %vm309, %v5297
      %5331 = vst.msk [vmem:[%s5328 + $0x19] sm:$0xff] %vm309, %v5298
      %5332 = vst.msk [vmem:[%s5328 + $0x21] sm:$0xff] %vm309, %v5299
      %5333 = vst.msk [vmem:[%s5328 + $0x31] sm:$0xff] %vm309, %v5300
      %5334 = vst.msk [vmem:[%s5328 + $0x39] sm:$0xff] %vm309, %v5301
      %5335 = vst.msk [vmem:[%s5328 + $0x49] sm:$0xff] %vm309, %v5302
      %5336 = vst.msk [vmem:[%s5328 + $0x51] sm:$0xff] %vm309, %v5303
      %5337 = vst.msk [vmem:[%s5328 + $0x61] sm:$0xff] %vm309, %v5304
      %5338 = vst.msk [vmem:[%s5328 + $0x69] sm:$0xff] %vm309, %v5305
      %5339 = vst.msk [vmem:[%s5328 + $0x79] sm:$0xff] %vm309, %v5306
      %5340 = vst.msk [vmem:[%s5328 + $0x81] sm:$0xff] %vm309, %v5307
      %5341 = vst.msk [vmem:[%s5328 + $0x91] sm:$0xff] %vm309, %v5308
      %5342 = vst.msk [vmem:[%s5328 + $0x99] sm:$0xff] %vm309, %v5309
      %5343 = vst.msk [vmem:[%s5328 + $0xa9] sm:$0xff] %vm309, %v5310
      %5344 = vst.msk [vmem:[%s5328 + $0xb1] sm:$0xff] %vm309, %v5311
      %5345 = vst.msk [vmem:[%s5328 + $0xc1] sm:$0xff] %vm309, %v5312
      %5346 = vst.msk [vmem:[%s5328 + $0xc9] sm:$0xff] %vm309, %v5313
      %5347 = vst.msk [vmem:[%s5328 + $0xd9] sm:$0xff] %vm309, %v5314
      %5348 = vst.msk [vmem:[%s5328 + $0xe1] sm:$0xff] %vm309, %v5315
      %5349 = vst.msk [vmem:[%s5328 + $0xf1] sm:$0xff] %vm309, %v5316
      %5350 = vst.msk [vmem:[%s5328 + $0xf9] sm:$0xff] %vm309, %v5317
      %5351 = vst.msk [vmem:[%s5328 + $0x109] sm:$0xff] %vm309, %v5318
      %5352 = vst.msk [vmem:[%s5328 + $0x111] sm:$0xff] %vm309, %v5319
      %5353 = vst.msk [vmem:[%s5328 + $0x121] sm:$0xff] %vm309, %v5320
      %5354 = vst.msk [vmem:[%s5328 + $0x129] sm:$0xff] %vm309, %v5321
      %5355 = vst.msk [vmem:[%s5328 + $0x139] sm:$0xff] %vm309, %v5322
      %5356 = vst.msk [vmem:[%s5328 + $0x141] sm:$0xff] %vm309, %v5323
      %5357 = vst.msk [vmem:[%s5328 + $0x151] sm:$0xff] %vm309, %v5324
      %5358 = vst.msk [vmem:[%s5328 + $0x159] sm:$0xff] %vm309, %v5325
      %5359 = vst.msk [vmem:[%s5328 + $0x169] sm:$0xff] %vm309, %v5326
      %5360 = vst.msk [vmem:[%s5328 + $0x171] sm:$0xff] %vm309, %v5327
      %v5361 = vld [vmem:[#allocation3] sm:$0xff]
      %v5362 = vld [vmem:[#allocation3 + $0x8] sm:$0xff]
      %v5363 = vld [vmem:[#allocation3 + $0x18] sm:$0xff]
      %v5364 = vld [vmem:[#allocation3 + $0x20] sm:$0xff]
      %v5365 = vld [vmem:[#allocation3 + $0x30] sm:$0xff]
      %v5366 = vld [vmem:[#allocation3 + $0x38] sm:$0xff]
      %v5367 = vld [vmem:[#allocation3 + $0x48] sm:$0xff]
      %v5368 = vld [vmem:[#allocation3 + $0x50] sm:$0xff]
      %v5369 = vld [vmem:[#allocation3 + $0x60] sm:$0xff]
      %v5370 = vld [vmem:[#allocation3 + $0x68] sm:$0xff]
      %v5371 = vld [vmem:[#allocation3 + $0x78] sm:$0xff]
      %v5372 = vld [vmem:[#allocation3 + $0x80] sm:$0xff]
      %v5373 = vld [vmem:[#allocation3 + $0x90] sm:$0xff]
      %v5374 = vld [vmem:[#allocation3 + $0x98] sm:$0xff]
      %v5375 = vld [vmem:[#allocation3 + $0xa8] sm:$0xff]
      %v5376 = vld [vmem:[#allocation3 + $0xb0] sm:$0xff]
      %v5377 = vld [vmem:[#allocation3 + $0xc0] sm:$0xff]
      %v5378 = vld [vmem:[#allocation3 + $0xc8] sm:$0xff]
      %v5379 = vld [vmem:[#allocation3 + $0xd8] sm:$0xff]
      %v5380 = vld [vmem:[#allocation3 + $0xe0] sm:$0xff]
      %v5381 = vld [vmem:[#allocation3 + $0xf0] sm:$0xff]
      %v5382 = vld [vmem:[#allocation3 + $0xf8] sm:$0xff]
      %v5383 = vld [vmem:[#allocation3 + $0x108] sm:$0xff]
      %v5384 = vld [vmem:[#allocation3 + $0x110] sm:$0xff]
      %v5385 = vld [vmem:[#allocation3 + $0x120] sm:$0xff]
      %v5386 = vld [vmem:[#allocation3 + $0x128] sm:$0xff]
      %v5387 = vld [vmem:[#allocation3 + $0x138] sm:$0xff]
      %v5388 = vld [vmem:[#allocation3 + $0x140] sm:$0xff]
      %v5389 = vld [vmem:[#allocation3 + $0x150] sm:$0xff]
      %v5390 = vld [vmem:[#allocation3 + $0x158] sm:$0xff]
      %v5391 = vld [vmem:[#allocation3 + $0x168] sm:$0xff]
      %v5392 = vld [vmem:[#allocation3 + $0x170] sm:$0xff]
      %v5393 = vld [vmem:[%s4] sm:$0xff]
      %v5394 = vld [vmem:[%s4 + $0x8] sm:$0xff]
      %v5395 = vld [vmem:[%s4 + $0x10] sm:$0xff]
      %v5396 = vld [vmem:[%s4 + $0x18] sm:$0xff]
      %v5397 = vld [vmem:[#allocation3 + $0x1] sm:$0xff]
      %v5398 = vld [vmem:[#allocation3 + $0x9] sm:$0xff]
      %v5399 = vld [vmem:[#allocation3 + $0x19] sm:$0xff]
      %v5400 = vld [vmem:[#allocation3 + $0x21] sm:$0xff]
      %v5401 = vld [vmem:[#allocation3 + $0x31] sm:$0xff]
      %v5402 = vld [vmem:[#allocation3 + $0x39] sm:$0xff]
      %v5403 = vld [vmem:[#allocation3 + $0x49] sm:$0xff]
      %v5404 = vld [vmem:[#allocation3 + $0x51] sm:$0xff]
      %v5405 = vld [vmem:[#allocation3 + $0x61] sm:$0xff]
      %v5406 = vld [vmem:[#allocation3 + $0x69] sm:$0xff]
      %v5407 = vld [vmem:[#allocation3 + $0x79] sm:$0xff]
      %v5408 = vld [vmem:[#allocation3 + $0x81] sm:$0xff]
      %v5409 = vld [vmem:[#allocation3 + $0x91] sm:$0xff]
      %v5410 = vld [vmem:[#allocation3 + $0x99] sm:$0xff]
      %v5411 = vld [vmem:[#allocation3 + $0xa9] sm:$0xff]
      %v5412 = vld [vmem:[#allocation3 + $0xb1] sm:$0xff]
      %v5413 = vld [vmem:[#allocation3 + $0xc1] sm:$0xff]
      %v5414 = vld [vmem:[#allocation3 + $0xc9] sm:$0xff]
      %v5415 = vld [vmem:[#allocation3 + $0xd9] sm:$0xff]
      %v5416 = vld [vmem:[#allocation3 + $0xe1] sm:$0xff]
      %v5417 = vld [vmem:[#allocation3 + $0xf1] sm:$0xff]
      %v5418 = vld [vmem:[#allocation3 + $0xf9] sm:$0xff]
      %v5419 = vld [vmem:[#allocation3 + $0x109] sm:$0xff]
      %v5420 = vld [vmem:[#allocation3 + $0x111] sm:$0xff]
      %v5421 = vld [vmem:[#allocation3 + $0x121] sm:$0xff]
      %v5422 = vld [vmem:[#allocation3 + $0x129] sm:$0xff]
      %v5423 = vld [vmem:[#allocation3 + $0x139] sm:$0xff]
      %v5424 = vld [vmem:[#allocation3 + $0x141] sm:$0xff]
      %v5425 = vld [vmem:[#allocation3 + $0x151] sm:$0xff]
      %v5426 = vld [vmem:[#allocation3 + $0x159] sm:$0xff]
      %v5427 = vld [vmem:[#allocation3 + $0x169] sm:$0xff]
      %v5428 = vld [vmem:[#allocation3 + $0x171] sm:$0xff]
      %s5429 = scalar_lea.vmem %s4, 32
      %v5430 = vld [vmem:[%s5429] sm:$0xff]
      %v5431 = vld [vmem:[%s5429 + $0x8] sm:$0xff]
      %v5432 = vld [vmem:[%s5429 + $0x10] sm:$0xff]
      %v5433 = vld [vmem:[%s5429 + $0x18] sm:$0xff]
      %v5435 = vsel %vm309, %v5397, 0
      %v5438 = vsel %vm309, %v5398, 0
      %v5441 = vsel %vm309, %v5399, 0
      %v5444 = vsel %vm309, %v5400, 0
      %v5447 = vsel %vm309, %v5401, 0
      %v5450 = vsel %vm309, %v5402, 0
      %v5453 = vsel %vm309, %v5403, 0
      %v5456 = vsel %vm309, %v5404, 0
      %v5459 = vsel %vm309, %v5405, 0
      %v5462 = vsel %vm309, %v5406, 0
      %v5465 = vsel %vm309, %v5407, 0
      %v5468 = vsel %vm309, %v5408, 0
      %v5471 = vsel %vm309, %v5409, 0
      %v5474 = vsel %vm309, %v5410, 0
      %v5477 = vsel %vm309, %v5411, 0
      %v5480 = vsel %vm309, %v5412, 0
      %v5483 = vsel %vm309, %v5413, 0
      %v5486 = vsel %vm309, %v5414, 0
      %v5489 = vsel %vm309, %v5415, 0
      %v5492 = vsel %vm309, %v5416, 0
      %v5495 = vsel %vm309, %v5417, 0
      %v5498 = vsel %vm309, %v5418, 0
      %v5501 = vsel %vm309, %v5419, 0
      %v5504 = vsel %vm309, %v5420, 0
      %v5507 = vsel %vm309, %v5421, 0
      %v5510 = vsel %vm309, %v5422, 0
      %v5513 = vsel %vm309, %v5423, 0
      %v5516 = vsel %vm309, %v5424, 0
      %v5519 = vsel %vm309, %v5425, 0
      %v5522 = vsel %vm309, %v5426, 0
      %v5525 = vsel %vm309, %v5427, 0
      %v5528 = vsel %vm309, %v5428, 0
      %5530 = vmatprep.subr.mxu0 0.0
      %5531 = vmatpush1.msra.mxu0 %v5430
      %5532 = vmatprep.subr.mxu0 0.0
      %5533 = vmatpush1.msra.mxu0 %v5431
      %5534 = vmatprep.subr.mxu0 0.0
      %5535 = vmatpush1.msra.mxu0 %v5432
      %5536 = vmatprep.subr.mxu0 0.0
      %5537 = vmatpush1.msra.mxu0 %v5433
      %5538 = vmatprep.subr.mxu0 0.0
      %5539 = vmatpush1.msra.mxu0 0.0
      %5540 = vmatprep.subr.mxu0 0.0
      %5541 = vmatpush1.msra.mxu0 0.0
      %5542 = vmatprep.subr.mxu0 0.0
      %5543 = vmatpush1.msra.mxu0 0.0
      %5544 = vmatprep.subr.mxu0 0.0
      %5545 = vmatpush1.msra.mxu0 0.0
      %5546 = vmatprep.subr.mxu0 0.0
      %5547 = vmatpush1.msra.mxu0 0.0
      %5548 = vmatprep.subr.mxu0 0.0
      %5549 = vmatpush1.msra.mxu0 0.0
      %5550 = vmatprep.subr.mxu0 0.0
      %5551 = vmatpush1.msra.mxu0 0.0
      %5552 = vmatprep.subr.mxu0 0.0
      %5553 = vmatpush1.msra.mxu0 0.0
      %5554 = vmatprep.subr.mxu0 0.0
      %5555 = vmatpush1.msra.mxu0 0.0
      %5556 = vmatprep.subr.mxu0 0.0
      %5557 = vmatpush1.msra.mxu0 0.0
      %5558 = vmatprep.subr.mxu0 0.0
      %5559 = vmatpush1.msra.mxu0 0.0
      %5560 = vmatprep.subr.mxu0 0.0
      %5561 = vmatpush1.msra.mxu0 0.0
      %5562 = vmatprep.subr.mxu0 0.0
      %5563 = vmatpush1.msra.mxu0 0.0
      %5564 = vmatprep.subr.mxu0 0.0
      %5565 = vmatpush1.msra.mxu0 0.0
      %5566 = vmatprep.subr.mxu0 0.0
      %5567 = vmatpush1.msra.mxu0 0.0
      %5568 = vmatprep.subr.mxu0 0.0
      %5569 = vmatpush1.msra.mxu0 0.0
      %5570 = vmatprep.subr.mxu0 0.0
      %5571 = vmatpush1.msra.mxu0 0.0
      %5572 = vmatprep.subr.mxu0 0.0
      %5573 = vmatpush1.msra.mxu0 0.0
      %5574 = vmatprep.subr.mxu0 0.0
      %5575 = vmatpush1.msra.mxu0 0.0
      %5576 = vmatprep.subr.mxu0 0.0
      %5577 = vmatpush1.msra.mxu0 0.0
      %5578 = vmatprep.subr.mxu0 0.0
      %5579 = vmatpush1.msra.mxu0 0.0
      %5580 = vmatprep.subr.mxu0 0.0
      %5581 = vmatpush1.msra.mxu0 0.0
      %5582 = vmatprep.subr.mxu0 0.0
      %5583 = vmatpush1.msra.mxu0 0.0
      %5584 = vmatprep.subr.mxu0 0.0
      %5585 = vmatpush1.msra.mxu0 0.0
      %5586 = vmatprep.subr.mxu0 0.0
      %5587 = vmatpush1.msra.mxu0 0.0
      %5588 = vmatprep.subr.mxu0 0.0
      %5589 = vmatpush1.msra.mxu0 0.0
      %5590 = vmatprep.subr.mxu0 0.0
      %5591 = vmatpush1.msra.mxu0 0.0
      %5592 = vmatprep.subr.mxu0 0.0
      %5593 = vmatpush1.msra.mxu0 0.0
      %5594 = vmatprep.mubr.f32.mxu0 0.0
      %5595 = vmatmul.mubr.f32.gmra.mrb[0].mxu0 %v5435
      %v5596 = vpop.f32.mrb[0].mxu0
      %v5597 = vadd.f32 0.0, %v5596
      %v5598 = vpop.f32.mrb[0].mxu0
      %5599 = vmatprep.mubr.f32.mxu0 0.0
      %5600 = vmatmul.mubr.f32.gmra.mrb[0].mxu0 %v5438
      %v5601 = vpop.f32.mrb[0].mxu0
      %v5602 = vadd.f32 0.0, %v5601
      %v5603 = vpop.f32.mrb[0].mxu0
      %5604 = vmatprep.mubr.f32.mxu0 0.0
      %5605 = vmatmul.mubr.f32.gmra.mrb[0].mxu0 %v5441
      %v5606 = vpop.f32.mrb[0].mxu0
      %v5607 = vadd.f32 0.0, %v5606
      %v5608 = vpop.f32.mrb[0].mxu0
      %5609 = vmatprep.mubr.f32.mxu0 0.0
      %5610 = vmatmul.mubr.f32.gmra.mrb[0].mxu0 %v5444
      %v5611 = vpop.f32.mrb[0].mxu0
      %v5612 = vadd.f32 0.0, %v5611
      %v5613 = vpop.f32.mrb[0].mxu0
      %5614 = vmatprep.mubr.f32.mxu0 0.0
      %5615 = vmatmul.mubr.f32.gmra.mrb[0].mxu0 %v5447
      %v5616 = vpop.f32.mrb[0].mxu0
      %v5617 = vadd.f32 0.0, %v5616
      %v5618 = vpop.f32.mrb[0].mxu0
      %5619 = vmatprep.mubr.f32.mxu0 0.0
      %5620 = vmatmul.mubr.f32.gmra.mrb[0].mxu0 %v5450
      %v5621 = vpop.f32.mrb[0].mxu0
      %v5622 = vadd.f32 0.0, %v5621
      %v5623 = vpop.f32.mrb[0].mxu0
      %5624 = vmatprep.mubr.f32.mxu0 0.0
      %5625 = vmatmul.mubr.f32.gmra.mrb[0].mxu0 %v5453
      %v5626 = vpop.f32.mrb[0].mxu0
      %v5627 = vadd.f32 0.0, %v5626
      %v5628 = vpop.f32.mrb[0].mxu0
      %5629 = vmatprep.mubr.f32.mxu0 0.0
      %5630 = vmatmul.mubr.f32.gmra.mrb[0].mxu0 %v5456
      %v5631 = vpop.f32.mrb[0].mxu0
      %v5632 = vadd.f32 0.0, %v5631
      %v5633 = vpop.f32.mrb[0].mxu0
      %5634 = vmatprep.mubr.f32.mxu0 0.0
      %5635 = vmatmul.mubr.f32.gmra.mrb[0].mxu0 %v5459
      %v5636 = vpop.f32.mrb[0].mxu0
      %v5637 = vadd.f32 0.0, %v5636
      %v5638 = vpop.f32.mrb[0].mxu0
      %5639 = vmatprep.mubr.f32.mxu0 0.0
      %5640 = vmatmul.mubr.f32.gmra.mrb[0].mxu0 %v5462
      %v5641 = vpop.f32.mrb[0].mxu0
      %v5642 = vadd.f32 0.0, %v5641
      %v5643 = vpop.f32.mrb[0].mxu0
      %5644 = vmatprep.mubr.f32.mxu0 0.0
      %5645 = vmatmul.mubr.f32.gmra.mrb[0].mxu0 %v5465
      %v5646 = vpop.f32.mrb[0].mxu0
      %v5647 = vadd.f32 0.0, %v5646
      %v5648 = vpop.f32.mrb[0].mxu0
      %5649 = vmatprep.mubr.f32.mxu0 0.0
      %5650 = vmatmul.mubr.f32.gmra.mrb[0].mxu0 %v5468
      %v5651 = vpop.f32.mrb[0].mxu0
      %v5652 = vadd.f32 0.0, %v5651
      %v5653 = vpop.f32.mrb[0].mxu0
      %5654 = vmatprep.mubr.f32.mxu0 0.0
      %5655 = vmatmul.mubr.f32.gmra.mrb[0].mxu0 %v5471
      %v5656 = vpop.f32.mrb[0].mxu0
      %v5657 = vadd.f32 0.0, %v5656
      %v5658 = vpop.f32.mrb[0].mxu0
      %5659 = vmatprep.mubr.f32.mxu0 0.0
      %5660 = vmatmul.mubr.f32.gmra.mrb[0].mxu0 %v5474
      %v5661 = vpop.f32.mrb[0].mxu0
      %v5662 = vadd.f32 0.0, %v5661
      %v5663 = vpop.f32.mrb[0].mxu0
      %5664 = vmatprep.mubr.f32.mxu0 0.0
      %5665 = vmatmul.mubr.f32.gmra.mrb[0].mxu0 %v5477
      %v5666 = vpop.f32.mrb[0].mxu0
      %v5667 = vadd.f32 0.0, %v5666
      %v5668 = vpop.f32.mrb[0].mxu0
      %5669 = vmatprep.mubr.f32.mxu0 0.0
      %5670 = vmatmul.mubr.f32.gmra.mrb[0].mxu0 %v5480
      %v5671 = vpop.f32.mrb[0].mxu0
      %v5672 = vadd.f32 0.0, %v5671
      %v5673 = vpop.f32.mrb[0].mxu0
      %5674 = vmatprep.mubr.f32.mxu0 0.0
      %5675 = vmatmul.mubr.f32.gmra.mrb[0].mxu0 %v5483
      %v5676 = vpop.f32.mrb[0].mxu0
      %v5677 = vadd.f32 0.0, %v5676
      %v5678 = vpop.f32.mrb[0].mxu0
      %5679 = vmatprep.mubr.f32.mxu0 0.0
      %5680 = vmatmul.mubr.f32.gmra.mrb[0].mxu0 %v5486
      %v5681 = vpop.f32.mrb[0].mxu0
      %v5682 = vadd.f32 0.0, %v5681
      %v5683 = vpop.f32.mrb[0].mxu0
      %5684 = vmatprep.mubr.f32.mxu0 0.0
      %5685 = vmatmul.mubr.f32.gmra.mrb[0].mxu0 %v5489
      %v5686 = vpop.f32.mrb[0].mxu0
      %v5687 = vadd.f32 0.0, %v5686
      %v5688 = vpop.f32.mrb[0].mxu0
      %5689 = vmatprep.mubr.f32.mxu0 0.0
      %5690 = vmatmul.mubr.f32.gmra.mrb[0].mxu0 %v5492
      %v5691 = vpop.f32.mrb[0].mxu0
      %v5692 = vadd.f32 0.0, %v5691
      %v5693 = vpop.f32.mrb[0].mxu0
      %5694 = vmatprep.mubr.f32.mxu0 0.0
      %5695 = vmatmul.mubr.f32.gmra.mrb[0].mxu0 %v5495
      %v5696 = vpop.f32.mrb[0].mxu0
      %v5697 = vadd.f32 0.0, %v5696
      %v5698 = vpop.f32.mrb[0].mxu0
      %5699 = vmatprep.mubr.f32.mxu0 0.0
      %5700 = vmatmul.mubr.f32.gmra.mrb[0].mxu0 %v5498
      %v5701 = vpop.f32.mrb[0].mxu0
      %v5702 = vadd.f32 0.0, %v5701
      %v5703 = vpop.f32.mrb[0].mxu0
      %5704 = vmatprep.mubr.f32.mxu0 0.0
      %5705 = vmatmul.mubr.f32.gmra.mrb[0].mxu0 %v5501
      %v5706 = vpop.f32.mrb[0].mxu0
      %v5707 = vadd.f32 0.0, %v5706
      %v5708 = vpop.f32.mrb[0].mxu0
      %5709 = vmatprep.mubr.f32.mxu0 0.0
      %5710 = vmatmul.mubr.f32.gmra.mrb[0].mxu0 %v5504
      %v5711 = vpop.f32.mrb[0].mxu0
      %v5712 = vadd.f32 0.0, %v5711
      %v5713 = vpop.f32.mrb[0].mxu0
      %5714 = vmatprep.mubr.f32.mxu0 0.0
      %5715 = vmatmul.mubr.f32.gmra.mrb[0].mxu0 %v5507
      %v5716 = vpop.f32.mrb[0].mxu0
      %v5717 = vadd.f32 0.0, %v5716
      %v5718 = vpop.f32.mrb[0].mxu0
      %5719 = vmatprep.mubr.f32.mxu0 0.0
      %5720 = vmatmul.mubr.f32.gmra.mrb[0].mxu0 %v5510
      %v5721 = vpop.f32.mrb[0].mxu0
      %v5722 = vadd.f32 0.0, %v5721
      %v5723 = vpop.f32.mrb[0].mxu0
      %5724 = vmatprep.mubr.f32.mxu0 0.0
      %5725 = vmatmul.mubr.f32.gmra.mrb[0].mxu0 %v5513
      %v5726 = vpop.f32.mrb[0].mxu0
      %v5727 = vadd.f32 0.0, %v5726
      %v5728 = vpop.f32.mrb[0].mxu0
      %5729 = vmatprep.mubr.f32.mxu0 0.0
      %5730 = vmatmul.mubr.f32.gmra.mrb[0].mxu0 %v5516
      %v5731 = vpop.f32.mrb[0].mxu0
      %v5732 = vadd.f32 0.0, %v5731
      %v5733 = vpop.f32.mrb[0].mxu0
      %5734 = vmatprep.mubr.f32.mxu0 0.0
      %5735 = vmatmul.mubr.f32.gmra.mrb[0].mxu0 %v5519
      %v5736 = vpop.f32.mrb[0].mxu0
      %v5737 = vadd.f32 0.0, %v5736
      %v5738 = vpop.f32.mrb[0].mxu0
      %5739 = vmatprep.mubr.f32.mxu0 0.0
      %5740 = vmatmul.mubr.f32.gmra.mrb[0].mxu0 %v5522
      %v5741 = vpop.f32.mrb[0].mxu0
      %v5742 = vadd.f32 0.0, %v5741
      %v5743 = vpop.f32.mrb[0].mxu0
      %5744 = vmatprep.mubr.f32.mxu0 0.0
      %5745 = vmatmul.mubr.f32.gmra.mrb[0].mxu0 %v5525
      %v5746 = vpop.f32.mrb[0].mxu0
      %v5747 = vadd.f32 0.0, %v5746
      %v5748 = vpop.f32.mrb[0].mxu0
      %5749 = vmatprep.mubr.f32.mxu0 0.0
      %5750 = vmatmul.mubr.f32.gmra.mrb[0].mxu0 %v5528
      %v5751 = vpop.f32.mrb[0].mxu0
      %v5752 = vadd.f32 0.0, %v5751
      %v5753 = vpop.f32.mrb[0].mxu0
      %5754 = vdwg.mxu0
      %v5756 = vsel %vm309, %v5361, 0
      %v5759 = vsel %vm309, %v5362, 0
      %v5762 = vsel %vm309, %v5363, 0
      %v5765 = vsel %vm309, %v5364, 0
      %v5768 = vsel %vm309, %v5365, 0
      %v5771 = vsel %vm309, %v5366, 0
      %v5774 = vsel %vm309, %v5367, 0
      %v5777 = vsel %vm309, %v5368, 0
      %v5780 = vsel %vm309, %v5369, 0
      %v5783 = vsel %vm309, %v5370, 0
      %v5786 = vsel %vm309, %v5371, 0
      %v5789 = vsel %vm309, %v5372, 0
      %v5792 = vsel %vm309, %v5373, 0
      %v5795 = vsel %vm309, %v5374, 0
      %v5798 = vsel %vm309, %v5375, 0
      %v5801 = vsel %vm309, %v5376, 0
      %v5804 = vsel %vm309, %v5377, 0
      %v5807 = vsel %vm309, %v5378, 0
      %v5810 = vsel %vm309, %v5379, 0
      %v5813 = vsel %vm309, %v5380, 0
      %v5816 = vsel %vm309, %v5381, 0
      %v5819 = vsel %vm309, %v5382, 0
      %v5822 = vsel %vm309, %v5383, 0
      %v5825 = vsel %vm309, %v5384, 0
      %v5828 = vsel %vm309, %v5385, 0
      %v5831 = vsel %vm309, %v5386, 0
      %v5834 = vsel %vm309, %v5387, 0
      %v5837 = vsel %vm309, %v5388, 0
      %v5840 = vsel %vm309, %v5389, 0
      %v5843 = vsel %vm309, %v5390, 0
      %v5846 = vsel %vm309, %v5391, 0
      %v5849 = vsel %vm309, %v5392, 0
      %5851 = vmatprep.subr.mxu0 0.0
      %5852 = vmatpush1.msra.mxu0 %v5393
      %5853 = vmatprep.subr.mxu0 0.0
      %5854 = vmatpush1.msra.mxu0 %v5394
      %5855 = vmatprep.subr.mxu0 0.0
      %5856 = vmatpush1.msra.mxu0 %v5395
      %5857 = vmatprep.subr.mxu0 0.0
      %5858 = vmatpush1.msra.mxu0 %v5396
      %5859 = vmatprep.subr.mxu0 0.0
      %5860 = vmatpush1.msra.mxu0 0.0
      %5861 = vmatprep.subr.mxu0 0.0
      %5862 = vmatpush1.msra.mxu0 0.0
      %5863 = vmatprep.subr.mxu0 0.0
      %5864 = vmatpush1.msra.mxu0 0.0
      %5865 = vmatprep.subr.mxu0 0.0
      %5866 = vmatpush1.msra.mxu0 0.0
      %5867 = vmatprep.subr.mxu0 0.0
      %5868 = vmatpush1.msra.mxu0 0.0
      %5869 = vmatprep.subr.mxu0 0.0
      %5870 = vmatpush1.msra.mxu0 0.0
      %5871 = vmatprep.subr.mxu0 0.0
      %5872 = vmatpush1.msra.mxu0 0.0
      %5873 = vmatprep.subr.mxu0 0.0
      %5874 = vmatpush1.msra.mxu0 0.0
      %5875 = vmatprep.subr.mxu0 0.0
      %5876 = vmatpush1.msra.mxu0 0.0
      %5877 = vmatprep.subr.mxu0 0.0
      %5878 = vmatpush1.msra.mxu0 0.0
      %5879 = vmatprep.subr.mxu0 0.0
      %5880 = vmatpush1.msra.mxu0 0.0
      %5881 = vmatprep.subr.mxu0 0.0
      %5882 = vmatpush1.msra.mxu0 0.0
      %5883 = vmatprep.subr.mxu0 0.0
      %5884 = vmatpush1.msra.mxu0 0.0
      %5885 = vmatprep.subr.mxu0 0.0
      %5886 = vmatpush1.msra.mxu0 0.0
      %5887 = vmatprep.subr.mxu0 0.0
      %5888 = vmatpush1.msra.mxu0 0.0
      %5889 = vmatprep.subr.mxu0 0.0
      %5890 = vmatpush1.msra.mxu0 0.0
      %5891 = vmatprep.subr.mxu0 0.0
      %5892 = vmatpush1.msra.mxu0 0.0
      %5893 = vmatprep.subr.mxu0 0.0
      %5894 = vmatpush1.msra.mxu0 0.0
      %5895 = vmatprep.subr.mxu0 0.0
      %5896 = vmatpush1.msra.mxu0 0.0
      %5897 = vmatprep.subr.mxu0 0.0
      %5898 = vmatpush1.msra.mxu0 0.0
      %5899 = vmatprep.subr.mxu0 0.0
      %5900 = vmatpush1.msra.mxu0 0.0
      %5901 = vmatprep.subr.mxu0 0.0
      %5902 = vmatpush1.msra.mxu0 0.0
      %5903 = vmatprep.subr.mxu0 0.0
      %5904 = vmatpush1.msra.mxu0 0.0
      %5905 = vmatprep.subr.mxu0 0.0
      %5906 = vmatpush1.msra.mxu0 0.0
      %5907 = vmatprep.subr.mxu0 0.0
      %5908 = vmatpush1.msra.mxu0 0.0
      %5909 = vmatprep.subr.mxu0 0.0
      %5910 = vmatpush1.msra.mxu0 0.0
      %5911 = vmatprep.subr.mxu0 0.0
      %5912 = vmatpush1.msra.mxu0 0.0
      %5913 = vmatprep.subr.mxu0 0.0
      %5914 = vmatpush1.msra.mxu0 0.0
      %5915 = vmatprep.mubr.f32.mxu0 0.0
      %5916 = vmatmul.mubr.f32.gmra.mrb[0].mxu0 %v5756
      %v5917 = vpop.f32.mrb[0].mxu0
      %v5918 = vadd.f32 %v5597, %v5917
      %v5919 = vpop.f32.mrb[0].mxu0
      %5920 = vmatprep.mubr.f32.mxu0 0.0
      %5921 = vmatmul.mubr.f32.gmra.mrb[0].mxu0 %v5759
      %v5922 = vpop.f32.mrb[0].mxu0
      %v5923 = vadd.f32 %v5602, %v5922
      %v5924 = vpop.f32.mrb[0].mxu0
      %5925 = vmatprep.mubr.f32.mxu0 0.0
      %5926 = vmatmul.mubr.f32.gmra.mrb[0].mxu0 %v5762
      %v5927 = vpop.f32.mrb[0].mxu0
      %v5928 = vadd.f32 %v5607, %v5927
      %v5929 = vpop.f32.mrb[0].mxu0
      %5930 = vmatprep.mubr.f32.mxu0 0.0
      %5931 = vmatmul.mubr.f32.gmra.mrb[0].mxu0 %v5765
      %v5932 = vpop.f32.mrb[0].mxu0
      %v5933 = vadd.f32 %v5612, %v5932
      %v5934 = vpop.f32.mrb[0].mxu0
      %5935 = vmatprep.mubr.f32.mxu0 0.0
      %5936 = vmatmul.mubr.f32.gmra.mrb[0].mxu0 %v5768
      %v5937 = vpop.f32.mrb[0].mxu0
      %v5938 = vadd.f32 %v5617, %v5937
      %v5939 = vpop.f32.mrb[0].mxu0
      %5940 = vmatprep.mubr.f32.mxu0 0.0
      %5941 = vmatmul.mubr.f32.gmra.mrb[0].mxu0 %v5771
      %v5942 = vpop.f32.mrb[0].mxu0
      %v5943 = vadd.f32 %v5622, %v5942
      %v5944 = vpop.f32.mrb[0].mxu0
      %5945 = vmatprep.mubr.f32.mxu0 0.0
      %5946 = vmatmul.mubr.f32.gmra.mrb[0].mxu0 %v5774
      %v5947 = vpop.f32.mrb[0].mxu0
      %v5948 = vadd.f32 %v5627, %v5947
      %v5949 = vpop.f32.mrb[0].mxu0
      %5950 = vmatprep.mubr.f32.mxu0 0.0
      %5951 = vmatmul.mubr.f32.gmra.mrb[0].mxu0 %v5777
      %v5952 = vpop.f32.mrb[0].mxu0
      %v5953 = vadd.f32 %v5632, %v5952
      %v5954 = vpop.f32.mrb[0].mxu0
      %5955 = vmatprep.mubr.f32.mxu0 0.0
      %5956 = vmatmul.mubr.f32.gmra.mrb[0].mxu0 %v5780
      %v5957 = vpop.f32.mrb[0].mxu0
      %v5958 = vadd.f32 %v5637, %v5957
      %v5959 = vpop.f32.mrb[0].mxu0
      %5960 = vmatprep.mubr.f32.mxu0 0.0
      %5961 = vmatmul.mubr.f32.gmra.mrb[0].mxu0 %v5783
      %v5962 = vpop.f32.mrb[0].mxu0
      %v5963 = vadd.f32 %v5642, %v5962
      %v5964 = vpop.f32.mrb[0].mxu0
      %5965 = vmatprep.mubr.f32.mxu0 0.0
      %5966 = vmatmul.mubr.f32.gmra.mrb[0].mxu0 %v5786
      %v5967 = vpop.f32.mrb[0].mxu0
      %v5968 = vadd.f32 %v5647, %v5967
      %v5969 = vpop.f32.mrb[0].mxu0
      %5970 = vmatprep.mubr.f32.mxu0 0.0
      %5971 = vmatmul.mubr.f32.gmra.mrb[0].mxu0 %v5789
      %v5972 = vpop.f32.mrb[0].mxu0
      %v5973 = vadd.f32 %v5652, %v5972
      %v5974 = vpop.f32.mrb[0].mxu0
      %5975 = vmatprep.mubr.f32.mxu0 0.0
      %5976 = vmatmul.mubr.f32.gmra.mrb[0].mxu0 %v5792
      %v5977 = vpop.f32.mrb[0].mxu0
      %v5978 = vadd.f32 %v5657, %v5977
      %v5979 = vpop.f32.mrb[0].mxu0
      %5980 = vmatprep.mubr.f32.mxu0 0.0
      %5981 = vmatmul.mubr.f32.gmra.mrb[0].mxu0 %v5795
      %v5982 = vpop.f32.mrb[0].mxu0
      %v5983 = vadd.f32 %v5662, %v5982
      %v5984 = vpop.f32.mrb[0].mxu0
      %5985 = vmatprep.mubr.f32.mxu0 0.0
      %5986 = vmatmul.mubr.f32.gmra.mrb[0].mxu0 %v5798
      %v5987 = vpop.f32.mrb[0].mxu0
      %v5988 = vadd.f32 %v5667, %v5987
      %v5989 = vpop.f32.mrb[0].mxu0
      %5990 = vmatprep.mubr.f32.mxu0 0.0
      %5991 = vmatmul.mubr.f32.gmra.mrb[0].mxu0 %v5801
      %v5992 = vpop.f32.mrb[0].mxu0
      %v5993 = vadd.f32 %v5672, %v5992
      %v5994 = vpop.f32.mrb[0].mxu0
      %5995 = vmatprep.mubr.f32.mxu0 0.0
      %5996 = vmatmul.mubr.f32.gmra.mrb[0].mxu0 %v5804
      %v5997 = vpop.f32.mrb[0].mxu0
      %v5998 = vadd.f32 %v5677, %v5997
      %v5999 = vpop.f32.mrb[0].mxu0
      %6000 = vmatprep.mubr.f32.mxu0 0.0
      %6001 = vmatmul.mubr.f32.gmra.mrb[0].mxu0 %v5807
      %v6002 = vpop.f32.mrb[0].mxu0
      %v6003 = vadd.f32 %v5682, %v6002
      %v6004 = vpop.f32.mrb[0].mxu0
      %6005 = vmatprep.mubr.f32.mxu0 0.0
      %6006 = vmatmul.mubr.f32.gmra.mrb[0].mxu0 %v5810
      %v6007 = vpop.f32.mrb[0].mxu0
      %v6008 = vadd.f32 %v5687, %v6007
      %v6009 = vpop.f32.mrb[0].mxu0
      %6010 = vmatprep.mubr.f32.mxu0 0.0
      %6011 = vmatmul.mubr.f32.gmra.mrb[0].mxu0 %v5813
      %v6012 = vpop.f32.mrb[0].mxu0
      %v6013 = vadd.f32 %v5692, %v6012
      %v6014 = vpop.f32.mrb[0].mxu0
      %6015 = vmatprep.mubr.f32.mxu0 0.0
      %6016 = vmatmul.mubr.f32.gmra.mrb[0].mxu0 %v5816
      %v6017 = vpop.f32.mrb[0].mxu0
      %v6018 = vadd.f32 %v5697, %v6017
      %v6019 = vpop.f32.mrb[0].mxu0
      %6020 = vmatprep.mubr.f32.mxu0 0.0
      %6021 = vmatmul.mubr.f32.gmra.mrb[0].mxu0 %v5819
      %v6022 = vpop.f32.mrb[0].mxu0
      %v6023 = vadd.f32 %v5702, %v6022
      %v6024 = vpop.f32.mrb[0].mxu0
      %6025 = vmatprep.mubr.f32.mxu0 0.0
      %6026 = vmatmul.mubr.f32.gmra.mrb[0].mxu0 %v5822
      %v6027 = vpop.f32.mrb[0].mxu0
      %v6028 = vadd.f32 %v5707, %v6027
      %v6029 = vpop.f32.mrb[0].mxu0
      %6030 = vmatprep.mubr.f32.mxu0 0.0
      %6031 = vmatmul.mubr.f32.gmra.mrb[0].mxu0 %v5825
      %v6032 = vpop.f32.mrb[0].mxu0
      %v6033 = vadd.f32 %v5712, %v6032
      %v6034 = vpop.f32.mrb[0].mxu0
      %6035 = vmatprep.mubr.f32.mxu0 0.0
      %6036 = vmatmul.mubr.f32.gmra.mrb[0].mxu0 %v5828
      %v6037 = vpop.f32.mrb[0].mxu0
      %v6038 = vadd.f32 %v5717, %v6037
      %v6039 = vpop.f32.mrb[0].mxu0
      %6040 = vmatprep.mubr.f32.mxu0 0.0
      %6041 = vmatmul.mubr.f32.gmra.mrb[0].mxu0 %v5831
      %v6042 = vpop.f32.mrb[0].mxu0
      %v6043 = vadd.f32 %v5722, %v6042
      %v6044 = vpop.f32.mrb[0].mxu0
      %6045 = vmatprep.mubr.f32.mxu0 0.0
      %6046 = vmatmul.mubr.f32.gmra.mrb[0].mxu0 %v5834
      %v6047 = vpop.f32.mrb[0].mxu0
      %v6048 = vadd.f32 %v5727, %v6047
      %v6049 = vpop.f32.mrb[0].mxu0
      %6050 = vmatprep.mubr.f32.mxu0 0.0
      %6051 = vmatmul.mubr.f32.gmra.mrb[0].mxu0 %v5837
      %v6052 = vpop.f32.mrb[0].mxu0
      %v6053 = vadd.f32 %v5732, %v6052
      %v6054 = vpop.f32.mrb[0].mxu0
      %6055 = vmatprep.mubr.f32.mxu0 0.0
      %6056 = vmatmul.mubr.f32.gmra.mrb[0].mxu0 %v5840
      %v6057 = vpop.f32.mrb[0].mxu0
      %v6058 = vadd.f32 %v5737, %v6057
      %v6059 = vpop.f32.mrb[0].mxu0
      %6060 = vmatprep.mubr.f32.mxu0 0.0
      %6061 = vmatmul.mubr.f32.gmra.mrb[0].mxu0 %v5843
      %v6062 = vpop.f32.mrb[0].mxu0
      %v6063 = vadd.f32 %v5742, %v6062
      %v6064 = vpop.f32.mrb[0].mxu0
      %6065 = vmatprep.mubr.f32.mxu0 0.0
      %6066 = vmatmul.mubr.f32.gmra.mrb[0].mxu0 %v5846
      %v6067 = vpop.f32.mrb[0].mxu0
      %v6068 = vadd.f32 %v5747, %v6067
      %v6069 = vpop.f32.mrb[0].mxu0
      %6070 = vmatprep.mubr.f32.mxu0 0.0
      %6071 = vmatmul.mubr.f32.gmra.mrb[0].mxu0 %v5849
      %v6072 = vpop.f32.mrb[0].mxu0
      %v6073 = vadd.f32 %v5752, %v6072
      %v6074 = vpop.f32.mrb[0].mxu0
      %6075 = vdwg.mxu0
      %v6076 = vld [vmem:[#allocation3 + $0x2] sm:$0xff]
      %v6077 = vld [vmem:[#allocation3 + $0xa] sm:$0xff]
      %v6078 = vld [vmem:[#allocation3 + $0x1a] sm:$0xff]
      %v6079 = vld [vmem:[#allocation3 + $0x22] sm:$0xff]
      %v6080 = vld [vmem:[#allocation3 + $0x32] sm:$0xff]
      %v6081 = vld [vmem:[#allocation3 + $0x3a] sm:$0xff]
      %v6082 = vld [vmem:[#allocation3 + $0x4a] sm:$0xff]
      %v6083 = vld [vmem:[#allocation3 + $0x52] sm:$0xff]
      %v6084 = vld [vmem:[#allocation3 + $0x62] sm:$0xff]
      %v6085 = vld [vmem:[#allocation3 + $0x6a] sm:$0xff]
      %v6086 = vld [vmem:[#allocation3 + $0x7a] sm:$0xff]
      %v6087 = vld [vmem:[#allocation3 + $0x82] sm:$0xff]
      %v6088 = vld [vmem:[#allocation3 + $0x92] sm:$0xff]
      %v6089 = vld [vmem:[#allocation3 + $0x9a] sm:$0xff]
      %v6090 = vld [vmem:[#allocation3 + $0xaa] sm:$0xff]
      %v6091 = vld [vmem:[#allocation3 + $0xb2] sm:$0xff]
      %v6092 = vld [vmem:[#allocation3 + $0xc2] sm:$0xff]
      %v6093 = vld [vmem:[#allocation3 + $0xca] sm:$0xff]
      %v6094 = vld [vmem:[#allocation3 + $0xda] sm:$0xff]
      %v6095 = vld [vmem:[#allocation3 + $0xe2] sm:$0xff]
      %v6096 = vld [vmem:[#allocation3 + $0xf2] sm:$0xff]
      %v6097 = vld [vmem:[#allocation3 + $0xfa] sm:$0xff]
      %v6098 = vld [vmem:[#allocation3 + $0x10a] sm:$0xff]
      %v6099 = vld [vmem:[#allocation3 + $0x112] sm:$0xff]
      %v6100 = vld [vmem:[#allocation3 + $0x122] sm:$0xff]
      %v6101 = vld [vmem:[#allocation3 + $0x12a] sm:$0xff]
      %v6102 = vld [vmem:[#allocation3 + $0x13a] sm:$0xff]
      %v6103 = vld [vmem:[#allocation3 + $0x142] sm:$0xff]
      %v6104 = vld [vmem:[#allocation3 + $0x152] sm:$0xff]
      %v6105 = vld [vmem:[#allocation3 + $0x15a] sm:$0xff]
      %v6106 = vld [vmem:[#allocation3 + $0x16a] sm:$0xff]
      %v6107 = vld [vmem:[#allocation3 + $0x172] sm:$0xff]
      %s6108 = scalar_lea.vmem %s4, 64
      %v6109 = vld [vmem:[%s6108] sm:$0xff]
      %v6110 = vld [vmem:[%s6108 + $0x8] sm:$0xff]
      %v6111 = vld [vmem:[%s6108 + $0x10] sm:$0xff]
      %v6112 = vld [vmem:[%s6108 + $0x18] sm:$0xff]
      %v6114 = vsel %vm309, %v6076, 0
      %v6117 = vsel %vm309, %v6077, 0
      %v6120 = vsel %vm309, %v6078, 0
      %v6123 = vsel %vm309, %v6079, 0
      %v6126 = vsel %vm309, %v6080, 0
      %v6129 = vsel %vm309, %v6081, 0
      %v6132 = vsel %vm309, %v6082, 0
      %v6135 = vsel %vm309, %v6083, 0
      %v6138 = vsel %vm309, %v6084, 0
      %v6141 = vsel %vm309, %v6085, 0
      %v6144 = vsel %vm309, %v6086, 0
      %v6147 = vsel %vm309, %v6087, 0
      %v6150 = vsel %vm309, %v6088, 0
      %v6153 = vsel %vm309, %v6089, 0
      %v6156 = vsel %vm309, %v6090, 0
      %v6159 = vsel %vm309, %v6091, 0
      %v6162 = vsel %vm309, %v6092, 0
      %v6165 = vsel %vm309, %v6093, 0
      %v6168 = vsel %vm309, %v6094, 0
      %v6171 = vsel %vm309, %v6095, 0
      %v6174 = vsel %vm309, %v6096, 0
      %v6177 = vsel %vm309, %v6097, 0
      %v6180 = vsel %vm309, %v6098, 0
      %v6183 = vsel %vm309, %v6099, 0
      %v6186 = vsel %vm309, %v6100, 0
      %v6189 = vsel %vm309, %v6101, 0
      %v6192 = vsel %vm309, %v6102, 0
      %v6195 = vsel %vm309, %v6103, 0
      %v6198 = vsel %vm309, %v6104, 0
      %v6201 = vsel %vm309, %v6105, 0
      %v6204 = vsel %vm309, %v6106, 0
      %v6207 = vsel %vm309, %v6107, 0
      %6209 = vmatprep.subr.mxu0 0.0
      %6210 = vmatpush1.msra.mxu0 %v6109
      %6211 = vmatprep.subr.mxu0 0.0
      %6212 = vmatpush1.msra.mxu0 %v6110
      %6213 = vmatprep.subr.mxu0 0.0
      %6214 = vmatpush1.msra.mxu0 %v6111
      %6215 = vmatprep.subr.mxu0 0.0
      %6216 = vmatpush1.msra.mxu0 %v6112
      %6217 = vmatprep.subr.mxu0 0.0
      %6218 = vmatpush1.msra.mxu0 0.0
      %6219 = vmatprep.subr.mxu0 0.0
      %6220 = vmatpush1.msra.mxu0 0.0
      %6221 = vmatprep.subr.mxu0 0.0
      %6222 = vmatpush1.msra.mxu0 0.0
      %6223 = vmatprep.subr.mxu0 0.0
      %6224 = vmatpush1.msra.mxu0 0.0
      %6225 = vmatprep.subr.mxu0 0.0
      %6226 = vmatpush1.msra.mxu0 0.0
      %6227 = vmatprep.subr.mxu0 0.0
      %6228 = vmatpush1.msra.mxu0 0.0
      %6229 = vmatprep.subr.mxu0 0.0
      %6230 = vmatpush1.msra.mxu0 0.0
      %6231 = vmatprep.subr.mxu0 0.0
      %6232 = vmatpush1.msra.mxu0 0.0
      %6233 = vmatprep.subr.mxu0 0.0
      %6234 = vmatpush1.msra.mxu0 0.0
      %6235 = vmatprep.subr.mxu0 0.0
      %6236 = vmatpush1.msra.mxu0 0.0
      %6237 = vmatprep.subr.mxu0 0.0
      %6238 = vmatpush1.msra.mxu0 0.0
      %6239 = vmatprep.subr.mxu0 0.0
      %6240 = vmatpush1.msra.mxu0 0.0
      %6241 = vmatprep.subr.mxu0 0.0
      %6242 = vmatpush1.msra.mxu0 0.0
      %6243 = vmatprep.subr.mxu0 0.0
      %6244 = vmatpush1.msra.mxu0 0.0
      %6245 = vmatprep.subr.mxu0 0.0
      %6246 = vmatpush1.msra.mxu0 0.0
      %6247 = vmatprep.subr.mxu0 0.0
      %6248 = vmatpush1.msra.mxu0 0.0
      %6249 = vmatprep.subr.mxu0 0.0
      %6250 = vmatpush1.msra.mxu0 0.0
      %6251 = vmatprep.subr.mxu0 0.0
      %6252 = vmatpush1.msra.mxu0 0.0
      %6253 = vmatprep.subr.mxu0 0.0
      %6254 = vmatpush1.msra.mxu0 0.0
      %6255 = vmatprep.subr.mxu0 0.0
      %6256 = vmatpush1.msra.mxu0 0.0
      %6257 = vmatprep.subr.mxu0 0.0
      %6258 = vmatpush1.msra.mxu0 0.0
      %6259 = vmatprep.subr.mxu0 0.0
      %6260 = vmatpush1.msra.mxu0 0.0
      %6261 = vmatprep.subr.mxu0 0.0
      %6262 = vmatpush1.msra.mxu0 0.0
      %6263 = vmatprep.subr.mxu0 0.0
      %6264 = vmatpush1.msra.mxu0 0.0
      %6265 = vmatprep.subr.mxu0 0.0
      %6266 = vmatpush1.msra.mxu0 0.0
      %6267 = vmatprep.subr.mxu0 0.0
      %6268 = vmatpush1.msra.mxu0 0.0
      %6269 = vmatprep.subr.mxu0 0.0
      %6270 = vmatpush1.msra.mxu0 0.0
      %6271 = vmatprep.subr.mxu0 0.0
      %6272 = vmatpush1.msra.mxu0 0.0
      %6273 = vmatprep.mubr.f32.mxu0 0.0
      %6274 = vmatmul.mubr.f32.gmra.mrb[0].mxu0 %v6114
      %v6275 = vpop.f32.mrb[0].mxu0
      %v6276 = vadd.f32 0.0, %v6275
      %v6277 = vpop.f32.mrb[0].mxu0
      %6278 = vmatprep.mubr.f32.mxu0 0.0
      %6279 = vmatmul.mubr.f32.gmra.mrb[0].mxu0 %v6117
      %v6280 = vpop.f32.mrb[0].mxu0
      %v6281 = vadd.f32 0.0, %v6280
      %v6282 = vpop.f32.mrb[0].mxu0
      %6283 = vmatprep.mubr.f32.mxu0 0.0
      %6284 = vmatmul.mubr.f32.gmra.mrb[0].mxu0 %v6120
      %v6285 = vpop.f32.mrb[0].mxu0
      %v6286 = vadd.f32 0.0, %v6285
      %v6287 = vpop.f32.mrb[0].mxu0
      %6288 = vmatprep.mubr.f32.mxu0 0.0
      %6289 = vmatmul.mubr.f32.gmra.mrb[0].mxu0 %v6123
      %v6290 = vpop.f32.mrb[0].mxu0
      %v6291 = vadd.f32 0.0, %v6290
      %v6292 = vpop.f32.mrb[0].mxu0
      %6293 = vmatprep.mubr.f32.mxu0 0.0
      %6294 = vmatmul.mubr.f32.gmra.mrb[0].mxu0 %v6126
      %v6295 = vpop.f32.mrb[0].mxu0
      %v6296 = vadd.f32 0.0, %v6295
      %v6297 = vpop.f32.mrb[0].mxu0
      %6298 = vmatprep.mubr.f32.mxu0 0.0
      %6299 = vmatmul.mubr.f32.gmra.mrb[0].mxu0 %v6129
      %v6300 = vpop.f32.mrb[0].mxu0
      %v6301 = vadd.f32 0.0, %v6300
      %v6302 = vpop.f32.mrb[0].mxu0
      %6303 = vmatprep.mubr.f32.mxu0 0.0
      %6304 = vmatmul.mubr.f32.gmra.mrb[0].mxu0 %v6132
      %v6305 = vpop.f32.mrb[0].mxu0
      %v6306 = vadd.f32 0.0, %v6305
      %v6307 = vpop.f32.mrb[0].mxu0
      %6308 = vmatprep.mubr.f32.mxu0 0.0
      %6309 = vmatmul.mubr.f32.gmra.mrb[0].mxu0 %v6135
      %v6310 = vpop.f32.mrb[0].mxu0
      %v6311 = vadd.f32 0.0, %v6310
      %v6312 = vpop.f32.mrb[0].mxu0
      %6313 = vmatprep.mubr.f32.mxu0 0.0
      %6314 = vmatmul.mubr.f32.gmra.mrb[0].mxu0 %v6138
      %v6315 = vpop.f32.mrb[0].mxu0
      %v6316 = vadd.f32 0.0, %v6315
      %v6317 = vpop.f32.mrb[0].mxu0
      %6318 = vmatprep.mubr.f32.mxu0 0.0
      %6319 = vmatmul.mubr.f32.gmra.mrb[0].mxu0 %v6141
      %v6320 = vpop.f32.mrb[0].mxu0
      %v6321 = vadd.f32 0.0, %v6320
      %v6322 = vpop.f32.mrb[0].mxu0
      %6323 = vmatprep.mubr.f32.mxu0 0.0
      %6324 = vmatmul.mubr.f32.gmra.mrb[0].mxu0 %v6144
      %v6325 = vpop.f32.mrb[0].mxu0
      %v6326 = vadd.f32 0.0, %v6325
      %v6327 = vpop.f32.mrb[0].mxu0
      %6328 = vmatprep.mubr.f32.mxu0 0.0
      %6329 = vmatmul.mubr.f32.gmra.mrb[0].mxu0 %v6147
      %v6330 = vpop.f32.mrb[0].mxu0
      %v6331 = vadd.f32 0.0, %v6330
      %v6332 = vpop.f32.mrb[0].mxu0
      %6333 = vmatprep.mubr.f32.mxu0 0.0
      %6334 = vmatmul.mubr.f32.gmra.mrb[0].mxu0 %v6150
      %v6335 = vpop.f32.mrb[0].mxu0
      %v6336 = vadd.f32 0.0, %v6335
      %v6337 = vpop.f32.mrb[0].mxu0
      %6338 = vmatprep.mubr.f32.mxu0 0.0
      %6339 = vmatmul.mubr.f32.gmra.mrb[0].mxu0 %v6153
      %v6340 = vpop.f32.mrb[0].mxu0
      %v6341 = vadd.f32 0.0, %v6340
      %v6342 = vpop.f32.mrb[0].mxu0
      %6343 = vmatprep.mubr.f32.mxu0 0.0
      %6344 = vmatmul.mubr.f32.gmra.mrb[0].mxu0 %v6156
      %v6345 = vpop.f32.mrb[0].mxu0
      %v6346 = vadd.f32 0.0, %v6345
      %v6347 = vpop.f32.mrb[0].mxu0
      %6348 = vmatprep.mubr.f32.mxu0 0.0
      %6349 = vmatmul.mubr.f32.gmra.mrb[0].mxu0 %v6159
      %v6350 = vpop.f32.mrb[0].mxu0
      %v6351 = vadd.f32 0.0, %v6350
      %v6352 = vpop.f32.mrb[0].mxu0
      %6353 = vmatprep.mubr.f32.mxu0 0.0
      %6354 = vmatmul.mubr.f32.gmra.mrb[0].mxu0 %v6162
      %v6355 = vpop.f32.mrb[0].mxu0
      %v6356 = vadd.f32 0.0, %v6355
      %v6357 = vpop.f32.mrb[0].mxu0
      %6358 = vmatprep.mubr.f32.mxu0 0.0
      %6359 = vmatmul.mubr.f32.gmra.mrb[0].mxu0 %v6165
      %v6360 = vpop.f32.mrb[0].mxu0
      %v6361 = vadd.f32 0.0, %v6360
      %v6362 = vpop.f32.mrb[0].mxu0
      %6363 = vmatprep.mubr.f32.mxu0 0.0
      %6364 = vmatmul.mubr.f32.gmra.mrb[0].mxu0 %v6168
      %v6365 = vpop.f32.mrb[0].mxu0
      %v6366 = vadd.f32 0.0, %v6365
      %v6367 = vpop.f32.mrb[0].mxu0
      %6368 = vmatprep.mubr.f32.mxu0 0.0
      %6369 = vmatmul.mubr.f32.gmra.mrb[0].mxu0 %v6171
      %v6370 = vpop.f32.mrb[0].mxu0
      %v6371 = vadd.f32 0.0, %v6370
      %v6372 = vpop.f32.mrb[0].mxu0
      %6373 = vmatprep.mubr.f32.mxu0 0.0
      %6374 = vmatmul.mubr.f32.gmra.mrb[0].mxu0 %v6174
      %v6375 = vpop.f32.mrb[0].mxu0
      %v6376 = vadd.f32 0.0, %v6375
      %v6377 = vpop.f32.mrb[0].mxu0
      %6378 = vmatprep.mubr.f32.mxu0 0.0
      %6379 = vmatmul.mubr.f32.gmra.mrb[0].mxu0 %v6177
      %v6380 = vpop.f32.mrb[0].mxu0
      %v6381 = vadd.f32 0.0, %v6380
      %v6382 = vpop.f32.mrb[0].mxu0
      %6383 = vmatprep.mubr.f32.mxu0 0.0
      %6384 = vmatmul.mubr.f32.gmra.mrb[0].mxu0 %v6180
      %v6385 = vpop.f32.mrb[0].mxu0
      %v6386 = vadd.f32 0.0, %v6385
      %v6387 = vpop.f32.mrb[0].mxu0
      %6388 = vmatprep.mubr.f32.mxu0 0.0
      %6389 = vmatmul.mubr.f32.gmra.mrb[0].mxu0 %v6183
      %v6390 = vpop.f32.mrb[0].mxu0
      %v6391 = vadd.f32 0.0, %v6390
      %v6392 = vpop.f32.mrb[0].mxu0
      %6393 = vmatprep.mubr.f32.mxu0 0.0
      %6394 = vmatmul.mubr.f32.gmra.mrb[0].mxu0 %v6186
      %v6395 = vpop.f32.mrb[0].mxu0
      %v6396 = vadd.f32 0.0, %v6395
      %v6397 = vpop.f32.mrb[0].mxu0
      %6398 = vmatprep.mubr.f32.mxu0 0.0
      %6399 = vmatmul.mubr.f32.gmra.mrb[0].mxu0 %v6189
      %v6400 = vpop.f32.mrb[0].mxu0
      %v6401 = vadd.f32 0.0, %v6400
      %v6402 = vpop.f32.mrb[0].mxu0
      %6403 = vmatprep.mubr.f32.mxu0 0.0
      %6404 = vmatmul.mubr.f32.gmra.mrb[0].mxu0 %v6192
      %v6405 = vpop.f32.mrb[0].mxu0
      %v6406 = vadd.f32 0.0, %v6405
      %v6407 = vpop.f32.mrb[0].mxu0
      %6408 = vmatprep.mubr.f32.mxu0 0.0
      %6409 = vmatmul.mubr.f32.gmra.mrb[0].mxu0 %v6195
      %v6410 = vpop.f32.mrb[0].mxu0
      %v6411 = vadd.f32 0.0, %v6410
      %v6412 = vpop.f32.mrb[0].mxu0
      %6413 = vmatprep.mubr.f32.mxu0 0.0
      %6414 = vmatmul.mubr.f32.gmra.mrb[0].mxu0 %v6198
      %v6415 = vpop.f32.mrb[0].mxu0
      %v6416 = vadd.f32 0.0, %v6415
      %v6417 = vpop.f32.mrb[0].mxu0
      %6418 = vmatprep.mubr.f32.mxu0 0.0
      %6419 = vmatmul.mubr.f32.gmra.mrb[0].mxu0 %v6201
      %v6420 = vpop.f32.mrb[0].mxu0
      %v6421 = vadd.f32 0.0, %v6420
      %v6422 = vpop.f32.mrb[0].mxu0
      %6423 = vmatprep.mubr.f32.mxu0 0.0
      %6424 = vmatmul.mubr.f32.gmra.mrb[0].mxu0 %v6204
      %v6425 = vpop.f32.mrb[0].mxu0
      %v6426 = vadd.f32 0.0, %v6425
      %v6427 = vpop.f32.mrb[0].mxu0
      %6428 = vmatprep.mubr.f32.mxu0 0.0
      %6429 = vmatmul.mubr.f32.gmra.mrb[0].mxu0 %v6207
      %v6430 = vpop.f32.mrb[0].mxu0
      %v6431 = vadd.f32 0.0, %v6430
      %v6432 = vpop.f32.mrb[0].mxu0
      %6433 = vdwg.mxu0
      %v6434 = vadd.f32 %v5918, %v6276
      %v6435 = vadd.f32 %v5923, %v6281
      %v6436 = vadd.f32 %v5928, %v6286
      %v6437 = vadd.f32 %v5933, %v6291
      %v6438 = vadd.f32 %v5938, %v6296
      %v6439 = vadd.f32 %v5943, %v6301
      %v6440 = vadd.f32 %v5948, %v6306
      %v6441 = vadd.f32 %v5953, %v6311
      %v6442 = vadd.f32 %v5958, %v6316
      %v6443 = vadd.f32 %v5963, %v6321
      %v6444 = vadd.f32 %v5968, %v6326
      %v6445 = vadd.f32 %v5973, %v6331
      %v6446 = vadd.f32 %v5978, %v6336
      %v6447 = vadd.f32 %v5983, %v6341
      %v6448 = vadd.f32 %v5988, %v6346
      %v6449 = vadd.f32 %v5993, %v6351
      %v6450 = vadd.f32 %v5998, %v6356
      %v6451 = vadd.f32 %v6003, %v6361
      %v6452 = vadd.f32 %v6008, %v6366
      %v6453 = vadd.f32 %v6013, %v6371
      %v6454 = vadd.f32 %v6018, %v6376
      %v6455 = vadd.f32 %v6023, %v6381
      %v6456 = vadd.f32 %v6028, %v6386
      %v6457 = vadd.f32 %v6033, %v6391
      %v6458 = vadd.f32 %v6038, %v6396
      %v6459 = vadd.f32 %v6043, %v6401
      %v6460 = vadd.f32 %v6048, %v6406
      %v6461 = vadd.f32 %v6053, %v6411
      %v6462 = vadd.f32 %v6058, %v6416
      %v6463 = vadd.f32 %v6063, %v6421
      %v6464 = vadd.f32 %v6068, %v6426
      %v6465 = vadd.f32 %v6073, %v6431
      %v6466 = vld [vmem:[%s5328] sm:$0xff]
      %v6467 = vld [vmem:[%s5328 + $0x8] sm:$0xff]
      %v6468 = vld [vmem:[%s5328 + $0x18] sm:$0xff]
      %v6469 = vld [vmem:[%s5328 + $0x20] sm:$0xff]
      %v6470 = vld [vmem:[%s5328 + $0x30] sm:$0xff]
      %v6471 = vld [vmem:[%s5328 + $0x38] sm:$0xff]
      %v6472 = vld [vmem:[%s5328 + $0x48] sm:$0xff]
      %v6473 = vld [vmem:[%s5328 + $0x50] sm:$0xff]
      %v6474 = vld [vmem:[%s5328 + $0x60] sm:$0xff]
      %v6475 = vld [vmem:[%s5328 + $0x68] sm:$0xff]
      %v6476 = vld [vmem:[%s5328 + $0x78] sm:$0xff]
      %v6477 = vld [vmem:[%s5328 + $0x80] sm:$0xff]
      %v6478 = vld [vmem:[%s5328 + $0x90] sm:$0xff]
      %v6479 = vld [vmem:[%s5328 + $0x98] sm:$0xff]
      %v6480 = vld [vmem:[%s5328 + $0xa8] sm:$0xff]
      %v6481 = vld [vmem:[%s5328 + $0xb0] sm:$0xff]
      %v6482 = vld [vmem:[%s5328 + $0xc0] sm:$0xff]
      %v6483 = vld [vmem:[%s5328 + $0xc8] sm:$0xff]
      %v6484 = vld [vmem:[%s5328 + $0xd8] sm:$0xff]
      %v6485 = vld [vmem:[%s5328 + $0xe0] sm:$0xff]
      %v6486 = vld [vmem:[%s5328 + $0xf0] sm:$0xff]
      %v6487 = vld [vmem:[%s5328 + $0xf8] sm:$0xff]
      %v6488 = vld [vmem:[%s5328 + $0x108] sm:$0xff]
      %v6489 = vld [vmem:[%s5328 + $0x110] sm:$0xff]
      %v6490 = vld [vmem:[%s5328 + $0x120] sm:$0xff]
      %v6491 = vld [vmem:[%s5328 + $0x128] sm:$0xff]
      %v6492 = vld [vmem:[%s5328 + $0x138] sm:$0xff]
      %v6493 = vld [vmem:[%s5328 + $0x140] sm:$0xff]
      %v6494 = vld [vmem:[%s5328 + $0x150] sm:$0xff]
      %v6495 = vld [vmem:[%s5328 + $0x158] sm:$0xff]
      %v6496 = vld [vmem:[%s5328 + $0x168] sm:$0xff]
      %v6497 = vld [vmem:[%s5328 + $0x170] sm:$0xff]
      %s6498 = scalar_lea.vmem %s4, 96
      %v6499 = vld [vmem:[%s6498] sm:$0xff]
      %v6500 = vld [vmem:[%s6498 + $0x8] sm:$0xff]
      %v6501 = vld [vmem:[%s6498 + $0x10] sm:$0xff]
      %v6502 = vld [vmem:[%s6498 + $0x18] sm:$0xff]
      %v6504 = vsel %vm309, %v6466, 0
      %v6507 = vsel %vm309, %v6467, 0
      %v6510 = vsel %vm309, %v6468, 0
      %v6513 = vsel %vm309, %v6469, 0
      %v6516 = vsel %vm309, %v6470, 0
      %v6519 = vsel %vm309, %v6471, 0
      %v6522 = vsel %vm309, %v6472, 0
      %v6525 = vsel %vm309, %v6473, 0
      %v6528 = vsel %vm309, %v6474, 0
      %v6531 = vsel %vm309, %v6475, 0
      %v6534 = vsel %vm309, %v6476, 0
      %v6537 = vsel %vm309, %v6477, 0
      %v6540 = vsel %vm309, %v6478, 0
      %v6543 = vsel %vm309, %v6479, 0
      %v6546 = vsel %vm309, %v6480, 0
      %v6549 = vsel %vm309, %v6481, 0
      %v6552 = vsel %vm309, %v6482, 0
      %v6555 = vsel %vm309, %v6483, 0
      %v6558 = vsel %vm309, %v6484, 0
      %v6561 = vsel %vm309, %v6485, 0
      %v6564 = vsel %vm309, %v6486, 0
      %v6567 = vsel %vm309, %v6487, 0
      %v6570 = vsel %vm309, %v6488, 0
      %v6573 = vsel %vm309, %v6489, 0
      %v6576 = vsel %vm309, %v6490, 0
      %v6579 = vsel %vm309, %v6491, 0
      %v6582 = vsel %vm309, %v6492, 0
      %v6585 = vsel %vm309, %v6493, 0
      %v6588 = vsel %vm309, %v6494, 0
      %v6591 = vsel %vm309, %v6495, 0
      %v6594 = vsel %vm309, %v6496, 0
      %v6597 = vsel %vm309, %v6497, 0
      %6599 = vmatprep.subr.mxu0 0.0
      %6600 = vmatpush1.msra.mxu0 %v6499
      %6601 = vmatprep.subr.mxu0 0.0
      %6602 = vmatpush1.msra.mxu0 %v6500
      %6603 = vmatprep.subr.mxu0 0.0
      %6604 = vmatpush1.msra.mxu0 %v6501
      %6605 = vmatprep.subr.mxu0 0.0
      %6606 = vmatpush1.msra.mxu0 %v6502
      %6607 = vmatprep.subr.mxu0 0.0
      %6608 = vmatpush1.msra.mxu0 0.0
      %6609 = vmatprep.subr.mxu0 0.0
      %6610 = vmatpush1.msra.mxu0 0.0
      %6611 = vmatprep.subr.mxu0 0.0
      %6612 = vmatpush1.msra.mxu0 0.0
      %6613 = vmatprep.subr.mxu0 0.0
      %6614 = vmatpush1.msra.mxu0 0.0
      %6615 = vmatprep.subr.mxu0 0.0
      %6616 = vmatpush1.msra.mxu0 0.0
      %6617 = vmatprep.subr.mxu0 0.0
      %6618 = vmatpush1.msra.mxu0 0.0
      %6619 = vmatprep.subr.mxu0 0.0
      %6620 = vmatpush1.msra.mxu0 0.0
      %6621 = vmatprep.subr.mxu0 0.0
      %6622 = vmatpush1.msra.mxu0 0.0
      %6623 = vmatprep.subr.mxu0 0.0
      %6624 = vmatpush1.msra.mxu0 0.0
      %6625 = vmatprep.subr.mxu0 0.0
      %6626 = vmatpush1.msra.mxu0 0.0
      %6627 = vmatprep.subr.mxu0 0.0
      %6628 = vmatpush1.msra.mxu0 0.0
      %6629 = vmatprep.subr.mxu0 0.0
      %6630 = vmatpush1.msra.mxu0 0.0
      %6631 = vmatprep.subr.mxu0 0.0
      %6632 = vmatpush1.msra.mxu0 0.0
      %6633 = vmatprep.subr.mxu0 0.0
      %6634 = vmatpush1.msra.mxu0 0.0
      %6635 = vmatprep.subr.mxu0 0.0
      %6636 = vmatpush1.msra.mxu0 0.0
      %6637 = vmatprep.subr.mxu0 0.0
      %6638 = vmatpush1.msra.mxu0 0.0
      %6639 = vmatprep.subr.mxu0 0.0
      %6640 = vmatpush1.msra.mxu0 0.0
      %6641 = vmatprep.subr.mxu0 0.0
      %6642 = vmatpush1.msra.mxu0 0.0
      %6643 = vmatprep.subr.mxu0 0.0
      %6644 = vmatpush1.msra.mxu0 0.0
      %6645 = vmatprep.subr.mxu0 0.0
      %6646 = vmatpush1.msra.mxu0 0.0
      %6647 = vmatprep.subr.mxu0 0.0
      %6648 = vmatpush1.msra.mxu0 0.0
      %6649 = vmatprep.subr.mxu0 0.0
      %6650 = vmatpush1.msra.mxu0 0.0
      %6651 = vmatprep.subr.mxu0 0.0
      %6652 = vmatpush1.msra.mxu0 0.0
      %6653 = vmatprep.subr.mxu0 0.0
      %6654 = vmatpush1.msra.mxu0 0.0
      %6655 = vmatprep.subr.mxu0 0.0
      %6656 = vmatpush1.msra.mxu0 0.0
      %6657 = vmatprep.subr.mxu0 0.0
      %6658 = vmatpush1.msra.mxu0 0.0
      %6659 = vmatprep.subr.mxu0 0.0
      %6660 = vmatpush1.msra.mxu0 0.0
      %6661 = vmatprep.subr.mxu0 0.0
      %6662 = vmatpush1.msra.mxu0 0.0
      %6663 = vmatprep.mubr.f32.mxu0 0.0
      %6664 = vmatmul.mubr.f32.gmra.mrb[0].mxu0 %v6504
      %v6665 = vpop.f32.mrb[0].mxu0
      %v6666 = vadd.f32 0.0, %v6665
      %v6667 = vpop.f32.mrb[0].mxu0
      %6668 = vmatprep.mubr.f32.mxu0 0.0
      %6669 = vmatmul.mubr.f32.gmra.mrb[0].mxu0 %v6507
      %v6670 = vpop.f32.mrb[0].mxu0
      %v6671 = vadd.f32 0.0, %v6670
      %v6672 = vpop.f32.mrb[0].mxu0
      %6673 = vmatprep.mubr.f32.mxu0 0.0
      %6674 = vmatmul.mubr.f32.gmra.mrb[0].mxu0 %v6510
      %v6675 = vpop.f32.mrb[0].mxu0
      %v6676 = vadd.f32 0.0, %v6675
      %v6677 = vpop.f32.mrb[0].mxu0
      %6678 = vmatprep.mubr.f32.mxu0 0.0
      %6679 = vmatmul.mubr.f32.gmra.mrb[0].mxu0 %v6513
      %v6680 = vpop.f32.mrb[0].mxu0
      %v6681 = vadd.f32 0.0, %v6680
      %v6682 = vpop.f32.mrb[0].mxu0
      %6683 = vmatprep.mubr.f32.mxu0 0.0
      %6684 = vmatmul.mubr.f32.gmra.mrb[0].mxu0 %v6516
      %v6685 = vpop.f32.mrb[0].mxu0
      %v6686 = vadd.f32 0.0, %v6685
      %v6687 = vpop.f32.mrb[0].mxu0
      %6688 = vmatprep.mubr.f32.mxu0 0.0
      %6689 = vmatmul.mubr.f32.gmra.mrb[0].mxu0 %v6519
      %v6690 = vpop.f32.mrb[0].mxu0
      %v6691 = vadd.f32 0.0, %v6690
      %v6692 = vpop.f32.mrb[0].mxu0
      %6693 = vmatprep.mubr.f32.mxu0 0.0
      %6694 = vmatmul.mubr.f32.gmra.mrb[0].mxu0 %v6522
      %v6695 = vpop.f32.mrb[0].mxu0
      %v6696 = vadd.f32 0.0, %v6695
      %v6697 = vpop.f32.mrb[0].mxu0
      %6698 = vmatprep.mubr.f32.mxu0 0.0
      %6699 = vmatmul.mubr.f32.gmra.mrb[0].mxu0 %v6525
      %v6700 = vpop.f32.mrb[0].mxu0
      %v6701 = vadd.f32 0.0, %v6700
      %v6702 = vpop.f32.mrb[0].mxu0
      %6703 = vmatprep.mubr.f32.mxu0 0.0
      %6704 = vmatmul.mubr.f32.gmra.mrb[0].mxu0 %v6528
      %v6705 = vpop.f32.mrb[0].mxu0
      %v6706 = vadd.f32 0.0, %v6705
      %v6707 = vpop.f32.mrb[0].mxu0
      %6708 = vmatprep.mubr.f32.mxu0 0.0
      %6709 = vmatmul.mubr.f32.gmra.mrb[0].mxu0 %v6531
      %v6710 = vpop.f32.mrb[0].mxu0
      %v6711 = vadd.f32 0.0, %v6710
      %v6712 = vpop.f32.mrb[0].mxu0
      %6713 = vmatprep.mubr.f32.mxu0 0.0
      %6714 = vmatmul.mubr.f32.gmra.mrb[0].mxu0 %v6534
      %v6715 = vpop.f32.mrb[0].mxu0
      %v6716 = vadd.f32 0.0, %v6715
      %v6717 = vpop.f32.mrb[0].mxu0
      %6718 = vmatprep.mubr.f32.mxu0 0.0
      %6719 = vmatmul.mubr.f32.gmra.mrb[0].mxu0 %v6537
      %v6720 = vpop.f32.mrb[0].mxu0
      %v6721 = vadd.f32 0.0, %v6720
      %v6722 = vpop.f32.mrb[0].mxu0
      %6723 = vmatprep.mubr.f32.mxu0 0.0
      %6724 = vmatmul.mubr.f32.gmra.mrb[0].mxu0 %v6540
      %v6725 = vpop.f32.mrb[0].mxu0
      %v6726 = vadd.f32 0.0, %v6725
      %v6727 = vpop.f32.mrb[0].mxu0
      %6728 = vmatprep.mubr.f32.mxu0 0.0
      %6729 = vmatmul.mubr.f32.gmra.mrb[0].mxu0 %v6543
      %v6730 = vpop.f32.mrb[0].mxu0
      %v6731 = vadd.f32 0.0, %v6730
      %v6732 = vpop.f32.mrb[0].mxu0
      %6733 = vmatprep.mubr.f32.mxu0 0.0
      %6734 = vmatmul.mubr.f32.gmra.mrb[0].mxu0 %v6546
      %v6735 = vpop.f32.mrb[0].mxu0
      %v6736 = vadd.f32 0.0, %v6735
      %v6737 = vpop.f32.mrb[0].mxu0
      %6738 = vmatprep.mubr.f32.mxu0 0.0
      %6739 = vmatmul.mubr.f32.gmra.mrb[0].mxu0 %v6549
      %v6740 = vpop.f32.mrb[0].mxu0
      %v6741 = vadd.f32 0.0, %v6740
      %v6742 = vpop.f32.mrb[0].mxu0
      %6743 = vmatprep.mubr.f32.mxu0 0.0
      %6744 = vmatmul.mubr.f32.gmra.mrb[0].mxu0 %v6552
      %v6745 = vpop.f32.mrb[0].mxu0
      %v6746 = vadd.f32 0.0, %v6745
      %v6747 = vpop.f32.mrb[0].mxu0
      %6748 = vmatprep.mubr.f32.mxu0 0.0
      %6749 = vmatmul.mubr.f32.gmra.mrb[0].mxu0 %v6555
      %v6750 = vpop.f32.mrb[0].mxu0
      %v6751 = vadd.f32 0.0, %v6750
      %v6752 = vpop.f32.mrb[0].mxu0
      %6753 = vmatprep.mubr.f32.mxu0 0.0
      %6754 = vmatmul.mubr.f32.gmra.mrb[0].mxu0 %v6558
      %v6755 = vpop.f32.mrb[0].mxu0
      %v6756 = vadd.f32 0.0, %v6755
      %v6757 = vpop.f32.mrb[0].mxu0
      %6758 = vmatprep.mubr.f32.mxu0 0.0
      %6759 = vmatmul.mubr.f32.gmra.mrb[0].mxu0 %v6561
      %v6760 = vpop.f32.mrb[0].mxu0
      %v6761 = vadd.f32 0.0, %v6760
      %v6762 = vpop.f32.mrb[0].mxu0
      %6763 = vmatprep.mubr.f32.mxu0 0.0
      %6764 = vmatmul.mubr.f32.gmra.mrb[0].mxu0 %v6564
      %v6765 = vpop.f32.mrb[0].mxu0
      %v6766 = vadd.f32 0.0, %v6765
      %v6767 = vpop.f32.mrb[0].mxu0
      %6768 = vmatprep.mubr.f32.mxu0 0.0
      %6769 = vmatmul.mubr.f32.gmra.mrb[0].mxu0 %v6567
      %v6770 = vpop.f32.mrb[0].mxu0
      %v6771 = vadd.f32 0.0, %v6770
      %v6772 = vpop.f32.mrb[0].mxu0
      %6773 = vmatprep.mubr.f32.mxu0 0.0
      %6774 = vmatmul.mubr.f32.gmra.mrb[0].mxu0 %v6570
      %v6775 = vpop.f32.mrb[0].mxu0
      %v6776 = vadd.f32 0.0, %v6775
      %v6777 = vpop.f32.mrb[0].mxu0
      %6778 = vmatprep.mubr.f32.mxu0 0.0
      %6779 = vmatmul.mubr.f32.gmra.mrb[0].mxu0 %v6573
      %v6780 = vpop.f32.mrb[0].mxu0
      %v6781 = vadd.f32 0.0, %v6780
      %v6782 = vpop.f32.mrb[0].mxu0
      %6783 = vmatprep.mubr.f32.mxu0 0.0
      %6784 = vmatmul.mubr.f32.gmra.mrb[0].mxu0 %v6576
      %v6785 = vpop.f32.mrb[0].mxu0
      %v6786 = vadd.f32 0.0, %v6785
      %v6787 = vpop.f32.mrb[0].mxu0
      %6788 = vmatprep.mubr.f32.mxu0 0.0
      %6789 = vmatmul.mubr.f32.gmra.mrb[0].mxu0 %v6579
      %v6790 = vpop.f32.mrb[0].mxu0
      %v6791 = vadd.f32 0.0, %v6790
      %v6792 = vpop.f32.mrb[0].mxu0
      %6793 = vmatprep.mubr.f32.mxu0 0.0
      %6794 = vmatmul.mubr.f32.gmra.mrb[0].mxu0 %v6582
      %v6795 = vpop.f32.mrb[0].mxu0
      %v6796 = vadd.f32 0.0, %v6795
      %v6797 = vpop.f32.mrb[0].mxu0
      %6798 = vmatprep.mubr.f32.mxu0 0.0
      %6799 = vmatmul.mubr.f32.gmra.mrb[0].mxu0 %v6585
      %v6800 = vpop.f32.mrb[0].mxu0
      %v6801 = vadd.f32 0.0, %v6800
      %v6802 = vpop.f32.mrb[0].mxu0
      %6803 = vmatprep.mubr.f32.mxu0 0.0
      %6804 = vmatmul.mubr.f32.gmra.mrb[0].mxu0 %v6588
      %v6805 = vpop.f32.mrb[0].mxu0
      %v6806 = vadd.f32 0.0, %v6805
      %v6807 = vpop.f32.mrb[0].mxu0
      %6808 = vmatprep.mubr.f32.mxu0 0.0
      %6809 = vmatmul.mubr.f32.gmra.mrb[0].mxu0 %v6591
      %v6810 = vpop.f32.mrb[0].mxu0
      %v6811 = vadd.f32 0.0, %v6810
      %v6812 = vpop.f32.mrb[0].mxu0
      %6813 = vmatprep.mubr.f32.mxu0 0.0
      %6814 = vmatmul.mubr.f32.gmra.mrb[0].mxu0 %v6594
      %v6815 = vpop.f32.mrb[0].mxu0
      %v6816 = vadd.f32 0.0, %v6815
      %v6817 = vpop.f32.mrb[0].mxu0
      %6818 = vmatprep.mubr.f32.mxu0 0.0
      %6819 = vmatmul.mubr.f32.gmra.mrb[0].mxu0 %v6597
      %v6820 = vpop.f32.mrb[0].mxu0
      %v6821 = vadd.f32 0.0, %v6820
      %v6822 = vpop.f32.mrb[0].mxu0
      %6823 = vdwg.mxu0
      %v6824 = vadd.f32 %v6434, %v6666
      %v6825 = vadd.f32 %v6435, %v6671
      %v6826 = vadd.f32 %v6436, %v6676
      %v6827 = vadd.f32 %v6437, %v6681
      %v6828 = vadd.f32 %v6438, %v6686
      %v6829 = vadd.f32 %v6439, %v6691
      %v6830 = vadd.f32 %v6440, %v6696
      %v6831 = vadd.f32 %v6441, %v6701
      %v6832 = vadd.f32 %v6442, %v6706
      %v6833 = vadd.f32 %v6443, %v6711
      %v6834 = vadd.f32 %v6444, %v6716
      %v6835 = vadd.f32 %v6445, %v6721
      %v6836 = vadd.f32 %v6446, %v6726
      %v6837 = vadd.f32 %v6447, %v6731
      %v6838 = vadd.f32 %v6448, %v6736
      %v6839 = vadd.f32 %v6449, %v6741
      %v6840 = vadd.f32 %v6450, %v6746
      %v6841 = vadd.f32 %v6451, %v6751
      %v6842 = vadd.f32 %v6452, %v6756
      %v6843 = vadd.f32 %v6453, %v6761
      %v6844 = vadd.f32 %v6454, %v6766
      %v6845 = vadd.f32 %v6455, %v6771
      %v6846 = vadd.f32 %v6456, %v6776
      %v6847 = vadd.f32 %v6457, %v6781
      %v6848 = vadd.f32 %v6458, %v6786
      %v6849 = vadd.f32 %v6459, %v6791
      %v6850 = vadd.f32 %v6460, %v6796
      %v6851 = vadd.f32 %v6461, %v6801
      %v6852 = vadd.f32 %v6462, %v6806
      %v6853 = vadd.f32 %v6463, %v6811
      %v6854 = vadd.f32 %v6464, %v6816
      %v6855 = vadd.f32 %v6465, %v6821
      %v6856 = vld [vmem:[%s5328 + $0x1] sm:$0xff]
      %v6857 = vld [vmem:[%s5328 + $0x9] sm:$0xff]
      %v6858 = vld [vmem:[%s5328 + $0x19] sm:$0xff]
      %v6859 = vld [vmem:[%s5328 + $0x21] sm:$0xff]
      %v6860 = vld [vmem:[%s5328 + $0x31] sm:$0xff]
      %v6861 = vld [vmem:[%s5328 + $0x39] sm:$0xff]
      %v6862 = vld [vmem:[%s5328 + $0x49] sm:$0xff]
      %v6863 = vld [vmem:[%s5328 + $0x51] sm:$0xff]
      %v6864 = vld [vmem:[%s5328 + $0x61] sm:$0xff]
      %v6865 = vld [vmem:[%s5328 + $0x69] sm:$0xff]
      %v6866 = vld [vmem:[%s5328 + $0x79] sm:$0xff]
      %v6867 = vld [vmem:[%s5328 + $0x81] sm:$0xff]
      %v6868 = vld [vmem:[%s5328 + $0x91] sm:$0xff]
      %v6869 = vld [vmem:[%s5328 + $0x99] sm:$0xff]
      %v6870 = vld [vmem:[%s5328 + $0xa9] sm:$0xff]
      %v6871 = vld [vmem:[%s5328 + $0xb1] sm:$0xff]
      %v6872 = vld [vmem:[%s5328 + $0xc1] sm:$0xff]
      %v6873 = vld [vmem:[%s5328 + $0xc9] sm:$0xff]
      %v6874 = vld [vmem:[%s5328 + $0xd9] sm:$0xff]
      %v6875 = vld [vmem:[%s5328 + $0xe1] sm:$0xff]
      %v6876 = vld [vmem:[%s5328 + $0xf1] sm:$0xff]
      %v6877 = vld [vmem:[%s5328 + $0xf9] sm:$0xff]
      %v6878 = vld [vmem:[%s5328 + $0x109] sm:$0xff]
      %v6879 = vld [vmem:[%s5328 + $0x111] sm:$0xff]
      %v6880 = vld [vmem:[%s5328 + $0x121] sm:$0xff]
      %v6881 = vld [vmem:[%s5328 + $0x129] sm:$0xff]
      %v6882 = vld [vmem:[%s5328 + $0x139] sm:$0xff]
      %v6883 = vld [vmem:[%s5328 + $0x141] sm:$0xff]
      %v6884 = vld [vmem:[%s5328 + $0x151] sm:$0xff]
      %v6885 = vld [vmem:[%s5328 + $0x159] sm:$0xff]
      %v6886 = vld [vmem:[%s5328 + $0x169] sm:$0xff]
      %v6887 = vld [vmem:[%s5328 + $0x171] sm:$0xff]
      %s6888 = scalar_lea.vmem %s4, 128
      %v6889 = vld [vmem:[%s6888] sm:$0xff]
      %v6890 = vld [vmem:[%s6888 + $0x8] sm:$0xff]
      %v6891 = vld [vmem:[%s6888 + $0x10] sm:$0xff]
      %v6892 = vld [vmem:[%s6888 + $0x18] sm:$0xff]
      %v6894 = vsel %vm309, %v6856, 0
      %v6897 = vsel %vm309, %v6857, 0
      %v6900 = vsel %vm309, %v6858, 0
      %v6903 = vsel %vm309, %v6859, 0
      %v6906 = vsel %vm309, %v6860, 0
      %v6909 = vsel %vm309, %v6861, 0
      %v6912 = vsel %vm309, %v6862, 0
      %v6915 = vsel %vm309, %v6863, 0
      %v6918 = vsel %vm309, %v6864, 0
      %v6921 = vsel %vm309, %v6865, 0
      %v6924 = vsel %vm309, %v6866, 0
      %v6927 = vsel %vm309, %v6867, 0
      %v6930 = vsel %vm309, %v6868, 0
      %v6933 = vsel %vm309, %v6869, 0
      %v6936 = vsel %vm309, %v6870, 0
      %v6939 = vsel %vm309, %v6871, 0
      %v6942 = vsel %vm309, %v6872, 0
      %v6945 = vsel %vm309, %v6873, 0
      %v6948 = vsel %vm309, %v6874, 0
      %v6951 = vsel %vm309, %v6875, 0
      %v6954 = vsel %vm309, %v6876, 0
      %v6957 = vsel %vm309, %v6877, 0
      %v6960 = vsel %vm309, %v6878, 0
      %v6963 = vsel %vm309, %v6879, 0
      %v6966 = vsel %vm309, %v6880, 0
      %v6969 = vsel %vm309, %v6881, 0
      %v6972 = vsel %vm309, %v6882, 0
      %v6975 = vsel %vm309, %v6883, 0
      %v6978 = vsel %vm309, %v6884, 0
      %v6981 = vsel %vm309, %v6885, 0
      %v6984 = vsel %vm309, %v6886, 0
      %v6987 = vsel %vm309, %v6887, 0
      %6989 = vmatprep.subr.mxu0 0.0
      %6990 = vmatpush1.msra.mxu0 %v6889
      %6991 = vmatprep.subr.mxu0 0.0
      %6992 = vmatpush1.msra.mxu0 %v6890
      %6993 = vmatprep.subr.mxu0 0.0
      %6994 = vmatpush1.msra.mxu0 %v6891
      %6995 = vmatprep.subr.mxu0 0.0
      %6996 = vmatpush1.msra.mxu0 %v6892
      %6997 = vmatprep.subr.mxu0 0.0
      %6998 = vmatpush1.msra.mxu0 0.0
      %6999 = vmatprep.subr.mxu0 0.0
      %7000 = vmatpush1.msra.mxu0 0.0
      %7001 = vmatprep.subr.mxu0 0.0
      %7002 = vmatpush1.msra.mxu0 0.0
      %7003 = vmatprep.subr.mxu0 0.0
      %7004 = vmatpush1.msra.mxu0 0.0
      %7005 = vmatprep.subr.mxu0 0.0
      %7006 = vmatpush1.msra.mxu0 0.0
      %7007 = vmatprep.subr.mxu0 0.0
      %7008 = vmatpush1.msra.mxu0 0.0
      %7009 = vmatprep.subr.mxu0 0.0
      %7010 = vmatpush1.msra.mxu0 0.0
      %7011 = vmatprep.subr.mxu0 0.0
      %7012 = vmatpush1.msra.mxu0 0.0
      %7013 = vmatprep.subr.mxu0 0.0
      %7014 = vmatpush1.msra.mxu0 0.0
      %7015 = vmatprep.subr.mxu0 0.0
      %7016 = vmatpush1.msra.mxu0 0.0
      %7017 = vmatprep.subr.mxu0 0.0
      %7018 = vmatpush1.msra.mxu0 0.0
      %7019 = vmatprep.subr.mxu0 0.0
      %7020 = vmatpush1.msra.mxu0 0.0
      %7021 = vmatprep.subr.mxu0 0.0
      %7022 = vmatpush1.msra.mxu0 0.0
      %7023 = vmatprep.subr.mxu0 0.0
      %7024 = vmatpush1.msra.mxu0 0.0
      %7025 = vmatprep.subr.mxu0 0.0
      %7026 = vmatpush1.msra.mxu0 0.0
      %7027 = vmatprep.subr.mxu0 0.0
      %7028 = vmatpush1.msra.mxu0 0.0
      %7029 = vmatprep.subr.mxu0 0.0
      %7030 = vmatpush1.msra.mxu0 0.0
      %7031 = vmatprep.subr.mxu0 0.0
      %7032 = vmatpush1.msra.mxu0 0.0
      %7033 = vmatprep.subr.mxu0 0.0
      %7034 = vmatpush1.msra.mxu0 0.0
      %7035 = vmatprep.subr.mxu0 0.0
      %7036 = vmatpush1.msra.mxu0 0.0
      %7037 = vmatprep.subr.mxu0 0.0
      %7038 = vmatpush1.msra.mxu0 0.0
      %7039 = vmatprep.subr.mxu0 0.0
      %7040 = vmatpush1.msra.mxu0 0.0
      %7041 = vmatprep.subr.mxu0 0.0
      %7042 = vmatpush1.msra.mxu0 0.0
      %7043 = vmatprep.subr.mxu0 0.0
      %7044 = vmatpush1.msra.mxu0 0.0
      %7045 = vmatprep.subr.mxu0 0.0
      %7046 = vmatpush1.msra.mxu0 0.0
      %7047 = vmatprep.subr.mxu0 0.0
      %7048 = vmatpush1.msra.mxu0 0.0
      %7049 = vmatprep.subr.mxu0 0.0
      %7050 = vmatpush1.msra.mxu0 0.0
      %7051 = vmatprep.subr.mxu0 0.0
      %7052 = vmatpush1.msra.mxu0 0.0
      %7053 = vmatprep.mubr.f32.mxu0 0.0
      %7054 = vmatmul.mubr.f32.gmra.mrb[0].mxu0 %v6894
      %v7055 = vpop.f32.mrb[0].mxu0
      %v7056 = vadd.f32 0.0, %v7055
      %v7057 = vpop.f32.mrb[0].mxu0
      %7058 = vmatprep.mubr.f32.mxu0 0.0
      %7059 = vmatmul.mubr.f32.gmra.mrb[0].mxu0 %v6897
      %v7060 = vpop.f32.mrb[0].mxu0
      %v7061 = vadd.f32 0.0, %v7060
      %v7062 = vpop.f32.mrb[0].mxu0
      %7063 = vmatprep.mubr.f32.mxu0 0.0
      %7064 = vmatmul.mubr.f32.gmra.mrb[0].mxu0 %v6900
      %v7065 = vpop.f32.mrb[0].mxu0
      %v7066 = vadd.f32 0.0, %v7065
      %v7067 = vpop.f32.mrb[0].mxu0
      %7068 = vmatprep.mubr.f32.mxu0 0.0
      %7069 = vmatmul.mubr.f32.gmra.mrb[0].mxu0 %v6903
      %v7070 = vpop.f32.mrb[0].mxu0
      %v7071 = vadd.f32 0.0, %v7070
      %v7072 = vpop.f32.mrb[0].mxu0
      %7073 = vmatprep.mubr.f32.mxu0 0.0
      %7074 = vmatmul.mubr.f32.gmra.mrb[0].mxu0 %v6906
      %v7075 = vpop.f32.mrb[0].mxu0
      %v7076 = vadd.f32 0.0, %v7075
      %v7077 = vpop.f32.mrb[0].mxu0
      %7078 = vmatprep.mubr.f32.mxu0 0.0
      %7079 = vmatmul.mubr.f32.gmra.mrb[0].mxu0 %v6909
      %v7080 = vpop.f32.mrb[0].mxu0
      %v7081 = vadd.f32 0.0, %v7080
      %v7082 = vpop.f32.mrb[0].mxu0
      %7083 = vmatprep.mubr.f32.mxu0 0.0
      %7084 = vmatmul.mubr.f32.gmra.mrb[0].mxu0 %v6912
      %v7085 = vpop.f32.mrb[0].mxu0
      %v7086 = vadd.f32 0.0, %v7085
      %v7087 = vpop.f32.mrb[0].mxu0
      %7088 = vmatprep.mubr.f32.mxu0 0.0
      %7089 = vmatmul.mubr.f32.gmra.mrb[0].mxu0 %v6915
      %v7090 = vpop.f32.mrb[0].mxu0
      %v7091 = vadd.f32 0.0, %v7090
      %v7092 = vpop.f32.mrb[0].mxu0
      %7093 = vmatprep.mubr.f32.mxu0 0.0
      %7094 = vmatmul.mubr.f32.gmra.mrb[0].mxu0 %v6918
      %v7095 = vpop.f32.mrb[0].mxu0
      %v7096 = vadd.f32 0.0, %v7095
      %v7097 = vpop.f32.mrb[0].mxu0
      %7098 = vmatprep.mubr.f32.mxu0 0.0
      %7099 = vmatmul.mubr.f32.gmra.mrb[0].mxu0 %v6921
      %v7100 = vpop.f32.mrb[0].mxu0
      %v7101 = vadd.f32 0.0, %v7100
      %v7102 = vpop.f32.mrb[0].mxu0
      %7103 = vmatprep.mubr.f32.mxu0 0.0
      %7104 = vmatmul.mubr.f32.gmra.mrb[0].mxu0 %v6924
      %v7105 = vpop.f32.mrb[0].mxu0
      %v7106 = vadd.f32 0.0, %v7105
      %v7107 = vpop.f32.mrb[0].mxu0
      %7108 = vmatprep.mubr.f32.mxu0 0.0
      %7109 = vmatmul.mubr.f32.gmra.mrb[0].mxu0 %v6927
      %v7110 = vpop.f32.mrb[0].mxu0
      %v7111 = vadd.f32 0.0, %v7110
      %v7112 = vpop.f32.mrb[0].mxu0
      %7113 = vmatprep.mubr.f32.mxu0 0.0
      %7114 = vmatmul.mubr.f32.gmra.mrb[0].mxu0 %v6930
      %v7115 = vpop.f32.mrb[0].mxu0
      %v7116 = vadd.f32 0.0, %v7115
      %v7117 = vpop.f32.mrb[0].mxu0
      %7118 = vmatprep.mubr.f32.mxu0 0.0
      %7119 = vmatmul.mubr.f32.gmra.mrb[0].mxu0 %v6933
      %v7120 = vpop.f32.mrb[0].mxu0
      %v7121 = vadd.f32 0.0, %v7120
      %v7122 = vpop.f32.mrb[0].mxu0
      %7123 = vmatprep.mubr.f32.mxu0 0.0
      %7124 = vmatmul.mubr.f32.gmra.mrb[0].mxu0 %v6936
      %v7125 = vpop.f32.mrb[0].mxu0
      %v7126 = vadd.f32 0.0, %v7125
      %v7127 = vpop.f32.mrb[0].mxu0
      %7128 = vmatprep.mubr.f32.mxu0 0.0
      %7129 = vmatmul.mubr.f32.gmra.mrb[0].mxu0 %v6939
      %v7130 = vpop.f32.mrb[0].mxu0
      %v7131 = vadd.f32 0.0, %v7130
      %v7132 = vpop.f32.mrb[0].mxu0
      %7133 = vmatprep.mubr.f32.mxu0 0.0
      %7134 = vmatmul.mubr.f32.gmra.mrb[0].mxu0 %v6942
      %v7135 = vpop.f32.mrb[0].mxu0
      %v7136 = vadd.f32 0.0, %v7135
      %v7137 = vpop.f32.mrb[0].mxu0
      %7138 = vmatprep.mubr.f32.mxu0 0.0
      %7139 = vmatmul.mubr.f32.gmra.mrb[0].mxu0 %v6945
      %v7140 = vpop.f32.mrb[0].mxu0
      %v7141 = vadd.f32 0.0, %v7140
      %v7142 = vpop.f32.mrb[0].mxu0
      %7143 = vmatprep.mubr.f32.mxu0 0.0
      %7144 = vmatmul.mubr.f32.gmra.mrb[0].mxu0 %v6948
      %v7145 = vpop.f32.mrb[0].mxu0
      %v7146 = vadd.f32 0.0, %v7145
      %v7147 = vpop.f32.mrb[0].mxu0
      %7148 = vmatprep.mubr.f32.mxu0 0.0
      %7149 = vmatmul.mubr.f32.gmra.mrb[0].mxu0 %v6951
      %v7150 = vpop.f32.mrb[0].mxu0
      %v7151 = vadd.f32 0.0, %v7150
      %v7152 = vpop.f32.mrb[0].mxu0
      %7153 = vmatprep.mubr.f32.mxu0 0.0
      %7154 = vmatmul.mubr.f32.gmra.mrb[0].mxu0 %v6954
      %v7155 = vpop.f32.mrb[0].mxu0
      %v7156 = vadd.f32 0.0, %v7155
      %v7157 = vpop.f32.mrb[0].mxu0
      %7158 = vmatprep.mubr.f32.mxu0 0.0
      %7159 = vmatmul.mubr.f32.gmra.mrb[0].mxu0 %v6957
      %v7160 = vpop.f32.mrb[0].mxu0
      %v7161 = vadd.f32 0.0, %v7160
      %v7162 = vpop.f32.mrb[0].mxu0
      %7163 = vmatprep.mubr.f32.mxu0 0.0
      %7164 = vmatmul.mubr.f32.gmra.mrb[0].mxu0 %v6960
      %v7165 = vpop.f32.mrb[0].mxu0
      %v7166 = vadd.f32 0.0, %v7165
      %v7167 = vpop.f32.mrb[0].mxu0
      %7168 = vmatprep.mubr.f32.mxu0 0.0
      %7169 = vmatmul.mubr.f32.gmra.mrb[0].mxu0 %v6963
      %v7170 = vpop.f32.mrb[0].mxu0
      %v7171 = vadd.f32 0.0, %v7170
      %v7172 = vpop.f32.mrb[0].mxu0
      %7173 = vmatprep.mubr.f32.mxu0 0.0
      %7174 = vmatmul.mubr.f32.gmra.mrb[0].mxu0 %v6966
      %v7175 = vpop.f32.mrb[0].mxu0
      %v7176 = vadd.f32 0.0, %v7175
      %v7177 = vpop.f32.mrb[0].mxu0
      %7178 = vmatprep.mubr.f32.mxu0 0.0
      %7179 = vmatmul.mubr.f32.gmra.mrb[0].mxu0 %v6969
      %v7180 = vpop.f32.mrb[0].mxu0
      %v7181 = vadd.f32 0.0, %v7180
      %v7182 = vpop.f32.mrb[0].mxu0
      %7183 = vmatprep.mubr.f32.mxu0 0.0
      %7184 = vmatmul.mubr.f32.gmra.mrb[0].mxu0 %v6972
      %v7185 = vpop.f32.mrb[0].mxu0
      %v7186 = vadd.f32 0.0, %v7185
      %v7187 = vpop.f32.mrb[0].mxu0
      %7188 = vmatprep.mubr.f32.mxu0 0.0
      %7189 = vmatmul.mubr.f32.gmra.mrb[0].mxu0 %v6975
      %v7190 = vpop.f32.mrb[0].mxu0
      %v7191 = vadd.f32 0.0, %v7190
      %v7192 = vpop.f32.mrb[0].mxu0
      %7193 = vmatprep.mubr.f32.mxu0 0.0
      %7194 = vmatmul.mubr.f32.gmra.mrb[0].mxu0 %v6978
      %v7195 = vpop.f32.mrb[0].mxu0
      %v7196 = vadd.f32 0.0, %v7195
      %v7197 = vpop.f32.mrb[0].mxu0
      %7198 = vmatprep.mubr.f32.mxu0 0.0
      %7199 = vmatmul.mubr.f32.gmra.mrb[0].mxu0 %v6981
      %v7200 = vpop.f32.mrb[0].mxu0
      %v7201 = vadd.f32 0.0, %v7200
      %v7202 = vpop.f32.mrb[0].mxu0
      %7203 = vmatprep.mubr.f32.mxu0 0.0
      %7204 = vmatmul.mubr.f32.gmra.mrb[0].mxu0 %v6984
      %v7205 = vpop.f32.mrb[0].mxu0
      %v7206 = vadd.f32 0.0, %v7205
      %v7207 = vpop.f32.mrb[0].mxu0
      %7208 = vmatprep.mubr.f32.mxu0 0.0
      %7209 = vmatmul.mubr.f32.gmra.mrb[0].mxu0 %v6987
      %v7210 = vpop.f32.mrb[0].mxu0
      %v7211 = vadd.f32 0.0, %v7210
      %v7212 = vpop.f32.mrb[0].mxu0
      %7213 = vdwg.mxu0
      %v7214 = vadd.f32 %v6824, %v7056
      %v7215 = vadd.f32 %v6825, %v7061
      %v7216 = vadd.f32 %v6826, %v7066
      %v7217 = vadd.f32 %v6827, %v7071
      %v7218 = vadd.f32 %v6828, %v7076
      %v7219 = vadd.f32 %v6829, %v7081
      %v7220 = vadd.f32 %v6830, %v7086
      %v7221 = vadd.f32 %v6831, %v7091
      %v7222 = vadd.f32 %v6832, %v7096
      %v7223 = vadd.f32 %v6833, %v7101
      %v7224 = vadd.f32 %v6834, %v7106
      %v7225 = vadd.f32 %v6835, %v7111
      %v7226 = vadd.f32 %v6836, %v7116
      %v7227 = vadd.f32 %v6837, %v7121
      %v7228 = vadd.f32 %v6838, %v7126
      %v7229 = vadd.f32 %v6839, %v7131
      %v7230 = vadd.f32 %v6840, %v7136
      %v7231 = vadd.f32 %v6841, %v7141
      %v7232 = vadd.f32 %v6842, %v7146
      %v7233 = vadd.f32 %v6843, %v7151
      %v7234 = vadd.f32 %v6844, %v7156
      %v7235 = vadd.f32 %v6845, %v7161
      %v7236 = vadd.f32 %v6846, %v7166
      %v7237 = vadd.f32 %v6847, %v7171
      %v7238 = vadd.f32 %v6848, %v7176
      %v7239 = vadd.f32 %v6849, %v7181
      %v7240 = vadd.f32 %v6850, %v7186
      %v7241 = vadd.f32 %v6851, %v7191
      %v7242 = vadd.f32 %v6852, %v7196
      %v7243 = vadd.f32 %v6853, %v7201
      %v7244 = vadd.f32 %v6854, %v7206
      %v7245 = vadd.f32 %v6855, %v7211
      %v7246 = vld [vmem:[%s5328 + $0x2] sm:$0xff]
      %v7247 = vld [vmem:[%s5328 + $0xa] sm:$0xff]
      %v7248 = vld [vmem:[%s5328 + $0x1a] sm:$0xff]
      %v7249 = vld [vmem:[%s5328 + $0x22] sm:$0xff]
      %v7250 = vld [vmem:[%s5328 + $0x32] sm:$0xff]
      %v7251 = vld [vmem:[%s5328 + $0x3a] sm:$0xff]
      %v7252 = vld [vmem:[%s5328 + $0x4a] sm:$0xff]
      %v7253 = vld [vmem:[%s5328 + $0x52] sm:$0xff]
      %v7254 = vld [vmem:[%s5328 + $0x62] sm:$0xff]
      %v7255 = vld [vmem:[%s5328 + $0x6a] sm:$0xff]
      %v7256 = vld [vmem:[%s5328 + $0x7a] sm:$0xff]
      %v7257 = vld [vmem:[%s5328 + $0x82] sm:$0xff]
      %v7258 = vld [vmem:[%s5328 + $0x92] sm:$0xff]
      %v7259 = vld [vmem:[%s5328 + $0x9a] sm:$0xff]
      %v7260 = vld [vmem:[%s5328 + $0xaa] sm:$0xff]
      %v7261 = vld [vmem:[%s5328 + $0xb2] sm:$0xff]
      %v7262 = vld [vmem:[%s5328 + $0xc2] sm:$0xff]
      %v7263 = vld [vmem:[%s5328 + $0xca] sm:$0xff]
      %v7264 = vld [vmem:[%s5328 + $0xda] sm:$0xff]
      %v7265 = vld [vmem:[%s5328 + $0xe2] sm:$0xff]
      %v7266 = vld [vmem:[%s5328 + $0xf2] sm:$0xff]
      %v7267 = vld [vmem:[%s5328 + $0xfa] sm:$0xff]
      %v7268 = vld [vmem:[%s5328 + $0x10a] sm:$0xff]
      %v7269 = vld [vmem:[%s5328 + $0x112] sm:$0xff]
      %v7270 = vld [vmem:[%s5328 + $0x122] sm:$0xff]
      %v7271 = vld [vmem:[%s5328 + $0x12a] sm:$0xff]
      %v7272 = vld [vmem:[%s5328 + $0x13a] sm:$0xff]
      %v7273 = vld [vmem:[%s5328 + $0x142] sm:$0xff]
      %v7274 = vld [vmem:[%s5328 + $0x152] sm:$0xff]
      %v7275 = vld [vmem:[%s5328 + $0x15a] sm:$0xff]
      %v7276 = vld [vmem:[%s5328 + $0x16a] sm:$0xff]
      %v7277 = vld [vmem:[%s5328 + $0x172] sm:$0xff]
      %s7278 = scalar_lea.vmem %s4, 160
      %v7279 = vld [vmem:[%s7278] sm:$0xff]
      %v7280 = vld [vmem:[%s7278 + $0x8] sm:$0xff]
      %v7281 = vld [vmem:[%s7278 + $0x10] sm:$0xff]
      %v7282 = vld [vmem:[%s7278 + $0x18] sm:$0xff]
      %v7284 = vsel %vm309, %v7246, 0
      %v7287 = vsel %vm309, %v7247, 0
      %v7290 = vsel %vm309, %v7248, 0
      %v7293 = vsel %vm309, %v7249, 0
      %v7296 = vsel %vm309, %v7250, 0
      %v7299 = vsel %vm309, %v7251, 0
      %v7302 = vsel %vm309, %v7252, 0
      %v7305 = vsel %vm309, %v7253, 0
      %v7308 = vsel %vm309, %v7254, 0
      %v7311 = vsel %vm309, %v7255, 0
      %v7314 = vsel %vm309, %v7256, 0
      %v7317 = vsel %vm309, %v7257, 0
      %v7320 = vsel %vm309, %v7258, 0
      %v7323 = vsel %vm309, %v7259, 0
      %v7326 = vsel %vm309, %v7260, 0
      %v7329 = vsel %vm309, %v7261, 0
      %v7332 = vsel %vm309, %v7262, 0
      %v7335 = vsel %vm309, %v7263, 0
      %v7338 = vsel %vm309, %v7264, 0
      %v7341 = vsel %vm309, %v7265, 0
      %v7344 = vsel %vm309, %v7266, 0
      %v7347 = vsel %vm309, %v7267, 0
      %v7350 = vsel %vm309, %v7268, 0
      %v7353 = vsel %vm309, %v7269, 0
      %v7356 = vsel %vm309, %v7270, 0
      %v7359 = vsel %vm309, %v7271, 0
      %v7362 = vsel %vm309, %v7272, 0
      %v7365 = vsel %vm309, %v7273, 0
      %v7368 = vsel %vm309, %v7274, 0
      %v7371 = vsel %vm309, %v7275, 0
      %v7374 = vsel %vm309, %v7276, 0
      %v7377 = vsel %vm309, %v7277, 0
      %7379 = vmatprep.subr.mxu0 0.0
      %7380 = vmatpush1.msra.mxu0 %v7279
      %7381 = vmatprep.subr.mxu0 0.0
      %7382 = vmatpush1.msra.mxu0 %v7280
      %7383 = vmatprep.subr.mxu0 0.0
      %7384 = vmatpush1.msra.mxu0 %v7281
      %7385 = vmatprep.subr.mxu0 0.0
      %7386 = vmatpush1.msra.mxu0 %v7282
      %7387 = vmatprep.subr.mxu0 0.0
      %7388 = vmatpush1.msra.mxu0 0.0
      %7389 = vmatprep.subr.mxu0 0.0
      %7390 = vmatpush1.msra.mxu0 0.0
      %7391 = vmatprep.subr.mxu0 0.0
      %7392 = vmatpush1.msra.mxu0 0.0
      %7393 = vmatprep.subr.mxu0 0.0
      %7394 = vmatpush1.msra.mxu0 0.0
      %7395 = vmatprep.subr.mxu0 0.0
      %7396 = vmatpush1.msra.mxu0 0.0
      %7397 = vmatprep.subr.mxu0 0.0
      %7398 = vmatpush1.msra.mxu0 0.0
      %7399 = vmatprep.subr.mxu0 0.0
      %7400 = vmatpush1.msra.mxu0 0.0
      %7401 = vmatprep.subr.mxu0 0.0
      %7402 = vmatpush1.msra.mxu0 0.0
      %7403 = vmatprep.subr.mxu0 0.0
      %7404 = vmatpush1.msra.mxu0 0.0
      %7405 = vmatprep.subr.mxu0 0.0
      %7406 = vmatpush1.msra.mxu0 0.0
      %7407 = vmatprep.subr.mxu0 0.0
      %7408 = vmatpush1.msra.mxu0 0.0
      %7409 = vmatprep.subr.mxu0 0.0
      %7410 = vmatpush1.msra.mxu0 0.0
      %7411 = vmatprep.subr.mxu0 0.0
      %7412 = vmatpush1.msra.mxu0 0.0
      %7413 = vmatprep.subr.mxu0 0.0
      %7414 = vmatpush1.msra.mxu0 0.0
      %7415 = vmatprep.subr.mxu0 0.0
      %7416 = vmatpush1.msra.mxu0 0.0
      %7417 = vmatprep.subr.mxu0 0.0
      %7418 = vmatpush1.msra.mxu0 0.0
      %7419 = vmatprep.subr.mxu0 0.0
      %7420 = vmatpush1.msra.mxu0 0.0
      %7421 = vmatprep.subr.mxu0 0.0
      %7422 = vmatpush1.msra.mxu0 0.0
      %7423 = vmatprep.subr.mxu0 0.0
      %7424 = vmatpush1.msra.mxu0 0.0
      %7425 = vmatprep.subr.mxu0 0.0
      %7426 = vmatpush1.msra.mxu0 0.0
      %7427 = vmatprep.subr.mxu0 0.0
      %7428 = vmatpush1.msra.mxu0 0.0
      %7429 = vmatprep.subr.mxu0 0.0
      %7430 = vmatpush1.msra.mxu0 0.0
      %7431 = vmatprep.subr.mxu0 0.0
      %7432 = vmatpush1.msra.mxu0 0.0
      %7433 = vmatprep.subr.mxu0 0.0
      %7434 = vmatpush1.msra.mxu0 0.0
      %7435 = vmatprep.subr.mxu0 0.0
      %7436 = vmatpush1.msra.mxu0 0.0
      %7437 = vmatprep.subr.mxu0 0.0
      %7438 = vmatpush1.msra.mxu0 0.0
      %7439 = vmatprep.subr.mxu0 0.0
      %7440 = vmatpush1.msra.mxu0 0.0
      %7441 = vmatprep.subr.mxu0 0.0
      %7442 = vmatpush1.msra.mxu0 0.0
      %7443 = vmatprep.mubr.f32.mxu0 0.0
      %7444 = vmatmul.mubr.f32.gmra.mrb[0].mxu0 %v7284
      %v7445 = vpop.f32.mrb[0].mxu0
      %v7446 = vadd.f32 0.0, %v7445
      %v7447 = vpop.f32.mrb[0].mxu0
      %7448 = vmatprep.mubr.f32.mxu0 0.0
      %7449 = vmatmul.mubr.f32.gmra.mrb[0].mxu0 %v7287
      %v7450 = vpop.f32.mrb[0].mxu0
      %v7451 = vadd.f32 0.0, %v7450
      %v7452 = vpop.f32.mrb[0].mxu0
      %7453 = vmatprep.mubr.f32.mxu0 0.0
      %7454 = vmatmul.mubr.f32.gmra.mrb[0].mxu0 %v7290
      %v7455 = vpop.f32.mrb[0].mxu0
      %v7456 = vadd.f32 0.0, %v7455
      %v7457 = vpop.f32.mrb[0].mxu0
      %7458 = vmatprep.mubr.f32.mxu0 0.0
      %7459 = vmatmul.mubr.f32.gmra.mrb[0].mxu0 %v7293
      %v7460 = vpop.f32.mrb[0].mxu0
      %v7461 = vadd.f32 0.0, %v7460
      %v7462 = vpop.f32.mrb[0].mxu0
      %7463 = vmatprep.mubr.f32.mxu0 0.0
      %7464 = vmatmul.mubr.f32.gmra.mrb[0].mxu0 %v7296
      %v7465 = vpop.f32.mrb[0].mxu0
      %v7466 = vadd.f32 0.0, %v7465
      %v7467 = vpop.f32.mrb[0].mxu0
      %7468 = vmatprep.mubr.f32.mxu0 0.0
      %7469 = vmatmul.mubr.f32.gmra.mrb[0].mxu0 %v7299
      %v7470 = vpop.f32.mrb[0].mxu0
      %v7471 = vadd.f32 0.0, %v7470
      %v7472 = vpop.f32.mrb[0].mxu0
      %7473 = vmatprep.mubr.f32.mxu0 0.0
      %7474 = vmatmul.mubr.f32.gmra.mrb[0].mxu0 %v7302
      %v7475 = vpop.f32.mrb[0].mxu0
      %v7476 = vadd.f32 0.0, %v7475
      %v7477 = vpop.f32.mrb[0].mxu0
      %7478 = vmatprep.mubr.f32.mxu0 0.0
      %7479 = vmatmul.mubr.f32.gmra.mrb[0].mxu0 %v7305
      %v7480 = vpop.f32.mrb[0].mxu0
      %v7481 = vadd.f32 0.0, %v7480
      %v7482 = vpop.f32.mrb[0].mxu0
      %7483 = vmatprep.mubr.f32.mxu0 0.0
      %7484 = vmatmul.mubr.f32.gmra.mrb[0].mxu0 %v7308
      %v7485 = vpop.f32.mrb[0].mxu0
      %v7486 = vadd.f32 0.0, %v7485
      %v7487 = vpop.f32.mrb[0].mxu0
      %7488 = vmatprep.mubr.f32.mxu0 0.0
      %7489 = vmatmul.mubr.f32.gmra.mrb[0].mxu0 %v7311
      %v7490 = vpop.f32.mrb[0].mxu0
      %v7491 = vadd.f32 0.0, %v7490
      %v7492 = vpop.f32.mrb[0].mxu0
      %7493 = vmatprep.mubr.f32.mxu0 0.0
      %7494 = vmatmul.mubr.f32.gmra.mrb[0].mxu0 %v7314
      %v7495 = vpop.f32.mrb[0].mxu0
      %v7496 = vadd.f32 0.0, %v7495
      %v7497 = vpop.f32.mrb[0].mxu0
      %7498 = vmatprep.mubr.f32.mxu0 0.0
      %7499 = vmatmul.mubr.f32.gmra.mrb[0].mxu0 %v7317
      %v7500 = vpop.f32.mrb[0].mxu0
      %v7501 = vadd.f32 0.0, %v7500
      %v7502 = vpop.f32.mrb[0].mxu0
      %7503 = vmatprep.mubr.f32.mxu0 0.0
      %7504 = vmatmul.mubr.f32.gmra.mrb[0].mxu0 %v7320
      %v7505 = vpop.f32.mrb[0].mxu0
      %v7506 = vadd.f32 0.0, %v7505
      %v7507 = vpop.f32.mrb[0].mxu0
      %7508 = vmatprep.mubr.f32.mxu0 0.0
      %7509 = vmatmul.mubr.f32.gmra.mrb[0].mxu0 %v7323
      %v7510 = vpop.f32.mrb[0].mxu0
      %v7511 = vadd.f32 0.0, %v7510
      %v7512 = vpop.f32.mrb[0].mxu0
      %7513 = vmatprep.mubr.f32.mxu0 0.0
      %7514 = vmatmul.mubr.f32.gmra.mrb[0].mxu0 %v7326
      %v7515 = vpop.f32.mrb[0].mxu0
      %v7516 = vadd.f32 0.0, %v7515
      %v7517 = vpop.f32.mrb[0].mxu0
      %7518 = vmatprep.mubr.f32.mxu0 0.0
      %7519 = vmatmul.mubr.f32.gmra.mrb[0].mxu0 %v7329
      %v7520 = vpop.f32.mrb[0].mxu0
      %v7521 = vadd.f32 0.0, %v7520
      %v7522 = vpop.f32.mrb[0].mxu0
      %7523 = vmatprep.mubr.f32.mxu0 0.0
      %7524 = vmatmul.mubr.f32.gmra.mrb[0].mxu0 %v7332
      %v7525 = vpop.f32.mrb[0].mxu0
      %v7526 = vadd.f32 0.0, %v7525
      %v7527 = vpop.f32.mrb[0].mxu0
      %7528 = vmatprep.mubr.f32.mxu0 0.0
      %7529 = vmatmul.mubr.f32.gmra.mrb[0].mxu0 %v7335
      %v7530 = vpop.f32.mrb[0].mxu0
      %v7531 = vadd.f32 0.0, %v7530
      %v7532 = vpop.f32.mrb[0].mxu0
      %7533 = vmatprep.mubr.f32.mxu0 0.0
      %7534 = vmatmul.mubr.f32.gmra.mrb[0].mxu0 %v7338
      %v7535 = vpop.f32.mrb[0].mxu0
      %v7536 = vadd.f32 0.0, %v7535
      %v7537 = vpop.f32.mrb[0].mxu0
      %7538 = vmatprep.mubr.f32.mxu0 0.0
      %7539 = vmatmul.mubr.f32.gmra.mrb[0].mxu0 %v7341
      %v7540 = vpop.f32.mrb[0].mxu0
      %v7541 = vadd.f32 0.0, %v7540
      %v7542 = vpop.f32.mrb[0].mxu0
      %7543 = vmatprep.mubr.f32.mxu0 0.0
      %7544 = vmatmul.mubr.f32.gmra.mrb[0].mxu0 %v7344
      %v7545 = vpop.f32.mrb[0].mxu0
      %v7546 = vadd.f32 0.0, %v7545
      %v7547 = vpop.f32.mrb[0].mxu0
      %7548 = vmatprep.mubr.f32.mxu0 0.0
      %7549 = vmatmul.mubr.f32.gmra.mrb[0].mxu0 %v7347
      %v7550 = vpop.f32.mrb[0].mxu0
      %v7551 = vadd.f32 0.0, %v7550
      %v7552 = vpop.f32.mrb[0].mxu0
      %7553 = vmatprep.mubr.f32.mxu0 0.0
      %7554 = vmatmul.mubr.f32.gmra.mrb[0].mxu0 %v7350
      %v7555 = vpop.f32.mrb[0].mxu0
      %v7556 = vadd.f32 0.0, %v7555
      %v7557 = vpop.f32.mrb[0].mxu0
      %7558 = vmatprep.mubr.f32.mxu0 0.0
      %7559 = vmatmul.mubr.f32.gmra.mrb[0].mxu0 %v7353
      %v7560 = vpop.f32.mrb[0].mxu0
      %v7561 = vadd.f32 0.0, %v7560
      %v7562 = vpop.f32.mrb[0].mxu0
      %7563 = vmatprep.mubr.f32.mxu0 0.0
      %7564 = vmatmul.mubr.f32.gmra.mrb[0].mxu0 %v7356
      %v7565 = vpop.f32.mrb[0].mxu0
      %v7566 = vadd.f32 0.0, %v7565
      %v7567 = vpop.f32.mrb[0].mxu0
      %7568 = vmatprep.mubr.f32.mxu0 0.0
      %7569 = vmatmul.mubr.f32.gmra.mrb[0].mxu0 %v7359
      %v7570 = vpop.f32.mrb[0].mxu0
      %v7571 = vadd.f32 0.0, %v7570
      %v7572 = vpop.f32.mrb[0].mxu0
      %7573 = vmatprep.mubr.f32.mxu0 0.0
      %7574 = vmatmul.mubr.f32.gmra.mrb[0].mxu0 %v7362
      %v7575 = vpop.f32.mrb[0].mxu0
      %v7576 = vadd.f32 0.0, %v7575
      %v7577 = vpop.f32.mrb[0].mxu0
      %7578 = vmatprep.mubr.f32.mxu0 0.0
      %7579 = vmatmul.mubr.f32.gmra.mrb[0].mxu0 %v7365
      %v7580 = vpop.f32.mrb[0].mxu0
      %v7581 = vadd.f32 0.0, %v7580
      %v7582 = vpop.f32.mrb[0].mxu0
      %7583 = vmatprep.mubr.f32.mxu0 0.0
      %7584 = vmatmul.mubr.f32.gmra.mrb[0].mxu0 %v7368
      %v7585 = vpop.f32.mrb[0].mxu0
      %v7586 = vadd.f32 0.0, %v7585
      %v7587 = vpop.f32.mrb[0].mxu0
      %7588 = vmatprep.mubr.f32.mxu0 0.0
      %7589 = vmatmul.mubr.f32.gmra.mrb[0].mxu0 %v7371
      %v7590 = vpop.f32.mrb[0].mxu0
      %v7591 = vadd.f32 0.0, %v7590
      %v7592 = vpop.f32.mrb[0].mxu0
      %7593 = vmatprep.mubr.f32.mxu0 0.0
      %7594 = vmatmul.mubr.f32.gmra.mrb[0].mxu0 %v7374
      %v7595 = vpop.f32.mrb[0].mxu0
      %v7596 = vadd.f32 0.0, %v7595
      %v7597 = vpop.f32.mrb[0].mxu0
      %7598 = vmatprep.mubr.f32.mxu0 0.0
      %7599 = vmatmul.mubr.f32.gmra.mrb[0].mxu0 %v7377
      %v7600 = vpop.f32.mrb[0].mxu0
      %v7601 = vadd.f32 0.0, %v7600
      %v7602 = vpop.f32.mrb[0].mxu0
      %7603 = vdwg.mxu0
      %v7604 = vadd.f32 %v7214, %v7446
      %v7605 = vadd.f32 %v7215, %v7451
      %v7606 = vadd.f32 %v7216, %v7456
      %v7607 = vadd.f32 %v7217, %v7461
      %v7608 = vadd.f32 %v7218, %v7466
      %v7609 = vadd.f32 %v7219, %v7471
      %v7610 = vadd.f32 %v7220, %v7476
      %v7611 = vadd.f32 %v7221, %v7481
      %v7612 = vadd.f32 %v7222, %v7486
      %v7613 = vadd.f32 %v7223, %v7491
      %v7614 = vadd.f32 %v7224, %v7496
      %v7615 = vadd.f32 %v7225, %v7501
      %v7616 = vadd.f32 %v7226, %v7506
      %v7617 = vadd.f32 %v7227, %v7511
      %v7618 = vadd.f32 %v7228, %v7516
      %v7619 = vadd.f32 %v7229, %v7521
      %v7620 = vadd.f32 %v7230, %v7526
      %v7621 = vadd.f32 %v7231, %v7531
      %v7622 = vadd.f32 %v7232, %v7536
      %v7623 = vadd.f32 %v7233, %v7541
      %v7624 = vadd.f32 %v7234, %v7546
      %v7625 = vadd.f32 %v7235, %v7551
      %v7626 = vadd.f32 %v7236, %v7556
      %v7627 = vadd.f32 %v7237, %v7561
      %v7628 = vadd.f32 %v7238, %v7566
      %v7629 = vadd.f32 %v7239, %v7571
      %v7630 = vadd.f32 %v7240, %v7576
      %v7631 = vadd.f32 %v7241, %v7581
      %v7632 = vadd.f32 %v7242, %v7586
      %v7633 = vadd.f32 %v7243, %v7591
      %v7634 = vadd.f32 %v7244, %v7596
      %v7635 = vadd.f32 %v7245, %v7601
      %s7636 = scalar_lea.vmem [#allocation3], 48
      %v7637 = vld [vmem:[%s7636] sm:$0xff]
      %v7638 = vld [vmem:[%s7636 + $0x8] sm:$0xff]
      %v7639 = vld [vmem:[%s7636 + $0x18] sm:$0xff]
      %v7640 = vld [vmem:[%s7636 + $0x20] sm:$0xff]
      %v7641 = vld [vmem:[%s7636 + $0x30] sm:$0xff]
      %v7642 = vld [vmem:[%s7636 + $0x38] sm:$0xff]
      %v7643 = vld [vmem:[%s7636 + $0x48] sm:$0xff]
      %v7644 = vld [vmem:[%s7636 + $0x50] sm:$0xff]
      %v7645 = vld [vmem:[%s7636 + $0x60] sm:$0xff]
      %v7646 = vld [vmem:[%s7636 + $0x68] sm:$0xff]
      %v7647 = vld [vmem:[%s7636 + $0x78] sm:$0xff]
      %v7648 = vld [vmem:[%s7636 + $0x80] sm:$0xff]
      %v7649 = vld [vmem:[%s7636 + $0x90] sm:$0xff]
      %v7650 = vld [vmem:[%s7636 + $0x98] sm:$0xff]
      %v7651 = vld [vmem:[%s7636 + $0xa8] sm:$0xff]
      %v7652 = vld [vmem:[%s7636 + $0xb0] sm:$0xff]
      %v7653 = vld [vmem:[%s7636 + $0xc0] sm:$0xff]
      %v7654 = vld [vmem:[%s7636 + $0xc8] sm:$0xff]
      %v7655 = vld [vmem:[%s7636 + $0xd8] sm:$0xff]
      %v7656 = vld [vmem:[%s7636 + $0xe0] sm:$0xff]
      %v7657 = vld [vmem:[%s7636 + $0xf0] sm:$0xff]
      %v7658 = vld [vmem:[%s7636 + $0xf8] sm:$0xff]
      %v7659 = vld [vmem:[%s7636 + $0x108] sm:$0xff]
      %v7660 = vld [vmem:[%s7636 + $0x110] sm:$0xff]
      %v7661 = vld [vmem:[%s7636 + $0x120] sm:$0xff]
      %v7662 = vld [vmem:[%s7636 + $0x128] sm:$0xff]
      %v7663 = vld [vmem:[%s7636 + $0x138] sm:$0xff]
      %v7664 = vld [vmem:[%s7636 + $0x140] sm:$0xff]
      %v7665 = vld [vmem:[%s7636 + $0x150] sm:$0xff]
      %v7666 = vld [vmem:[%s7636 + $0x158] sm:$0xff]
      %v7667 = vld [vmem:[%s7636 + $0x168] sm:$0xff]
      %v7668 = vld [vmem:[%s7636 + $0x170] sm:$0xff]
      %s7669 = scalar_lea.vmem %s4, 192
      %v7670 = vld [vmem:[%s7669] sm:$0xff]
      %v7671 = vld [vmem:[%s7669 + $0x8] sm:$0xff]
      %v7672 = vld [vmem:[%s7669 + $0x10] sm:$0xff]
      %v7673 = vld [vmem:[%s7669 + $0x18] sm:$0xff]
      %v7675 = vsel %vm309, %v7637, 0
      %v7678 = vsel %vm309, %v7638, 0
      %v7681 = vsel %vm309, %v7639, 0
      %v7684 = vsel %vm309, %v7640, 0
      %v7687 = vsel %vm309, %v7641, 0
      %v7690 = vsel %vm309, %v7642, 0
      %v7693 = vsel %vm309, %v7643, 0
      %v7696 = vsel %vm309, %v7644, 0
      %v7699 = vsel %vm309, %v7645, 0
      %v7702 = vsel %vm309, %v7646, 0
      %v7705 = vsel %vm309, %v7647, 0
      %v7708 = vsel %vm309, %v7648, 0
      %v7711 = vsel %vm309, %v7649, 0
      %v7714 = vsel %vm309, %v7650, 0
      %v7717 = vsel %vm309, %v7651, 0
      %v7720 = vsel %vm309, %v7652, 0
      %v7723 = vsel %vm309, %v7653, 0
      %v7726 = vsel %vm309, %v7654, 0
      %v7729 = vsel %vm309, %v7655, 0
      %v7732 = vsel %vm309, %v7656, 0
      %v7735 = vsel %vm309, %v7657, 0
      %v7738 = vsel %vm309, %v7658, 0
      %v7741 = vsel %vm309, %v7659, 0
      %v7744 = vsel %vm309, %v7660, 0
      %v7747 = vsel %vm309, %v7661, 0
      %v7750 = vsel %vm309, %v7662, 0
      %v7753 = vsel %vm309, %v7663, 0
      %v7756 = vsel %vm309, %v7664, 0
      %v7759 = vsel %vm309, %v7665, 0
      %v7762 = vsel %vm309, %v7666, 0
      %v7765 = vsel %vm309, %v7667, 0
      %v7768 = vsel %vm309, %v7668, 0
      %7770 = vmatprep.subr.mxu0 0.0
      %7771 = vmatpush1.msra.mxu0 %v7670
      %7772 = vmatprep.subr.mxu0 0.0
      %7773 = vmatpush1.msra.mxu0 %v7671
      %7774 = vmatprep.subr.mxu0 0.0
      %7775 = vmatpush1.msra.mxu0 %v7672
      %7776 = vmatprep.subr.mxu0 0.0
      %7777 = vmatpush1.msra.mxu0 %v7673
      %7778 = vmatprep.subr.mxu0 0.0
      %7779 = vmatpush1.msra.mxu0 0.0
      %7780 = vmatprep.subr.mxu0 0.0
      %7781 = vmatpush1.msra.mxu0 0.0
      %7782 = vmatprep.subr.mxu0 0.0
      %7783 = vmatpush1.msra.mxu0 0.0
      %7784 = vmatprep.subr.mxu0 0.0
      %7785 = vmatpush1.msra.mxu0 0.0
      %7786 = vmatprep.subr.mxu0 0.0
      %7787 = vmatpush1.msra.mxu0 0.0
      %7788 = vmatprep.subr.mxu0 0.0
      %7789 = vmatpush1.msra.mxu0 0.0
      %7790 = vmatprep.subr.mxu0 0.0
      %7791 = vmatpush1.msra.mxu0 0.0
      %7792 = vmatprep.subr.mxu0 0.0
      %7793 = vmatpush1.msra.mxu0 0.0
      %7794 = vmatprep.subr.mxu0 0.0
      %7795 = vmatpush1.msra.mxu0 0.0
      %7796 = vmatprep.subr.mxu0 0.0
      %7797 = vmatpush1.msra.mxu0 0.0
      %7798 = vmatprep.subr.mxu0 0.0
      %7799 = vmatpush1.msra.mxu0 0.0
      %7800 = vmatprep.subr.mxu0 0.0
      %7801 = vmatpush1.msra.mxu0 0.0
      %7802 = vmatprep.subr.mxu0 0.0
      %7803 = vmatpush1.msra.mxu0 0.0
      %7804 = vmatprep.subr.mxu0 0.0
      %7805 = vmatpush1.msra.mxu0 0.0
      %7806 = vmatprep.subr.mxu0 0.0
      %7807 = vmatpush1.msra.mxu0 0.0
      %7808 = vmatprep.subr.mxu0 0.0
      %7809 = vmatpush1.msra.mxu0 0.0
      %7810 = vmatprep.subr.mxu0 0.0
      %7811 = vmatpush1.msra.mxu0 0.0
      %7812 = vmatprep.subr.mxu0 0.0
      %7813 = vmatpush1.msra.mxu0 0.0
      %7814 = vmatprep.subr.mxu0 0.0
      %7815 = vmatpush1.msra.mxu0 0.0
      %7816 = vmatprep.subr.mxu0 0.0
      %7817 = vmatpush1.msra.mxu0 0.0
      %7818 = vmatprep.subr.mxu0 0.0
      %7819 = vmatpush1.msra.mxu0 0.0
      %7820 = vmatprep.subr.mxu0 0.0
      %7821 = vmatpush1.msra.mxu0 0.0
      %7822 = vmatprep.subr.mxu0 0.0
      %7823 = vmatpush1.msra.mxu0 0.0
      %7824 = vmatprep.subr.mxu0 0.0
      %7825 = vmatpush1.msra.mxu0 0.0
      %7826 = vmatprep.subr.mxu0 0.0
      %7827 = vmatpush1.msra.mxu0 0.0
      %7828 = vmatprep.subr.mxu0 0.0
      %7829 = vmatpush1.msra.mxu0 0.0
      %7830 = vmatprep.subr.mxu0 0.0
      %7831 = vmatpush1.msra.mxu0 0.0
      %7832 = vmatprep.subr.mxu0 0.0
      %7833 = vmatpush1.msra.mxu0 0.0
      %7834 = vmatprep.mubr.f32.mxu0 0.0
      %7835 = vmatmul.mubr.f32.gmra.mrb[0].mxu0 %v7675
      %v7836 = vpop.f32.mrb[0].mxu0
      %v7837 = vadd.f32 0.0, %v7836
      %v7838 = vpop.f32.mrb[0].mxu0
      %7839 = vmatprep.mubr.f32.mxu0 0.0
      %7840 = vmatmul.mubr.f32.gmra.mrb[0].mxu0 %v7678
      %v7841 = vpop.f32.mrb[0].mxu0
      %v7842 = vadd.f32 0.0, %v7841
      %v7843 = vpop.f32.mrb[0].mxu0
      %7844 = vmatprep.mubr.f32.mxu0 0.0
      %7845 = vmatmul.mubr.f32.gmra.mrb[0].mxu0 %v7681
      %v7846 = vpop.f32.mrb[0].mxu0
      %v7847 = vadd.f32 0.0, %v7846
      %v7848 = vpop.f32.mrb[0].mxu0
      %7849 = vmatprep.mubr.f32.mxu0 0.0
      %7850 = vmatmul.mubr.f32.gmra.mrb[0].mxu0 %v7684
      %v7851 = vpop.f32.mrb[0].mxu0
      %v7852 = vadd.f32 0.0, %v7851
      %v7853 = vpop.f32.mrb[0].mxu0
      %7854 = vmatprep.mubr.f32.mxu0 0.0
      %7855 = vmatmul.mubr.f32.gmra.mrb[0].mxu0 %v7687
      %v7856 = vpop.f32.mrb[0].mxu0
      %v7857 = vadd.f32 0.0, %v7856
      %v7858 = vpop.f32.mrb[0].mxu0
      %7859 = vmatprep.mubr.f32.mxu0 0.0
      %7860 = vmatmul.mubr.f32.gmra.mrb[0].mxu0 %v7690
      %v7861 = vpop.f32.mrb[0].mxu0
      %v7862 = vadd.f32 0.0, %v7861
      %v7863 = vpop.f32.mrb[0].mxu0
      %7864 = vmatprep.mubr.f32.mxu0 0.0
      %7865 = vmatmul.mubr.f32.gmra.mrb[0].mxu0 %v7693
      %v7866 = vpop.f32.mrb[0].mxu0
      %v7867 = vadd.f32 0.0, %v7866
      %v7868 = vpop.f32.mrb[0].mxu0
      %7869 = vmatprep.mubr.f32.mxu0 0.0
      %7870 = vmatmul.mubr.f32.gmra.mrb[0].mxu0 %v7696
      %v7871 = vpop.f32.mrb[0].mxu0
      %v7872 = vadd.f32 0.0, %v7871
      %v7873 = vpop.f32.mrb[0].mxu0
      %7874 = vmatprep.mubr.f32.mxu0 0.0
      %7875 = vmatmul.mubr.f32.gmra.mrb[0].mxu0 %v7699
      %v7876 = vpop.f32.mrb[0].mxu0
      %v7877 = vadd.f32 0.0, %v7876
      %v7878 = vpop.f32.mrb[0].mxu0
      %7879 = vmatprep.mubr.f32.mxu0 0.0
      %7880 = vmatmul.mubr.f32.gmra.mrb[0].mxu0 %v7702
      %v7881 = vpop.f32.mrb[0].mxu0
      %v7882 = vadd.f32 0.0, %v7881
      %v7883 = vpop.f32.mrb[0].mxu0
      %7884 = vmatprep.mubr.f32.mxu0 0.0
      %7885 = vmatmul.mubr.f32.gmra.mrb[0].mxu0 %v7705
      %v7886 = vpop.f32.mrb[0].mxu0
      %v7887 = vadd.f32 0.0, %v7886
      %v7888 = vpop.f32.mrb[0].mxu0
      %7889 = vmatprep.mubr.f32.mxu0 0.0
      %7890 = vmatmul.mubr.f32.gmra.mrb[0].mxu0 %v7708
      %v7891 = vpop.f32.mrb[0].mxu0
      %v7892 = vadd.f32 0.0, %v7891
      %v7893 = vpop.f32.mrb[0].mxu0
      %7894 = vmatprep.mubr.f32.mxu0 0.0
      %7895 = vmatmul.mubr.f32.gmra.mrb[0].mxu0 %v7711
      %v7896 = vpop.f32.mrb[0].mxu0
      %v7897 = vadd.f32 0.0, %v7896
      %v7898 = vpop.f32.mrb[0].mxu0
      %7899 = vmatprep.mubr.f32.mxu0 0.0
      %7900 = vmatmul.mubr.f32.gmra.mrb[0].mxu0 %v7714
      %v7901 = vpop.f32.mrb[0].mxu0
      %v7902 = vadd.f32 0.0, %v7901
      %v7903 = vpop.f32.mrb[0].mxu0
      %7904 = vmatprep.mubr.f32.mxu0 0.0
      %7905 = vmatmul.mubr.f32.gmra.mrb[0].mxu0 %v7717
      %v7906 = vpop.f32.mrb[0].mxu0
      %v7907 = vadd.f32 0.0, %v7906
      %v7908 = vpop.f32.mrb[0].mxu0
      %7909 = vmatprep.mubr.f32.mxu0 0.0
      %7910 = vmatmul.mubr.f32.gmra.mrb[0].mxu0 %v7720
      %v7911 = vpop.f32.mrb[0].mxu0
      %v7912 = vadd.f32 0.0, %v7911
      %v7913 = vpop.f32.mrb[0].mxu0
      %7914 = vmatprep.mubr.f32.mxu0 0.0
      %7915 = vmatmul.mubr.f32.gmra.mrb[0].mxu0 %v7723
      %v7916 = vpop.f32.mrb[0].mxu0
      %v7917 = vadd.f32 0.0, %v7916
      %v7918 = vpop.f32.mrb[0].mxu0
      %7919 = vmatprep.mubr.f32.mxu0 0.0
      %7920 = vmatmul.mubr.f32.gmra.mrb[0].mxu0 %v7726
      %v7921 = vpop.f32.mrb[0].mxu0
      %v7922 = vadd.f32 0.0, %v7921
      %v7923 = vpop.f32.mrb[0].mxu0
      %7924 = vmatprep.mubr.f32.mxu0 0.0
      %7925 = vmatmul.mubr.f32.gmra.mrb[0].mxu0 %v7729
      %v7926 = vpop.f32.mrb[0].mxu0
      %v7927 = vadd.f32 0.0, %v7926
      %v7928 = vpop.f32.mrb[0].mxu0
      %7929 = vmatprep.mubr.f32.mxu0 0.0
      %7930 = vmatmul.mubr.f32.gmra.mrb[0].mxu0 %v7732
      %v7931 = vpop.f32.mrb[0].mxu0
      %v7932 = vadd.f32 0.0, %v7931
      %v7933 = vpop.f32.mrb[0].mxu0
      %7934 = vmatprep.mubr.f32.mxu0 0.0
      %7935 = vmatmul.mubr.f32.gmra.mrb[0].mxu0 %v7735
      %v7936 = vpop.f32.mrb[0].mxu0
      %v7937 = vadd.f32 0.0, %v7936
      %v7938 = vpop.f32.mrb[0].mxu0
      %7939 = vmatprep.mubr.f32.mxu0 0.0
      %7940 = vmatmul.mubr.f32.gmra.mrb[0].mxu0 %v7738
      %v7941 = vpop.f32.mrb[0].mxu0
      %v7942 = vadd.f32 0.0, %v7941
      %v7943 = vpop.f32.mrb[0].mxu0
      %7944 = vmatprep.mubr.f32.mxu0 0.0
      %7945 = vmatmul.mubr.f32.gmra.mrb[0].mxu0 %v7741
      %v7946 = vpop.f32.mrb[0].mxu0
      %v7947 = vadd.f32 0.0, %v7946
      %v7948 = vpop.f32.mrb[0].mxu0
      %7949 = vmatprep.mubr.f32.mxu0 0.0
      %7950 = vmatmul.mubr.f32.gmra.mrb[0].mxu0 %v7744
      %v7951 = vpop.f32.mrb[0].mxu0
      %v7952 = vadd.f32 0.0, %v7951
      %v7953 = vpop.f32.mrb[0].mxu0
      %7954 = vmatprep.mubr.f32.mxu0 0.0
      %7955 = vmatmul.mubr.f32.gmra.mrb[0].mxu0 %v7747
      %v7956 = vpop.f32.mrb[0].mxu0
      %v7957 = vadd.f32 0.0, %v7956
      %v7958 = vpop.f32.mrb[0].mxu0
      %7959 = vmatprep.mubr.f32.mxu0 0.0
      %7960 = vmatmul.mubr.f32.gmra.mrb[0].mxu0 %v7750
      %v7961 = vpop.f32.mrb[0].mxu0
      %v7962 = vadd.f32 0.0, %v7961
      %v7963 = vpop.f32.mrb[0].mxu0
      %7964 = vmatprep.mubr.f32.mxu0 0.0
      %7965 = vmatmul.mubr.f32.gmra.mrb[0].mxu0 %v7753
      %v7966 = vpop.f32.mrb[0].mxu0
      %v7967 = vadd.f32 0.0, %v7966
      %v7968 = vpop.f32.mrb[0].mxu0
      %7969 = vmatprep.mubr.f32.mxu0 0.0
      %7970 = vmatmul.mubr.f32.gmra.mrb[0].mxu0 %v7756
      %v7971 = vpop.f32.mrb[0].mxu0
      %v7972 = vadd.f32 0.0, %v7971
      %v7973 = vpop.f32.mrb[0].mxu0
      %7974 = vmatprep.mubr.f32.mxu0 0.0
      %7975 = vmatmul.mubr.f32.gmra.mrb[0].mxu0 %v7759
      %v7976 = vpop.f32.mrb[0].mxu0
      %v7977 = vadd.f32 0.0, %v7976
      %v7978 = vpop.f32.mrb[0].mxu0
      %7979 = vmatprep.mubr.f32.mxu0 0.0
      %7980 = vmatmul.mubr.f32.gmra.mrb[0].mxu0 %v7762
      %v7981 = vpop.f32.mrb[0].mxu0
      %v7982 = vadd.f32 0.0, %v7981
      %v7983 = vpop.f32.mrb[0].mxu0
      %7984 = vmatprep.mubr.f32.mxu0 0.0
      %7985 = vmatmul.mubr.f32.gmra.mrb[0].mxu0 %v7765
      %v7986 = vpop.f32.mrb[0].mxu0
      %v7987 = vadd.f32 0.0, %v7986
      %v7988 = vpop.f32.mrb[0].mxu0
      %7989 = vmatprep.mubr.f32.mxu0 0.0
      %7990 = vmatmul.mubr.f32.gmra.mrb[0].mxu0 %v7768
      %v7991 = vpop.f32.mrb[0].mxu0
      %v7992 = vadd.f32 0.0, %v7991
      %v7993 = vpop.f32.mrb[0].mxu0
      %7994 = vdwg.mxu0
      %v7995 = vadd.f32 %v7604, %v7837
      %v7996 = vadd.f32 %v7605, %v7842
      %v7997 = vadd.f32 %v7606, %v7847
      %v7998 = vadd.f32 %v7607, %v7852
      %v7999 = vadd.f32 %v7608, %v7857
      %v8000 = vadd.f32 %v7609, %v7862
      %v8001 = vadd.f32 %v7610, %v7867
      %v8002 = vadd.f32 %v7611, %v7872
      %v8003 = vadd.f32 %v7612, %v7877
      %v8004 = vadd.f32 %v7613, %v7882
      %v8005 = vadd.f32 %v7614, %v7887
      %v8006 = vadd.f32 %v7615, %v7892
      %v8007 = vadd.f32 %v7616, %v7897
      %v8008 = vadd.f32 %v7617, %v7902
      %v8009 = vadd.f32 %v7618, %v7907
      %v8010 = vadd.f32 %v7619, %v7912
      %v8011 = vadd.f32 %v7620, %v7917
      %v8012 = vadd.f32 %v7621, %v7922
      %v8013 = vadd.f32 %v7622, %v7927
      %v8014 = vadd.f32 %v7623, %v7932
      %v8015 = vadd.f32 %v7624, %v7937
      %v8016 = vadd.f32 %v7625, %v7942
      %v8017 = vadd.f32 %v7626, %v7947
      %v8018 = vadd.f32 %v7627, %v7952
      %v8019 = vadd.f32 %v7628, %v7957
      %v8020 = vadd.f32 %v7629, %v7962
      %v8021 = vadd.f32 %v7630, %v7967
      %v8022 = vadd.f32 %v7631, %v7972
      %v8023 = vadd.f32 %v7632, %v7977
      %v8024 = vadd.f32 %v7633, %v7982
      %v8025 = vadd.f32 %v7634, %v7987
      %v8026 = vadd.f32 %v7635, %v7992
      %v8027 = vld [vmem:[%s7636 + $0x1] sm:$0xff]
      %v8028 = vld [vmem:[%s7636 + $0x9] sm:$0xff]
      %v8029 = vld [vmem:[%s7636 + $0x19] sm:$0xff]
      %v8030 = vld [vmem:[%s7636 + $0x21] sm:$0xff]
      %v8031 = vld [vmem:[%s7636 + $0x31] sm:$0xff]
      %v8032 = vld [vmem:[%s7636 + $0x39] sm:$0xff]
      %v8033 = vld [vmem:[%s7636 + $0x49] sm:$0xff]
      %v8034 = vld [vmem:[%s7636 + $0x51] sm:$0xff]
      %v8035 = vld [vmem:[%s7636 + $0x61] sm:$0xff]
      %v8036 = vld [vmem:[%s7636 + $0x69] sm:$0xff]
      %v8037 = vld [vmem:[%s7636 + $0x79] sm:$0xff]
      %v8038 = vld [vmem:[%s7636 + $0x81] sm:$0xff]
      %v8039 = vld [vmem:[%s7636 + $0x91] sm:$0xff]
      %v8040 = vld [vmem:[%s7636 + $0x99] sm:$0xff]
      %v8041 = vld [vmem:[%s7636 + $0xa9] sm:$0xff]
      %v8042 = vld [vmem:[%s7636 + $0xb1] sm:$0xff]
      %v8043 = vld [vmem:[%s7636 + $0xc1] sm:$0xff]
      %v8044 = vld [vmem:[%s7636 + $0xc9] sm:$0xff]
      %v8045 = vld [vmem:[%s7636 + $0xd9] sm:$0xff]
      %v8046 = vld [vmem:[%s7636 + $0xe1] sm:$0xff]
      %v8047 = vld [vmem:[%s7636 + $0xf1] sm:$0xff]
      %v8048 = vld [vmem:[%s7636 + $0xf9] sm:$0xff]
      %v8049 = vld [vmem:[%s7636 + $0x109] sm:$0xff]
      %v8050 = vld [vmem:[%s7636 + $0x111] sm:$0xff]
      %v8051 = vld [vmem:[%s7636 + $0x121] sm:$0xff]
      %v8052 = vld [vmem:[%s7636 + $0x129] sm:$0xff]
      %v8053 = vld [vmem:[%s7636 + $0x139] sm:$0xff]
      %v8054 = vld [vmem:[%s7636 + $0x141] sm:$0xff]
      %v8055 = vld [vmem:[%s7636 + $0x151] sm:$0xff]
      %v8056 = vld [vmem:[%s7636 + $0x159] sm:$0xff]
      %v8057 = vld [vmem:[%s7636 + $0x169] sm:$0xff]
      %v8058 = vld [vmem:[%s7636 + $0x171] sm:$0xff]
      %s8059 = scalar_lea.vmem %s4, 224
      %v8060 = vld [vmem:[%s8059] sm:$0xff]
      %v8061 = vld [vmem:[%s8059 + $0x8] sm:$0xff]
      %v8062 = vld [vmem:[%s8059 + $0x10] sm:$0xff]
      %v8063 = vld [vmem:[%s8059 + $0x18] sm:$0xff]
      %v8065 = vsel %vm309, %v8027, 0
      %v8068 = vsel %vm309, %v8028, 0
      %v8071 = vsel %vm309, %v8029, 0
      %v8074 = vsel %vm309, %v8030, 0
      %v8077 = vsel %vm309, %v8031, 0
      %v8080 = vsel %vm309, %v8032, 0
      %v8083 = vsel %vm309, %v8033, 0
      %v8086 = vsel %vm309, %v8034, 0
      %v8089 = vsel %vm309, %v8035, 0
      %v8092 = vsel %vm309, %v8036, 0
      %v8095 = vsel %vm309, %v8037, 0
      %v8098 = vsel %vm309, %v8038, 0
      %v8101 = vsel %vm309, %v8039, 0
      %v8104 = vsel %vm309, %v8040, 0
      %v8107 = vsel %vm309, %v8041, 0
      %v8110 = vsel %vm309, %v8042, 0
      %v8113 = vsel %vm309, %v8043, 0
      %v8116 = vsel %vm309, %v8044, 0
      %v8119 = vsel %vm309, %v8045, 0
      %v8122 = vsel %vm309, %v8046, 0
      %v8125 = vsel %vm309, %v8047, 0
      %v8128 = vsel %vm309, %v8048, 0
      %v8131 = vsel %vm309, %v8049, 0
      %v8134 = vsel %vm309, %v8050, 0
      %v8137 = vsel %vm309, %v8051, 0
      %v8140 = vsel %vm309, %v8052, 0
      %v8143 = vsel %vm309, %v8053, 0
      %v8146 = vsel %vm309, %v8054, 0
      %v8149 = vsel %vm309, %v8055, 0
      %v8152 = vsel %vm309, %v8056, 0
      %v8155 = vsel %vm309, %v8057, 0
      %v8158 = vsel %vm309, %v8058, 0
      %8160 = vmatprep.subr.mxu0 0.0
      %8161 = vmatpush1.msra.mxu0 %v8060
      %8162 = vmatprep.subr.mxu0 0.0
      %8163 = vmatpush1.msra.mxu0 %v8061
      %8164 = vmatprep.subr.mxu0 0.0
      %8165 = vmatpush1.msra.mxu0 %v8062
      %8166 = vmatprep.subr.mxu0 0.0
      %8167 = vmatpush1.msra.mxu0 %v8063
      %8168 = vmatprep.subr.mxu0 0.0
      %8169 = vmatpush1.msra.mxu0 0.0
      %8170 = vmatprep.subr.mxu0 0.0
      %8171 = vmatpush1.msra.mxu0 0.0
      %8172 = vmatprep.subr.mxu0 0.0
      %8173 = vmatpush1.msra.mxu0 0.0
      %8174 = vmatprep.subr.mxu0 0.0
      %8175 = vmatpush1.msra.mxu0 0.0
      %8176 = vmatprep.subr.mxu0 0.0
      %8177 = vmatpush1.msra.mxu0 0.0
      %8178 = vmatprep.subr.mxu0 0.0
      %8179 = vmatpush1.msra.mxu0 0.0
      %8180 = vmatprep.subr.mxu0 0.0
      %8181 = vmatpush1.msra.mxu0 0.0
      %8182 = vmatprep.subr.mxu0 0.0
      %8183 = vmatpush1.msra.mxu0 0.0
      %8184 = vmatprep.subr.mxu0 0.0
      %8185 = vmatpush1.msra.mxu0 0.0
      %8186 = vmatprep.subr.mxu0 0.0
      %8187 = vmatpush1.msra.mxu0 0.0
      %8188 = vmatprep.subr.mxu0 0.0
      %8189 = vmatpush1.msra.mxu0 0.0
      %8190 = vmatprep.subr.mxu0 0.0
      %8191 = vmatpush1.msra.mxu0 0.0
      %8192 = vmatprep.subr.mxu0 0.0
      %8193 = vmatpush1.msra.mxu0 0.0
      %8194 = vmatprep.subr.mxu0 0.0
      %8195 = vmatpush1.msra.mxu0 0.0
      %8196 = vmatprep.subr.mxu0 0.0
      %8197 = vmatpush1.msra.mxu0 0.0
      %8198 = vmatprep.subr.mxu0 0.0
      %8199 = vmatpush1.msra.mxu0 0.0
      %8200 = vmatprep.subr.mxu0 0.0
      %8201 = vmatpush1.msra.mxu0 0.0
      %8202 = vmatprep.subr.mxu0 0.0
      %8203 = vmatpush1.msra.mxu0 0.0
      %8204 = vmatprep.subr.mxu0 0.0
      %8205 = vmatpush1.msra.mxu0 0.0
      %8206 = vmatprep.subr.mxu0 0.0
      %8207 = vmatpush1.msra.mxu0 0.0
      %8208 = vmatprep.subr.mxu0 0.0
      %8209 = vmatpush1.msra.mxu0 0.0
      %8210 = vmatprep.subr.mxu0 0.0
      %8211 = vmatpush1.msra.mxu0 0.0
      %8212 = vmatprep.subr.mxu0 0.0
      %8213 = vmatpush1.msra.mxu0 0.0
      %8214 = vmatprep.subr.mxu0 0.0
      %8215 = vmatpush1.msra.mxu0 0.0
      %8216 = vmatprep.subr.mxu0 0.0
      %8217 = vmatpush1.msra.mxu0 0.0
      %8218 = vmatprep.subr.mxu0 0.0
      %8219 = vmatpush1.msra.mxu0 0.0
      %8220 = vmatprep.subr.mxu0 0.0
      %8221 = vmatpush1.msra.mxu0 0.0
      %8222 = vmatprep.subr.mxu0 0.0
      %8223 = vmatpush1.msra.mxu0 0.0
      %8224 = vmatprep.mubr.f32.mxu0 0.0
      %8225 = vmatmul.mubr.f32.gmra.mrb[0].mxu0 %v8065
      %v8226 = vpop.f32.mrb[0].mxu0
      %v8227 = vadd.f32 0.0, %v8226
      %v8228 = vpop.f32.mrb[0].mxu0
      %8229 = vmatprep.mubr.f32.mxu0 0.0
      %8230 = vmatmul.mubr.f32.gmra.mrb[0].mxu0 %v8068
      %v8231 = vpop.f32.mrb[0].mxu0
      %v8232 = vadd.f32 0.0, %v8231
      %v8233 = vpop.f32.mrb[0].mxu0
      %8234 = vmatprep.mubr.f32.mxu0 0.0
      %8235 = vmatmul.mubr.f32.gmra.mrb[0].mxu0 %v8071
      %v8236 = vpop.f32.mrb[0].mxu0
      %v8237 = vadd.f32 0.0, %v8236
      %v8238 = vpop.f32.mrb[0].mxu0
      %8239 = vmatprep.mubr.f32.mxu0 0.0
      %8240 = vmatmul.mubr.f32.gmra.mrb[0].mxu0 %v8074
      %v8241 = vpop.f32.mrb[0].mxu0
      %v8242 = vadd.f32 0.0, %v8241
      %v8243 = vpop.f32.mrb[0].mxu0
      %8244 = vmatprep.mubr.f32.mxu0 0.0
      %8245 = vmatmul.mubr.f32.gmra.mrb[0].mxu0 %v8077
      %v8246 = vpop.f32.mrb[0].mxu0
      %v8247 = vadd.f32 0.0, %v8246
      %v8248 = vpop.f32.mrb[0].mxu0
      %8249 = vmatprep.mubr.f32.mxu0 0.0
      %8250 = vmatmul.mubr.f32.gmra.mrb[0].mxu0 %v8080
      %v8251 = vpop.f32.mrb[0].mxu0
      %v8252 = vadd.f32 0.0, %v8251
      %v8253 = vpop.f32.mrb[0].mxu0
      %8254 = vmatprep.mubr.f32.mxu0 0.0
      %8255 = vmatmul.mubr.f32.gmra.mrb[0].mxu0 %v8083
      %v8256 = vpop.f32.mrb[0].mxu0
      %v8257 = vadd.f32 0.0, %v8256
      %v8258 = vpop.f32.mrb[0].mxu0
      %8259 = vmatprep.mubr.f32.mxu0 0.0
      %8260 = vmatmul.mubr.f32.gmra.mrb[0].mxu0 %v8086
      %v8261 = vpop.f32.mrb[0].mxu0
      %v8262 = vadd.f32 0.0, %v8261
      %v8263 = vpop.f32.mrb[0].mxu0
      %8264 = vmatprep.mubr.f32.mxu0 0.0
      %8265 = vmatmul.mubr.f32.gmra.mrb[0].mxu0 %v8089
      %v8266 = vpop.f32.mrb[0].mxu0
      %v8267 = vadd.f32 0.0, %v8266
      %v8268 = vpop.f32.mrb[0].mxu0
      %8269 = vmatprep.mubr.f32.mxu0 0.0
      %8270 = vmatmul.mubr.f32.gmra.mrb[0].mxu0 %v8092
      %v8271 = vpop.f32.mrb[0].mxu0
      %v8272 = vadd.f32 0.0, %v8271
      %v8273 = vpop.f32.mrb[0].mxu0
      %8274 = vmatprep.mubr.f32.mxu0 0.0
      %8275 = vmatmul.mubr.f32.gmra.mrb[0].mxu0 %v8095
      %v8276 = vpop.f32.mrb[0].mxu0
      %v8277 = vadd.f32 0.0, %v8276
      %v8278 = vpop.f32.mrb[0].mxu0
      %8279 = vmatprep.mubr.f32.mxu0 0.0
      %8280 = vmatmul.mubr.f32.gmra.mrb[0].mxu0 %v8098
      %v8281 = vpop.f32.mrb[0].mxu0
      %v8282 = vadd.f32 0.0, %v8281
      %v8283 = vpop.f32.mrb[0].mxu0
      %8284 = vmatprep.mubr.f32.mxu0 0.0
      %8285 = vmatmul.mubr.f32.gmra.mrb[0].mxu0 %v8101
      %v8286 = vpop.f32.mrb[0].mxu0
      %v8287 = vadd.f32 0.0, %v8286
      %v8288 = vpop.f32.mrb[0].mxu0
      %8289 = vmatprep.mubr.f32.mxu0 0.0
      %8290 = vmatmul.mubr.f32.gmra.mrb[0].mxu0 %v8104
      %v8291 = vpop.f32.mrb[0].mxu0
      %v8292 = vadd.f32 0.0, %v8291
      %v8293 = vpop.f32.mrb[0].mxu0
      %8294 = vmatprep.mubr.f32.mxu0 0.0
      %8295 = vmatmul.mubr.f32.gmra.mrb[0].mxu0 %v8107
      %v8296 = vpop.f32.mrb[0].mxu0
      %v8297 = vadd.f32 0.0, %v8296
      %v8298 = vpop.f32.mrb[0].mxu0
      %8299 = vmatprep.mubr.f32.mxu0 0.0
      %8300 = vmatmul.mubr.f32.gmra.mrb[0].mxu0 %v8110
      %v8301 = vpop.f32.mrb[0].mxu0
      %v8302 = vadd.f32 0.0, %v8301
      %v8303 = vpop.f32.mrb[0].mxu0
      %8304 = vmatprep.mubr.f32.mxu0 0.0
      %8305 = vmatmul.mubr.f32.gmra.mrb[0].mxu0 %v8113
      %v8306 = vpop.f32.mrb[0].mxu0
      %v8307 = vadd.f32 0.0, %v8306
      %v8308 = vpop.f32.mrb[0].mxu0
      %8309 = vmatprep.mubr.f32.mxu0 0.0
      %8310 = vmatmul.mubr.f32.gmra.mrb[0].mxu0 %v8116
      %v8311 = vpop.f32.mrb[0].mxu0
      %v8312 = vadd.f32 0.0, %v8311
      %v8313 = vpop.f32.mrb[0].mxu0
      %8314 = vmatprep.mubr.f32.mxu0 0.0
      %8315 = vmatmul.mubr.f32.gmra.mrb[0].mxu0 %v8119
      %v8316 = vpop.f32.mrb[0].mxu0
      %v8317 = vadd.f32 0.0, %v8316
      %v8318 = vpop.f32.mrb[0].mxu0
      %8319 = vmatprep.mubr.f32.mxu0 0.0
      %8320 = vmatmul.mubr.f32.gmra.mrb[0].mxu0 %v8122
      %v8321 = vpop.f32.mrb[0].mxu0
      %v8322 = vadd.f32 0.0, %v8321
      %v8323 = vpop.f32.mrb[0].mxu0
      %8324 = vmatprep.mubr.f32.mxu0 0.0
      %8325 = vmatmul.mubr.f32.gmra.mrb[0].mxu0 %v8125
      %v8326 = vpop.f32.mrb[0].mxu0
      %v8327 = vadd.f32 0.0, %v8326
      %v8328 = vpop.f32.mrb[0].mxu0
      %8329 = vmatprep.mubr.f32.mxu0 0.0
      %8330 = vmatmul.mubr.f32.gmra.mrb[0].mxu0 %v8128
      %v8331 = vpop.f32.mrb[0].mxu0
      %v8332 = vadd.f32 0.0, %v8331
      %v8333 = vpop.f32.mrb[0].mxu0
      %8334 = vmatprep.mubr.f32.mxu0 0.0
      %8335 = vmatmul.mubr.f32.gmra.mrb[0].mxu0 %v8131
      %v8336 = vpop.f32.mrb[0].mxu0
      %v8337 = vadd.f32 0.0, %v8336
      %v8338 = vpop.f32.mrb[0].mxu0
      %8339 = vmatprep.mubr.f32.mxu0 0.0
      %8340 = vmatmul.mubr.f32.gmra.mrb[0].mxu0 %v8134
      %v8341 = vpop.f32.mrb[0].mxu0
      %v8342 = vadd.f32 0.0, %v8341
      %v8343 = vpop.f32.mrb[0].mxu0
      %8344 = vmatprep.mubr.f32.mxu0 0.0
      %8345 = vmatmul.mubr.f32.gmra.mrb[0].mxu0 %v8137
      %v8346 = vpop.f32.mrb[0].mxu0
      %v8347 = vadd.f32 0.0, %v8346
      %v8348 = vpop.f32.mrb[0].mxu0
      %8349 = vmatprep.mubr.f32.mxu0 0.0
      %8350 = vmatmul.mubr.f32.gmra.mrb[0].mxu0 %v8140
      %v8351 = vpop.f32.mrb[0].mxu0
      %v8352 = vadd.f32 0.0, %v8351
      %v8353 = vpop.f32.mrb[0].mxu0
      %8354 = vmatprep.mubr.f32.mxu0 0.0
      %8355 = vmatmul.mubr.f32.gmra.mrb[0].mxu0 %v8143
      %v8356 = vpop.f32.mrb[0].mxu0
      %v8357 = vadd.f32 0.0, %v8356
      %v8358 = vpop.f32.mrb[0].mxu0
      %8359 = vmatprep.mubr.f32.mxu0 0.0
      %8360 = vmatmul.mubr.f32.gmra.mrb[0].mxu0 %v8146
      %v8361 = vpop.f32.mrb[0].mxu0
      %v8362 = vadd.f32 0.0, %v8361
      %v8363 = vpop.f32.mrb[0].mxu0
      %8364 = vmatprep.mubr.f32.mxu0 0.0
      %8365 = vmatmul.mubr.f32.gmra.mrb[0].mxu0 %v8149
      %v8366 = vpop.f32.mrb[0].mxu0
      %v8367 = vadd.f32 0.0, %v8366
      %v8368 = vpop.f32.mrb[0].mxu0
      %8369 = vmatprep.mubr.f32.mxu0 0.0
      %8370 = vmatmul.mubr.f32.gmra.mrb[0].mxu0 %v8152
      %v8371 = vpop.f32.mrb[0].mxu0
      %v8372 = vadd.f32 0.0, %v8371
      %v8373 = vpop.f32.mrb[0].mxu0
      %8374 = vmatprep.mubr.f32.mxu0 0.0
      %8375 = vmatmul.mubr.f32.gmra.mrb[0].mxu0 %v8155
      %v8376 = vpop.f32.mrb[0].mxu0
      %v8377 = vadd.f32 0.0, %v8376
      %v8378 = vpop.f32.mrb[0].mxu0
      %8379 = vmatprep.mubr.f32.mxu0 0.0
      %8380 = vmatmul.mubr.f32.gmra.mrb[0].mxu0 %v8158
      %v8381 = vpop.f32.mrb[0].mxu0
      %v8382 = vadd.f32 0.0, %v8381
      %v8383 = vpop.f32.mrb[0].mxu0
      %8384 = vdwg.mxu0
      %v8385 = vadd.f32 %v7995, %v8227
      %v8386 = vadd.f32 %v7996, %v8232
      %v8387 = vadd.f32 %v7997, %v8237
      %v8388 = vadd.f32 %v7998, %v8242
      %v8389 = vadd.f32 %v7999, %v8247
      %v8390 = vadd.f32 %v8000, %v8252
      %v8391 = vadd.f32 %v8001, %v8257
      %v8392 = vadd.f32 %v8002, %v8262
      %v8393 = vadd.f32 %v8003, %v8267
      %v8394 = vadd.f32 %v8004, %v8272
      %v8395 = vadd.f32 %v8005, %v8277
      %v8396 = vadd.f32 %v8006, %v8282
      %v8397 = vadd.f32 %v8007, %v8287
      %v8398 = vadd.f32 %v8008, %v8292
      %v8399 = vadd.f32 %v8009, %v8297
      %v8400 = vadd.f32 %v8010, %v8302
      %v8401 = vadd.f32 %v8011, %v8307
      %v8402 = vadd.f32 %v8012, %v8312
      %v8403 = vadd.f32 %v8013, %v8317
      %v8404 = vadd.f32 %v8014, %v8322
      %v8405 = vadd.f32 %v8015, %v8327
      %v8406 = vadd.f32 %v8016, %v8332
      %v8407 = vadd.f32 %v8017, %v8337
      %v8408 = vadd.f32 %v8018, %v8342
      %v8409 = vadd.f32 %v8019, %v8347
      %v8410 = vadd.f32 %v8020, %v8352
      %v8411 = vadd.f32 %v8021, %v8357
      %v8412 = vadd.f32 %v8022, %v8362
      %v8413 = vadd.f32 %v8023, %v8367
      %v8414 = vadd.f32 %v8024, %v8372
      %v8415 = vadd.f32 %v8025, %v8377
      %v8416 = vadd.f32 %v8026, %v8382
      %v8417 = vld [vmem:[%s7636 + $0x2] sm:$0xff]
      %v8418 = vld [vmem:[%s7636 + $0xa] sm:$0xff]
      %v8419 = vld [vmem:[%s7636 + $0x1a] sm:$0xff]
      %v8420 = vld [vmem:[%s7636 + $0x22] sm:$0xff]
      %v8421 = vld [vmem:[%s7636 + $0x32] sm:$0xff]
      %v8422 = vld [vmem:[%s7636 + $0x3a] sm:$0xff]
      %v8423 = vld [vmem:[%s7636 + $0x4a] sm:$0xff]
      %v8424 = vld [vmem:[%s7636 + $0x52] sm:$0xff]
      %v8425 = vld [vmem:[%s7636 + $0x62] sm:$0xff]
      %v8426 = vld [vmem:[%s7636 + $0x6a] sm:$0xff]
      %v8427 = vld [vmem:[%s7636 + $0x7a] sm:$0xff]
      %v8428 = vld [vmem:[%s7636 + $0x82] sm:$0xff]
      %v8429 = vld [vmem:[%s7636 + $0x92] sm:$0xff]
      %v8430 = vld [vmem:[%s7636 + $0x9a] sm:$0xff]
      %v8431 = vld [vmem:[%s7636 + $0xaa] sm:$0xff]
      %v8432 = vld [vmem:[%s7636 + $0xb2] sm:$0xff]
      %v8433 = vld [vmem:[%s7636 + $0xc2] sm:$0xff]
      %v8434 = vld [vmem:[%s7636 + $0xca] sm:$0xff]
      %v8435 = vld [vmem:[%s7636 + $0xda] sm:$0xff]
      %v8436 = vld [vmem:[%s7636 + $0xe2] sm:$0xff]
      %v8437 = vld [vmem:[%s7636 + $0xf2] sm:$0xff]
      %v8438 = vld [vmem:[%s7636 + $0xfa] sm:$0xff]
      %v8439 = vld [vmem:[%s7636 + $0x10a] sm:$0xff]
      %v8440 = vld [vmem:[%s7636 + $0x112] sm:$0xff]
      %v8441 = vld [vmem:[%s7636 + $0x122] sm:$0xff]
      %v8442 = vld [vmem:[%s7636 + $0x12a] sm:$0xff]
      %v8443 = vld [vmem:[%s7636 + $0x13a] sm:$0xff]
      %v8444 = vld [vmem:[%s7636 + $0x142] sm:$0xff]
      %v8445 = vld [vmem:[%s7636 + $0x152] sm:$0xff]
      %v8446 = vld [vmem:[%s7636 + $0x15a] sm:$0xff]
      %v8447 = vld [vmem:[%s7636 + $0x16a] sm:$0xff]
      %v8448 = vld [vmem:[%s7636 + $0x172] sm:$0xff]
      %s8449 = scalar_lea.vmem %s4, 256
      %v8450 = vld [vmem:[%s8449] sm:$0xff]
      %v8451 = vld [vmem:[%s8449 + $0x8] sm:$0xff]
      %v8452 = vld [vmem:[%s8449 + $0x10] sm:$0xff]
      %v8453 = vld [vmem:[%s8449 + $0x18] sm:$0xff]
      %v8455 = vsel %vm309, %v8417, 0
      %v8458 = vsel %vm309, %v8418, 0
      %v8461 = vsel %vm309, %v8419, 0
      %v8464 = vsel %vm309, %v8420, 0
      %v8467 = vsel %vm309, %v8421, 0
      %v8470 = vsel %vm309, %v8422, 0
      %v8473 = vsel %vm309, %v8423, 0
      %v8476 = vsel %vm309, %v8424, 0
      %v8479 = vsel %vm309, %v8425, 0
      %v8482 = vsel %vm309, %v8426, 0
      %v8485 = vsel %vm309, %v8427, 0
      %v8488 = vsel %vm309, %v8428, 0
      %v8491 = vsel %vm309, %v8429, 0
      %v8494 = vsel %vm309, %v8430, 0
      %v8497 = vsel %vm309, %v8431, 0
      %v8500 = vsel %vm309, %v8432, 0
      %v8503 = vsel %vm309, %v8433, 0
      %v8506 = vsel %vm309, %v8434, 0
      %v8509 = vsel %vm309, %v8435, 0
      %v8512 = vsel %vm309, %v8436, 0
      %v8515 = vsel %vm309, %v8437, 0
      %v8518 = vsel %vm309, %v8438, 0
      %v8521 = vsel %vm309, %v8439, 0
      %v8524 = vsel %vm309, %v8440, 0
      %v8527 = vsel %vm309, %v8441, 0
      %v8530 = vsel %vm309, %v8442, 0
      %v8533 = vsel %vm309, %v8443, 0
      %v8536 = vsel %vm309, %v8444, 0
      %v8539 = vsel %vm309, %v8445, 0
      %v8542 = vsel %vm309, %v8446, 0
      %v8545 = vsel %vm309, %v8447, 0
      %v8548 = vsel %vm309, %v8448, 0
      %8550 = vmatprep.subr.mxu0 0.0
      %8551 = vmatpush1.msra.mxu0 %v8450
      %8552 = vmatprep.subr.mxu0 0.0
      %8553 = vmatpush1.msra.mxu0 %v8451
      %8554 = vmatprep.subr.mxu0 0.0
      %8555 = vmatpush1.msra.mxu0 %v8452
      %8556 = vmatprep.subr.mxu0 0.0
      %8557 = vmatpush1.msra.mxu0 %v8453
      %8558 = vmatprep.subr.mxu0 0.0
      %8559 = vmatpush1.msra.mxu0 0.0
      %8560 = vmatprep.subr.mxu0 0.0
      %8561 = vmatpush1.msra.mxu0 0.0
      %8562 = vmatprep.subr.mxu0 0.0
      %8563 = vmatpush1.msra.mxu0 0.0
      %8564 = vmatprep.subr.mxu0 0.0
      %8565 = vmatpush1.msra.mxu0 0.0
      %8566 = vmatprep.subr.mxu0 0.0
      %8567 = vmatpush1.msra.mxu0 0.0
      %8568 = vmatprep.subr.mxu0 0.0
      %8569 = vmatpush1.msra.mxu0 0.0
      %8570 = vmatprep.subr.mxu0 0.0
      %8571 = vmatpush1.msra.mxu0 0.0
      %8572 = vmatprep.subr.mxu0 0.0
      %8573 = vmatpush1.msra.mxu0 0.0
      %8574 = vmatprep.subr.mxu0 0.0
      %8575 = vmatpush1.msra.mxu0 0.0
      %8576 = vmatprep.subr.mxu0 0.0
      %8577 = vmatpush1.msra.mxu0 0.0
      %8578 = vmatprep.subr.mxu0 0.0
      %8579 = vmatpush1.msra.mxu0 0.0
      %8580 = vmatprep.subr.mxu0 0.0
      %8581 = vmatpush1.msra.mxu0 0.0
      %8582 = vmatprep.subr.mxu0 0.0
      %8583 = vmatpush1.msra.mxu0 0.0
      %8584 = vmatprep.subr.mxu0 0.0
      %8585 = vmatpush1.msra.mxu0 0.0
      %8586 = vmatprep.subr.mxu0 0.0
      %8587 = vmatpush1.msra.mxu0 0.0
      %8588 = vmatprep.subr.mxu0 0.0
      %8589 = vmatpush1.msra.mxu0 0.0
      %8590 = vmatprep.subr.mxu0 0.0
      %8591 = vmatpush1.msra.mxu0 0.0
      %8592 = vmatprep.subr.mxu0 0.0
      %8593 = vmatpush1.msra.mxu0 0.0
      %8594 = vmatprep.subr.mxu0 0.0
      %8595 = vmatpush1.msra.mxu0 0.0
      %8596 = vmatprep.subr.mxu0 0.0
      %8597 = vmatpush1.msra.mxu0 0.0
      %8598 = vmatprep.subr.mxu0 0.0
      %8599 = vmatpush1.msra.mxu0 0.0
      %8600 = vmatprep.subr.mxu0 0.0
      %8601 = vmatpush1.msra.mxu0 0.0
      %8602 = vmatprep.subr.mxu0 0.0
      %8603 = vmatpush1.msra.mxu0 0.0
      %8604 = vmatprep.subr.mxu0 0.0
      %8605 = vmatpush1.msra.mxu0 0.0
      %8606 = vmatprep.subr.mxu0 0.0
      %8607 = vmatpush1.msra.mxu0 0.0
      %8608 = vmatprep.subr.mxu0 0.0
      %8609 = vmatpush1.msra.mxu0 0.0
      %8610 = vmatprep.subr.mxu0 0.0
      %8611 = vmatpush1.msra.mxu0 0.0
      %8612 = vmatprep.subr.mxu0 0.0
      %8613 = vmatpush1.msra.mxu0 0.0
      %8614 = vmatprep.mubr.f32.mxu0 0.0
      %8615 = vmatmul.mubr.f32.gmra.mrb[0].mxu0 %v8455
      %v8616 = vpop.f32.mrb[0].mxu0
      %v8617 = vadd.f32 0.0, %v8616
      %v8618 = vpop.f32.mrb[0].mxu0
      %8619 = vmatprep.mubr.f32.mxu0 0.0
      %8620 = vmatmul.mubr.f32.gmra.mrb[0].mxu0 %v8458
      %v8621 = vpop.f32.mrb[0].mxu0
      %v8622 = vadd.f32 0.0, %v8621
      %v8623 = vpop.f32.mrb[0].mxu0
      %8624 = vmatprep.mubr.f32.mxu0 0.0
      %8625 = vmatmul.mubr.f32.gmra.mrb[0].mxu0 %v8461
      %v8626 = vpop.f32.mrb[0].mxu0
      %v8627 = vadd.f32 0.0, %v8626
      %v8628 = vpop.f32.mrb[0].mxu0
      %8629 = vmatprep.mubr.f32.mxu0 0.0
      %8630 = vmatmul.mubr.f32.gmra.mrb[0].mxu0 %v8464
      %v8631 = vpop.f32.mrb[0].mxu0
      %v8632 = vadd.f32 0.0, %v8631
      %v8633 = vpop.f32.mrb[0].mxu0
      %8634 = vmatprep.mubr.f32.mxu0 0.0
      %8635 = vmatmul.mubr.f32.gmra.mrb[0].mxu0 %v8467
      %v8636 = vpop.f32.mrb[0].mxu0
      %v8637 = vadd.f32 0.0, %v8636
      %v8638 = vpop.f32.mrb[0].mxu0
      %8639 = vmatprep.mubr.f32.mxu0 0.0
      %8640 = vmatmul.mubr.f32.gmra.mrb[0].mxu0 %v8470
      %v8641 = vpop.f32.mrb[0].mxu0
      %v8642 = vadd.f32 0.0, %v8641
      %v8643 = vpop.f32.mrb[0].mxu0
      %8644 = vmatprep.mubr.f32.mxu0 0.0
      %8645 = vmatmul.mubr.f32.gmra.mrb[0].mxu0 %v8473
      %v8646 = vpop.f32.mrb[0].mxu0
      %v8647 = vadd.f32 0.0, %v8646
      %v8648 = vpop.f32.mrb[0].mxu0
      %8649 = vmatprep.mubr.f32.mxu0 0.0
      %8650 = vmatmul.mubr.f32.gmra.mrb[0].mxu0 %v8476
      %v8651 = vpop.f32.mrb[0].mxu0
      %v8652 = vadd.f32 0.0, %v8651
      %v8653 = vpop.f32.mrb[0].mxu0
      %8654 = vmatprep.mubr.f32.mxu0 0.0
      %8655 = vmatmul.mubr.f32.gmra.mrb[0].mxu0 %v8479
      %v8656 = vpop.f32.mrb[0].mxu0
      %v8657 = vadd.f32 0.0, %v8656
      %v8658 = vpop.f32.mrb[0].mxu0
      %8659 = vmatprep.mubr.f32.mxu0 0.0
      %8660 = vmatmul.mubr.f32.gmra.mrb[0].mxu0 %v8482
      %v8661 = vpop.f32.mrb[0].mxu0
      %v8662 = vadd.f32 0.0, %v8661
      %v8663 = vpop.f32.mrb[0].mxu0
      %8664 = vmatprep.mubr.f32.mxu0 0.0
      %8665 = vmatmul.mubr.f32.gmra.mrb[0].mxu0 %v8485
      %v8666 = vpop.f32.mrb[0].mxu0
      %v8667 = vadd.f32 0.0, %v8666
      %v8668 = vpop.f32.mrb[0].mxu0
      %8669 = vmatprep.mubr.f32.mxu0 0.0
      %8670 = vmatmul.mubr.f32.gmra.mrb[0].mxu0 %v8488
      %v8671 = vpop.f32.mrb[0].mxu0
      %v8672 = vadd.f32 0.0, %v8671
      %v8673 = vpop.f32.mrb[0].mxu0
      %8674 = vmatprep.mubr.f32.mxu0 0.0
      %8675 = vmatmul.mubr.f32.gmra.mrb[0].mxu0 %v8491
      %v8676 = vpop.f32.mrb[0].mxu0
      %v8677 = vadd.f32 0.0, %v8676
      %v8678 = vpop.f32.mrb[0].mxu0
      %8679 = vmatprep.mubr.f32.mxu0 0.0
      %8680 = vmatmul.mubr.f32.gmra.mrb[0].mxu0 %v8494
      %v8681 = vpop.f32.mrb[0].mxu0
      %v8682 = vadd.f32 0.0, %v8681
      %v8683 = vpop.f32.mrb[0].mxu0
      %8684 = vmatprep.mubr.f32.mxu0 0.0
      %8685 = vmatmul.mubr.f32.gmra.mrb[0].mxu0 %v8497
      %v8686 = vpop.f32.mrb[0].mxu0
      %v8687 = vadd.f32 0.0, %v8686
      %v8688 = vpop.f32.mrb[0].mxu0
      %8689 = vmatprep.mubr.f32.mxu0 0.0
      %8690 = vmatmul.mubr.f32.gmra.mrb[0].mxu0 %v8500
      %v8691 = vpop.f32.mrb[0].mxu0
      %v8692 = vadd.f32 0.0, %v8691
      %v8693 = vpop.f32.mrb[0].mxu0
      %8694 = vmatprep.mubr.f32.mxu0 0.0
      %8695 = vmatmul.mubr.f32.gmra.mrb[0].mxu0 %v8503
      %v8696 = vpop.f32.mrb[0].mxu0
      %v8697 = vadd.f32 0.0, %v8696
      %v8698 = vpop.f32.mrb[0].mxu0
      %8699 = vmatprep.mubr.f32.mxu0 0.0
      %8700 = vmatmul.mubr.f32.gmra.mrb[0].mxu0 %v8506
      %v8701 = vpop.f32.mrb[0].mxu0
      %v8702 = vadd.f32 0.0, %v8701
      %v8703 = vpop.f32.mrb[0].mxu0
      %8704 = vmatprep.mubr.f32.mxu0 0.0
      %8705 = vmatmul.mubr.f32.gmra.mrb[0].mxu0 %v8509
      %v8706 = vpop.f32.mrb[0].mxu0
      %v8707 = vadd.f32 0.0, %v8706
      %v8708 = vpop.f32.mrb[0].mxu0
      %8709 = vmatprep.mubr.f32.mxu0 0.0
      %8710 = vmatmul.mubr.f32.gmra.mrb[0].mxu0 %v8512
      %v8711 = vpop.f32.mrb[0].mxu0
      %v8712 = vadd.f32 0.0, %v8711
      %v8713 = vpop.f32.mrb[0].mxu0
      %8714 = vmatprep.mubr.f32.mxu0 0.0
      %8715 = vmatmul.mubr.f32.gmra.mrb[0].mxu0 %v8515
      %v8716 = vpop.f32.mrb[0].mxu0
      %v8717 = vadd.f32 0.0, %v8716
      %v8718 = vpop.f32.mrb[0].mxu0
      %8719 = vmatprep.mubr.f32.mxu0 0.0
      %8720 = vmatmul.mubr.f32.gmra.mrb[0].mxu0 %v8518
      %v8721 = vpop.f32.mrb[0].mxu0
      %v8722 = vadd.f32 0.0, %v8721
      %v8723 = vpop.f32.mrb[0].mxu0
      %8724 = vmatprep.mubr.f32.mxu0 0.0
      %8725 = vmatmul.mubr.f32.gmra.mrb[0].mxu0 %v8521
      %v8726 = vpop.f32.mrb[0].mxu0
      %v8727 = vadd.f32 0.0, %v8726
      %v8728 = vpop.f32.mrb[0].mxu0
      %8729 = vmatprep.mubr.f32.mxu0 0.0
      %8730 = vmatmul.mubr.f32.gmra.mrb[0].mxu0 %v8524
      %v8731 = vpop.f32.mrb[0].mxu0
      %v8732 = vadd.f32 0.0, %v8731
      %v8733 = vpop.f32.mrb[0].mxu0
      %8734 = vmatprep.mubr.f32.mxu0 0.0
      %8735 = vmatmul.mubr.f32.gmra.mrb[0].mxu0 %v8527
      %v8736 = vpop.f32.mrb[0].mxu0
      %v8737 = vadd.f32 0.0, %v8736
      %v8738 = vpop.f32.mrb[0].mxu0
      %8739 = vmatprep.mubr.f32.mxu0 0.0
      %8740 = vmatmul.mubr.f32.gmra.mrb[0].mxu0 %v8530
      %v8741 = vpop.f32.mrb[0].mxu0
      %v8742 = vadd.f32 0.0, %v8741
      %v8743 = vpop.f32.mrb[0].mxu0
      %8744 = vmatprep.mubr.f32.mxu0 0.0
      %8745 = vmatmul.mubr.f32.gmra.mrb[0].mxu0 %v8533
      %v8746 = vpop.f32.mrb[0].mxu0
      %v8747 = vadd.f32 0.0, %v8746
      %v8748 = vpop.f32.mrb[0].mxu0
      %8749 = vmatprep.mubr.f32.mxu0 0.0
      %8750 = vmatmul.mubr.f32.gmra.mrb[0].mxu0 %v8536
      %v8751 = vpop.f32.mrb[0].mxu0
      %v8752 = vadd.f32 0.0, %v8751
      %v8753 = vpop.f32.mrb[0].mxu0
      %8754 = vmatprep.mubr.f32.mxu0 0.0
      %8755 = vmatmul.mubr.f32.gmra.mrb[0].mxu0 %v8539
      %v8756 = vpop.f32.mrb[0].mxu0
      %v8757 = vadd.f32 0.0, %v8756
      %v8758 = vpop.f32.mrb[0].mxu0
      %8759 = vmatprep.mubr.f32.mxu0 0.0
      %8760 = vmatmul.mubr.f32.gmra.mrb[0].mxu0 %v8542
      %v8761 = vpop.f32.mrb[0].mxu0
      %v8762 = vadd.f32 0.0, %v8761
      %v8763 = vpop.f32.mrb[0].mxu0
      %8764 = vmatprep.mubr.f32.mxu0 0.0
      %8765 = vmatmul.mubr.f32.gmra.mrb[0].mxu0 %v8545
      %v8766 = vpop.f32.mrb[0].mxu0
      %v8767 = vadd.f32 0.0, %v8766
      %v8768 = vpop.f32.mrb[0].mxu0
      %8769 = vmatprep.mubr.f32.mxu0 0.0
      %8770 = vmatmul.mubr.f32.gmra.mrb[0].mxu0 %v8548
      %v8771 = vpop.f32.mrb[0].mxu0
      %v8772 = vadd.f32 0.0, %v8771
      %v8773 = vpop.f32.mrb[0].mxu0
      %8774 = vdwg.mxu0
      %v8775 = vadd.f32 %v8385, %v8617
      %v8776 = vadd.f32 %v8386, %v8622
      %v8777 = vadd.f32 %v8387, %v8627
      %v8778 = vadd.f32 %v8388, %v8632
      %v8779 = vadd.f32 %v8389, %v8637
      %v8780 = vadd.f32 %v8390, %v8642
      %v8781 = vadd.f32 %v8391, %v8647
      %v8782 = vadd.f32 %v8392, %v8652
      %v8783 = vadd.f32 %v8393, %v8657
      %v8784 = vadd.f32 %v8394, %v8662
      %v8785 = vadd.f32 %v8395, %v8667
      %v8786 = vadd.f32 %v8396, %v8672
      %v8787 = vadd.f32 %v8397, %v8677
      %v8788 = vadd.f32 %v8398, %v8682
      %v8789 = vadd.f32 %v8399, %v8687
      %v8790 = vadd.f32 %v8400, %v8692
      %v8791 = vadd.f32 %v8401, %v8697
      %v8792 = vadd.f32 %v8402, %v8702
      %v8793 = vadd.f32 %v8403, %v8707
      %v8794 = vadd.f32 %v8404, %v8712
      %v8795 = vadd.f32 %v8405, %v8717
      %v8796 = vadd.f32 %v8406, %v8722
      %v8797 = vadd.f32 %v8407, %v8727
      %v8798 = vadd.f32 %v8408, %v8732
      %v8799 = vadd.f32 %v8409, %v8737
      %v8800 = vadd.f32 %v8410, %v8742
      %v8801 = vadd.f32 %v8411, %v8747
      %v8802 = vadd.f32 %v8412, %v8752
      %v8803 = vadd.f32 %v8413, %v8757
      %v8804 = vadd.f32 %v8414, %v8762
      %v8805 = vadd.f32 %v8415, %v8767
      %v8806 = vadd.f32 %v8416, %v8772
      %v8807 = vlaneseq
      %v8808 = vshrl.u32 %v8807, 7
      %v8809 = vsub.s32 2, %v8808
      %v8810 = vrot.slane %v252, %v8809
      %v8811 = vadd.f32 %v8775, %v8810
      %v8812 = vadd.f32 %v8776, %v8810
      %v8813 = vadd.f32 %v8777, %v8810
      %v8814 = vadd.f32 %v8778, %v8810
      %v8815 = vadd.f32 %v8779, %v8810
      %v8816 = vadd.f32 %v8780, %v8810
      %v8817 = vadd.f32 %v8781, %v8810
      %v8818 = vadd.f32 %v8782, %v8810
      %v8819 = vadd.f32 %v8783, %v8810
      %v8820 = vadd.f32 %v8784, %v8810
      %v8821 = vadd.f32 %v8785, %v8810
      %v8822 = vadd.f32 %v8786, %v8810
      %v8823 = vadd.f32 %v8787, %v8810
      %v8824 = vadd.f32 %v8788, %v8810
      %v8825 = vadd.f32 %v8789, %v8810
      %v8826 = vadd.f32 %v8790, %v8810
      %v8827 = vadd.f32 %v8791, %v8810
      %v8828 = vadd.f32 %v8792, %v8810
      %v8829 = vadd.f32 %v8793, %v8810
      %v8830 = vadd.f32 %v8794, %v8810
      %v8831 = vadd.f32 %v8795, %v8810
      %v8832 = vadd.f32 %v8796, %v8810
      %v8833 = vadd.f32 %v8797, %v8810
      %v8834 = vadd.f32 %v8798, %v8810
      %v8835 = vadd.f32 %v8799, %v8810
      %v8836 = vadd.f32 %v8800, %v8810
      %v8837 = vadd.f32 %v8801, %v8810
      %v8838 = vadd.f32 %v8802, %v8810
      %v8839 = vadd.f32 %v8803, %v8810
      %v8840 = vadd.f32 %v8804, %v8810
      %v8841 = vadd.f32 %v8805, %v8810
      %v8842 = vadd.f32 %v8806, %v8810
      %v8843 = vmax.f32 %v8811, 0.0
      %v8844 = vmax.f32 %v8812, 0.0
      %v8845 = vmax.f32 %v8813, 0.0
      %v8846 = vmax.f32 %v8814, 0.0
      %v8847 = vmax.f32 %v8815, 0.0
      %v8848 = vmax.f32 %v8816, 0.0
      %v8849 = vmax.f32 %v8817, 0.0
      %v8850 = vmax.f32 %v8818, 0.0
      %v8851 = vmax.f32 %v8819, 0.0
      %v8852 = vmax.f32 %v8820, 0.0
      %v8853 = vmax.f32 %v8821, 0.0
      %v8854 = vmax.f32 %v8822, 0.0
      %v8855 = vmax.f32 %v8823, 0.0
      %v8856 = vmax.f32 %v8824, 0.0
      %v8857 = vmax.f32 %v8825, 0.0
      %v8858 = vmax.f32 %v8826, 0.0
      %v8859 = vmax.f32 %v8827, 0.0
      %v8860 = vmax.f32 %v8828, 0.0
      %v8861 = vmax.f32 %v8829, 0.0
      %v8862 = vmax.f32 %v8830, 0.0
      %v8863 = vmax.f32 %v8831, 0.0
      %v8864 = vmax.f32 %v8832, 0.0
      %v8865 = vmax.f32 %v8833, 0.0
      %v8866 = vmax.f32 %v8834, 0.0
      %v8867 = vmax.f32 %v8835, 0.0
      %v8868 = vmax.f32 %v8836, 0.0
      %v8869 = vmax.f32 %v8837, 0.0
      %v8870 = vmax.f32 %v8838, 0.0
      %v8871 = vmax.f32 %v8839, 0.0
      %v8872 = vmax.f32 %v8840, 0.0
      %v8873 = vmax.f32 %v8841, 0.0
      %v8874 = vmax.f32 %v8842, 0.0
      %v8875 = vlaneseq
      %v8876 = vshrl.u32 %v8875, 7
      %v8877 = vadd.s32 %v8876, 8
      %v8878 = vadd.s32 %v8876, 16
      %v8879 = vadd.s32 %v8876, 24
      %v8880 = vadd.s32 %v8876, 32
      %v8881 = vadd.s32 %v8876, 40
      %v8882 = vadd.s32 %v8876, 48
      %v8883 = vadd.s32 %v8876, 56
      %v8884 = vlaneseq
      %v8885 = vand.u32 %v8884, 127
      %v8886 = vadd.s32 %v8885, 128
      %v8887 = vshra.s32 %v8876, 3
      %v8888 = vshra.s32 %v8877, 3
      %v8889 = vshra.s32 %v8878, 3
      %v8890 = vshra.s32 %v8879, 3
      %v8891 = vshra.s32 %v8880, 3
      %v8892 = vshra.s32 %v8881, 3
      %v8893 = vshra.s32 %v8882, 3
      %v8894 = vshra.s32 %v8883, 3
      %v8895 = vmul.u32 %v8887, 32
      %v8896 = vmul.u32 %v8888, 32
      %v8897 = vmul.u32 %v8889, 32
      %v8898 = vmul.u32 %v8890, 32
      %v8899 = vmul.u32 %v8891, 32
      %v8900 = vmul.u32 %v8892, 32
      %v8901 = vmul.u32 %v8893, 32
      %v8902 = vmul.u32 %v8894, 32
      %v8903 = vand.u32 %v8876, 7
      %v8904 = vand.u32 %v8877, 7
      %v8905 = vand.u32 %v8878, 7
      %v8906 = vand.u32 %v8879, 7
      %v8907 = vand.u32 %v8880, 7
      %v8908 = vand.u32 %v8881, 7
      %v8909 = vand.u32 %v8882, 7
      %v8910 = vand.u32 %v8883, 7
      %v8911 = vmul.u32 %v8903, 2
      %v8912 = vmul.u32 %v8904, 2
      %v8913 = vmul.u32 %v8905, 2
      %v8914 = vmul.u32 %v8906, 2
      %v8915 = vmul.u32 %v8907, 2
      %v8916 = vmul.u32 %v8908, 2
      %v8917 = vmul.u32 %v8909, 2
      %v8918 = vmul.u32 %v8910, 2
      %v8919 = vadd.s32 %v8895, %v8911
      %v8920 = vadd.s32 %v8896, %v8912
      %v8921 = vadd.s32 %v8897, %v8913
      %v8922 = vadd.s32 %v8898, %v8914
      %v8923 = vadd.s32 %v8899, %v8915
      %v8924 = vadd.s32 %v8900, %v8916
      %v8925 = vadd.s32 %v8901, %v8917
      %v8926 = vadd.s32 %v8902, %v8918
      %vm8927 = vcmp.eq.s32.totalorder %v8885, %v8919
      %vm8928 = vcmp.eq.s32.totalorder %v8886, %v8919
      %vm8929 = vcmp.eq.s32.totalorder %v8885, %v8920
      %vm8930 = vcmp.eq.s32.totalorder %v8886, %v8920
      %vm8931 = vcmp.eq.s32.totalorder %v8885, %v8921
      %vm8932 = vcmp.eq.s32.totalorder %v8886, %v8921
      %vm8933 = vcmp.eq.s32.totalorder %v8885, %v8922
      %vm8934 = vcmp.eq.s32.totalorder %v8886, %v8922
      %vm8935 = vcmp.eq.s32.totalorder %v8885, %v8923
      %vm8936 = vcmp.eq.s32.totalorder %v8886, %v8923
      %vm8937 = vcmp.eq.s32.totalorder %v8885, %v8924
      %vm8938 = vcmp.eq.s32.totalorder %v8886, %v8924
      %vm8939 = vcmp.eq.s32.totalorder %v8885, %v8925
      %vm8940 = vcmp.eq.s32.totalorder %v8886, %v8925
      %vm8941 = vcmp.eq.s32.totalorder %v8885, %v8926
      %vm8942 = vcmp.eq.s32.totalorder %v8886, %v8926
      %v8943 = vsel %vm8927, 1, 0
      %v8944 = vsel %vm8928, 1, 0
      %v8945 = vsel %vm8929, 1, 0
      %v8946 = vsel %vm8930, 1, 0
      %v8947 = vsel %vm8931, 1, 0
      %v8948 = vsel %vm8932, 1, 0
      %v8949 = vsel %vm8933, 1, 0
      %v8950 = vsel %vm8934, 1, 0
      %v8951 = vsel %vm8935, 1, 0
      %v8952 = vsel %vm8936, 1, 0
      %v8953 = vsel %vm8937, 1, 0
      %v8954 = vsel %vm8938, 1, 0
      %v8955 = vsel %vm8939, 1, 0
      %v8956 = vsel %vm8940, 1, 0
      %v8957 = vsel %vm8941, 1, 0
      %v8958 = vsel %vm8942, 1, 0
      %v8959 = vcvt.s32.f32 %v8943
      %v8960 = vcvt.s32.f32 %v8944
      %v8961 = vcvt.s32.f32 %v8945
      %v8962 = vcvt.s32.f32 %v8946
      %v8963 = vcvt.s32.f32 %v8947
      %v8964 = vcvt.s32.f32 %v8948
      %v8965 = vcvt.s32.f32 %v8949
      %v8966 = vcvt.s32.f32 %v8950
      %v8967 = vcvt.s32.f32 %v8951
      %v8968 = vcvt.s32.f32 %v8952
      %v8969 = vcvt.s32.f32 %v8953
      %v8970 = vcvt.s32.f32 %v8954
      %v8971 = vcvt.s32.f32 %v8955
      %v8972 = vcvt.s32.f32 %v8956
      %v8973 = vcvt.s32.f32 %v8957
      %v8974 = vcvt.s32.f32 %v8958
      %8975 = vmatprep.subr.mxu0 0.0
      %8976 = vmatpush1.msra.mxu0 %v5228
      %8977 = vmatprep.subr.mxu0 0.0
      %8978 = vmatpush1.msra.mxu0 %v5229
      %8979 = vmatprep.subr.mxu0 0.0
      %8980 = vmatpush1.msra.mxu0 %v5230
      %8981 = vmatprep.subr.mxu0 0.0
      %8982 = vmatpush1.msra.mxu0 %v5231
      %8983 = vmatprep.subr.mxu0 0.0
      %8984 = vmatpush1.msra.mxu0 %v5232
      %8985 = vmatprep.subr.mxu0 0.0
      %8986 = vmatpush1.msra.mxu0 %v5233
      %8987 = vmatprep.subr.mxu0 0.0
      %8988 = vmatpush1.msra.mxu0 %v5234
      %8989 = vmatprep.subr.mxu0 0.0
      %8990 = vmatpush1.msra.mxu0 %v5235
      %8991 = vmatprep.subr.mxu0 0.0
      %8992 = vmatpush1.msra.mxu0 %v5236
      %8993 = vmatprep.subr.mxu0 0.0
      %8994 = vmatpush1.msra.mxu0 %v5237
      %8995 = vmatprep.subr.mxu0 0.0
      %8996 = vmatpush1.msra.mxu0 %v5238
      %8997 = vmatprep.subr.mxu0 0.0
      %8998 = vmatpush1.msra.mxu0 %v5239
      %8999 = vmatprep.subr.mxu0 0.0
      %9000 = vmatpush1.msra.mxu0 %v5240
      %9001 = vmatprep.subr.mxu0 0.0
      %9002 = vmatpush1.msra.mxu0 %v5241
      %9003 = vmatprep.subr.mxu0 0.0
      %9004 = vmatpush1.msra.mxu0 %v5242
      %9005 = vmatprep.subr.mxu0 0.0
      %9006 = vmatpush1.msra.mxu0 %v5243
      %9007 = vmatprep.subr.mxu0 0.0
      %9008 = vmatpush1.msra.mxu0 %v5244
      %9009 = vmatprep.subr.mxu0 0.0
      %9010 = vmatpush1.msra.mxu0 %v5245
      %9011 = vmatprep.subr.mxu0 0.0
      %9012 = vmatpush1.msra.mxu0 %v5246
      %9013 = vmatprep.subr.mxu0 0.0
      %9014 = vmatpush1.msra.mxu0 %v5247
      %9015 = vmatprep.subr.mxu0 0.0
      %9016 = vmatpush1.msra.mxu0 %v5248
      %9017 = vmatprep.subr.mxu0 0.0
      %9018 = vmatpush1.msra.mxu0 %v5249
      %9019 = vmatprep.subr.mxu0 0.0
      %9020 = vmatpush1.msra.mxu0 %v5250
      %9021 = vmatprep.subr.mxu0 0.0
      %9022 = vmatpush1.msra.mxu0 %v5251
      %9023 = vmatprep.subr.mxu0 0.0
      %9024 = vmatpush1.msra.mxu0 %v5252
      %9025 = vmatprep.subr.mxu0 0.0
      %9026 = vmatpush1.msra.mxu0 %v5253
      %9027 = vmatprep.subr.mxu0 0.0
      %9028 = vmatpush1.msra.mxu0 %v5254
      %9029 = vmatprep.subr.mxu0 0.0
      %9030 = vmatpush1.msra.mxu0 %v5255
      %9031 = vmatprep.subr.mxu0 0.0
      %9032 = vmatpush1.msra.mxu0 %v5256
      %9033 = vmatprep.subr.mxu0 0.0
      %9034 = vmatpush1.msra.mxu0 %v5257
      %9035 = vmatprep.subr.mxu0 0.0
      %9036 = vmatpush1.msra.mxu0 %v5258
      %9037 = vmatprep.subr.mxu0 0.0
      %9038 = vmatpush1.msra.mxu0 %v5259
      %9039 = vmatprep.mubr.f32.mxu0 %v8960
      %9040 = vmatmul.mubr.f32.gmra.mrb[0].mxu0 %v8959
      %v9041 = vpop.f32.mrb[0].mxu0
      %v9042 = vadd.f32 0.0, %v9041
      %v9043 = vpop.f32.mrb[0].mxu0
      %9044 = vmatprep.mubr.f32.mxu0 %v8962
      %9045 = vmatmul.mubr.f32.gmra.mrb[0].mxu0 %v8961
      %v9046 = vpop.f32.mrb[0].mxu0
      %v9047 = vadd.f32 0.0, %v9046
      %v9048 = vpop.f32.mrb[0].mxu0
      %9049 = vmatprep.mubr.f32.mxu0 %v8964
      %9050 = vmatmul.mubr.f32.gmra.mrb[0].mxu0 %v8963
      %v9051 = vpop.f32.mrb[0].mxu0
      %v9052 = vadd.f32 0.0, %v9051
      %v9053 = vpop.f32.mrb[0].mxu0
      %9054 = vmatprep.mubr.f32.mxu0 %v8966
      %9055 = vmatmul.mubr.f32.gmra.mrb[0].mxu0 %v8965
      %v9056 = vpop.f32.mrb[0].mxu0
      %v9057 = vadd.f32 0.0, %v9056
      %v9058 = vpop.f32.mrb[0].mxu0
      %9059 = vmatprep.mubr.f32.mxu0 %v8968
      %9060 = vmatmul.mubr.f32.gmra.mrb[0].mxu0 %v8967
      %v9061 = vpop.f32.mrb[0].mxu0
      %v9062 = vadd.f32 0.0, %v9061
      %v9063 = vpop.f32.mrb[0].mxu0
      %9064 = vmatprep.mubr.f32.mxu0 %v8970
      %9065 = vmatmul.mubr.f32.gmra.mrb[0].mxu0 %v8969
      %v9066 = vpop.f32.mrb[0].mxu0
      %v9067 = vadd.f32 0.0, %v9066
      %v9068 = vpop.f32.mrb[0].mxu0
      %9069 = vmatprep.mubr.f32.mxu0 %v8972
      %9070 = vmatmul.mubr.f32.gmra.mrb[0].mxu0 %v8971
      %v9071 = vpop.f32.mrb[0].mxu0
      %v9072 = vadd.f32 0.0, %v9071
      %v9073 = vpop.f32.mrb[0].mxu0
      %9074 = vmatprep.mubr.f32.mxu0 %v8974
      %9075 = vmatmul.mubr.f32.gmra.mrb[0].mxu0 %v8973
      %v9076 = vpop.f32.mrb[0].mxu0
      %v9077 = vadd.f32 0.0, %v9076
      %v9078 = vpop.f32.mrb[0].mxu0
      %9079 = vdwg.mxu0
      %v9080 = vadd.s32 %v8919, 1
      %v9081 = vadd.s32 %v8920, 1
      %v9082 = vadd.s32 %v8921, 1
      %v9083 = vadd.s32 %v8922, 1
      %v9084 = vadd.s32 %v8923, 1
      %v9085 = vadd.s32 %v8924, 1
      %v9086 = vadd.s32 %v8925, 1
      %v9087 = vadd.s32 %v8926, 1
      %vm9088 = vcmp.eq.s32.totalorder %v8885, %v9080
      %vm9089 = vcmp.eq.s32.totalorder %v8886, %v9080
      %vm9090 = vcmp.eq.s32.totalorder %v8885, %v9081
      %vm9091 = vcmp.eq.s32.totalorder %v8886, %v9081
      %vm9092 = vcmp.eq.s32.totalorder %v8885, %v9082
      %vm9093 = vcmp.eq.s32.totalorder %v8886, %v9082
      %vm9094 = vcmp.eq.s32.totalorder %v8885, %v9083
      %vm9095 = vcmp.eq.s32.totalorder %v8886, %v9083
      %vm9096 = vcmp.eq.s32.totalorder %v8885, %v9084
      %vm9097 = vcmp.eq.s32.totalorder %v8886, %v9084
      %vm9098 = vcmp.eq.s32.totalorder %v8885, %v9085
      %vm9099 = vcmp.eq.s32.totalorder %v8886, %v9085
      %vm9100 = vcmp.eq.s32.totalorder %v8885, %v9086
      %vm9101 = vcmp.eq.s32.totalorder %v8886, %v9086
      %vm9102 = vcmp.eq.s32.totalorder %v8885, %v9087
      %vm9103 = vcmp.eq.s32.totalorder %v8886, %v9087
      %v9104 = vsel %vm9088, 1, 0
      %v9105 = vsel %vm9089, 1, 0
      %v9106 = vsel %vm9090, 1, 0
      %v9107 = vsel %vm9091, 1, 0
      %v9108 = vsel %vm9092, 1, 0
      %v9109 = vsel %vm9093, 1, 0
      %v9110 = vsel %vm9094, 1, 0
      %v9111 = vsel %vm9095, 1, 0
      %v9112 = vsel %vm9096, 1, 0
      %v9113 = vsel %vm9097, 1, 0
      %v9114 = vsel %vm9098, 1, 0
      %v9115 = vsel %vm9099, 1, 0
      %v9116 = vsel %vm9100, 1, 0
      %v9117 = vsel %vm9101, 1, 0
      %v9118 = vsel %vm9102, 1, 0
      %v9119 = vsel %vm9103, 1, 0
      %v9120 = vcvt.s32.f32 %v9104
      %v9121 = vcvt.s32.f32 %v9105
      %v9122 = vcvt.s32.f32 %v9106
      %v9123 = vcvt.s32.f32 %v9107
      %v9124 = vcvt.s32.f32 %v9108
      %v9125 = vcvt.s32.f32 %v9109
      %v9126 = vcvt.s32.f32 %v9110
      %v9127 = vcvt.s32.f32 %v9111
      %v9128 = vcvt.s32.f32 %v9112
      %v9129 = vcvt.s32.f32 %v9113
      %v9130 = vcvt.s32.f32 %v9114
      %v9131 = vcvt.s32.f32 %v9115
      %v9132 = vcvt.s32.f32 %v9116
      %v9133 = vcvt.s32.f32 %v9117
      %v9134 = vcvt.s32.f32 %v9118
      %v9135 = vcvt.s32.f32 %v9119
      %9136 = vmatprep.subr.mxu0 0.0
      %9137 = vmatpush1.msra.mxu0 %v5228
      %9138 = vmatprep.subr.mxu0 0.0
      %9139 = vmatpush1.msra.mxu0 %v5229
      %9140 = vmatprep.subr.mxu0 0.0
      %9141 = vmatpush1.msra.mxu0 %v5230
      %9142 = vmatprep.subr.mxu0 0.0
      %9143 = vmatpush1.msra.mxu0 %v5231
      %9144 = vmatprep.subr.mxu0 0.0
      %9145 = vmatpush1.msra.mxu0 %v5232
      %9146 = vmatprep.subr.mxu0 0.0
      %9147 = vmatpush1.msra.mxu0 %v5233
      %9148 = vmatprep.subr.mxu0 0.0
      %9149 = vmatpush1.msra.mxu0 %v5234
      %9150 = vmatprep.subr.mxu0 0.0
      %9151 = vmatpush1.msra.mxu0 %v5235
      %9152 = vmatprep.subr.mxu0 0.0
      %9153 = vmatpush1.msra.mxu0 %v5236
      %9154 = vmatprep.subr.mxu0 0.0
      %9155 = vmatpush1.msra.mxu0 %v5237
      %9156 = vmatprep.subr.mxu0 0.0
      %9157 = vmatpush1.msra.mxu0 %v5238
      %9158 = vmatprep.subr.mxu0 0.0
      %9159 = vmatpush1.msra.mxu0 %v5239
      %9160 = vmatprep.subr.mxu0 0.0
      %9161 = vmatpush1.msra.mxu0 %v5240
      %9162 = vmatprep.subr.mxu0 0.0
      %9163 = vmatpush1.msra.mxu0 %v5241
      %9164 = vmatprep.subr.mxu0 0.0
      %9165 = vmatpush1.msra.mxu0 %v5242
      %9166 = vmatprep.subr.mxu0 0.0
      %9167 = vmatpush1.msra.mxu0 %v5243
      %9168 = vmatprep.subr.mxu0 0.0
      %9169 = vmatpush1.msra.mxu0 %v5244
      %9170 = vmatprep.subr.mxu0 0.0
      %9171 = vmatpush1.msra.mxu0 %v5245
      %9172 = vmatprep.subr.mxu0 0.0
      %9173 = vmatpush1.msra.mxu0 %v5246
      %9174 = vmatprep.subr.mxu0 0.0
      %9175 = vmatpush1.msra.mxu0 %v5247
      %9176 = vmatprep.subr.mxu0 0.0
      %9177 = vmatpush1.msra.mxu0 %v5248
      %9178 = vmatprep.subr.mxu0 0.0
      %9179 = vmatpush1.msra.mxu0 %v5249
      %9180 = vmatprep.subr.mxu0 0.0
      %9181 = vmatpush1.msra.mxu0 %v5250
      %9182 = vmatprep.subr.mxu0 0.0
      %9183 = vmatpush1.msra.mxu0 %v5251
      %9184 = vmatprep.subr.mxu0 0.0
      %9185 = vmatpush1.msra.mxu0 %v5252
      %9186 = vmatprep.subr.mxu0 0.0
      %9187 = vmatpush1.msra.mxu0 %v5253
      %9188 = vmatprep.subr.mxu0 0.0
      %9189 = vmatpush1.msra.mxu0 %v5254
      %9190 = vmatprep.subr.mxu0 0.0
      %9191 = vmatpush1.msra.mxu0 %v5255
      %9192 = vmatprep.subr.mxu0 0.0
      %9193 = vmatpush1.msra.mxu0 %v5256
      %9194 = vmatprep.subr.mxu0 0.0
      %9195 = vmatpush1.msra.mxu0 %v5257
      %9196 = vmatprep.subr.mxu0 0.0
      %9197 = vmatpush1.msra.mxu0 %v5258
      %9198 = vmatprep.subr.mxu0 0.0
      %9199 = vmatpush1.msra.mxu0 %v5259
      %9200 = vmatprep.mubr.f32.mxu0 %v9121
      %9201 = vmatmul.mubr.f32.gmra.mrb[0].mxu0 %v9120
      %v9202 = vpop.f32.mrb[0].mxu0
      %v9203 = vadd.f32 0.0, %v9202
      %v9204 = vpop.f32.mrb[0].mxu0
      %9205 = vmatprep.mubr.f32.mxu0 %v9123
      %9206 = vmatmul.mubr.f32.gmra.mrb[0].mxu0 %v9122
      %v9207 = vpop.f32.mrb[0].mxu0
      %v9208 = vadd.f32 0.0, %v9207
      %v9209 = vpop.f32.mrb[0].mxu0
      %9210 = vmatprep.mubr.f32.mxu0 %v9125
      %9211 = vmatmul.mubr.f32.gmra.mrb[0].mxu0 %v9124
      %v9212 = vpop.f32.mrb[0].mxu0
      %v9213 = vadd.f32 0.0, %v9212
      %v9214 = vpop.f32.mrb[0].mxu0
      %9215 = vmatprep.mubr.f32.mxu0 %v9127
      %9216 = vmatmul.mubr.f32.gmra.mrb[0].mxu0 %v9126
      %v9217 = vpop.f32.mrb[0].mxu0
      %v9218 = vadd.f32 0.0, %v9217
      %v9219 = vpop.f32.mrb[0].mxu0
      %9220 = vmatprep.mubr.f32.mxu0 %v9129
      %9221 = vmatmul.mubr.f32.gmra.mrb[0].mxu0 %v9128
      %v9222 = vpop.f32.mrb[0].mxu0
      %v9223 = vadd.f32 0.0, %v9222
      %v9224 = vpop.f32.mrb[0].mxu0
      %9225 = vmatprep.mubr.f32.mxu0 %v9131
      %9226 = vmatmul.mubr.f32.gmra.mrb[0].mxu0 %v9130
      %v9227 = vpop.f32.mrb[0].mxu0
      %v9228 = vadd.f32 0.0, %v9227
      %v9229 = vpop.f32.mrb[0].mxu0
      %9230 = vmatprep.mubr.f32.mxu0 %v9133
      %9231 = vmatmul.mubr.f32.gmra.mrb[0].mxu0 %v9132
      %v9232 = vpop.f32.mrb[0].mxu0
      %v9233 = vadd.f32 0.0, %v9232
      %v9234 = vpop.f32.mrb[0].mxu0
      %9235 = vmatprep.mubr.f32.mxu0 %v9135
      %9236 = vmatmul.mubr.f32.gmra.mrb[0].mxu0 %v9134
      %v9237 = vpop.f32.mrb[0].mxu0
      %v9238 = vadd.f32 0.0, %v9237
      %v9239 = vpop.f32.mrb[0].mxu0
      %9240 = vdwg.mxu0
      %v9241 = vmax.f32 %v9042, %v9203
      %v9242 = vmax.f32 %v9047, %v9208
      %v9243 = vmax.f32 %v9052, %v9213
      %v9244 = vmax.f32 %v9057, %v9218
      %v9245 = vmax.f32 %v9062, %v9223
      %v9246 = vmax.f32 %v9067, %v9228
      %v9247 = vmax.f32 %v9072, %v9233
      %v9248 = vmax.f32 %v9077, %v9238
      %v9249 = vadd.s32 %v8919, 16
      %v9250 = vadd.s32 %v8920, 16
      %v9251 = vadd.s32 %v8921, 16
      %v9252 = vadd.s32 %v8922, 16
      %v9253 = vadd.s32 %v8923, 16
      %v9254 = vadd.s32 %v8924, 16
      %v9255 = vadd.s32 %v8925, 16
      %v9256 = vadd.s32 %v8926, 16
      %vm9257 = vcmp.eq.s32.totalorder %v8885, %v9249
      %vm9258 = vcmp.eq.s32.totalorder %v8886, %v9249
      %vm9259 = vcmp.eq.s32.totalorder %v8885, %v9250
      %vm9260 = vcmp.eq.s32.totalorder %v8886, %v9250
      %vm9261 = vcmp.eq.s32.totalorder %v8885, %v9251
      %vm9262 = vcmp.eq.s32.totalorder %v8886, %v9251
      %vm9263 = vcmp.eq.s32.totalorder %v8885, %v9252
      %vm9264 = vcmp.eq.s32.totalorder %v8886, %v9252
      %vm9265 = vcmp.eq.s32.totalorder %v8885, %v9253
      %vm9266 = vcmp.eq.s32.totalorder %v8886, %v9253
      %vm9267 = vcmp.eq.s32.totalorder %v8885, %v9254
      %vm9268 = vcmp.eq.s32.totalorder %v8886, %v9254
      %vm9269 = vcmp.eq.s32.totalorder %v8885, %v9255
      %vm9270 = vcmp.eq.s32.totalorder %v8886, %v9255
      %vm9271 = vcmp.eq.s32.totalorder %v8885, %v9256
      %vm9272 = vcmp.eq.s32.totalorder %v8886, %v9256
      %v9273 = vsel %vm9257, 1, 0
      %v9274 = vsel %vm9258, 1, 0
      %v9275 = vsel %vm9259, 1, 0
      %v9276 = vsel %vm9260, 1, 0
      %v9277 = vsel %vm9261, 1, 0
      %v9278 = vsel %vm9262, 1, 0
      %v9279 = vsel %vm9263, 1, 0
      %v9280 = vsel %vm9264, 1, 0
      %v9281 = vsel %vm9265, 1, 0
      %v9282 = vsel %vm9266, 1, 0
      %v9283 = vsel %vm9267, 1, 0
      %v9284 = vsel %vm9268, 1, 0
      %v9285 = vsel %vm9269, 1, 0
      %v9286 = vsel %vm9270, 1, 0
      %v9287 = vsel %vm9271, 1, 0
      %v9288 = vsel %vm9272, 1, 0
      %v9289 = vcvt.s32.f32 %v9273
      %v9290 = vcvt.s32.f32 %v9274
      %v9291 = vcvt.s32.f32 %v9275
      %v9292 = vcvt.s32.f32 %v9276
      %v9293 = vcvt.s32.f32 %v9277
      %v9294 = vcvt.s32.f32 %v9278
      %v9295 = vcvt.s32.f32 %v9279
      %v9296 = vcvt.s32.f32 %v9280
      %v9297 = vcvt.s32.f32 %v9281
      %v9298 = vcvt.s32.f32 %v9282
      %v9299 = vcvt.s32.f32 %v9283
      %v9300 = vcvt.s32.f32 %v9284
      %v9301 = vcvt.s32.f32 %v9285
      %v9302 = vcvt.s32.f32 %v9286
      %v9303 = vcvt.s32.f32 %v9287
      %v9304 = vcvt.s32.f32 %v9288
      %9305 = vmatprep.subr.mxu0 0.0
      %9306 = vmatpush1.msra.mxu0 %v5228
      %9307 = vmatprep.subr.mxu0 0.0
      %9308 = vmatpush1.msra.mxu0 %v5229
      %9309 = vmatprep.subr.mxu0 0.0
      %9310 = vmatpush1.msra.mxu0 %v5230
      %9311 = vmatprep.subr.mxu0 0.0
      %9312 = vmatpush1.msra.mxu0 %v5231
      %9313 = vmatprep.subr.mxu0 0.0
      %9314 = vmatpush1.msra.mxu0 %v5232
      %9315 = vmatprep.subr.mxu0 0.0
      %9316 = vmatpush1.msra.mxu0 %v5233
      %9317 = vmatprep.subr.mxu0 0.0
      %9318 = vmatpush1.msra.mxu0 %v5234
      %9319 = vmatprep.subr.mxu0 0.0
      %9320 = vmatpush1.msra.mxu0 %v5235
      %9321 = vmatprep.subr.mxu0 0.0
      %9322 = vmatpush1.msra.mxu0 %v5236
      %9323 = vmatprep.subr.mxu0 0.0
      %9324 = vmatpush1.msra.mxu0 %v5237
      %9325 = vmatprep.subr.mxu0 0.0
      %9326 = vmatpush1.msra.mxu0 %v5238
      %9327 = vmatprep.subr.mxu0 0.0
      %9328 = vmatpush1.msra.mxu0 %v5239
      %9329 = vmatprep.subr.mxu0 0.0
      %9330 = vmatpush1.msra.mxu0 %v5240
      %9331 = vmatprep.subr.mxu0 0.0
      %9332 = vmatpush1.msra.mxu0 %v5241
      %9333 = vmatprep.subr.mxu0 0.0
      %9334 = vmatpush1.msra.mxu0 %v5242
      %9335 = vmatprep.subr.mxu0 0.0
      %9336 = vmatpush1.msra.mxu0 %v5243
      %9337 = vmatprep.subr.mxu0 0.0
      %9338 = vmatpush1.msra.mxu0 %v5244
      %9339 = vmatprep.subr.mxu0 0.0
      %9340 = vmatpush1.msra.mxu0 %v5245
      %9341 = vmatprep.subr.mxu0 0.0
      %9342 = vmatpush1.msra.mxu0 %v5246
      %9343 = vmatprep.subr.mxu0 0.0
      %9344 = vmatpush1.msra.mxu0 %v5247
      %9345 = vmatprep.subr.mxu0 0.0
      %9346 = vmatpush1.msra.mxu0 %v5248
      %9347 = vmatprep.subr.mxu0 0.0
      %9348 = vmatpush1.msra.mxu0 %v5249
      %9349 = vmatprep.subr.mxu0 0.0
      %9350 = vmatpush1.msra.mxu0 %v5250
      %9351 = vmatprep.subr.mxu0 0.0
      %9352 = vmatpush1.msra.mxu0 %v5251
      %9353 = vmatprep.subr.mxu0 0.0
      %9354 = vmatpush1.msra.mxu0 %v5252
      %9355 = vmatprep.subr.mxu0 0.0
      %9356 = vmatpush1.msra.mxu0 %v5253
      %9357 = vmatprep.subr.mxu0 0.0
      %9358 = vmatpush1.msra.mxu0 %v5254
      %9359 = vmatprep.subr.mxu0 0.0
      %9360 = vmatpush1.msra.mxu0 %v5255
      %9361 = vmatprep.subr.mxu0 0.0
      %9362 = vmatpush1.msra.mxu0 %v5256
      %9363 = vmatprep.subr.mxu0 0.0
      %9364 = vmatpush1.msra.mxu0 %v5257
      %9365 = vmatprep.subr.mxu0 0.0
      %9366 = vmatpush1.msra.mxu0 %v5258
      %9367 = vmatprep.subr.mxu0 0.0
      %9368 = vmatpush1.msra.mxu0 %v5259
      %9369 = vmatprep.mubr.f32.mxu0 %v9290
      %9370 = vmatmul.mubr.f32.gmra.mrb[0].mxu0 %v9289
      %v9371 = vpop.f32.mrb[0].mxu0
      %v9372 = vadd.f32 0.0, %v9371
      %v9373 = vpop.f32.mrb[0].mxu0
      %9374 = vmatprep.mubr.f32.mxu0 %v9292
      %9375 = vmatmul.mubr.f32.gmra.mrb[0].mxu0 %v9291
      %v9376 = vpop.f32.mrb[0].mxu0
      %v9377 = vadd.f32 0.0, %v9376
      %v9378 = vpop.f32.mrb[0].mxu0
      %9379 = vmatprep.mubr.f32.mxu0 %v9294
      %9380 = vmatmul.mubr.f32.gmra.mrb[0].mxu0 %v9293
      %v9381 = vpop.f32.mrb[0].mxu0
      %v9382 = vadd.f32 0.0, %v9381
      %v9383 = vpop.f32.mrb[0].mxu0
      %9384 = vmatprep.mubr.f32.mxu0 %v9296
      %9385 = vmatmul.mubr.f32.gmra.mrb[0].mxu0 %v9295
      %v9386 = vpop.f32.mrb[0].mxu0
      %v9387 = vadd.f32 0.0, %v9386
      %v9388 = vpop.f32.mrb[0].mxu0
      %9389 = vmatprep.mubr.f32.mxu0 %v9298
      %9390 = vmatmul.mubr.f32.gmra.mrb[0].mxu0 %v9297
      %v9391 = vpop.f32.mrb[0].mxu0
      %v9392 = vadd.f32 0.0, %v9391
      %v9393 = vpop.f32.mrb[0].mxu0
      %9394 = vmatprep.mubr.f32.mxu0 %v9300
      %9395 = vmatmul.mubr.f32.gmra.mrb[0].mxu0 %v9299
      %v9396 = vpop.f32.mrb[0].mxu0
      %v9397 = vadd.f32 0.0, %v9396
      %v9398 = vpop.f32.mrb[0].mxu0
      %9399 = vmatprep.mubr.f32.mxu0 %v9302
      %9400 = vmatmul.mubr.f32.gmra.mrb[0].mxu0 %v9301
      %v9401 = vpop.f32.mrb[0].mxu0
      %v9402 = vadd.f32 0.0, %v9401
      %v9403 = vpop.f32.mrb[0].mxu0
      %9404 = vmatprep.mubr.f32.mxu0 %v9304
      %9405 = vmatmul.mubr.f32.gmra.mrb[0].mxu0 %v9303
      %v9406 = vpop.f32.mrb[0].mxu0
      %v9407 = vadd.f32 0.0, %v9406
      %v9408 = vpop.f32.mrb[0].mxu0
      %9409 = vdwg.mxu0
      %v9410 = vmax.f32 %v9241, %v9372
      %v9411 = vmax.f32 %v9242, %v9377
      %v9412 = vmax.f32 %v9243, %v9382
      %v9413 = vmax.f32 %v9244, %v9387
      %v9414 = vmax.f32 %v9245, %v9392
      %v9415 = vmax.f32 %v9246, %v9397
      %v9416 = vmax.f32 %v9247, %v9402
      %v9417 = vmax.f32 %v9248, %v9407
      %v9418 = vadd.s32 %v8919, 17
      %v9419 = vadd.s32 %v8920, 17
      %v9420 = vadd.s32 %v8921, 17
      %v9421 = vadd.s32 %v8922, 17
      %v9422 = vadd.s32 %v8923, 17
      %v9423 = vadd.s32 %v8924, 17
      %v9424 = vadd.s32 %v8925, 17
      %v9425 = vadd.s32 %v8926, 17
      %vm9426 = vcmp.eq.s32.totalorder %v8885, %v9418
      %vm9427 = vcmp.eq.s32.totalorder %v8886, %v9418
      %vm9428 = vcmp.eq.s32.totalorder %v8885, %v9419
      %vm9429 = vcmp.eq.s32.totalorder %v8886, %v9419
      %vm9430 = vcmp.eq.s32.totalorder %v8885, %v9420
      %vm9431 = vcmp.eq.s32.totalorder %v8886, %v9420
      %vm9432 = vcmp.eq.s32.totalorder %v8885, %v9421
      %vm9433 = vcmp.eq.s32.totalorder %v8886, %v9421
      %vm9434 = vcmp.eq.s32.totalorder %v8885, %v9422
      %vm9435 = vcmp.eq.s32.totalorder %v8886, %v9422
      %vm9436 = vcmp.eq.s32.totalorder %v8885, %v9423
      %vm9437 = vcmp.eq.s32.totalorder %v8886, %v9423
      %vm9438 = vcmp.eq.s32.totalorder %v8885, %v9424
      %vm9439 = vcmp.eq.s32.totalorder %v8886, %v9424
      %vm9440 = vcmp.eq.s32.totalorder %v8885, %v9425
      %vm9441 = vcmp.eq.s32.totalorder %v8886, %v9425
      %v9442 = vsel %vm9426, 1, 0
      %v9443 = vsel %vm9427, 1, 0
      %v9444 = vsel %vm9428, 1, 0
      %v9445 = vsel %vm9429, 1, 0
      %v9446 = vsel %vm9430, 1, 0
      %v9447 = vsel %vm9431, 1, 0
      %v9448 = vsel %vm9432, 1, 0
      %v9449 = vsel %vm9433, 1, 0
      %v9450 = vsel %vm9434, 1, 0
      %v9451 = vsel %vm9435, 1, 0
      %v9452 = vsel %vm9436, 1, 0
      %v9453 = vsel %vm9437, 1, 0
      %v9454 = vsel %vm9438, 1, 0
      %v9455 = vsel %vm9439, 1, 0
      %v9456 = vsel %vm9440, 1, 0
      %v9457 = vsel %vm9441, 1, 0
      %v9458 = vcvt.s32.f32 %v9442
      %v9459 = vcvt.s32.f32 %v9443
      %v9460 = vcvt.s32.f32 %v9444
      %v9461 = vcvt.s32.f32 %v9445
      %v9462 = vcvt.s32.f32 %v9446
      %v9463 = vcvt.s32.f32 %v9447
      %v9464 = vcvt.s32.f32 %v9448
      %v9465 = vcvt.s32.f32 %v9449
      %v9466 = vcvt.s32.f32 %v9450
      %v9467 = vcvt.s32.f32 %v9451
      %v9468 = vcvt.s32.f32 %v9452
      %v9469 = vcvt.s32.f32 %v9453
      %v9470 = vcvt.s32.f32 %v9454
      %v9471 = vcvt.s32.f32 %v9455
      %v9472 = vcvt.s32.f32 %v9456
      %v9473 = vcvt.s32.f32 %v9457
      %9474 = vmatprep.subr.mxu0 0.0
      %9475 = vmatpush1.msra.mxu0 %v5228
      %9476 = vmatprep.subr.mxu0 0.0
      %9477 = vmatpush1.msra.mxu0 %v5229
      %9478 = vmatprep.subr.mxu0 0.0
      %9479 = vmatpush1.msra.mxu0 %v5230
      %9480 = vmatprep.subr.mxu0 0.0
      %9481 = vmatpush1.msra.mxu0 %v5231
      %9482 = vmatprep.subr.mxu0 0.0
      %9483 = vmatpush1.msra.mxu0 %v5232
      %9484 = vmatprep.subr.mxu0 0.0
      %9485 = vmatpush1.msra.mxu0 %v5233
      %9486 = vmatprep.subr.mxu0 0.0
      %9487 = vmatpush1.msra.mxu0 %v5234
      %9488 = vmatprep.subr.mxu0 0.0
      %9489 = vmatpush1.msra.mxu0 %v5235
      %9490 = vmatprep.subr.mxu0 0.0
      %9491 = vmatpush1.msra.mxu0 %v5236
      %9492 = vmatprep.subr.mxu0 0.0
      %9493 = vmatpush1.msra.mxu0 %v5237
      %9494 = vmatprep.subr.mxu0 0.0
      %9495 = vmatpush1.msra.mxu0 %v5238
      %9496 = vmatprep.subr.mxu0 0.0
      %9497 = vmatpush1.msra.mxu0 %v5239
      %9498 = vmatprep.subr.mxu0 0.0
      %9499 = vmatpush1.msra.mxu0 %v5240
      %9500 = vmatprep.subr.mxu0 0.0
      %9501 = vmatpush1.msra.mxu0 %v5241
      %9502 = vmatprep.subr.mxu0 0.0
      %9503 = vmatpush1.msra.mxu0 %v5242
      %9504 = vmatprep.subr.mxu0 0.0
      %9505 = vmatpush1.msra.mxu0 %v5243
      %9506 = vmatprep.subr.mxu0 0.0
      %9507 = vmatpush1.msra.mxu0 %v5244
      %9508 = vmatprep.subr.mxu0 0.0
      %9509 = vmatpush1.msra.mxu0 %v5245
      %9510 = vmatprep.subr.mxu0 0.0
      %9511 = vmatpush1.msra.mxu0 %v5246
      %9512 = vmatprep.subr.mxu0 0.0
      %9513 = vmatpush1.msra.mxu0 %v5247
      %9514 = vmatprep.subr.mxu0 0.0
      %9515 = vmatpush1.msra.mxu0 %v5248
      %9516 = vmatprep.subr.mxu0 0.0
      %9517 = vmatpush1.msra.mxu0 %v5249
      %9518 = vmatprep.subr.mxu0 0.0
      %9519 = vmatpush1.msra.mxu0 %v5250
      %9520 = vmatprep.subr.mxu0 0.0
      %9521 = vmatpush1.msra.mxu0 %v5251
      %9522 = vmatprep.subr.mxu0 0.0
      %9523 = vmatpush1.msra.mxu0 %v5252
      %9524 = vmatprep.subr.mxu0 0.0
      %9525 = vmatpush1.msra.mxu0 %v5253
      %9526 = vmatprep.subr.mxu0 0.0
      %9527 = vmatpush1.msra.mxu0 %v5254
      %9528 = vmatprep.subr.mxu0 0.0
      %9529 = vmatpush1.msra.mxu0 %v5255
      %9530 = vmatprep.subr.mxu0 0.0
      %9531 = vmatpush1.msra.mxu0 %v5256
      %9532 = vmatprep.subr.mxu0 0.0
      %9533 = vmatpush1.msra.mxu0 %v5257
      %9534 = vmatprep.subr.mxu0 0.0
      %9535 = vmatpush1.msra.mxu0 %v5258
      %9536 = vmatprep.subr.mxu0 0.0
      %9537 = vmatpush1.msra.mxu0 %v5259
      %9538 = vmatprep.mubr.f32.mxu0 %v9459
      %9539 = vmatmul.mubr.f32.gmra.mrb[0].mxu0 %v9458
      %v9540 = vpop.f32.mrb[0].mxu0
      %v9541 = vadd.f32 0.0, %v9540
      %v9542 = vpop.f32.mrb[0].mxu0
      %9543 = vmatprep.mubr.f32.mxu0 %v9461
      %9544 = vmatmul.mubr.f32.gmra.mrb[0].mxu0 %v9460
      %v9545 = vpop.f32.mrb[0].mxu0
      %v9546 = vadd.f32 0.0, %v9545
      %v9547 = vpop.f32.mrb[0].mxu0
      %9548 = vmatprep.mubr.f32.mxu0 %v9463
      %9549 = vmatmul.mubr.f32.gmra.mrb[0].mxu0 %v9462
      %v9550 = vpop.f32.mrb[0].mxu0
      %v9551 = vadd.f32 0.0, %v9550
      %v9552 = vpop.f32.mrb[0].mxu0
      %9553 = vmatprep.mubr.f32.mxu0 %v9465
      %9554 = vmatmul.mubr.f32.gmra.mrb[0].mxu0 %v9464
      %v9555 = vpop.f32.mrb[0].mxu0
      %v9556 = vadd.f32 0.0, %v9555
      %v9557 = vpop.f32.mrb[0].mxu0
      %9558 = vmatprep.mubr.f32.mxu0 %v9467
      %9559 = vmatmul.mubr.f32.gmra.mrb[0].mxu0 %v9466
      %v9560 = vpop.f32.mrb[0].mxu0
      %v9561 = vadd.f32 0.0, %v9560
      %v9562 = vpop.f32.mrb[0].mxu0
      %9563 = vmatprep.mubr.f32.mxu0 %v9469
      %9564 = vmatmul.mubr.f32.gmra.mrb[0].mxu0 %v9468
      %v9565 = vpop.f32.mrb[0].mxu0
      %v9566 = vadd.f32 0.0, %v9565
      %v9567 = vpop.f32.mrb[0].mxu0
      %9568 = vmatprep.mubr.f32.mxu0 %v9471
      %9569 = vmatmul.mubr.f32.gmra.mrb[0].mxu0 %v9470
      %v9570 = vpop.f32.mrb[0].mxu0
      %v9571 = vadd.f32 0.0, %v9570
      %v9572 = vpop.f32.mrb[0].mxu0
      %9573 = vmatprep.mubr.f32.mxu0 %v9473
      %9574 = vmatmul.mubr.f32.gmra.mrb[0].mxu0 %v9472
      %v9575 = vpop.f32.mrb[0].mxu0
      %v9576 = vadd.f32 0.0, %v9575
      %v9577 = vpop.f32.mrb[0].mxu0
      %9578 = vdwg.mxu0
      %v9579 = vmax.f32 %v9410, %v9541
      %v9580 = vmax.f32 %v9411, %v9546
      %v9581 = vmax.f32 %v9412, %v9551
      %v9582 = vmax.f32 %v9413, %v9556
      %v9583 = vmax.f32 %v9414, %v9561
      %v9584 = vmax.f32 %v9415, %v9566
      %v9585 = vmax.f32 %v9416, %v9571
      %v9586 = vmax.f32 %v9417, %v9576
      %v9587 = vsel %vm309, %v9579, 0.0
      %9588 = vadd.xlane.f32.xlu0 %v9587
      %v9589 = vpop.xlane.xlu0 %9588
      %v9590 = vsel %vm309, %v9580, 0.0
      %9591 = vadd.xlane.f32.xlu0 %v9590
      %v9592 = vpop.xlane.xlu0 %9591
      %v9593 = vsel %vm309, %v9581, 0.0
      %9594 = vadd.xlane.f32.xlu0 %v9593
      %v9595 = vpop.xlane.xlu0 %9594
      %v9596 = vsel %vm309, %v9582, 0.0
      %9597 = vadd.xlane.f32.xlu0 %v9596
      %v9598 = vpop.xlane.xlu0 %9597
      %v9599 = vsel %vm309, %v9583, 0.0
      %9600 = vadd.xlane.f32.xlu0 %v9599
      %v9601 = vpop.xlane.xlu0 %9600
      %v9602 = vsel %vm309, %v9584, 0.0
      %9603 = vadd.xlane.f32.xlu0 %v9602
      %v9604 = vpop.xlane.xlu0 %9603
      %v9605 = vsel %vm309, %v9585, 0.0
      %9606 = vadd.xlane.f32.xlu0 %v9605
      %v9607 = vpop.xlane.xlu0 %9606
      %v9608 = vsel %vm309, %v9586, 0.0
      %9609 = vadd.xlane.f32.xlu0 %v9608
      %v9610 = vpop.xlane.xlu0 %9609
      %v9611 = vrcp.pop 32.0
      %v9612 = vmul.f32 %v9589, %v9611
      %v9613 = vmul.f32 %v9592, %v9611
      %v9614 = vmul.f32 %v9595, %v9611
      %v9615 = vmul.f32 %v9598, %v9611
      %v9616 = vmul.f32 %v9601, %v9611
      %v9617 = vmul.f32 %v9604, %v9611
      %v9618 = vmul.f32 %v9607, %v9611
      %v9619 = vmul.f32 %v9610, %v9611
      %v9620 = vsub.f32 %v9579, %v9612
      %v9621 = vsub.f32 %v9580, %v9613
      %v9622 = vsub.f32 %v9581, %v9614
      %v9623 = vsub.f32 %v9582, %v9615
      %v9624 = vsub.f32 %v9583, %v9616
      %v9625 = vsub.f32 %v9584, %v9617
      %v9626 = vsub.f32 %v9585, %v9618
      %v9627 = vsub.f32 %v9586, %v9619
      %v9628 = vmul.f32 %v9620, %v9620
      %v9629 = vmul.f32 %v9621, %v9621
      %v9630 = vmul.f32 %v9622, %v9622
      %v9631 = vmul.f32 %v9623, %v9623
      %v9632 = vmul.f32 %v9624, %v9624
      %v9633 = vmul.f32 %v9625, %v9625
      %v9634 = vmul.f32 %v9626, %v9626
      %v9635 = vmul.f32 %v9627, %v9627
      %v9636 = vsel %vm309, %v9628, 0.0
      %9637 = vadd.xlane.f32.xlu0 %v9636
      %v9638 = vpop.xlane.xlu0 %9637
      %v9639 = vsel %vm309, %v9629, 0.0
      %9640 = vadd.xlane.f32.xlu0 %v9639
      %v9641 = vpop.xlane.xlu0 %9640
      %v9642 = vsel %vm309, %v9630, 0.0
      %9643 = vadd.xlane.f32.xlu0 %v9642
      %v9644 = vpop.xlane.xlu0 %9643
      %v9645 = vsel %vm309, %v9631, 0.0
      %9646 = vadd.xlane.f32.xlu0 %v9645
      %v9647 = vpop.xlane.xlu0 %9646
      %v9648 = vsel %vm309, %v9632, 0.0
      %9649 = vadd.xlane.f32.xlu0 %v9648
      %v9650 = vpop.xlane.xlu0 %9649
      %v9651 = vsel %vm309, %v9633, 0.0
      %9652 = vadd.xlane.f32.xlu0 %v9651
      %v9653 = vpop.xlane.xlu0 %9652
      %v9654 = vsel %vm309, %v9634, 0.0
      %9655 = vadd.xlane.f32.xlu0 %v9654
      %v9656 = vpop.xlane.xlu0 %9655
      %v9657 = vsel %vm309, %v9635, 0.0
      %9658 = vadd.xlane.f32.xlu0 %v9657
      %v9659 = vpop.xlane.xlu0 %9658
      %v9660 = vmul.f32 %v9638, %v9611
      %v9661 = vmul.f32 %v9641, %v9611
      %v9662 = vmul.f32 %v9644, %v9611
      %v9663 = vmul.f32 %v9647, %v9611
      %v9664 = vmul.f32 %v9650, %v9611
      %v9665 = vmul.f32 %v9653, %v9611
      %v9666 = vmul.f32 %v9656, %v9611
      %v9667 = vmul.f32 %v9659, %v9611
      %v9668 = vadd.f32 %v9660, 1e-05
      %v9669 = vadd.f32 %v9661, 1e-05
      %v9670 = vadd.f32 %v9662, 1e-05
      %v9671 = vadd.f32 %v9663, 1e-05
      %v9672 = vadd.f32 %v9664, 1e-05
      %v9673 = vadd.f32 %v9665, 1e-05
      %v9674 = vadd.f32 %v9666, 1e-05
      %v9675 = vadd.f32 %v9667, 1e-05
      %v9676 = vrsqrt.pop %v9668
      %v9677 = vrsqrt.pop %v9669
      %v9678 = vrsqrt.pop %v9670
      %v9679 = vrsqrt.pop %v9671
      %v9680 = vrsqrt.pop %v9672
      %v9681 = vrsqrt.pop %v9673
      %v9682 = vrsqrt.pop %v9674
      %v9683 = vrsqrt.pop %v9675
      %v9684 = vmul.f32 %v9620, %v9676
      %v9685 = vmul.f32 %v9621, %v9677
      %v9686 = vmul.f32 %v9622, %v9678
      %v9687 = vmul.f32 %v9623, %v9679
      %v9688 = vmul.f32 %v9624, %v9680
      %v9689 = vmul.f32 %v9625, %v9681
      %v9690 = vmul.f32 %v9626, %v9682
      %v9691 = vmul.f32 %v9627, %v9683
      %v9692 = vlaneseq
      %v9693 = vshrl.u32 %v9692, 7
      %v9694 = vsub.s32 3, %v9693
      %v9695 = vrot.slane %v252, %v9694
      %v9696 = vmul.f32 %v9684, %v9695
      %v9697 = vmul.f32 %v9685, %v9695
      %v9698 = vmul.f32 %v9686, %v9695
      %v9699 = vmul.f32 %v9687, %v9695
      %v9700 = vmul.f32 %v9688, %v9695
      %v9701 = vmul.f32 %v9689, %v9695
      %v9702 = vmul.f32 %v9690, %v9695
      %v9703 = vmul.f32 %v9691, %v9695
      %v9704 = vlaneseq
      %v9705 = vshrl.u32 %v9704, 7
      %v9706 = vsub.s32 4, %v9705
      %v9707 = vrot.slane %v252, %v9706
      %v9708 = vadd.f32 %v9696, %v9707
      %v9709 = vadd.f32 %v9697, %v9707
      %v9710 = vadd.f32 %v9698, %v9707
      %v9711 = vadd.f32 %v9699, %v9707
      %v9712 = vadd.f32 %v9700, %v9707
      %v9713 = vadd.f32 %v9701, %v9707
      %v9714 = vadd.f32 %v9702, %v9707
      %v9715 = vadd.f32 %v9703, %v9707
      %9716 = vst.msk [vmem:[%s251] sm:$0xff] %vm309, %v9708
      %9717 = vst.msk [vmem:[%s251 + $0x8] sm:$0xff] %vm309, %v9709
      %9718 = vst.msk [vmem:[%s251 + $0x10] sm:$0xff] %vm309, %v9710
      %9719 = vst.msk [vmem:[%s251 + $0x18] sm:$0xff] %vm309, %v9711
      %9720 = vst.msk [vmem:[%s251 + $0x20] sm:$0xff] %vm309, %v9712
      %9721 = vst.msk [vmem:[%s251 + $0x28] sm:$0xff] %vm309, %v9713
      %9722 = vst.msk [vmem:[%s251 + $0x30] sm:$0xff] %vm309, %v9714
      %9723 = vst.msk [vmem:[%s251 + $0x38] sm:$0xff] %vm309, %v9715
      %9724 = vmatprep.subr.mxu0 0.0
      %9725 = vmatpush1.msra.mxu0 %v8843
      %9726 = vmatprep.subr.mxu0 0.0
      %9727 = vmatpush1.msra.mxu0 %v8844
      %9728 = vmatprep.subr.mxu0 0.0
      %9729 = vmatpush1.msra.mxu0 %v8845
      %9730 = vmatprep.subr.mxu0 0.0
      %9731 = vmatpush1.msra.mxu0 %v8846
      %9732 = vmatprep.subr.mxu0 0.0
      %9733 = vmatpush1.msra.mxu0 %v8847
      %9734 = vmatprep.subr.mxu0 0.0
      %9735 = vmatpush1.msra.mxu0 %v8848
      %9736 = vmatprep.subr.mxu0 0.0
      %9737 = vmatpush1.msra.mxu0 %v8849
      %9738 = vmatprep.subr.mxu0 0.0
      %9739 = vmatpush1.msra.mxu0 %v8850
      %9740 = vmatprep.subr.mxu0 0.0
      %9741 = vmatpush1.msra.mxu0 %v8851
      %9742 = vmatprep.subr.mxu0 0.0
      %9743 = vmatpush1.msra.mxu0 %v8852
      %9744 = vmatprep.subr.mxu0 0.0
      %9745 = vmatpush1.msra.mxu0 %v8853
      %9746 = vmatprep.subr.mxu0 0.0
      %9747 = vmatpush1.msra.mxu0 %v8854
      %9748 = vmatprep.subr.mxu0 0.0
      %9749 = vmatpush1.msra.mxu0 %v8855
      %9750 = vmatprep.subr.mxu0 0.0
      %9751 = vmatpush1.msra.mxu0 %v8856
      %9752 = vmatprep.subr.mxu0 0.0
      %9753 = vmatpush1.msra.mxu0 %v8857
      %9754 = vmatprep.subr.mxu0 0.0
      %9755 = vmatpush1.msra.mxu0 %v8858
      %9756 = vmatprep.subr.mxu0 0.0
      %9757 = vmatpush1.msra.mxu0 %v8859
      %9758 = vmatprep.subr.mxu0 0.0
      %9759 = vmatpush1.msra.mxu0 %v8860
      %9760 = vmatprep.subr.mxu0 0.0
      %9761 = vmatpush1.msra.mxu0 %v8861
      %9762 = vmatprep.subr.mxu0 0.0
      %9763 = vmatpush1.msra.mxu0 %v8862
      %9764 = vmatprep.subr.mxu0 0.0
      %9765 = vmatpush1.msra.mxu0 %v8863
      %9766 = vmatprep.subr.mxu0 0.0
      %9767 = vmatpush1.msra.mxu0 %v8864
      %9768 = vmatprep.subr.mxu0 0.0
      %9769 = vmatpush1.msra.mxu0 %v8865
      %9770 = vmatprep.subr.mxu0 0.0
      %9771 = vmatpush1.msra.mxu0 %v8866
      %9772 = vmatprep.subr.mxu0 0.0
      %9773 = vmatpush1.msra.mxu0 %v8867
      %9774 = vmatprep.subr.mxu0 0.0
      %9775 = vmatpush1.msra.mxu0 %v8868
      %9776 = vmatprep.subr.mxu0 0.0
      %9777 = vmatpush1.msra.mxu0 %v8869
      %9778 = vmatprep.subr.mxu0 0.0
      %9779 = vmatpush1.msra.mxu0 %v8870
      %9780 = vmatprep.subr.mxu0 0.0
      %9781 = vmatpush1.msra.mxu0 %v8871
      %9782 = vmatprep.subr.mxu0 0.0
      %9783 = vmatpush1.msra.mxu0 %v8872
      %9784 = vmatprep.subr.mxu0 0.0
      %9785 = vmatpush1.msra.mxu0 %v8873
      %9786 = vmatprep.subr.mxu0 0.0
      %9787 = vmatpush1.msra.mxu0 %v8874
      %9788 = vmatprep.mubr.f32.mxu0 %v8960
      %9789 = vmatmul.mubr.f32.gmra.mrb[0].mxu0 %v8959
      %v9790 = vpop.f32.mrb[0].mxu0
      %v9791 = vadd.f32 0.0, %v9790
      %v9792 = vpop.f32.mrb[0].mxu0
      %9793 = vmatprep.mubr.f32.mxu0 %v8962
      %9794 = vmatmul.mubr.f32.gmra.mrb[0].mxu0 %v8961
      %v9795 = vpop.f32.mrb[0].mxu0
      %v9796 = vadd.f32 0.0, %v9795
      %v9797 = vpop.f32.mrb[0].mxu0
      %9798 = vmatprep.mubr.f32.mxu0 %v8964
      %9799 = vmatmul.mubr.f32.gmra.mrb[0].mxu0 %v8963
      %v9800 = vpop.f32.mrb[0].mxu0
      %v9801 = vadd.f32 0.0, %v9800
      %v9802 = vpop.f32.mrb[0].mxu0
      %9803 = vmatprep.mubr.f32.mxu0 %v8966
      %9804 = vmatmul.mubr.f32.gmra.mrb[0].mxu0 %v8965
      %v9805 = vpop.f32.mrb[0].mxu0
      %v9806 = vadd.f32 0.0, %v9805
      %v9807 = vpop.f32.mrb[0].mxu0
      %9808 = vmatprep.mubr.f32.mxu0 %v8968
      %9809 = vmatmul.mubr.f32.gmra.mrb[0].mxu0 %v8967
      %v9810 = vpop.f32.mrb[0].mxu0
      %v9811 = vadd.f32 0.0, %v9810
      %v9812 = vpop.f32.mrb[0].mxu0
      %9813 = vmatprep.mubr.f32.mxu0 %v8970
      %9814 = vmatmul.mubr.f32.gmra.mrb[0].mxu0 %v8969
      %v9815 = vpop.f32.mrb[0].mxu0
      %v9816 = vadd.f32 0.0, %v9815
      %v9817 = vpop.f32.mrb[0].mxu0
      %9818 = vmatprep.mubr.f32.mxu0 %v8972
      %9819 = vmatmul.mubr.f32.gmra.mrb[0].mxu0 %v8971
      %v9820 = vpop.f32.mrb[0].mxu0
      %v9821 = vadd.f32 0.0, %v9820
      %v9822 = vpop.f32.mrb[0].mxu0
      %9823 = vmatprep.mubr.f32.mxu0 %v8974
      %9824 = vmatmul.mubr.f32.gmra.mrb[0].mxu0 %v8973
      %v9825 = vpop.f32.mrb[0].mxu0
      %v9826 = vadd.f32 0.0, %v9825
      %v9827 = vpop.f32.mrb[0].mxu0
      %9828 = vdwg.mxu0
      %9829 = vmatprep.subr.mxu0 0.0
      %9830 = vmatpush1.msra.mxu0 %v8843
      %9831 = vmatprep.subr.mxu0 0.0
      %9832 = vmatpush1.msra.mxu0 %v8844
      %9833 = vmatprep.subr.mxu0 0.0
      %9834 = vmatpush1.msra.mxu0 %v8845
      %9835 = vmatprep.subr.mxu0 0.0
      %9836 = vmatpush1.msra.mxu0 %v8846
      %9837 = vmatprep.subr.mxu0 0.0
      %9838 = vmatpush1.msra.mxu0 %v8847
      %9839 = vmatprep.subr.mxu0 0.0
      %9840 = vmatpush1.msra.mxu0 %v8848
      %9841 = vmatprep.subr.mxu0 0.0
      %9842 = vmatpush1.msra.mxu0 %v8849
      %9843 = vmatprep.subr.mxu0 0.0
      %9844 = vmatpush1.msra.mxu0 %v8850
      %9845 = vmatprep.subr.mxu0 0.0
      %9846 = vmatpush1.msra.mxu0 %v8851
      %9847 = vmatprep.subr.mxu0 0.0
      %9848 = vmatpush1.msra.mxu0 %v8852
      %9849 = vmatprep.subr.mxu0 0.0
      %9850 = vmatpush1.msra.mxu0 %v8853
      %9851 = vmatprep.subr.mxu0 0.0
      %9852 = vmatpush1.msra.mxu0 %v8854
      %9853 = vmatprep.subr.mxu0 0.0
      %9854 = vmatpush1.msra.mxu0 %v8855
      %9855 = vmatprep.subr.mxu0 0.0
      %9856 = vmatpush1.msra.mxu0 %v8856
      %9857 = vmatprep.subr.mxu0 0.0
      %9858 = vmatpush1.msra.mxu0 %v8857
      %9859 = vmatprep.subr.mxu0 0.0
      %9860 = vmatpush1.msra.mxu0 %v8858
      %9861 = vmatprep.subr.mxu0 0.0
      %9862 = vmatpush1.msra.mxu0 %v8859
      %9863 = vmatprep.subr.mxu0 0.0
      %9864 = vmatpush1.msra.mxu0 %v8860
      %9865 = vmatprep.subr.mxu0 0.0
      %9866 = vmatpush1.msra.mxu0 %v8861
      %9867 = vmatprep.subr.mxu0 0.0
      %9868 = vmatpush1.msra.mxu0 %v8862
      %9869 = vmatprep.subr.mxu0 0.0
      %9870 = vmatpush1.msra.mxu0 %v8863
      %9871 = vmatprep.subr.mxu0 0.0
      %9872 = vmatpush1.msra.mxu0 %v8864
      %9873 = vmatprep.subr.mxu0 0.0
      %9874 = vmatpush1.msra.mxu0 %v8865
      %9875 = vmatprep.subr.mxu0 0.0
      %9876 = vmatpush1.msra.mxu0 %v8866
      %9877 = vmatprep.subr.mxu0 0.0
      %9878 = vmatpush1.msra.mxu0 %v8867
      %9879 = vmatprep.subr.mxu0 0.0
      %9880 = vmatpush1.msra.mxu0 %v8868
      %9881 = vmatprep.subr.mxu0 0.0
      %9882 = vmatpush1.msra.mxu0 %v8869
      %9883 = vmatprep.subr.mxu0 0.0
      %9884 = vmatpush1.msra.mxu0 %v8870
      %9885 = vmatprep.subr.mxu0 0.0
      %9886 = vmatpush1.msra.mxu0 %v8871
      %9887 = vmatprep.subr.mxu0 0.0
      %9888 = vmatpush1.msra.mxu0 %v8872
      %9889 = vmatprep.subr.mxu0 0.0
      %9890 = vmatpush1.msra.mxu0 %v8873
      %9891 = vmatprep.subr.mxu0 0.0
      %9892 = vmatpush1.msra.mxu0 %v8874
      %9893 = vmatprep.mubr.f32.mxu0 %v9121
      %9894 = vmatmul.mubr.f32.gmra.mrb[0].mxu0 %v9120
      %v9895 = vpop.f32.mrb[0].mxu0
      %v9896 = vadd.f32 0.0, %v9895
      %v9897 = vpop.f32.mrb[0].mxu0
      %9898 = vmatprep.mubr.f32.mxu0 %v9123
      %9899 = vmatmul.mubr.f32.gmra.mrb[0].mxu0 %v9122
      %v9900 = vpop.f32.mrb[0].mxu0
      %v9901 = vadd.f32 0.0, %v9900
      %v9902 = vpop.f32.mrb[0].mxu0
      %9903 = vmatprep.mubr.f32.mxu0 %v9125
      %9904 = vmatmul.mubr.f32.gmra.mrb[0].mxu0 %v9124
      %v9905 = vpop.f32.mrb[0].mxu0
      %v9906 = vadd.f32 0.0, %v9905
      %v9907 = vpop.f32.mrb[0].mxu0
      %9908 = vmatprep.mubr.f32.mxu0 %v9127
      %9909 = vmatmul.mubr.f32.gmra.mrb[0].mxu0 %v9126
      %v9910 = vpop.f32.mrb[0].mxu0
      %v9911 = vadd.f32 0.0, %v9910
      %v9912 = vpop.f32.mrb[0].mxu0
      %9913 = vmatprep.mubr.f32.mxu0 %v9129
      %9914 = vmatmul.mubr.f32.gmra.mrb[0].mxu0 %v9128
      %v9915 = vpop.f32.mrb[0].mxu0
      %v9916 = vadd.f32 0.0, %v9915
      %v9917 = vpop.f32.mrb[0].mxu0
      %9918 = vmatprep.mubr.f32.mxu0 %v9131
      %9919 = vmatmul.mubr.f32.gmra.mrb[0].mxu0 %v9130
      %v9920 = vpop.f32.mrb[0].mxu0
      %v9921 = vadd.f32 0.0, %v9920
      %v9922 = vpop.f32.mrb[0].mxu0
      %9923 = vmatprep.mubr.f32.mxu0 %v9133
      %9924 = vmatmul.mubr.f32.gmra.mrb[0].mxu0 %v9132
      %v9925 = vpop.f32.mrb[0].mxu0
      %v9926 = vadd.f32 0.0, %v9925
      %v9927 = vpop.f32.mrb[0].mxu0
      %9928 = vmatprep.mubr.f32.mxu0 %v9135
      %9929 = vmatmul.mubr.f32.gmra.mrb[0].mxu0 %v9134
      %v9930 = vpop.f32.mrb[0].mxu0
      %v9931 = vadd.f32 0.0, %v9930
      %v9932 = vpop.f32.mrb[0].mxu0
      %9933 = vdwg.mxu0
      %v9934 = vmax.f32 %v9791, %v9896
      %v9935 = vmax.f32 %v9796, %v9901
      %v9936 = vmax.f32 %v9801, %v9906
      %v9937 = vmax.f32 %v9806, %v9911
      %v9938 = vmax.f32 %v9811, %v9916
      %v9939 = vmax.f32 %v9816, %v9921
      %v9940 = vmax.f32 %v9821, %v9926
      %v9941 = vmax.f32 %v9826, %v9931
      %9942 = vmatprep.subr.mxu0 0.0
      %9943 = vmatpush1.msra.mxu0 %v8843
      %9944 = vmatprep.subr.mxu0 0.0
      %9945 = vmatpush1.msra.mxu0 %v8844
      %9946 = vmatprep.subr.mxu0 0.0
      %9947 = vmatpush1.msra.mxu0 %v8845
      %9948 = vmatprep.subr.mxu0 0.0
      %9949 = vmatpush1.msra.mxu0 %v8846
      %9950 = vmatprep.subr.mxu0 0.0
      %9951 = vmatpush1.msra.mxu0 %v8847
      %9952 = vmatprep.subr.mxu0 0.0
      %9953 = vmatpush1.msra.mxu0 %v8848
      %9954 = vmatprep.subr.mxu0 0.0
      %9955 = vmatpush1.msra.mxu0 %v8849
      %9956 = vmatprep.subr.mxu0 0.0
      %9957 = vmatpush1.msra.mxu0 %v8850
      %9958 = vmatprep.subr.mxu0 0.0
      %9959 = vmatpush1.msra.mxu0 %v8851
      %9960 = vmatprep.subr.mxu0 0.0
      %9961 = vmatpush1.msra.mxu0 %v8852
      %9962 = vmatprep.subr.mxu0 0.0
      %9963 = vmatpush1.msra.mxu0 %v8853
      %9964 = vmatprep.subr.mxu0 0.0
      %9965 = vmatpush1.msra.mxu0 %v8854
      %9966 = vmatprep.subr.mxu0 0.0
      %9967 = vmatpush1.msra.mxu0 %v8855
      %9968 = vmatprep.subr.mxu0 0.0
      %9969 = vmatpush1.msra.mxu0 %v8856
      %9970 = vmatprep.subr.mxu0 0.0
      %9971 = vmatpush1.msra.mxu0 %v8857
      %9972 = vmatprep.subr.mxu0 0.0
      %9973 = vmatpush1.msra.mxu0 %v8858
      %9974 = vmatprep.subr.mxu0 0.0
      %9975 = vmatpush1.msra.mxu0 %v8859
      %9976 = vmatprep.subr.mxu0 0.0
      %9977 = vmatpush1.msra.mxu0 %v8860
      %9978 = vmatprep.subr.mxu0 0.0
      %9979 = vmatpush1.msra.mxu0 %v8861
      %9980 = vmatprep.subr.mxu0 0.0
      %9981 = vmatpush1.msra.mxu0 %v8862
      %9982 = vmatprep.subr.mxu0 0.0
      %9983 = vmatpush1.msra.mxu0 %v8863
      %9984 = vmatprep.subr.mxu0 0.0
      %9985 = vmatpush1.msra.mxu0 %v8864
      %9986 = vmatprep.subr.mxu0 0.0
      %9987 = vmatpush1.msra.mxu0 %v8865
      %9988 = vmatprep.subr.mxu0 0.0
      %9989 = vmatpush1.msra.mxu0 %v8866
      %9990 = vmatprep.subr.mxu0 0.0
      %9991 = vmatpush1.msra.mxu0 %v8867
      %9992 = vmatprep.subr.mxu0 0.0
      %9993 = vmatpush1.msra.mxu0 %v8868
      %9994 = vmatprep.subr.mxu0 0.0
      %9995 = vmatpush1.msra.mxu0 %v8869
      %9996 = vmatprep.subr.mxu0 0.0
      %9997 = vmatpush1.msra.mxu0 %v8870
      %9998 = vmatprep.subr.mxu0 0.0
      %9999 = vmatpush1.msra.mxu0 %v8871
      %10000 = vmatprep.subr.mxu0 0.0
      %10001 = vmatpush1.msra.mxu0 %v8872
      %10002 = vmatprep.subr.mxu0 0.0
      %10003 = vmatpush1.msra.mxu0 %v8873
      %10004 = vmatprep.subr.mxu0 0.0
      %10005 = vmatpush1.msra.mxu0 %v8874
      %10006 = vmatprep.mubr.f32.mxu0 %v9290
      %10007 = vmatmul.mubr.f32.gmra.mrb[0].mxu0 %v9289
      %v10008 = vpop.f32.mrb[0].mxu0
      %v10009 = vadd.f32 0.0, %v10008
      %v10010 = vpop.f32.mrb[0].mxu0
      %10011 = vmatprep.mubr.f32.mxu0 %v9292
      %10012 = vmatmul.mubr.f32.gmra.mrb[0].mxu0 %v9291
      %v10013 = vpop.f32.mrb[0].mxu0
      %v10014 = vadd.f32 0.0, %v10013
      %v10015 = vpop.f32.mrb[0].mxu0
      %10016 = vmatprep.mubr.f32.mxu0 %v9294
      %10017 = vmatmul.mubr.f32.gmra.mrb[0].mxu0 %v9293
      %v10018 = vpop.f32.mrb[0].mxu0
      %v10019 = vadd.f32 0.0, %v10018
      %v10020 = vpop.f32.mrb[0].mxu0
      %10021 = vmatprep.mubr.f32.mxu0 %v9296
      %10022 = vmatmul.mubr.f32.gmra.mrb[0].mxu0 %v9295
      %v10023 = vpop.f32.mrb[0].mxu0
      %v10024 = vadd.f32 0.0, %v10023
      %v10025 = vpop.f32.mrb[0].mxu0
      %10026 = vmatprep.mubr.f32.mxu0 %v9298
      %10027 = vmatmul.mubr.f32.gmra.mrb[0].mxu0 %v9297
      %v10028 = vpop.f32.mrb[0].mxu0
      %v10029 = vadd.f32 0.0, %v10028
      %v10030 = vpop.f32.mrb[0].mxu0
      %10031 = vmatprep.mubr.f32.mxu0 %v9300
      %10032 = vmatmul.mubr.f32.gmra.mrb[0].mxu0 %v9299
      %v10033 = vpop.f32.mrb[0].mxu0
      %v10034 = vadd.f32 0.0, %v10033
      %v10035 = vpop.f32.mrb[0].mxu0
      %10036 = vmatprep.mubr.f32.mxu0 %v9302
      %10037 = vmatmul.mubr.f32.gmra.mrb[0].mxu0 %v9301
      %v10038 = vpop.f32.mrb[0].mxu0
      %v10039 = vadd.f32 0.0, %v10038
      %v10040 = vpop.f32.mrb[0].mxu0
      %10041 = vmatprep.mubr.f32.mxu0 %v9304
      %10042 = vmatmul.mubr.f32.gmra.mrb[0].mxu0 %v9303
      %v10043 = vpop.f32.mrb[0].mxu0
      %v10044 = vadd.f32 0.0, %v10043
      %v10045 = vpop.f32.mrb[0].mxu0
      %10046 = vdwg.mxu0
      %v10047 = vmax.f32 %v9934, %v10009
      %v10048 = vmax.f32 %v9935, %v10014
      %v10049 = vmax.f32 %v9936, %v10019
      %v10050 = vmax.f32 %v9937, %v10024
      %v10051 = vmax.f32 %v9938, %v10029
      %v10052 = vmax.f32 %v9939, %v10034
      %v10053 = vmax.f32 %v9940, %v10039
      %v10054 = vmax.f32 %v9941, %v10044
      %10055 = vmatprep.subr.mxu0 0.0
      %10056 = vmatpush1.msra.mxu0 %v8843
      %10057 = vmatprep.subr.mxu0 0.0
      %10058 = vmatpush1.msra.mxu0 %v8844
      %10059 = vmatprep.subr.mxu0 0.0
      %10060 = vmatpush1.msra.mxu0 %v8845
      %10061 = vmatprep.subr.mxu0 0.0
      %10062 = vmatpush1.msra.mxu0 %v8846
      %10063 = vmatprep.subr.mxu0 0.0
      %10064 = vmatpush1.msra.mxu0 %v8847
      %10065 = vmatprep.subr.mxu0 0.0
      %10066 = vmatpush1.msra.mxu0 %v8848
      %10067 = vmatprep.subr.mxu0 0.0
      %10068 = vmatpush1.msra.mxu0 %v8849
      %10069 = vmatprep.subr.mxu0 0.0
      %10070 = vmatpush1.msra.mxu0 %v8850
      %10071 = vmatprep.subr.mxu0 0.0
      %10072 = vmatpush1.msra.mxu0 %v8851
      %10073 = vmatprep.subr.mxu0 0.0
      %10074 = vmatpush1.msra.mxu0 %v8852
      %10075 = vmatprep.subr.mxu0 0.0
      %10076 = vmatpush1.msra.mxu0 %v8853
      %10077 = vmatprep.subr.mxu0 0.0
      %10078 = vmatpush1.msra.mxu0 %v8854
      %10079 = vmatprep.subr.mxu0 0.0
      %10080 = vmatpush1.msra.mxu0 %v8855
      %10081 = vmatprep.subr.mxu0 0.0
      %10082 = vmatpush1.msra.mxu0 %v8856
      %10083 = vmatprep.subr.mxu0 0.0
      %10084 = vmatpush1.msra.mxu0 %v8857
      %10085 = vmatprep.subr.mxu0 0.0
      %10086 = vmatpush1.msra.mxu0 %v8858
      %10087 = vmatprep.subr.mxu0 0.0
      %10088 = vmatpush1.msra.mxu0 %v8859
      %10089 = vmatprep.subr.mxu0 0.0
      %10090 = vmatpush1.msra.mxu0 %v8860
      %10091 = vmatprep.subr.mxu0 0.0
      %10092 = vmatpush1.msra.mxu0 %v8861
      %10093 = vmatprep.subr.mxu0 0.0
      %10094 = vmatpush1.msra.mxu0 %v8862
      %10095 = vmatprep.subr.mxu0 0.0
      %10096 = vmatpush1.msra.mxu0 %v8863
      %10097 = vmatprep.subr.mxu0 0.0
      %10098 = vmatpush1.msra.mxu0 %v8864
      %10099 = vmatprep.subr.mxu0 0.0
      %10100 = vmatpush1.msra.mxu0 %v8865
      %10101 = vmatprep.subr.mxu0 0.0
      %10102 = vmatpush1.msra.mxu0 %v8866
      %10103 = vmatprep.subr.mxu0 0.0
      %10104 = vmatpush1.msra.mxu0 %v8867
      %10105 = vmatprep.subr.mxu0 0.0
      %10106 = vmatpush1.msra.mxu0 %v8868
      %10107 = vmatprep.subr.mxu0 0.0
      %10108 = vmatpush1.msra.mxu0 %v8869
      %10109 = vmatprep.subr.mxu0 0.0
      %10110 = vmatpush1.msra.mxu0 %v8870
      %10111 = vmatprep.subr.mxu0 0.0
      %10112 = vmatpush1.msra.mxu0 %v8871
      %10113 = vmatprep.subr.mxu0 0.0
      %10114 = vmatpush1.msra.mxu0 %v8872
      %10115 = vmatprep.subr.mxu0 0.0
      %10116 = vmatpush1.msra.mxu0 %v8873
      %10117 = vmatprep.subr.mxu0 0.0
      %10118 = vmatpush1.msra.mxu0 %v8874
      %10119 = vmatprep.mubr.f32.mxu0 %v9459
      %10120 = vmatmul.mubr.f32.gmra.mrb[0].mxu0 %v9458
      %v10121 = vpop.f32.mrb[0].mxu0
      %v10122 = vadd.f32 0.0, %v10121
      %v10123 = vpop.f32.mrb[0].mxu0
      %10124 = vmatprep.mubr.f32.mxu0 %v9461
      %10125 = vmatmul.mubr.f32.gmra.mrb[0].mxu0 %v9460
      %v10126 = vpop.f32.mrb[0].mxu0
      %v10127 = vadd.f32 0.0, %v10126
      %v10128 = vpop.f32.mrb[0].mxu0
      %10129 = vmatprep.mubr.f32.mxu0 %v9463
      %10130 = vmatmul.mubr.f32.gmra.mrb[0].mxu0 %v9462
      %v10131 = vpop.f32.mrb[0].mxu0
      %v10132 = vadd.f32 0.0, %v10131
      %v10133 = vpop.f32.mrb[0].mxu0
      %10134 = vmatprep.mubr.f32.mxu0 %v9465
      %10135 = vmatmul.mubr.f32.gmra.mrb[0].mxu0 %v9464
      %v10136 = vpop.f32.mrb[0].mxu0
      %v10137 = vadd.f32 0.0, %v10136
      %v10138 = vpop.f32.mrb[0].mxu0
      %10139 = vmatprep.mubr.f32.mxu0 %v9467
      %10140 = vmatmul.mubr.f32.gmra.mrb[0].mxu0 %v9466
      %v10141 = vpop.f32.mrb[0].mxu0
      %v10142 = vadd.f32 0.0, %v10141
      %v10143 = vpop.f32.mrb[0].mxu0
      %10144 = vmatprep.mubr.f32.mxu0 %v9469
      %10145 = vmatmul.mubr.f32.gmra.mrb[0].mxu0 %v9468
      %v10146 = vpop.f32.mrb[0].mxu0
      %v10147 = vadd.f32 0.0, %v10146
      %v10148 = vpop.f32.mrb[0].mxu0
      %10149 = vmatprep.mubr.f32.mxu0 %v9471
      %10150 = vmatmul.mubr.f32.gmra.mrb[0].mxu0 %v9470
      %v10151 = vpop.f32.mrb[0].mxu0
      %v10152 = vadd.f32 0.0, %v10151
      %v10153 = vpop.f32.mrb[0].mxu0
      %10154 = vmatprep.mubr.f32.mxu0 %v9473
      %10155 = vmatmul.mubr.f32.gmra.mrb[0].mxu0 %v9472
      %v10156 = vpop.f32.mrb[0].mxu0
      %v10157 = vadd.f32 0.0, %v10156
      %v10158 = vpop.f32.mrb[0].mxu0
      %10159 = vdwg.mxu0
      %v10160 = vmax.f32 %v10047, %v10122
      %v10161 = vmax.f32 %v10048, %v10127
      %v10162 = vmax.f32 %v10049, %v10132
      %v10163 = vmax.f32 %v10050, %v10137
      %v10164 = vmax.f32 %v10051, %v10142
      %v10165 = vmax.f32 %v10052, %v10147
      %v10166 = vmax.f32 %v10053, %v10152
      %v10167 = vmax.f32 %v10054, %v10157
      %v10168 = vsel %vm309, %v10160, 0.0
      %10169 = vadd.xlane.f32.xlu0 %v10168
      %v10170 = vpop.xlane.xlu0 %10169
      %v10171 = vsel %vm309, %v10161, 0.0
      %10172 = vadd.xlane.f32.xlu0 %v10171
      %v10173 = vpop.xlane.xlu0 %10172
      %v10174 = vsel %vm309, %v10162, 0.0
      %10175 = vadd.xlane.f32.xlu0 %v10174
      %v10176 = vpop.xlane.xlu0 %10175
      %v10177 = vsel %vm309, %v10163, 0.0
      %10178 = vadd.xlane.f32.xlu0 %v10177
      %v10179 = vpop.xlane.xlu0 %10178
      %v10180 = vsel %vm309, %v10164, 0.0
      %10181 = vadd.xlane.f32.xlu0 %v10180
      %v10182 = vpop.xlane.xlu0 %10181
      %v10183 = vsel %vm309, %v10165, 0.0
      %10184 = vadd.xlane.f32.xlu0 %v10183
      %v10185 = vpop.xlane.xlu0 %10184
      %v10186 = vsel %vm309, %v10166, 0.0
      %10187 = vadd.xlane.f32.xlu0 %v10186
      %v10188 = vpop.xlane.xlu0 %10187
      %v10189 = vsel %vm309, %v10167, 0.0
      %10190 = vadd.xlane.f32.xlu0 %v10189
      %v10191 = vpop.xlane.xlu0 %10190
      %v10192 = vmul.f32 %v10170, %v9611
      %v10193 = vmul.f32 %v10173, %v9611
      %v10194 = vmul.f32 %v10176, %v9611
      %v10195 = vmul.f32 %v10179, %v9611
      %v10196 = vmul.f32 %v10182, %v9611
      %v10197 = vmul.f32 %v10185, %v9611
      %v10198 = vmul.f32 %v10188, %v9611
      %v10199 = vmul.f32 %v10191, %v9611
      %v10200 = vsub.f32 %v10160, %v10192
      %v10201 = vsub.f32 %v10161, %v10193
      %v10202 = vsub.f32 %v10162, %v10194
      %v10203 = vsub.f32 %v10163, %v10195
      %v10204 = vsub.f32 %v10164, %v10196
      %v10205 = vsub.f32 %v10165, %v10197
      %v10206 = vsub.f32 %v10166, %v10198
      %v10207 = vsub.f32 %v10167, %v10199
      %v10208 = vmul.f32 %v10200, %v10200
      %v10209 = vmul.f32 %v10201, %v10201
      %v10210 = vmul.f32 %v10202, %v10202
      %v10211 = vmul.f32 %v10203, %v10203
      %v10212 = vmul.f32 %v10204, %v10204
      %v10213 = vmul.f32 %v10205, %v10205
      %v10214 = vmul.f32 %v10206, %v10206
      %v10215 = vmul.f32 %v10207, %v10207
      %v10216 = vsel %vm309, %v10208, 0.0
      %10217 = vadd.xlane.f32.xlu0 %v10216
      %v10218 = vpop.xlane.xlu0 %10217
      %v10219 = vsel %vm309, %v10209, 0.0
      %10220 = vadd.xlane.f32.xlu0 %v10219
      %v10221 = vpop.xlane.xlu0 %10220
      %v10222 = vsel %vm309, %v10210, 0.0
      %10223 = vadd.xlane.f32.xlu0 %v10222
      %v10224 = vpop.xlane.xlu0 %10223
      %v10225 = vsel %vm309, %v10211, 0.0
      %10226 = vadd.xlane.f32.xlu0 %v10225
      %v10227 = vpop.xlane.xlu0 %10226
      %v10228 = vsel %vm309, %v10212, 0.0
      %10229 = vadd.xlane.f32.xlu0 %v10228
      %v10230 = vpop.xlane.xlu0 %10229
      %v10231 = vsel %vm309, %v10213, 0.0
      %10232 = vadd.xlane.f32.xlu0 %v10231
      %v10233 = vpop.xlane.xlu0 %10232
      %v10234 = vsel %vm309, %v10214, 0.0
      %10235 = vadd.xlane.f32.xlu0 %v10234
      %v10236 = vpop.xlane.xlu0 %10235
      %v10237 = vsel %vm309, %v10215, 0.0
      %10238 = vadd.xlane.f32.xlu0 %v10237
      %v10239 = vpop.xlane.xlu0 %10238
      %v10240 = vmul.f32 %v10218, %v9611
      %v10241 = vmul.f32 %v10221, %v9611
      %v10242 = vmul.f32 %v10224, %v9611
      %v10243 = vmul.f32 %v10227, %v9611
      %v10244 = vmul.f32 %v10230, %v9611
      %v10245 = vmul.f32 %v10233, %v9611
      %v10246 = vmul.f32 %v10236, %v9611
      %v10247 = vmul.f32 %v10239, %v9611
      %v10248 = vadd.f32 %v10240, 1e-05
      %v10249 = vadd.f32 %v10241, 1e-05
      %v10250 = vadd.f32 %v10242, 1e-05
      %v10251 = vadd.f32 %v10243, 1e-05
      %v10252 = vadd.f32 %v10244, 1e-05
      %v10253 = vadd.f32 %v10245, 1e-05
      %v10254 = vadd.f32 %v10246, 1e-05
      %v10255 = vadd.f32 %v10247, 1e-05
      %v10256 = vrsqrt.pop %v10248
      %v10257 = vrsqrt.pop %v10249
      %v10258 = vrsqrt.pop %v10250
      %v10259 = vrsqrt.pop %v10251
      %v10260 = vrsqrt.pop %v10252
      %v10261 = vrsqrt.pop %v10253
      %v10262 = vrsqrt.pop %v10254
      %v10263 = vrsqrt.pop %v10255
      %v10264 = vmul.f32 %v10200, %v10256
      %v10265 = vmul.f32 %v10201, %v10257
      %v10266 = vmul.f32 %v10202, %v10258
      %v10267 = vmul.f32 %v10203, %v10259
      %v10268 = vmul.f32 %v10204, %v10260
      %v10269 = vmul.f32 %v10205, %v10261
      %v10270 = vmul.f32 %v10206, %v10262
      %v10271 = vmul.f32 %v10207, %v10263
      %v10272 = vmul.f32 %v10264, %v9695
      %v10273 = vmul.f32 %v10265, %v9695
      %v10274 = vmul.f32 %v10266, %v9695
      %v10275 = vmul.f32 %v10267, %v9695
      %v10276 = vmul.f32 %v10268, %v9695
      %v10277 = vmul.f32 %v10269, %v9695
      %v10278 = vmul.f32 %v10270, %v9695
      %v10279 = vmul.f32 %v10271, %v9695
      %v10280 = vadd.f32 %v10272, %v9707
      %v10281 = vadd.f32 %v10273, %v9707
      %v10282 = vadd.f32 %v10274, %v9707
      %v10283 = vadd.f32 %v10275, %v9707
      %v10284 = vadd.f32 %v10276, %v9707
      %v10285 = vadd.f32 %v10277, %v9707
      %v10286 = vadd.f32 %v10278, %v9707
      %v10287 = vadd.f32 %v10279, %v9707
      %10288 = vst.msk [vmem:[%s251 + $0x40] sm:$0xff] %vm309, %v10280
      %10289 = vst.msk [vmem:[%s251 + $0x48] sm:$0xff] %vm309, %v10281
      %10290 = vst.msk [vmem:[%s251 + $0x50] sm:$0xff] %vm309, %v10282
      %10291 = vst.msk [vmem:[%s251 + $0x58] sm:$0xff] %vm309, %v10283
      %10292 = vst.msk [vmem:[%s251 + $0x60] sm:$0xff] %vm309, %v10284
      %10293 = vst.msk [vmem:[%s251 + $0x68] sm:$0xff] %vm309, %v10285
      %10294 = vst.msk [vmem:[%s251 + $0x70] sm:$0xff] %vm309, %v10286
      %10295 = vst.msk [vmem:[%s251 + $0x78] sm:$0xff] %vm309, %v10287
      %p10296 = scmp.lt.s32.totalorder %s17, 1
      %s10297 = scalar_select %p10296, %s17, 1
      %s10298 = smul.addr %s10297, 16
      %s10299 = smul.addr %s10298, 8
      %s10300 = scalar_lea.vmem %s6, %s10299
      // Predicated region
      $region45: #{multires_block_15.1} parent=43 // pred_check
        %p10301 = pneg %p166
      $region46: #{multires_block_15.1} parent=43 // pred_check_branch
        %10303 = sbr.rel (%p10301) target = $region48
      $region47: #{multires_block_15.1} parent=43 // pred_region
        _
      $region48: #{multires_block_15.1} parent=43 // pred_fallthru
        _
    $region44: #{multires_block_15.1} parent=5 // pred_fallthru
      _
    %p10304 = scmp.le.s32.totalorder 2, %s12
    // Predicated region
    $region49: #{multires_block_15.1} parent=5 // pred_check
      %p10305 = pneg %p10304
    $region50: #{multires_block_15.1} parent=5 // pred_check_branch
      %10307 = sbr.rel (%p10305) target = $region52
    $region51: #{multires_block_15.1} parent=5 // pred_region
      %s10308 = ssub.s32 %s12, 2
      // Predicated region
      $region53: #{multires_block_15.1} parent=51 // pred_check
        %p10309 = pneg %p172
      $region54: #{multires_block_15.1} parent=51 // pred_check_branch
        %10311 = sbr.rel (%p10309) target = $region56
      $region55: #{multires_block_15.1} parent=51 // pred_region
        %p10312 = scmp.lt.s32.totalorder %s18, 1
        %s10313 = scalar_select %p10312, %s18, 1
        %s10314 = smul.addr %s10313, 16
        %s10315 = smul.addr %s10314, 8
        %s10316 = scalar_lea.vmem %s6, %s10315
      $region56: #{multires_block_15.1} parent=51 // pred_fallthru
        _
    $region52: #{multires_block_15.1} parent=5 // pred_fallthru
      _
  $region6: #{multires_block_15.1} parent=0 // loop_footer
    %s16 = sadd.s32 1, %s12
  $region7: #{multires_block_15.1} parent=0 // loop_footer_branch
    %11 = sbr.rel target = $region3
  $region8: #{multires_block_15.1} parent=0 // loop_exit
    _

</llo_original>
